<compile_context>
chip_gen: v7x
topology: tpu7x:2x2x1
jax: 0.10.0
libtpu: 0.0.40
codegen_flags: <defaults>
</compile_context>

<pallas_src>
import math
import functools

import jax
import jax.numpy as jnp
from jax.experimental import pallas as pl
from jax.experimental.pallas import tpu as pltpu


def _mha_kernel(q_ref, k_ref, v_ref, mask_ref,
                wq_ref, bq_ref, wk_ref, bk_ref,
                wv_ref, bv_ref, wo_ref, bo_ref,
                out_ref, *, nb_head):
    rows, d_model = q_ref.shape          # rows = rn * T
    T = mask_ref.shape[0]
    rn = rows // T
    d_k = d_model // nb_head

    # ---- input projections: (rows, D) @ (D, D) on the MXU (bf16 in, f32 acc).
    # Wq / bq were pre-scaled by 1/sqrt(d_k) in the wrapper.
    q = jnp.dot(q_ref[...], wq_ref[...], preferred_element_type=jnp.float32) + bq_ref[...]
    k = jnp.dot(k_ref[...], wk_ref[...], preferred_element_type=jnp.float32) + bk_ref[...]
    v = jnp.dot(v_ref[...], wv_ref[...], preferred_element_type=jnp.float32) + bv_ref[...]

    # Additive mask, computed once per grid step (hoisted out of the head loop).
    neg = jnp.where(mask_ref[...] == 0.0, jnp.float32(-1e9), jnp.float32(0.0))  # (T, T)

    # (rows, D) -> (rn, T, D): leading-dim split only (layout no-op).
    qb = q.astype(jnp.bfloat16).reshape(rn, T, d_model)
    kb = k.astype(jnp.bfloat16).reshape(rn, T, d_model)
    vb = v.astype(jnp.bfloat16).reshape(rn, T, d_model)

    # Output-projection accumulator (f32).
    acc = jnp.zeros((rows, d_model), jnp.float32)

    for h in range(nb_head):                      # static unroll; nb_head is small
        lo = h * d_k
        qh = qb[:, :, lo:lo + d_k]                # (rn, T, d_k)
        kh = kb[:, :, lo:lo + d_k]
        vh = vb[:, :, lo:lo + d_k]

        # Batched QK^T over the rn slices, contracting the last dims directly
        # (no transposed copy of kh).
        s = jnp.einsum('rtd,rsd->rts', qh, kh,
                       preferred_element_type=jnp.float32)     # (rn, T, T)
        s = s + neg                                            # broadcast over rn

        # Numerically-stable softmax; divide via EUP approximate reciprocal.
        m = jnp.max(s, axis=-1, keepdims=True)
        e = jnp.exp(s - m)
        p = e * pl.reciprocal(jnp.sum(e, axis=-1, keepdims=True), approx=True)

        o = jnp.einsum('rts,rsd->rtd', p.astype(jnp.bfloat16), vh,
                       preferred_element_type=jnp.float32)     # (rn, T, d_k)

        # concat-over-heads + output projection, expressed as an accumulation:
        #   concat_h(o_h) @ Wo == sum_h o_h @ Wo[h*d_k:(h+1)*d_k, :]
        acc = acc + jnp.dot(o.reshape(rows, d_k).astype(jnp.bfloat16),
                            wo_ref[lo:lo + d_k, :],
                            preferred_element_type=jnp.float32)

    out_ref[...] = acc + bo_ref[...]


def _pick_block_rows(N, T, target_rows=256):
    """Largest divisor rn of N with rn*T <= target_rows and rn*T % 8 == 0."""
    best = None
    for rn in range(1, N + 1):
        if N % rn:
            continue
        if rn * T > max(target_rows, T):
            continue
        if (rn * T) % 8:
            continue
        best = rn
    return best if best is not None else N   # full-dim block is always legal


def multi_head_attention(query, key, value, mask, params, *, nb_head,
                         block_rows=None):
    """query/key/value: (B, N, T, D); mask: (B, T, T); returns (B, N, T, D)."""
    B, N, T, D = query.shape
    assert D % nb_head == 0
    d_k = D // nb_head
    wq, bq, wk, bk, wv, bv, wo, bo = params

    rn = block_rows if block_rows is not None else _pick_block_rows(N, T)
    assert N % rn == 0, "block_rows must divide N"
    rows = rn * T

    # Fold the 1/sqrt(d_k) attention scale into the query projection.
    scale = 1.0 / math.sqrt(d_k)
    wq_s = wq * scale
    bq_s = bq * scale

    bf16 = jnp.bfloat16
    # bf16 MXU operands (also halves the input DMA); biases stay f32.
    q2 = query.astype(bf16).reshape(B, N * T, D)
    k2 = key.astype(bf16).reshape(B, N * T, D)
    v2 = value.astype(bf16).reshape(B, N * T, D)
    mask = mask.astype(jnp.float32)

    kernel = functools.partial(_mha_kernel, nb_head=nb_head)

    x_spec = pl.BlockSpec((None, rows, D), lambda b, n: (b, n, 0))
    mask_spec = pl.BlockSpec((None, T, T), lambda b, n: (b, 0, 0))
    w_spec = pl.BlockSpec((D, D), lambda b, n: (0, 0))
    b_spec = pl.BlockSpec((1, D), lambda b, n: (0, 0))

    out = pl.pallas_call(
        kernel,
        out_shape=jax.ShapeDtypeStruct((B, N * T, D), jnp.float32),
        grid_spec=pltpu.PrefetchScalarGridSpec(
            num_scalar_prefetch=0,
            grid=(B, N // rn),
            in_specs=[x_spec, x_spec, x_spec, mask_spec,
                      w_spec, b_spec, w_spec, b_spec,
                      w_spec, b_spec, w_spec, b_spec],
            out_specs=pl.BlockSpec((None, rows, D), lambda b, n: (b, n, 0)),
        ),
        compiler_params=pltpu.CompilerParams(
            dimension_semantics=("parallel", "parallel")),
    )(q2, k2, v2, mask,
      wq_s.astype(bf16), bq_s.astype(jnp.float32),
      wk.astype(bf16), bk.astype(jnp.float32),
      wv.astype(bf16), bv.astype(jnp.float32),
      wo.astype(bf16), bo.astype(jnp.float32))

    return out.reshape(B, N, T, D)


def _reference(query, key, value, mask, params, *, nb_head):
    """Pure-JAX (f32) reference mirroring the PyTorch forward."""
    B, N, T, D = query.shape
    d_k = D // nb_head
    wq, bq, wk, bk, wv, bv, wo, bo = params

    def proj(x, w, b):
        y = jnp.einsum('bntd,de->bnte', x, w) + b[0]
        return y.reshape(B, N, T, nb_head, d_k).transpose(0, 1, 3, 2, 4)

    q = proj(query, wq, bq)
    k = proj(key, wk, bk)
    v = proj(value, wv, bv)

    scores = jnp.einsum('bnhtd,bnhsd->bnhts', q, k) / math.sqrt(d_k)
    m = mask[:, None, None, :, :]            # (B, 1, 1, T, T)
    scores = jnp.where(m == 0, -1e9, scores)
    p = jax.nn.softmax(scores, axis=-1)
    x = jnp.einsum('bnhts,bnhsd->bnhtd', p, v)
    x = x.transpose(0, 1, 3, 2, 4).reshape(B, N, T, D)
    return jnp.einsum('bntd,de->bnte', x, wo) + bo[0]


if __name__ == "__main__":
    # TODO(synk): dropout with p > 0 (train mode) is not implemented; the module
    # default p=0.0 makes it a no-op, and the stored attention map is not returned.
    B, N, T, D = 2, 16, 8, 32
    nb_head = 4

    root = jax.random.PRNGKey(0)
    ks = jax.random.split(root, 11)

    query = jax.random.normal(ks[0], (B, N, T, D), jnp.float32)
    key_ = jax.random.normal(ks[1], (B, N, T, D), jnp.float32)
    value = jax.random.normal(ks[2], (B, N, T, D), jnp.float32)

    # Lower-triangular (causal) mask, broadcast over N and heads like PyTorch.
    mask = jnp.tril(jnp.ones((T, T), jnp.float32))[None].repeat(B, axis=0)

    def init_linear(kw, kb):
        bound = 1.0 / math.sqrt(D)
        w = jax.random.uniform(kw, (D, D), jnp.float32, -bound, bound)
        b = jax.random.uniform(kb, (1, D), jnp.float32, -bound, bound)
        return w, b

    wq, bq = init_linear(ks[3], ks[4])
    wk, bk = init_linear(ks[5], ks[6])
    wv, bv = init_linear(ks[7], ks[8])
    wo, bo = init_linear(ks[9], ks[10])
    params = (wq, bq, wk, bk, wv, bv, wo, bo)

    out = multi_head_attention(query, key_, value, mask, params, nb_head=nb_head)
    out = jax.block_until_ready(out)

    ref = _reference(query, key_, value, mask, params, nb_head=nb_head)
    assert out.shape == (B, N, T, D)
    # bf16 MXU operands + approximate reciprocal => looser tolerance than pure f32.
    err = float(jnp.max(jnp.abs(out - ref)))
    assert jnp.allclose(out, ref, atol=3e-2, rtol=3e-2), f"mismatch vs reference (max abs diff {err})"

    print("KERNEL_OK")
</pallas_src>

<mosaic_0001>
module attributes {stable_mosaic.version = 11 : i64} {
  func.func @_mha_kernel(%arg0: i32, %arg1: i32, %arg2: memref<1x128x32xbf16, #tpu.memory_space<vmem>>, %arg3: memref<1x128x32xbf16, #tpu.memory_space<vmem>>, %arg4: memref<1x128x32xbf16, #tpu.memory_space<vmem>>, %arg5: memref<1x8x8xf32, #tpu.memory_space<vmem>>, %arg6: memref<32x32xbf16, #tpu.memory_space<vmem>>, %arg7: memref<1x32xf32, #tpu.memory_space<vmem>>, %arg8: memref<32x32xbf16, #tpu.memory_space<vmem>>, %arg9: memref<1x32xf32, #tpu.memory_space<vmem>>, %arg10: memref<32x32xbf16, #tpu.memory_space<vmem>>, %arg11: memref<1x32xf32, #tpu.memory_space<vmem>>, %arg12: memref<32x32xbf16, #tpu.memory_space<vmem>>, %arg13: memref<1x32xf32, #tpu.memory_space<vmem>>, %arg14: memref<1x128x32xf32, #tpu.memory_space<vmem>>) attributes {dimension_semantics = [#tpu.dimension_semantics<parallel>, #tpu.dimension_semantics<parallel>], iteration_bounds = array<i64: 2, 1>, scalar_prefetch = 0 : i64, scratch_operands = 0 : i64, tpu.core_type = #tpu.core_type<tc>, window_params = [{transform_indices = @transform_0, window_bounds = array<i64: 1, 128, 32>}, {transform_indices = @transform_1, window_bounds = array<i64: 1, 128, 32>}, {transform_indices = @transform_2, window_bounds = array<i64: 1, 128, 32>}, {transform_indices = @transform_3, window_bounds = array<i64: 1, 8, 8>}, {pipeline_mode = #tpu.pipeline_mode<synchronous>, transform_indices = @transform_4, window_bounds = array<i64: 32, 32>}, {pipeline_mode = #tpu.pipeline_mode<synchronous>, transform_indices = @transform_5, window_bounds = array<i64: 1, 32>}, {pipeline_mode = #tpu.pipeline_mode<synchronous>, transform_indices = @transform_6, window_bounds = array<i64: 32, 32>}, {pipeline_mode = #tpu.pipeline_mode<synchronous>, transform_indices = @transform_7, window_bounds = array<i64: 1, 32>}, {pipeline_mode = #tpu.pipeline_mode<synchronous>, transform_indices = @transform_8, window_bounds = array<i64: 32, 32>}, {pipeline_mode = #tpu.pipeline_mode<synchronous>, transform_indices = @transform_9, window_bounds = array<i64: 1, 32>}, {pipeline_mode = #tpu.pipeline_mode<synchronous>, transform_indices = @transform_10, window_bounds = array<i64: 32, 32>}, {pipeline_mode = #tpu.pipeline_mode<synchronous>, transform_indices = @transform_11, window_bounds = array<i64: 1, 32>}, {transform_indices = @transform_12, window_bounds = array<i64: 1, 128, 32>}]} {
    %c0 = arith.constant 0 : index
    %c0_0 = arith.constant 0 : index
    %c0_1 = arith.constant 0 : index
    %0 = vector.load %arg2[%c0, %c0_0, %c0_1] : memref<1x128x32xbf16, #tpu.memory_space<vmem>>, vector<1x128x32xbf16>
    %1 = vector.shape_cast %0 : vector<1x128x32xbf16> to vector<128x32xbf16>
    %c0_2 = arith.constant 0 : index
    %c0_3 = arith.constant 0 : index
    %2 = vector.load %arg6[%c0_2, %c0_3] : memref<32x32xbf16, #tpu.memory_space<vmem>>, vector<32x32xbf16>
    %cst = arith.constant dense<0.000000e+00> : vector<128x32xf32>
    %3 = tpu.matmul %1, %2, %cst {dimension_numbers = #tpu.dot_dimension_numbers<[1], [0], [0], [1], [0, 0, 1, 1], [], []>} : vector<128x32xbf16>, vector<32x32xbf16>, vector<128x32xf32> -> vector<128x32xf32>
    %c0_4 = arith.constant 0 : index
    %c0_5 = arith.constant 0 : index
    %4 = vector.load %arg7[%c0_4, %c0_5] : memref<1x32xf32, #tpu.memory_space<vmem>>, vector<1x32xf32>
    %5 = vector.broadcast %4 : vector<1x32xf32> to vector<128x32xf32>
    %6 = arith.addf %3, %5 : vector<128x32xf32>
    %c0_6 = arith.constant 0 : index
    %c0_7 = arith.constant 0 : index
    %c0_8 = arith.constant 0 : index
    %7 = vector.load %arg3[%c0_6, %c0_7, %c0_8] : memref<1x128x32xbf16, #tpu.memory_space<vmem>>, vector<1x128x32xbf16>
    %8 = vector.shape_cast %7 : vector<1x128x32xbf16> to vector<128x32xbf16>
    %c0_9 = arith.constant 0 : index
    %c0_10 = arith.constant 0 : index
    %9 = vector.load %arg8[%c0_9, %c0_10] : memref<32x32xbf16, #tpu.memory_space<vmem>>, vector<32x32xbf16>
    %cst_11 = arith.constant dense<0.000000e+00> : vector<128x32xf32>
    %10 = tpu.matmul %8, %9, %cst_11 {dimension_numbers = #tpu.dot_dimension_numbers<[1], [0], [0], [1], [0, 0, 1, 1], [], []>} : vector<128x32xbf16>, vector<32x32xbf16>, vector<128x32xf32> -> vector<128x32xf32>
    %c0_12 = arith.constant 0 : index
    %c0_13 = arith.constant 0 : index
    %11 = vector.load %arg9[%c0_12, %c0_13] : memref<1x32xf32, #tpu.memory_space<vmem>>, vector<1x32xf32>
    %12 = vector.broadcast %11 : vector<1x32xf32> to vector<128x32xf32>
    %13 = arith.addf %10, %12 : vector<128x32xf32>
    %c0_14 = arith.constant 0 : index
    %c0_15 = arith.constant 0 : index
    %c0_16 = arith.constant 0 : index
    %14 = vector.load %arg4[%c0_14, %c0_15, %c0_16] : memref<1x128x32xbf16, #tpu.memory_space<vmem>>, vector<1x128x32xbf16>
    %15 = vector.shape_cast %14 : vector<1x128x32xbf16> to vector<128x32xbf16>
    %c0_17 = arith.constant 0 : index
    %c0_18 = arith.constant 0 : index
    %16 = vector.load %arg10[%c0_17, %c0_18] : memref<32x32xbf16, #tpu.memory_space<vmem>>, vector<32x32xbf16>
    %cst_19 = arith.constant dense<0.000000e+00> : vector<128x32xf32>
    %17 = tpu.matmul %15, %16, %cst_19 {dimension_numbers = #tpu.dot_dimension_numbers<[1], [0], [0], [1], [0, 0, 1, 1], [], []>} : vector<128x32xbf16>, vector<32x32xbf16>, vector<128x32xf32> -> vector<128x32xf32>
    %c0_20 = arith.constant 0 : index
    %c0_21 = arith.constant 0 : index
    %18 = vector.load %arg11[%c0_20, %c0_21] : memref<1x32xf32, #tpu.memory_space<vmem>>, vector<1x32xf32>
    %19 = vector.broadcast %18 : vector<1x32xf32> to vector<128x32xf32>
    %20 = arith.addf %17, %19 : vector<128x32xf32>
    %c0_22 = arith.constant 0 : index
    %c0_23 = arith.constant 0 : index
    %c0_24 = arith.constant 0 : index
    %21 = vector.load %arg5[%c0_22, %c0_23, %c0_24] : memref<1x8x8xf32, #tpu.memory_space<vmem>>, vector<1x8x8xf32>
    %22 = vector.shape_cast %21 : vector<1x8x8xf32> to vector<8x8xf32>
    %cst_25 = arith.constant 0.000000e+00 : f32
    %23 = vector.broadcast %cst_25 : f32 to vector<8x8xf32>
    %24 = arith.cmpf oeq, %22, %23 : vector<8x8xf32>
    %cst_26 = arith.constant -1.000000e+09 : f32
    %cst_27 = arith.constant 0.000000e+00 : f32
    %25 = vector.broadcast %cst_26 : f32 to vector<8x8xf32>
    %26 = vector.broadcast %cst_27 : f32 to vector<8x8xf32>
    %27 = arith.select %24, %25, %26 : vector<8x8xi1>, vector<8x8xf32>
    %28 = arith.truncf %6 : vector<128x32xf32> to vector<128x32xbf16>
    %29 = vector.shape_cast %28 : vector<128x32xbf16> to vector<16x8x32xbf16>
    %30 = arith.truncf %13 : vector<128x32xf32> to vector<128x32xbf16>
    %31 = vector.shape_cast %30 : vector<128x32xbf16> to vector<16x8x32xbf16>
    %32 = arith.truncf %20 : vector<128x32xf32> to vector<128x32xbf16>
    %33 = vector.shape_cast %32 : vector<128x32xbf16> to vector<16x8x32xbf16>
    %cst_28 = arith.constant 0.000000e+00 : f32
    %34 = vector.broadcast %cst_28 : f32 to vector<128x32xf32>
    %35 = vector.extract_strided_slice %29 {offsets = [0, 0, 0], sizes = [16, 8, 8], strides = [1, 1, 1]} : vector<16x8x32xbf16> to vector<16x8x8xbf16>
    %36 = vector.extract_strided_slice %31 {offsets = [0, 0, 0], sizes = [16, 8, 8], strides = [1, 1, 1]} : vector<16x8x32xbf16> to vector<16x8x8xbf16>
    %37 = vector.extract_strided_slice %33 {offsets = [0, 0, 0], sizes = [16, 8, 8], strides = [1, 1, 1]} : vector<16x8x32xbf16> to vector<16x8x8xbf16>
    "tpu.trace_start"() <{level = 10 : i32, message = "rtd,rsd->rts"}> : () -> ()
    %cst_29 = arith.constant dense<0.000000e+00> : vector<16x8x8xf32>
    %38 = tpu.matmul %35, %36, %cst_29 {dimension_numbers = #tpu.dot_dimension_numbers<[2], [2], [1], [1], [0, 0, 0, 1, 1, 1], [0], [0]>} : vector<16x8x8xbf16>, vector<16x8x8xbf16>, vector<16x8x8xf32> -> vector<16x8x8xf32>
    "tpu.trace_stop"() : () -> ()
    %39 = vector.shape_cast %27 : vector<8x8xf32> to vector<1x8x8xf32>
    %40 = vector.broadcast %39 : vector<1x8x8xf32> to vector<16x8x8xf32>
    %41 = arith.addf %38, %40 : vector<16x8x8xf32>
    %cst_30 = arith.constant dense<0xFF800000> : vector<16x8xf32>
    %42 = vector.multi_reduction <maximumf>, %41, %cst_30 [2] : vector<16x8x8xf32> to vector<16x8xf32>
    %43 = vector.shape_cast %42 : vector<16x8xf32> to vector<16x8x1xf32>
    %44 = vector.broadcast %43 : vector<16x8x1xf32> to vector<16x8x8xf32>
    %45 = arith.subf %41, %44 : vector<16x8x8xf32>
    %46 = math.exp %45 : vector<16x8x8xf32>
    %cst_31 = arith.constant dense<0.000000e+00> : vector<16x8xf32>
    %47 = vector.multi_reduction <add>, %46, %cst_31 [2] : vector<16x8x8xf32> to vector<16x8xf32>
    %48 = vector.shape_cast %47 : vector<16x8xf32> to vector<16x8x1xf32>
    %49 = tpu.reciprocal %48 {approx = true} : vector<16x8x1xf32> -> vector<16x8x1xf32>
    %50 = vector.broadcast %49 : vector<16x8x1xf32> to vector<16x8x8xf32>
    %51 = arith.mulf %46, %50 : vector<16x8x8xf32>
    %52 = arith.truncf %51 : vector<16x8x8xf32> to vector<16x8x8xbf16>
    "tpu.trace_start"() <{level = 10 : i32, message = "rts,rsd->rtd"}> : () -> ()
    %cst_32 = arith.constant dense<0.000000e+00> : vector<16x8x8xf32>
    %53 = tpu.matmul %52, %37, %cst_32 {dimension_numbers = #tpu.dot_dimension_numbers<[2], [1], [1], [2], [0, 0, 0, 1, 1, 2], [0], [0]>} : vector<16x8x8xbf16>, vector<16x8x8xbf16>, vector<16x8x8xf32> -> vector<16x8x8xf32>
    "tpu.trace_stop"() : () -> ()
    %54 = vector.shape_cast %53 : vector<16x8x8xf32> to vector<128x8xf32>
    %55 = arith.truncf %54 : vector<128x8xf32> to vector<128x8xbf16>
    %c0_33 = arith.constant 0 : index
    %c0_34 = arith.constant 0 : index
    %56 = vector.load %arg12[%c0_33, %c0_34] : memref<32x32xbf16, #tpu.memory_space<vmem>>, vector<8x32xbf16>
    %cst_35 = arith.constant dense<0.000000e+00> : vector<128x32xf32>
    %57 = tpu.matmul %55, %56, %cst_35 {dimension_numbers = #tpu.dot_dimension_numbers<[1], [0], [0], [1], [0, 0, 1, 1], [], []>} : vector<128x8xbf16>, vector<8x32xbf16>, vector<128x32xf32> -> vector<128x32xf32>
    %58 = arith.addf %34, %57 : vector<128x32xf32>
    %59 = vector.extract_strided_slice %29 {offsets = [0, 0, 8], sizes = [16, 8, 8], strides = [1, 1, 1]} : vector<16x8x32xbf16> to vector<16x8x8xbf16>
    %60 = vector.extract_strided_slice %31 {offsets = [0, 0, 8], sizes = [16, 8, 8], strides = [1, 1, 1]} : vector<16x8x32xbf16> to vector<16x8x8xbf16>
    %61 = vector.extract_strided_slice %33 {offsets = [0, 0, 8], sizes = [16, 8, 8], strides = [1, 1, 1]} : vector<16x8x32xbf16> to vector<16x8x8xbf16>
    "tpu.trace_start"() <{level = 10 : i32, message = "rtd,rsd->rts"}> : () -> ()
    %cst_36 = arith.constant dense<0.000000e+00> : vector<16x8x8xf32>
    %62 = tpu.matmul %59, %60, %cst_36 {dimension_numbers = #tpu.dot_dimension_numbers<[2], [2], [1], [1], [0, 0, 0, 1, 1, 1], [0], [0]>} : vector<16x8x8xbf16>, vector<16x8x8xbf16>, vector<16x8x8xf32> -> vector<16x8x8xf32>
    "tpu.trace_stop"() : () -> ()
    %63 = vector.shape_cast %27 : vector<8x8xf32> to vector<1x8x8xf32>
    %64 = vector.broadcast %63 : vector<1x8x8xf32> to vector<16x8x8xf32>
    %65 = arith.addf %62, %64 : vector<16x8x8xf32>
    %cst_37 = arith.constant dense<0xFF800000> : vector<16x8xf32>
    %66 = vector.multi_reduction <maximumf>, %65, %cst_37 [2] : vector<16x8x8xf32> to vector<16x8xf32>
    %67 = vector.shape_cast %66 : vector<16x8xf32> to vector<16x8x1xf32>
    %68 = vector.broadcast %67 : vector<16x8x1xf32> to vector<16x8x8xf32>
    %69 = arith.subf %65, %68 : vector<16x8x8xf32>
    %70 = math.exp %69 : vector<16x8x8xf32>
    %cst_38 = arith.constant dense<0.000000e+00> : vector<16x8xf32>
    %71 = vector.multi_reduction <add>, %70, %cst_38 [2] : vector<16x8x8xf32> to vector<16x8xf32>
    %72 = vector.shape_cast %71 : vector<16x8xf32> to vector<16x8x1xf32>
    %73 = tpu.reciprocal %72 {approx = true} : vector<16x8x1xf32> -> vector<16x8x1xf32>
    %74 = vector.broadcast %73 : vector<16x8x1xf32> to vector<16x8x8xf32>
    %75 = arith.mulf %70, %74 : vector<16x8x8xf32>
    %76 = arith.truncf %75 : vector<16x8x8xf32> to vector<16x8x8xbf16>
    "tpu.trace_start"() <{level = 10 : i32, message = "rts,rsd->rtd"}> : () -> ()
    %cst_39 = arith.constant dense<0.000000e+00> : vector<16x8x8xf32>
    %77 = tpu.matmul %76, %61, %cst_39 {dimension_numbers = #tpu.dot_dimension_numbers<[2], [1], [1], [2], [0, 0, 0, 1, 1, 2], [0], [0]>} : vector<16x8x8xbf16>, vector<16x8x8xbf16>, vector<16x8x8xf32> -> vector<16x8x8xf32>
    "tpu.trace_stop"() : () -> ()
    %78 = vector.shape_cast %77 : vector<16x8x8xf32> to vector<128x8xf32>
    %79 = arith.truncf %78 : vector<128x8xf32> to vector<128x8xbf16>
    %c8 = arith.constant 8 : index
    %c0_40 = arith.constant 0 : index
    %80 = vector.load %arg12[%c8, %c0_40] : memref<32x32xbf16, #tpu.memory_space<vmem>>, vector<8x32xbf16>
    %cst_41 = arith.constant dense<0.000000e+00> : vector<128x32xf32>
    %81 = tpu.matmul %79, %80, %cst_41 {dimension_numbers = #tpu.dot_dimension_numbers<[1], [0], [0], [1], [0, 0, 1, 1], [], []>} : vector<128x8xbf16>, vector<8x32xbf16>, vector<128x32xf32> -> vector<128x32xf32>
    %82 = arith.addf %58, %81 : vector<128x32xf32>
    %83 = vector.extract_strided_slice %29 {offsets = [0, 0, 16], sizes = [16, 8, 8], strides = [1, 1, 1]} : vector<16x8x32xbf16> to vector<16x8x8xbf16>
    %84 = vector.extract_strided_slice %31 {offsets = [0, 0, 16], sizes = [16, 8, 8], strides = [1, 1, 1]} : vector<16x8x32xbf16> to vector<16x8x8xbf16>
    %85 = vector.extract_strided_slice %33 {offsets = [0, 0, 16], sizes = [16, 8, 8], strides = [1, 1, 1]} : vector<16x8x32xbf16> to vector<16x8x8xbf16>
    "tpu.trace_start"() <{level = 10 : i32, message = "rtd,rsd->rts"}> : () -> ()
    %cst_42 = arith.constant dense<0.000000e+00> : vector<16x8x8xf32>
    %86 = tpu.matmul %83, %84, %cst_42 {dimension_numbers = #tpu.dot_dimension_numbers<[2], [2], [1], [1], [0, 0, 0, 1, 1, 1], [0], [0]>} : vector<16x8x8xbf16>, vector<16x8x8xbf16>, vector<16x8x8xf32> -> vector<16x8x8xf32>
    "tpu.trace_stop"() : () -> ()
    %87 = vector.shape_cast %27 : vector<8x8xf32> to vector<1x8x8xf32>
    %88 = vector.broadcast %87 : vector<1x8x8xf32> to vector<16x8x8xf32>
    %89 = arith.addf %86, %88 : vector<16x8x8xf32>
    %cst_43 = arith.constant dense<0xFF800000> : vector<16x8xf32>
    %90 = vector.multi_reduction <maximumf>, %89, %cst_43 [2] : vector<16x8x8xf32> to vector<16x8xf32>
    %91 = vector.shape_cast %90 : vector<16x8xf32> to vector<16x8x1xf32>
    %92 = vector.broadcast %91 : vector<16x8x1xf32> to vector<16x8x8xf32>
    %93 = arith.subf %89, %92 : vector<16x8x8xf32>
    %94 = math.exp %93 : vector<16x8x8xf32>
    %cst_44 = arith.constant dense<0.000000e+00> : vector<16x8xf32>
    %95 = vector.multi_reduction <add>, %94, %cst_44 [2] : vector<16x8x8xf32> to vector<16x8xf32>
    %96 = vector.shape_cast %95 : vector<16x8xf32> to vector<16x8x1xf32>
    %97 = tpu.reciprocal %96 {approx = true} : vector<16x8x1xf32> -> vector<16x8x1xf32>
    %98 = vector.broadcast %97 : vector<16x8x1xf32> to vector<16x8x8xf32>
    %99 = arith.mulf %94, %98 : vector<16x8x8xf32>
    %100 = arith.truncf %99 : vector<16x8x8xf32> to vector<16x8x8xbf16>
    "tpu.trace_start"() <{level = 10 : i32, message = "rts,rsd->rtd"}> : () -> ()
    %cst_45 = arith.constant dense<0.000000e+00> : vector<16x8x8xf32>
    %101 = tpu.matmul %100, %85, %cst_45 {dimension_numbers = #tpu.dot_dimension_numbers<[2], [1], [1], [2], [0, 0, 0, 1, 1, 2], [0], [0]>} : vector<16x8x8xbf16>, vector<16x8x8xbf16>, vector<16x8x8xf32> -> vector<16x8x8xf32>
    "tpu.trace_stop"() : () -> ()
    %102 = vector.shape_cast %101 : vector<16x8x8xf32> to vector<128x8xf32>
    %103 = arith.truncf %102 : vector<128x8xf32> to vector<128x8xbf16>
    %c16 = arith.constant 16 : index
    %c0_46 = arith.constant 0 : index
    %104 = vector.load %arg12[%c16, %c0_46] : memref<32x32xbf16, #tpu.memory_space<vmem>>, vector<8x32xbf16>
    %cst_47 = arith.constant dense<0.000000e+00> : vector<128x32xf32>
    %105 = tpu.matmul %103, %104, %cst_47 {dimension_numbers = #tpu.dot_dimension_numbers<[1], [0], [0], [1], [0, 0, 1, 1], [], []>} : vector<128x8xbf16>, vector<8x32xbf16>, vector<128x32xf32> -> vector<128x32xf32>
    %106 = arith.addf %82, %105 : vector<128x32xf32>
    %107 = vector.extract_strided_slice %29 {offsets = [0, 0, 24], sizes = [16, 8, 8], strides = [1, 1, 1]} : vector<16x8x32xbf16> to vector<16x8x8xbf16>
    %108 = vector.extract_strided_slice %31 {offsets = [0, 0, 24], sizes = [16, 8, 8], strides = [1, 1, 1]} : vector<16x8x32xbf16> to vector<16x8x8xbf16>
    %109 = vector.extract_strided_slice %33 {offsets = [0, 0, 24], sizes = [16, 8, 8], strides = [1, 1, 1]} : vector<16x8x32xbf16> to vector<16x8x8xbf16>
    "tpu.trace_start"() <{level = 10 : i32, message = "rtd,rsd->rts"}> : () -> ()
    %cst_48 = arith.constant dense<0.000000e+00> : vector<16x8x8xf32>
    %110 = tpu.matmul %107, %108, %cst_48 {dimension_numbers = #tpu.dot_dimension_numbers<[2], [2], [1], [1], [0, 0, 0, 1, 1, 1], [0], [0]>} : vector<16x8x8xbf16>, vector<16x8x8xbf16>, vector<16x8x8xf32> -> vector<16x8x8xf32>
    "tpu.trace_stop"() : () -> ()
    %111 = vector.shape_cast %27 : vector<8x8xf32> to vector<1x8x8xf32>
    %112 = vector.broadcast %111 : vector<1x8x8xf32> to vector<16x8x8xf32>
    %113 = arith.addf %110, %112 : vector<16x8x8xf32>
    %cst_49 = arith.constant dense<0xFF800000> : vector<16x8xf32>
    %114 = vector.multi_reduction <maximumf>, %113, %cst_49 [2] : vector<16x8x8xf32> to vector<16x8xf32>
    %115 = vector.shape_cast %114 : vector<16x8xf32> to vector<16x8x1xf32>
    %116 = vector.broadcast %115 : vector<16x8x1xf32> to vector<16x8x8xf32>
    %117 = arith.subf %113, %116 : vector<16x8x8xf32>
    %118 = math.exp %117 : vector<16x8x8xf32>
    %cst_50 = arith.constant dense<0.000000e+00> : vector<16x8xf32>
    %119 = vector.multi_reduction <add>, %118, %cst_50 [2] : vector<16x8x8xf32> to vector<16x8xf32>
    %120 = vector.shape_cast %119 : vector<16x8xf32> to vector<16x8x1xf32>
    %121 = tpu.reciprocal %120 {approx = true} : vector<16x8x1xf32> -> vector<16x8x1xf32>
    %122 = vector.broadcast %121 : vector<16x8x1xf32> to vector<16x8x8xf32>
    %123 = arith.mulf %118, %122 : vector<16x8x8xf32>
    %124 = arith.truncf %123 : vector<16x8x8xf32> to vector<16x8x8xbf16>
    "tpu.trace_start"() <{level = 10 : i32, message = "rts,rsd->rtd"}> : () -> ()
    %cst_51 = arith.constant dense<0.000000e+00> : vector<16x8x8xf32>
    %125 = tpu.matmul %124, %109, %cst_51 {dimension_numbers = #tpu.dot_dimension_numbers<[2], [1], [1], [2], [0, 0, 0, 1, 1, 2], [0], [0]>} : vector<16x8x8xbf16>, vector<16x8x8xbf16>, vector<16x8x8xf32> -> vector<16x8x8xf32>
    "tpu.trace_stop"() : () -> ()
    %126 = vector.shape_cast %125 : vector<16x8x8xf32> to vector<128x8xf32>
    %127 = arith.truncf %126 : vector<128x8xf32> to vector<128x8xbf16>
    %c24 = arith.constant 24 : index
    %c0_52 = arith.constant 0 : index
    %128 = vector.load %arg12[%c24, %c0_52] : memref<32x32xbf16, #tpu.memory_space<vmem>>, vector<8x32xbf16>
    %cst_53 = arith.constant dense<0.000000e+00> : vector<128x32xf32>
    %129 = tpu.matmul %127, %128, %cst_53 {dimension_numbers = #tpu.dot_dimension_numbers<[1], [0], [0], [1], [0, 0, 1, 1], [], []>} : vector<128x8xbf16>, vector<8x32xbf16>, vector<128x32xf32> -> vector<128x32xf32>
    %130 = arith.addf %106, %129 : vector<128x32xf32>
    %c0_54 = arith.constant 0 : index
    %c0_55 = arith.constant 0 : index
    %131 = vector.load %arg13[%c0_54, %c0_55] : memref<1x32xf32, #tpu.memory_space<vmem>>, vector<1x32xf32>
    %132 = vector.broadcast %131 : vector<1x32xf32> to vector<128x32xf32>
    %133 = arith.addf %130, %132 : vector<128x32xf32>
    %c0_56 = arith.constant 0 : index
    %c0_57 = arith.constant 0 : index
    %c0_58 = arith.constant 0 : index
    %134 = vector.load %arg14[%c0_56, %c0_57, %c0_58] : memref<1x128x32xf32, #tpu.memory_space<vmem>>, vector<1x128x32xf32>
    %135 = vector.shape_cast %134 : vector<1x128x32xf32> to vector<128x32xf32>
    %136 = vector.shape_cast %133 : vector<128x32xf32> to vector<1x128x32xf32>
    tpu.vector_store %arg14[%c0_56, %c0_57, %c0_58], %136 {strides = array<i32>} : memref<1x128x32xf32, #tpu.memory_space<vmem>>, vector<1x128x32xf32>,
    return
  }
  func.func @transform_0(%arg0: i32, %arg1: i32) -> (i32, i32, i32) {
    %c0_i32 = arith.constant 0 : i32
    %c0_i32_0 = arith.constant 0 : i32
    return %arg0, %arg1, %c0_i32 : i32, i32, i32
  }
  func.func @transform_1(%arg0: i32, %arg1: i32) -> (i32, i32, i32) {
    %c0_i32 = arith.constant 0 : i32
    %c0_i32_0 = arith.constant 0 : i32
    return %arg0, %arg1, %c0_i32 : i32, i32, i32
  }
  func.func @transform_2(%arg0: i32, %arg1: i32) -> (i32, i32, i32) {
    %c0_i32 = arith.constant 0 : i32
    %c0_i32_0 = arith.constant 0 : i32
    return %arg0, %arg1, %c0_i32 : i32, i32, i32
  }
  func.func @transform_3(%arg0: i32, %arg1: i32) -> (i32, i32, i32) {
    %c0_i32 = arith.constant 0 : i32
    %c0_i32_0 = arith.constant 0 : i32
    %c0_i32_1 = arith.constant 0 : i32
    return %arg0, %c0_i32, %c0_i32_0 : i32, i32, i32
  }
  func.func @transform_4(%arg0: i32, %arg1: i32) -> (i32, i32) {
    %c0_i32 = arith.constant 0 : i32
    %c0_i32_0 = arith.constant 0 : i32
    %c0_i32_1 = arith.constant 0 : i32
    return %c0_i32, %c0_i32_0 : i32, i32
  }
  func.func @transform_5(%arg0: i32, %arg1: i32) -> (i32, i32) {
    %c0_i32 = arith.constant 0 : i32
    %c0_i32_0 = arith.constant 0 : i32
    %c0_i32_1 = arith.constant 0 : i32
    return %c0_i32, %c0_i32_0 : i32, i32
  }
  func.func @transform_6(%arg0: i32, %arg1: i32) -> (i32, i32) {
    %c0_i32 = arith.constant 0 : i32
    %c0_i32_0 = arith.constant 0 : i32
    %c0_i32_1 = arith.constant 0 : i32
    return %c0_i32, %c0_i32_0 : i32, i32
  }
  func.func @transform_7(%arg0: i32, %arg1: i32) -> (i32, i32) {
    %c0_i32 = arith.constant 0 : i32
    %c0_i32_0 = arith.constant 0 : i32
    %c0_i32_1 = arith.constant 0 : i32
    return %c0_i32, %c0_i32_0 : i32, i32
  }
  func.func @transform_8(%arg0: i32, %arg1: i32) -> (i32, i32) {
    %c0_i32 = arith.constant 0 : i32
    %c0_i32_0 = arith.constant 0 : i32
    %c0_i32_1 = arith.constant 0 : i32
    return %c0_i32, %c0_i32_0 : i32, i32
  }
  func.func @transform_9(%arg0: i32, %arg1: i32) -> (i32, i32) {
    %c0_i32 = arith.constant 0 : i32
    %c0_i32_0 = arith.constant 0 : i32
    %c0_i32_1 = arith.constant 0 : i32
    return %c0_i32, %c0_i32_0 : i32, i32
  }
  func.func @transform_10(%arg0: i32, %arg1: i32) -> (i32, i32) {
    %c0_i32 = arith.constant 0 : i32
    %c0_i32_0 = arith.constant 0 : i32
    %c0_i32_1 = arith.constant 0 : i32
    return %c0_i32, %c0_i32_0 : i32, i32
  }
  func.func @transform_11(%arg0: i32, %arg1: i32) -> (i32, i32) {
    %c0_i32 = arith.constant 0 : i32
    %c0_i32_0 = arith.constant 0 : i32
    %c0_i32_1 = arith.constant 0 : i32
    return %c0_i32, %c0_i32_0 : i32, i32
  }
  func.func @transform_12(%arg0: i32, %arg1: i32) -> (i32, i32, i32) {
    %c0_i32 = arith.constant 0 : i32
    %c0_i32_0 = arith.constant 0 : i32
    return %arg0, %arg1, %c0_i32 : i32, i32, i32
  }
}

</mosaic_0001>

<llo_original>
// kernel: tpu_custom_call.1
$region0: #{tpu_custom_call.1}
  #allocation0 [shape = 'u32[]', space=smem, size = 0x4, offset = 0x4, fixed_abs, tag = 'smem constant byte address 0x4 - core index']
  #allocation1 [shape = 'u32[144,128]{1,0:T(1,128)}', space=vmem, size = 0x12000, scoped, tag = 'internal scratch']
  %s0 = inlined_call_operand.vmem [shape: bf16[2,128,32], index: 0, kind: input, shape index: {}]
  %s1 = inlined_call_operand.vmem [shape: bf16[2,128,32], index: 1, kind: input, shape index: {}]
  %s2 = inlined_call_operand.vmem [shape: bf16[2,128,32], index: 2, kind: input, shape index: {}]
  %s3 = inlined_call_operand.vmem [shape: f32[2,8,8], index: 3, kind: input, shape index: {}]
  %s4 = inlined_call_operand.vmem [shape: bf16[32,32], index: 4, kind: input, shape index: {}]
  %s5 = inlined_call_operand.vmem [shape: f32[1,32], index: 5, kind: input, shape index: {}]
  %s6 = inlined_call_operand.vmem [shape: bf16[32,32], index: 6, kind: input, shape index: {}]
  %s7 = inlined_call_operand.vmem [shape: f32[1,32], index: 7, kind: input, shape index: {}]
  %s8 = inlined_call_operand.vmem [shape: bf16[32,32], index: 8, kind: input, shape index: {}]
  %s9 = inlined_call_operand.vmem [shape: f32[1,32], index: 9, kind: input, shape index: {}]
  %s10 = inlined_call_operand.vmem [shape: bf16[32,32], index: 10, kind: input, shape index: {}]
  %s11 = inlined_call_operand.vmem [shape: f32[1,32], index: 11, kind: input, shape index: {}]
  %s12 = inlined_call_operand.vmem [shape: f32[2,128,32], index: 12, kind: output, shape index: {}]
  %s13 = sld [smem:[#allocation0]]
  $region81: #{tpu_custom_call.1} parent=0
    _
  %s15 = ssub.s32 1, %s13
  %s16 = scalar_select 0, %s15, %s13
  loop: start=0, step=1, limit=4
  $region2: #{tpu_custom_call.1} parent=0 // loop_pre_header
    _
  $region3: #{tpu_custom_call.1} parent=0 // loop_header
    %s18 = sphi 0, %s22
    %p19 = scmp.ge.s32.totalorder %s18, 4
    %s25 = sphi 0, %s37
    %s26 = sphi 0, %s33
    %s27 = sphi 0, %s25
    %s28 = sphi 0, %s26
    %s29 = sphi 0, %s27
    %s30 = sphi 0, %s28
    %s42 = sphi 0, %s44
    %s45 = sphi 0, %s42
    %s46 = sphi 0, %s45
    %s62 = sphi 0, %s46
    %s70 = sphi 0, %s72
    %s73 = sphi 0, %s70
    %s74 = sphi 0, %s73
    %s90 = sphi 0, %s74
    %s98 = sphi 0, %s100
    %s101 = sphi 0, %s98
    %s102 = sphi 0, %s101
    %s118 = sphi 0, %s102
    %s124 = sphi 0, %s126
    %s127 = sphi 0, %s124
    %s128 = sphi 0, %s127
    %s144 = sphi 0, %s128
    %s148 = sphi 0, %s148
    %s150 = sphi 0, %s148
    %s151 = sphi 0, %s150
    %s165 = sphi 0, %s151
    %s169 = sphi 0, %s169
    %s171 = sphi 0, %s169
    %s172 = sphi 0, %s171
    %s186 = sphi 0, %s172
    %s190 = sphi 0, %s190
    %s192 = sphi 0, %s190
    %s193 = sphi 0, %s192
    %s207 = sphi 0, %s193
    %s211 = sphi 0, %s211
    %s213 = sphi 0, %s211
    %s214 = sphi 0, %s213
    %s228 = sphi 0, %s214
    %s232 = sphi 0, %s232
    %s234 = sphi 0, %s232
    %s235 = sphi 0, %s234
    %s249 = sphi 0, %s235
    %s253 = sphi 0, %s253
    %s255 = sphi 0, %s253
    %s256 = sphi 0, %s255
    %s270 = sphi 0, %s256
    %s274 = sphi 0, %s274
    %s276 = sphi 0, %s274
    %s277 = sphi 0, %s276
    %s291 = sphi 0, %s277
    %s295 = sphi 0, %s295
    %s297 = sphi 0, %s295
    %s298 = sphi 0, %s297
    %s312 = sphi 0, %s298
    %s320 = sphi 0, %s322
    %s323 = sphi 0, %s320
    %s324 = sphi 0, %s323
    %s340 = sphi 0, %s324
  $region4: #{tpu_custom_call.1} parent=0 // loop_header_branch
    %21 = sbr.rel (%p19) target = $region8
  $region5: #{tpu_custom_call.1} parent=0 // loop_body
    %s23 = ssub.s32 %s18, 1
    %s24 = ssub.s32 %s18, 2
    %s31 = sadd.s32 1, %s26
    %p32 = scmp.ge.s32.totalorder %s31, 1
    %s33 = scalar_select %p32, 0, %s31
    %s34 = sadd.s32 1, %s25
    %s35 = scalar_select %p32, %s34, %s25
    %p36 = scmp.ge.s32.totalorder %s35, 2
    %s37 = scalar_select %p36, 0, %s35
    %s38 = ssub.s32 %s25, %s37
    %s39 = ssub.s32 %s26, %s33
    %s40 = sor.u32 %s38, %s39
    %p41 = scmp.eq.s32.totalorder %s40, 0
    %s43 = sadd.s32 %s42, 1
    %s44 = scalar_select %p41, %s42, %s43
    %p47 = pneg %p41
    %p48 = scmp.eq.s32.totalorder %s18, 1
    %p49 = por %p47, %p48
    %p50 = scmp.ne.s32.totalorder %s42, %s45
    %p51 = scmp.eq.s32.totalorder %s18, 0
    %p52 = por %p50, %p51
    %p53 = scmp.ne.s32.totalorder %s42, %s45
    %p54 = scmp.eq.s32.totalorder %s23, 1
    %p55 = por %p53, %p54
    %p56 = scmp.ne.s32.totalorder %s45, %s46
    %p57 = scmp.eq.s32.totalorder %s23, 0
    %p58 = por %p56, %p57
    %p59 = scmp.ne.s32.totalorder %s45, %s46
    %p60 = scmp.eq.s32.totalorder %s24, 1
    %p61 = por %p59, %p60
    %p63 = scmp.ne.s32.totalorder %s46, %s62
    %p64 = scmp.eq.s32.totalorder %s24, 0
    %p65 = por %p63, %p64
    %s66 = ssub.s32 %s25, %s37
    %s67 = ssub.s32 %s26, %s33
    %s68 = sor.u32 %s66, %s67
    %p69 = scmp.eq.s32.totalorder %s68, 0
    %s71 = sadd.s32 %s70, 1
    %s72 = scalar_select %p69, %s70, %s71
    %p75 = pneg %p69
    %p76 = scmp.eq.s32.totalorder %s18, 1
    %p77 = por %p75, %p76
    %p78 = scmp.ne.s32.totalorder %s70, %s73
    %p79 = scmp.eq.s32.totalorder %s18, 0
    %p80 = por %p78, %p79
    %p81 = scmp.ne.s32.totalorder %s70, %s73
    %p82 = scmp.eq.s32.totalorder %s23, 1
    %p83 = por %p81, %p82
    %p84 = scmp.ne.s32.totalorder %s73, %s74
    %p85 = scmp.eq.s32.totalorder %s23, 0
    %p86 = por %p84, %p85
    %p87 = scmp.ne.s32.totalorder %s73, %s74
    %p88 = scmp.eq.s32.totalorder %s24, 1
    %p89 = por %p87, %p88
    %p91 = scmp.ne.s32.totalorder %s74, %s90
    %p92 = scmp.eq.s32.totalorder %s24, 0
    %p93 = por %p91, %p92
    %s94 = ssub.s32 %s25, %s37
    %s95 = ssub.s32 %s26, %s33
    %s96 = sor.u32 %s94, %s95
    %p97 = scmp.eq.s32.totalorder %s96, 0
    %s99 = sadd.s32 %s98, 1
    %s100 = scalar_select %p97, %s98, %s99
    %p103 = pneg %p97
    %p104 = scmp.eq.s32.totalorder %s18, 1
    %p105 = por %p103, %p104
    %p106 = scmp.ne.s32.totalorder %s98, %s101
    %p107 = scmp.eq.s32.totalorder %s18, 0
    %p108 = por %p106, %p107
    %p109 = scmp.ne.s32.totalorder %s98, %s101
    %p110 = scmp.eq.s32.totalorder %s23, 1
    %p111 = por %p109, %p110
    %p112 = scmp.ne.s32.totalorder %s101, %s102
    %p113 = scmp.eq.s32.totalorder %s23, 0
    %p114 = por %p112, %p113
    %p115 = scmp.ne.s32.totalorder %s101, %s102
    %p116 = scmp.eq.s32.totalorder %s24, 1
    %p117 = por %p115, %p116
    %p119 = scmp.ne.s32.totalorder %s102, %s118
    %p120 = scmp.eq.s32.totalorder %s24, 0
    %p121 = por %p119, %p120
    %s122 = ssub.s32 %s25, %s37
    %p123 = scmp.eq.s32.totalorder %s122, 0
    %s125 = sadd.s32 %s124, 1
    %s126 = scalar_select %p123, %s124, %s125
    %p129 = pneg %p123
    %p130 = scmp.eq.s32.totalorder %s18, 1
    %p131 = por %p129, %p130
    %p132 = scmp.ne.s32.totalorder %s124, %s127
    %p133 = scmp.eq.s32.totalorder %s18, 0
    %p134 = por %p132, %p133
    %p135 = scmp.ne.s32.totalorder %s124, %s127
    %p136 = scmp.eq.s32.totalorder %s23, 1
    %p137 = por %p135, %p136
    %p138 = scmp.ne.s32.totalorder %s127, %s128
    %p139 = scmp.eq.s32.totalorder %s23, 0
    %p140 = por %p138, %p139
    %p141 = scmp.ne.s32.totalorder %s127, %s128
    %p142 = scmp.eq.s32.totalorder %s24, 1
    %p143 = por %p141, %p142
    %p145 = scmp.ne.s32.totalorder %s128, %s144
    %p146 = scmp.eq.s32.totalorder %s24, 0
    %p147 = por %p145, %p146
    %s149 = sadd.s32 %s148, 1
    %p152 = scmp.eq.s32.totalorder %s18, 1
    %p153 = scmp.ne.s32.totalorder %s148, %s150
    %p154 = scmp.eq.s32.totalorder %s18, 0
    %p155 = por %p153, %p154
    %p156 = scmp.ne.s32.totalorder %s148, %s150
    %p157 = scmp.eq.s32.totalorder %s23, 1
    %p158 = por %p156, %p157
    %p159 = scmp.ne.s32.totalorder %s150, %s151
    %p160 = scmp.eq.s32.totalorder %s23, 0
    %p161 = por %p159, %p160
    %p162 = scmp.ne.s32.totalorder %s150, %s151
    %p163 = scmp.eq.s32.totalorder %s24, 1
    %p164 = por %p162, %p163
    %p166 = scmp.ne.s32.totalorder %s151, %s165
    %p167 = scmp.eq.s32.totalorder %s24, 0
    %p168 = por %p166, %p167
    %s170 = sadd.s32 %s169, 1
    %p173 = scmp.eq.s32.totalorder %s18, 1
    %p174 = scmp.ne.s32.totalorder %s169, %s171
    %p175 = scmp.eq.s32.totalorder %s18, 0
    %p176 = por %p174, %p175
    %p177 = scmp.ne.s32.totalorder %s169, %s171
    %p178 = scmp.eq.s32.totalorder %s23, 1
    %p179 = por %p177, %p178
    %p180 = scmp.ne.s32.totalorder %s171, %s172
    %p181 = scmp.eq.s32.totalorder %s23, 0
    %p182 = por %p180, %p181
    %p183 = scmp.ne.s32.totalorder %s171, %s172
    %p184 = scmp.eq.s32.totalorder %s24, 1
    %p185 = por %p183, %p184
    %p187 = scmp.ne.s32.totalorder %s172, %s186
    %p188 = scmp.eq.s32.totalorder %s24, 0
    %p189 = por %p187, %p188
    %s191 = sadd.s32 %s190, 1
    %p194 = scmp.eq.s32.totalorder %s18, 1
    %p195 = scmp.ne.s32.totalorder %s190, %s192
    %p196 = scmp.eq.s32.totalorder %s18, 0
    %p197 = por %p195, %p196
    %p198 = scmp.ne.s32.totalorder %s190, %s192
    %p199 = scmp.eq.s32.totalorder %s23, 1
    %p200 = por %p198, %p199
    %p201 = scmp.ne.s32.totalorder %s192, %s193
    %p202 = scmp.eq.s32.totalorder %s23, 0
    %p203 = por %p201, %p202
    %p204 = scmp.ne.s32.totalorder %s192, %s193
    %p205 = scmp.eq.s32.totalorder %s24, 1
    %p206 = por %p204, %p205
    %p208 = scmp.ne.s32.totalorder %s193, %s207
    %p209 = scmp.eq.s32.totalorder %s24, 0
    %p210 = por %p208, %p209
    %s212 = sadd.s32 %s211, 1
    %p215 = scmp.eq.s32.totalorder %s18, 1
    %p216 = scmp.ne.s32.totalorder %s211, %s213
    %p217 = scmp.eq.s32.totalorder %s18, 0
    %p218 = por %p216, %p217
    %p219 = scmp.ne.s32.totalorder %s211, %s213
    %p220 = scmp.eq.s32.totalorder %s23, 1
    %p221 = por %p219, %p220
    %p222 = scmp.ne.s32.totalorder %s213, %s214
    %p223 = scmp.eq.s32.totalorder %s23, 0
    %p224 = por %p222, %p223
    %p225 = scmp.ne.s32.totalorder %s213, %s214
    %p226 = scmp.eq.s32.totalorder %s24, 1
    %p227 = por %p225, %p226
    %p229 = scmp.ne.s32.totalorder %s214, %s228
    %p230 = scmp.eq.s32.totalorder %s24, 0
    %p231 = por %p229, %p230
    %s233 = sadd.s32 %s232, 1
    %p236 = scmp.eq.s32.totalorder %s18, 1
    %p237 = scmp.ne.s32.totalorder %s232, %s234
    %p238 = scmp.eq.s32.totalorder %s18, 0
    %p239 = por %p237, %p238
    %p240 = scmp.ne.s32.totalorder %s232, %s234
    %p241 = scmp.eq.s32.totalorder %s23, 1
    %p242 = por %p240, %p241
    %p243 = scmp.ne.s32.totalorder %s234, %s235
    %p244 = scmp.eq.s32.totalorder %s23, 0
    %p245 = por %p243, %p244
    %p246 = scmp.ne.s32.totalorder %s234, %s235
    %p247 = scmp.eq.s32.totalorder %s24, 1
    %p248 = por %p246, %p247
    %p250 = scmp.ne.s32.totalorder %s235, %s249
    %p251 = scmp.eq.s32.totalorder %s24, 0
    %p252 = por %p250, %p251
    %s254 = sadd.s32 %s253, 1
    %p257 = scmp.eq.s32.totalorder %s18, 1
    %p258 = scmp.ne.s32.totalorder %s253, %s255
    %p259 = scmp.eq.s32.totalorder %s18, 0
    %p260 = por %p258, %p259
    %p261 = scmp.ne.s32.totalorder %s253, %s255
    %p262 = scmp.eq.s32.totalorder %s23, 1
    %p263 = por %p261, %p262
    %p264 = scmp.ne.s32.totalorder %s255, %s256
    %p265 = scmp.eq.s32.totalorder %s23, 0
    %p266 = por %p264, %p265
    %p267 = scmp.ne.s32.totalorder %s255, %s256
    %p268 = scmp.eq.s32.totalorder %s24, 1
    %p269 = por %p267, %p268
    %p271 = scmp.ne.s32.totalorder %s256, %s270
    %p272 = scmp.eq.s32.totalorder %s24, 0
    %p273 = por %p271, %p272
    %s275 = sadd.s32 %s274, 1
    %p278 = scmp.eq.s32.totalorder %s18, 1
    %p279 = scmp.ne.s32.totalorder %s274, %s276
    %p280 = scmp.eq.s32.totalorder %s18, 0
    %p281 = por %p279, %p280
    %p282 = scmp.ne.s32.totalorder %s274, %s276
    %p283 = scmp.eq.s32.totalorder %s23, 1
    %p284 = por %p282, %p283
    %p285 = scmp.ne.s32.totalorder %s276, %s277
    %p286 = scmp.eq.s32.totalorder %s23, 0
    %p287 = por %p285, %p286
    %p288 = scmp.ne.s32.totalorder %s276, %s277
    %p289 = scmp.eq.s32.totalorder %s24, 1
    %p290 = por %p288, %p289
    %p292 = scmp.ne.s32.totalorder %s277, %s291
    %p293 = scmp.eq.s32.totalorder %s24, 0
    %p294 = por %p292, %p293
    %s296 = sadd.s32 %s295, 1
    %p299 = scmp.eq.s32.totalorder %s18, 1
    %p300 = scmp.ne.s32.totalorder %s295, %s297
    %p301 = scmp.eq.s32.totalorder %s18, 0
    %p302 = por %p300, %p301
    %p303 = scmp.ne.s32.totalorder %s295, %s297
    %p304 = scmp.eq.s32.totalorder %s23, 1
    %p305 = por %p303, %p304
    %p306 = scmp.ne.s32.totalorder %s297, %s298
    %p307 = scmp.eq.s32.totalorder %s23, 0
    %p308 = por %p306, %p307
    %p309 = scmp.ne.s32.totalorder %s297, %s298
    %p310 = scmp.eq.s32.totalorder %s24, 1
    %p311 = por %p309, %p310
    %p313 = scmp.ne.s32.totalorder %s298, %s312
    %p314 = scmp.eq.s32.totalorder %s24, 0
    %p315 = por %p313, %p314
    %s316 = ssub.s32 %s25, %s37
    %s317 = ssub.s32 %s26, %s33
    %s318 = sor.u32 %s316, %s317
    %p319 = scmp.eq.s32.totalorder %s318, 0
    %s321 = sadd.s32 %s320, 1
    %s322 = scalar_select %p319, %s320, %s321
    %p325 = pneg %p319
    %p326 = scmp.eq.s32.totalorder %s18, 1
    %p327 = por %p325, %p326
    %p328 = scmp.ne.s32.totalorder %s320, %s323
    %p329 = scmp.eq.s32.totalorder %s18, 0
    %p330 = por %p328, %p329
    %p331 = scmp.ne.s32.totalorder %s320, %s323
    %p332 = scmp.eq.s32.totalorder %s23, 1
    %p333 = por %p331, %p332
    %p334 = scmp.ne.s32.totalorder %s323, %s324
    %p335 = scmp.eq.s32.totalorder %s23, 0
    %p336 = por %p334, %p335
    %p337 = scmp.ne.s32.totalorder %s323, %s324
    %p338 = scmp.eq.s32.totalorder %s24, 1
    %p339 = por %p337, %p338
    %p341 = scmp.ne.s32.totalorder %s324, %s340
    %p342 = scmp.eq.s32.totalorder %s24, 0
    %p343 = por %p341, %p342
    %p344 = scmp.le.s32.totalorder 1, %s18
    %p345 = scmp.lt.s32.totalorder %s18, 3
    %p346 = pnand %p344, %p345
    %p347 = pneg %p346
    // Predicated region
    $region9: #{tpu_custom_call.1} parent=5 // pred_check
      _
    $region10: #{tpu_custom_call.1} parent=5 // pred_check_branch
      %349 = sbr.rel (%p346) target = $region12
    $region11: #{tpu_custom_call.1} parent=5 // pred_region
      %s350 = ssub.s32 %s18, 1
      // Predicated region
      $region13: #{tpu_custom_call.1} parent=11 // pred_check
        %p351 = pneg %p161
      $region14: #{tpu_custom_call.1} parent=11 // pred_check_branch
        %353 = sbr.rel (%p351) target = $region16
      $region15: #{tpu_custom_call.1} parent=11 // pred_region
        _
      $region16: #{tpu_custom_call.1} parent=11 // pred_fallthru
        _
      // Predicated region
      $region17: #{tpu_custom_call.1} parent=11 // pred_check
        %p354 = pneg %p182
      $region18: #{tpu_custom_call.1} parent=11 // pred_check_branch
        %356 = sbr.rel (%p354) target = $region20
      $region19: #{tpu_custom_call.1} parent=11 // pred_region
        _
      $region20: #{tpu_custom_call.1} parent=11 // pred_fallthru
        _
      // Predicated region
      $region21: #{tpu_custom_call.1} parent=11 // pred_check
        %p357 = pneg %p203
      $region22: #{tpu_custom_call.1} parent=11 // pred_check_branch
        %359 = sbr.rel (%p357) target = $region24
      $region23: #{tpu_custom_call.1} parent=11 // pred_region
        _
      $region24: #{tpu_custom_call.1} parent=11 // pred_fallthru
        _
      // Predicated region
      $region25: #{tpu_custom_call.1} parent=11 // pred_check
        %p360 = pneg %p224
      $region26: #{tpu_custom_call.1} parent=11 // pred_check_branch
        %362 = sbr.rel (%p360) target = $region28
      $region27: #{tpu_custom_call.1} parent=11 // pred_region
        _
      $region28: #{tpu_custom_call.1} parent=11 // pred_fallthru
        _
      // Predicated region
      $region29: #{tpu_custom_call.1} parent=11 // pred_check
        %p363 = pneg %p245
      $region30: #{tpu_custom_call.1} parent=11 // pred_check_branch
        %365 = sbr.rel (%p363) target = $region32
      $region31: #{tpu_custom_call.1} parent=11 // pred_region
        _
      $region32: #{tpu_custom_call.1} parent=11 // pred_fallthru
        _
      // Predicated region
      $region33: #{tpu_custom_call.1} parent=11 // pred_check
        %p366 = pneg %p266
      $region34: #{tpu_custom_call.1} parent=11 // pred_check_branch
        %368 = sbr.rel (%p366) target = $region36
      $region35: #{tpu_custom_call.1} parent=11 // pred_region
        _
      $region36: #{tpu_custom_call.1} parent=11 // pred_fallthru
        _
      // Predicated region
      $region37: #{tpu_custom_call.1} parent=11 // pred_check
        %p369 = pneg %p287
      $region38: #{tpu_custom_call.1} parent=11 // pred_check_branch
        %371 = sbr.rel (%p369) target = $region40
      $region39: #{tpu_custom_call.1} parent=11 // pred_region
        _
      $region40: #{tpu_custom_call.1} parent=11 // pred_fallthru
        _
      // Predicated region
      $region41: #{tpu_custom_call.1} parent=11 // pred_check
        %p372 = pneg %p308
      $region42: #{tpu_custom_call.1} parent=11 // pred_check_branch
        %374 = sbr.rel (%p372) target = $region44
      $region43: #{tpu_custom_call.1} parent=11 // pred_region
        _
      $region44: #{tpu_custom_call.1} parent=11 // pred_fallthru
        _
    $region12: #{tpu_custom_call.1} parent=5 // pred_fallthru
      _
    %p375 = scmp.lt.s32.totalorder %s18, 2
    // Predicated region
    $region45: #{tpu_custom_call.1} parent=5 // pred_check
      %p376 = pneg %p375
    $region46: #{tpu_custom_call.1} parent=5 // pred_check_branch
      %378 = sbr.rel (%p376) target = $region48
    $region47: #{tpu_custom_call.1} parent=5 // pred_region
      // Predicated region
      $region49: #{tpu_custom_call.1} parent=47 // pred_check
        %p379 = pneg %p52
      $region50: #{tpu_custom_call.1} parent=47 // pred_check_branch
        %381 = sbr.rel (%p379) target = $region52
      $region51: #{tpu_custom_call.1} parent=47 // pred_region
        %s382 = smul.u32 16, %s26
        %p383 = scmp.lt.s32.totalorder %s25, 1
        %s384 = scalar_select %p383, %s25, 1
        %p385 = scmp.lt.s32.totalorder %s382, 15
        %s386 = scalar_select %p385, %s382, 15
        %s387 = smul.addr %s384, 16
        %s388 = sadd.s32 %s386, %s387
        %s389 = smul.addr %s388, 4
        %s390 = scalar_lea.vmem %s0, %s389
        %s391 = smul.u32 16, %s26
      $region52: #{tpu_custom_call.1} parent=47 // pred_fallthru
        _
      // Predicated region
      $region53: #{tpu_custom_call.1} parent=47 // pred_check
        %p392 = pneg %p80
      $region54: #{tpu_custom_call.1} parent=47 // pred_check_branch
        %394 = sbr.rel (%p392) target = $region56
      $region55: #{tpu_custom_call.1} parent=47 // pred_region
        %s395 = smul.u32 16, %s26
        %p396 = scmp.lt.s32.totalorder %s25, 1
        %s397 = scalar_select %p396, %s25, 1
        %p398 = scmp.lt.s32.totalorder %s395, 15
        %s399 = scalar_select %p398, %s395, 15
        %s400 = smul.addr %s397, 16
        %s401 = sadd.s32 %s399, %s400
        %s402 = smul.addr %s401, 4
        %s403 = scalar_lea.vmem %s1, %s402
        %s404 = smul.u32 16, %s26
      $region56: #{tpu_custom_call.1} parent=47 // pred_fallthru
        _
      // Predicated region
      $region57: #{tpu_custom_call.1} parent=47 // pred_check
        %p405 = pneg %p108
      $region58: #{tpu_custom_call.1} parent=47 // pred_check_branch
        %407 = sbr.rel (%p405) target = $region60
      $region59: #{tpu_custom_call.1} parent=47 // pred_region
        %s408 = smul.u32 16, %s26
        %p409 = scmp.lt.s32.totalorder %s25, 1
        %s410 = scalar_select %p409, %s25, 1
        %p411 = scmp.lt.s32.totalorder %s408, 15
        %s412 = scalar_select %p411, %s408, 15
        %s413 = smul.addr %s410, 16
        %s414 = sadd.s32 %s412, %s413
        %s415 = smul.addr %s414, 4
        %s416 = scalar_lea.vmem %s2, %s415
        %s417 = smul.u32 16, %s26
      $region60: #{tpu_custom_call.1} parent=47 // pred_fallthru
        _
      // Predicated region
      $region61: #{tpu_custom_call.1} parent=47 // pred_check
        %p418 = pneg %p134
      $region62: #{tpu_custom_call.1} parent=47 // pred_check_branch
        %420 = sbr.rel (%p418) target = $region64
      $region63: #{tpu_custom_call.1} parent=47 // pred_region
        %p421 = scmp.lt.s32.totalorder %s25, 1
        %s422 = scalar_select %p421, %s25, 1
        %s423 = smul.addr %s422, 8
        %s424 = scalar_lea.vmem %s3, %s423
      $region64: #{tpu_custom_call.1} parent=47 // pred_fallthru
        _
    $region48: #{tpu_custom_call.1} parent=5 // pred_fallthru
      _
    %p425 = scmp.le.s32.totalorder 1, %s18
    %p426 = scmp.lt.s32.totalorder %s18, 3
    %p427 = pnand %p425, %p426
    %p428 = pneg %p427
    // Predicated region
    $region65: #{tpu_custom_call.1} parent=5 // pred_check
      _
    $region66: #{tpu_custom_call.1} parent=5 // pred_check_branch
      %430 = sbr.rel (%p427) target = $region68
    $region67: #{tpu_custom_call.1} parent=5 // pred_region
      %s431 = ssub.s32 %s18, 1
      %s432 = smul.u32 16, %s28
      %p433 = scmp.lt.s32.totalorder %s27, 1
      %s434 = scalar_select %p433, %s27, 1
      %p435 = scmp.lt.s32.totalorder %s432, 15
      %s436 = scalar_select %p435, %s432, 15
      %s437 = smul.addr %s434, 16
      %s438 = sadd.s32 %s436, %s437
      %s439 = smul.addr %s438, 4
      %s440 = scalar_lea.vmem %s0, %s439
      %p441 = pneg %p58
      %p442 = pneg %p55
      %s443 = smul.u32 16, %s28
      %p444 = scmp.lt.s32.totalorder %s27, 1
      %s445 = scalar_select %p444, %s27, 1
      %p446 = scmp.lt.s32.totalorder %s443, 15
      %s447 = scalar_select %p446, %s443, 15
      %s448 = smul.addr %s445, 16
      %s449 = sadd.s32 %s447, %s448
      %s450 = smul.addr %s449, 4
      %s451 = scalar_lea.vmem %s1, %s450
      %p452 = pneg %p86
      %p453 = pneg %p83
      %s454 = smul.u32 16, %s28
      %p455 = scmp.lt.s32.totalorder %s27, 1
      %s456 = scalar_select %p455, %s27, 1
      %p457 = scmp.lt.s32.totalorder %s454, 15
      %s458 = scalar_select %p457, %s454, 15
      %s459 = smul.addr %s456, 16
      %s460 = sadd.s32 %s458, %s459
      %s461 = smul.addr %s460, 4
      %s462 = scalar_lea.vmem %s2, %s461
      %p463 = pneg %p114
      %p464 = pneg %p111
      %p465 = scmp.lt.s32.totalorder %s27, 1
      %s466 = scalar_select %p465, %s27, 1
      %s467 = smul.addr %s466, 8
      %s468 = scalar_lea.vmem %s3, %s467
      %p469 = pneg %p140
      %p470 = pneg %p137
      %p471 = pneg %p161
      %p472 = pneg %p158
      %p473 = pneg %p182
      %p474 = pneg %p179
      %p475 = pneg %p203
      %p476 = pneg %p200
      %p477 = pneg %p224
      %p478 = pneg %p221
      %p479 = pneg %p245
      %p480 = pneg %p242
      %p481 = pneg %p266
      %p482 = pneg %p263
      %p483 = pneg %p287
      %p484 = pneg %p284
      %p485 = pneg %p308
      %p486 = pneg %p305
      %p487 = pneg %p336
      %p488 = pneg %p333
      %s489 = smul.u32 16, %s28
      %p490 = scmp.lt.s32.totalorder %s27, 1
      %s491 = scalar_select %p490, %s27, 1
      %p492 = scmp.lt.s32.totalorder %s489, 15
      %s493 = scalar_select %p492, %s489, 15
      %s494 = smul.addr %s491, 16
      %s495 = sadd.s32 %s493, %s494
      %s496 = smul.addr %s495, 8
      %s497 = scalar_lea.vmem %s12, %s496
      %s498 = smul.u32 16, %s28
      %p499 = scmp.lt.s32.totalorder %s27, 1
      %s500 = scalar_select %p499, %s27, 1
      %p501 = scmp.lt.s32.totalorder %s498, 15
      %s502 = scalar_select %p501, %s498, 15
      %s503 = smul.addr %s500, 16
      %s504 = sadd.s32 %s502, %s503
      %s505 = smul.addr %s504, 4
      %s506 = scalar_lea.vmem %s0, %s505
      %s507 = smul.u32 16, %s28
      %s508 = smul.u32 16, %s28
      %p509 = scmp.lt.s32.totalorder %s27, 1
      %s510 = scalar_select %p509, %s27, 1
      %p511 = scmp.lt.s32.totalorder %s508, 15
      %s512 = scalar_select %p511, %s508, 15
      %s513 = smul.addr %s510, 16
      %s514 = sadd.s32 %s512, %s513
      %s515 = smul.addr %s514, 4
      %s516 = scalar_lea.vmem %s1, %s515
      %s517 = smul.u32 16, %s28
      %s518 = smul.u32 16, %s28
      %p519 = scmp.lt.s32.totalorder %s27, 1
      %s520 = scalar_select %p519, %s27, 1
      %p521 = scmp.lt.s32.totalorder %s518, 15
      %s522 = scalar_select %p521, %s518, 15
      %s523 = smul.addr %s520, 16
      %s524 = sadd.s32 %s522, %s523
      %s525 = smul.addr %s524, 4
      %s526 = scalar_lea.vmem %s2, %s525
      %s527 = smul.u32 16, %s28
      %p528 = scmp.lt.s32.totalorder %s27, 1
      %s529 = scalar_select %p528, %s27, 1
      %s530 = smul.addr %s529, 8
      %s531 = scalar_lea.vmem %s3, %s530
      %s532 = smul.u32 16, %s28
      %p533 = scmp.lt.s32.totalorder %s27, 1
      %s534 = scalar_select %p533, %s27, 1
      %p535 = scmp.lt.s32.totalorder %s532, 15
      %s536 = scalar_select %p535, %s532, 15
      %s537 = smul.addr %s534, 16
      %s538 = sadd.s32 %s536, %s537
      %s539 = smul.addr %s538, 8
      %s540 = scalar_lea.vmem %s12, %s539
      %s541 = smul.u32 16, %s28
      %v543 = vld [vmem:[%s506] sm:$0xf]
      %v544 = vld [vmem:[%s506 + $0x4] sm:$0xf]
      %v545 = vld [vmem:[%s506 + $0x8] sm:$0xf]
      %v546 = vld [vmem:[%s506 + $0xc] sm:$0xf]
      %v547 = vld [vmem:[%s506 + $0x10] sm:$0xf]
      %v548 = vld [vmem:[%s506 + $0x14] sm:$0xf]
      %v549 = vld [vmem:[%s506 + $0x18] sm:$0xf]
      %v550 = vld [vmem:[%s506 + $0x1c] sm:$0xf]
      %v551 = vld [vmem:[%s506 + $0x20] sm:$0xf]
      %v552 = vld [vmem:[%s506 + $0x24] sm:$0xf]
      %v553 = vld [vmem:[%s506 + $0x28] sm:$0xf]
      %v554 = vld [vmem:[%s506 + $0x2c] sm:$0xf]
      %v555 = vld [vmem:[%s506 + $0x30] sm:$0xf]
      %v556 = vld [vmem:[%s506 + $0x34] sm:$0xf]
      %v557 = vld [vmem:[%s506 + $0x38] sm:$0xf]
      %v558 = vld [vmem:[%s506 + $0x3c] sm:$0xf]
      %v559 = vld [vmem:[%s4] sm:$0xf]
      %v560 = vld [vmem:[%s4 + $0x4] sm:$0xf]
      %v561 = vld [vmem:[%s4 + $0x8] sm:$0xf]
      %v562 = vld [vmem:[%s4 + $0xc] sm:$0xf]
      %v563 = vld [vmem:[%s5] sm:$0x1]
      %v565 = vlaneseq
      %v566 = vshrl.u32 %v565, 7
      %v567 = vsub.s32 0, %v566
      %v568 = vrot.slane %v563, %v567
      %v586 = vunpack.c.l.b16 %v543
      %v587 = vunpack.c.l.b16 %v544
      %v588 = vunpack.c.l.b16 %v545
      %v589 = vunpack.c.l.b16 %v546
      %v590 = vunpack.c.l.b16 %v547
      %v591 = vunpack.c.l.b16 %v548
      %v592 = vunpack.c.l.b16 %v549
      %v593 = vunpack.c.l.b16 %v550
      %v594 = vunpack.c.l.b16 %v551
      %v595 = vunpack.c.l.b16 %v552
      %v596 = vunpack.c.l.b16 %v553
      %v597 = vunpack.c.l.b16 %v554
      %v598 = vunpack.c.l.b16 %v555
      %v599 = vunpack.c.l.b16 %v556
      %v600 = vunpack.c.l.b16 %v557
      %v601 = vunpack.c.l.b16 %v558
      %v602 = vpack.c.b16 %v587, %v586
      %v603 = vpack.c.b16 %v589, %v588
      %v604 = vpack.c.b16 %v591, %v590
      %v605 = vpack.c.b16 %v593, %v592
      %v606 = vpack.c.b16 %v595, %v594
      %v607 = vpack.c.b16 %v597, %v596
      %v608 = vpack.c.b16 %v599, %v598
      %v609 = vpack.c.b16 %v601, %v600
      %v614 = vunpack.c.l.b16 %v559
      %v615 = vunpack.c.l.b16 %v560
      %v616 = vunpack.c.l.b16 %v561
      %v617 = vunpack.c.l.b16 %v562
      %v618 = vpack.c.b16 %v615, %v614
      %v619 = vpack.c.b16 %v617, %v616
      %vm622 = vcmask 261120
      %v624 = vsel %vm622, %v602, 0
      %v627 = vsel %vm622, %v603, 0
      %v630 = vsel %vm622, %v604, 0
      %v633 = vsel %vm622, %v605, 0
      %v636 = vsel %vm622, %v606, 0
      %v639 = vsel %vm622, %v607, 0
      %v642 = vsel %vm622, %v608, 0
      %v645 = vsel %vm622, %v609, 0
      %647 = vmatprep.subr.bf16.mxu0 0
      %648 = vmatpush1.bf16.msra.mxu0 %v618
      %649 = vmatprep.subr.bf16.mxu0 0
      %650 = vmatpush1.bf16.msra.mxu0 %v619
      %651 = vmatprep.subr.bf16.mxu0 0
      %652 = vmatpush1.bf16.msra.mxu0 0
      %653 = vmatprep.subr.bf16.mxu0 0
      %654 = vmatpush1.bf16.msra.mxu0 0
      %655 = vmatprep.subr.bf16.mxu0 0
      %656 = vmatpush1.bf16.msra.mxu0 0
      %657 = vmatprep.subr.bf16.mxu0 0
      %658 = vmatpush1.bf16.msra.mxu0 0
      %659 = vmatprep.subr.bf16.mxu0 0
      %660 = vmatpush1.bf16.msra.mxu0 0
      %661 = vmatprep.subr.bf16.mxu0 0
      %662 = vmatpush1.bf16.msra.mxu0 0
      %663 = vmatprep.subr.bf16.mxu0 0
      %664 = vmatpush1.bf16.msra.mxu0 0
      %665 = vmatprep.subr.bf16.mxu0 0
      %666 = vmatpush1.bf16.msra.mxu0 0
      %667 = vmatprep.subr.bf16.mxu0 0
      %668 = vmatpush1.bf16.msra.mxu0 0
      %669 = vmatprep.subr.bf16.mxu0 0
      %670 = vmatpush1.bf16.msra.mxu0 0
      %671 = vmatprep.subr.bf16.mxu0 0
      %672 = vmatpush1.bf16.msra.mxu0 0
      %673 = vmatprep.subr.bf16.mxu0 0
      %674 = vmatpush1.bf16.msra.mxu0 0
      %675 = vmatprep.subr.bf16.mxu0 0
      %676 = vmatpush1.bf16.msra.mxu0 0
      %677 = vmatprep.subr.bf16.mxu0 0
      %678 = vmatpush1.bf16.msra.mxu0 0
      %679 = vmatprep.mubr.bf16.mxu0 0
      %680 = vmatmul.mubr.bf16.gmra.mrb[0].mxu0 %v624
      %v681 = vpop.f32.mrb[0].mxu0
      %v682 = vadd.f32 %v568, %v681
      %v683 = vpop.f32.mrb[0].mxu0
      %v684 = vpop.f32.mrb[0].mxu0
      %v685 = vadd.f32 %v568, %v684
      %v686 = vpop.f32.mrb[0].mxu0
      %687 = vmatprep.mubr.bf16.mxu0 0
      %688 = vmatmul.mubr.bf16.gmra.mrb[0].mxu0 %v627
      %v689 = vpop.f32.mrb[0].mxu0
      %v690 = vadd.f32 %v568, %v689
      %v691 = vpop.f32.mrb[0].mxu0
      %v692 = vpop.f32.mrb[0].mxu0
      %v693 = vadd.f32 %v568, %v692
      %v694 = vpop.f32.mrb[0].mxu0
      %695 = vmatprep.mubr.bf16.mxu0 0
      %696 = vmatmul.mubr.bf16.gmra.mrb[0].mxu0 %v630
      %v697 = vpop.f32.mrb[0].mxu0
      %v698 = vadd.f32 %v568, %v697
      %v699 = vpop.f32.mrb[0].mxu0
      %v700 = vpop.f32.mrb[0].mxu0
      %v701 = vadd.f32 %v568, %v700
      %v702 = vpop.f32.mrb[0].mxu0
      %703 = vmatprep.mubr.bf16.mxu0 0
      %704 = vmatmul.mubr.bf16.gmra.mrb[0].mxu0 %v633
      %v705 = vpop.f32.mrb[0].mxu0
      %v706 = vadd.f32 %v568, %v705
      %v707 = vpop.f32.mrb[0].mxu0
      %v708 = vpop.f32.mrb[0].mxu0
      %v709 = vadd.f32 %v568, %v708
      %v710 = vpop.f32.mrb[0].mxu0
      %711 = vmatprep.mubr.bf16.mxu0 0
      %712 = vmatmul.mubr.bf16.gmra.mrb[0].mxu0 %v636
      %v713 = vpop.f32.mrb[0].mxu0
      %v714 = vadd.f32 %v568, %v713
      %v715 = vpop.f32.mrb[0].mxu0
      %v716 = vpop.f32.mrb[0].mxu0
      %v717 = vadd.f32 %v568, %v716
      %v718 = vpop.f32.mrb[0].mxu0
      %719 = vmatprep.mubr.bf16.mxu0 0
      %720 = vmatmul.mubr.bf16.gmra.mrb[0].mxu0 %v639
      %v721 = vpop.f32.mrb[0].mxu0
      %v722 = vadd.f32 %v568, %v721
      %v723 = vpop.f32.mrb[0].mxu0
      %v724 = vpop.f32.mrb[0].mxu0
      %v725 = vadd.f32 %v568, %v724
      %v726 = vpop.f32.mrb[0].mxu0
      %727 = vmatprep.mubr.bf16.mxu0 0
      %728 = vmatmul.mubr.bf16.gmra.mrb[0].mxu0 %v642
      %v729 = vpop.f32.mrb[0].mxu0
      %v730 = vadd.f32 %v568, %v729
      %v731 = vpop.f32.mrb[0].mxu0
      %v732 = vpop.f32.mrb[0].mxu0
      %v733 = vadd.f32 %v568, %v732
      %v734 = vpop.f32.mrb[0].mxu0
      %735 = vmatprep.mubr.bf16.mxu0 0
      %736 = vmatmul.mubr.bf16.gmra.mrb[0].mxu0 %v645
      %v737 = vpop.f32.mrb[0].mxu0
      %v738 = vadd.f32 %v568, %v737
      %v739 = vpop.f32.mrb[0].mxu0
      %v740 = vpop.f32.mrb[0].mxu0
      %v741 = vadd.f32 %v568, %v740
      %v742 = vpop.f32.mrb[0].mxu0
      %743 = vdwg.mxu0
      %v744 = vld [vmem:[%s516] sm:$0xf]
      %v745 = vld [vmem:[%s516 + $0x4] sm:$0xf]
      %v746 = vld [vmem:[%s516 + $0x8] sm:$0xf]
      %v747 = vld [vmem:[%s516 + $0xc] sm:$0xf]
      %v748 = vld [vmem:[%s516 + $0x10] sm:$0xf]
      %v749 = vld [vmem:[%s516 + $0x14] sm:$0xf]
      %v750 = vld [vmem:[%s516 + $0x18] sm:$0xf]
      %v751 = vld [vmem:[%s516 + $0x1c] sm:$0xf]
      %v752 = vld [vmem:[%s516 + $0x20] sm:$0xf]
      %v753 = vld [vmem:[%s516 + $0x24] sm:$0xf]
      %v754 = vld [vmem:[%s516 + $0x28] sm:$0xf]
      %v755 = vld [vmem:[%s516 + $0x2c] sm:$0xf]
      %v756 = vld [vmem:[%s516 + $0x30] sm:$0xf]
      %v757 = vld [vmem:[%s516 + $0x34] sm:$0xf]
      %v758 = vld [vmem:[%s516 + $0x38] sm:$0xf]
      %v759 = vld [vmem:[%s516 + $0x3c] sm:$0xf]
      %v760 = vld [vmem:[%s6] sm:$0xf]
      %v761 = vld [vmem:[%s6 + $0x4] sm:$0xf]
      %v762 = vld [vmem:[%s6 + $0x8] sm:$0xf]
      %v763 = vld [vmem:[%s6 + $0xc] sm:$0xf]
      %v764 = vld [vmem:[%s7] sm:$0x1]
      %v766 = vlaneseq
      %v767 = vshrl.u32 %v766, 7
      %v768 = vsub.s32 0, %v767
      %v769 = vrot.slane %v764, %v768
      %v787 = vunpack.c.l.b16 %v744
      %v788 = vunpack.c.l.b16 %v745
      %v789 = vunpack.c.l.b16 %v746
      %v790 = vunpack.c.l.b16 %v747
      %v791 = vunpack.c.l.b16 %v748
      %v792 = vunpack.c.l.b16 %v749
      %v793 = vunpack.c.l.b16 %v750
      %v794 = vunpack.c.l.b16 %v751
      %v795 = vunpack.c.l.b16 %v752
      %v796 = vunpack.c.l.b16 %v753
      %v797 = vunpack.c.l.b16 %v754
      %v798 = vunpack.c.l.b16 %v755
      %v799 = vunpack.c.l.b16 %v756
      %v800 = vunpack.c.l.b16 %v757
      %v801 = vunpack.c.l.b16 %v758
      %v802 = vunpack.c.l.b16 %v759
      %v803 = vpack.c.b16 %v788, %v787
      %v804 = vpack.c.b16 %v790, %v789
      %v805 = vpack.c.b16 %v792, %v791
      %v806 = vpack.c.b16 %v794, %v793
      %v807 = vpack.c.b16 %v796, %v795
      %v808 = vpack.c.b16 %v798, %v797
      %v809 = vpack.c.b16 %v800, %v799
      %v810 = vpack.c.b16 %v802, %v801
      %v815 = vunpack.c.l.b16 %v760
      %v816 = vunpack.c.l.b16 %v761
      %v817 = vunpack.c.l.b16 %v762
      %v818 = vunpack.c.l.b16 %v763
      %v819 = vpack.c.b16 %v816, %v815
      %v820 = vpack.c.b16 %v818, %v817
      %v824 = vsel %vm622, %v803, 0
      %v827 = vsel %vm622, %v804, 0
      %v830 = vsel %vm622, %v805, 0
      %v833 = vsel %vm622, %v806, 0
      %v836 = vsel %vm622, %v807, 0
      %v839 = vsel %vm622, %v808, 0
      %v842 = vsel %vm622, %v809, 0
      %v845 = vsel %vm622, %v810, 0
      %847 = vmatprep.subr.bf16.mxu0 0
      %848 = vmatpush1.bf16.msra.mxu0 %v819
      %849 = vmatprep.subr.bf16.mxu0 0
      %850 = vmatpush1.bf16.msra.mxu0 %v820
      %851 = vmatprep.subr.bf16.mxu0 0
      %852 = vmatpush1.bf16.msra.mxu0 0
      %853 = vmatprep.subr.bf16.mxu0 0
      %854 = vmatpush1.bf16.msra.mxu0 0
      %855 = vmatprep.subr.bf16.mxu0 0
      %856 = vmatpush1.bf16.msra.mxu0 0
      %857 = vmatprep.subr.bf16.mxu0 0
      %858 = vmatpush1.bf16.msra.mxu0 0
      %859 = vmatprep.subr.bf16.mxu0 0
      %860 = vmatpush1.bf16.msra.mxu0 0
      %861 = vmatprep.subr.bf16.mxu0 0
      %862 = vmatpush1.bf16.msra.mxu0 0
      %863 = vmatprep.subr.bf16.mxu0 0
      %864 = vmatpush1.bf16.msra.mxu0 0
      %865 = vmatprep.subr.bf16.mxu0 0
      %866 = vmatpush1.bf16.msra.mxu0 0
      %867 = vmatprep.subr.bf16.mxu0 0
      %868 = vmatpush1.bf16.msra.mxu0 0
      %869 = vmatprep.subr.bf16.mxu0 0
      %870 = vmatpush1.bf16.msra.mxu0 0
      %871 = vmatprep.subr.bf16.mxu0 0
      %872 = vmatpush1.bf16.msra.mxu0 0
      %873 = vmatprep.subr.bf16.mxu0 0
      %874 = vmatpush1.bf16.msra.mxu0 0
      %875 = vmatprep.subr.bf16.mxu0 0
      %876 = vmatpush1.bf16.msra.mxu0 0
      %877 = vmatprep.subr.bf16.mxu0 0
      %878 = vmatpush1.bf16.msra.mxu0 0
      %879 = vmatprep.mubr.bf16.mxu0 0
      %880 = vmatmul.mubr.bf16.gmra.mrb[0].mxu0 %v824
      %v881 = vpop.f32.mrb[0].mxu0
      %v882 = vadd.f32 %v769, %v881
      %v883 = vpop.f32.mrb[0].mxu0
      %v884 = vpop.f32.mrb[0].mxu0
      %v885 = vadd.f32 %v769, %v884
      %v886 = vpop.f32.mrb[0].mxu0
      %887 = vmatprep.mubr.bf16.mxu0 0
      %888 = vmatmul.mubr.bf16.gmra.mrb[0].mxu0 %v827
      %v889 = vpop.f32.mrb[0].mxu0
      %v890 = vadd.f32 %v769, %v889
      %v891 = vpop.f32.mrb[0].mxu0
      %v892 = vpop.f32.mrb[0].mxu0
      %v893 = vadd.f32 %v769, %v892
      %v894 = vpop.f32.mrb[0].mxu0
      %895 = vmatprep.mubr.bf16.mxu0 0
      %896 = vmatmul.mubr.bf16.gmra.mrb[0].mxu0 %v830
      %v897 = vpop.f32.mrb[0].mxu0
      %v898 = vadd.f32 %v769, %v897
      %v899 = vpop.f32.mrb[0].mxu0
      %v900 = vpop.f32.mrb[0].mxu0
      %v901 = vadd.f32 %v769, %v900
      %v902 = vpop.f32.mrb[0].mxu0
      %903 = vmatprep.mubr.bf16.mxu0 0
      %904 = vmatmul.mubr.bf16.gmra.mrb[0].mxu0 %v833
      %v905 = vpop.f32.mrb[0].mxu0
      %v906 = vadd.f32 %v769, %v905
      %v907 = vpop.f32.mrb[0].mxu0
      %v908 = vpop.f32.mrb[0].mxu0
      %v909 = vadd.f32 %v769, %v908
      %v910 = vpop.f32.mrb[0].mxu0
      %911 = vmatprep.mubr.bf16.mxu0 0
      %912 = vmatmul.mubr.bf16.gmra.mrb[0].mxu0 %v836
      %v913 = vpop.f32.mrb[0].mxu0
      %v914 = vadd.f32 %v769, %v913
      %v915 = vpop.f32.mrb[0].mxu0
      %v916 = vpop.f32.mrb[0].mxu0
      %v917 = vadd.f32 %v769, %v916
      %v918 = vpop.f32.mrb[0].mxu0
      %919 = vmatprep.mubr.bf16.mxu0 0
      %920 = vmatmul.mubr.bf16.gmra.mrb[0].mxu0 %v839
      %v921 = vpop.f32.mrb[0].mxu0
      %v922 = vadd.f32 %v769, %v921
      %v923 = vpop.f32.mrb[0].mxu0
      %v924 = vpop.f32.mrb[0].mxu0
      %v925 = vadd.f32 %v769, %v924
      %v926 = vpop.f32.mrb[0].mxu0
      %927 = vmatprep.mubr.bf16.mxu0 0
      %928 = vmatmul.mubr.bf16.gmra.mrb[0].mxu0 %v842
      %v929 = vpop.f32.mrb[0].mxu0
      %v930 = vadd.f32 %v769, %v929
      %v931 = vpop.f32.mrb[0].mxu0
      %v932 = vpop.f32.mrb[0].mxu0
      %v933 = vadd.f32 %v769, %v932
      %v934 = vpop.f32.mrb[0].mxu0
      %935 = vmatprep.mubr.bf16.mxu0 0
      %936 = vmatmul.mubr.bf16.gmra.mrb[0].mxu0 %v845
      %v937 = vpop.f32.mrb[0].mxu0
      %v938 = vadd.f32 %v769, %v937
      %v939 = vpop.f32.mrb[0].mxu0
      %v940 = vpop.f32.mrb[0].mxu0
      %v941 = vadd.f32 %v769, %v940
      %v942 = vpop.f32.mrb[0].mxu0
      %943 = vdwg.mxu0
      %v944 = vld [vmem:[%s526] sm:$0xf]
      %v945 = vld [vmem:[%s526 + $0x4] sm:$0xf]
      %v946 = vld [vmem:[%s526 + $0x8] sm:$0xf]
      %v947 = vld [vmem:[%s526 + $0xc] sm:$0xf]
      %v948 = vld [vmem:[%s526 + $0x10] sm:$0xf]
      %v949 = vld [vmem:[%s526 + $0x14] sm:$0xf]
      %v950 = vld [vmem:[%s526 + $0x18] sm:$0xf]
      %v951 = vld [vmem:[%s526 + $0x1c] sm:$0xf]
      %v952 = vld [vmem:[%s526 + $0x20] sm:$0xf]
      %v953 = vld [vmem:[%s526 + $0x24] sm:$0xf]
      %v954 = vld [vmem:[%s526 + $0x28] sm:$0xf]
      %v955 = vld [vmem:[%s526 + $0x2c] sm:$0xf]
      %v956 = vld [vmem:[%s526 + $0x30] sm:$0xf]
      %v957 = vld [vmem:[%s526 + $0x34] sm:$0xf]
      %v958 = vld [vmem:[%s526 + $0x38] sm:$0xf]
      %v959 = vld [vmem:[%s526 + $0x3c] sm:$0xf]
      %v960 = vld [vmem:[%s8] sm:$0xf]
      %v961 = vld [vmem:[%s8 + $0x4] sm:$0xf]
      %v962 = vld [vmem:[%s8 + $0x8] sm:$0xf]
      %v963 = vld [vmem:[%s8 + $0xc] sm:$0xf]
      %v964 = vld [vmem:[%s9] sm:$0x1]
      %v966 = vlaneseq
      %v967 = vshrl.u32 %v966, 7
      %v968 = vsub.s32 0, %v967
      %v969 = vrot.slane %v964, %v968
      %v987 = vunpack.c.l.b16 %v944
      %v988 = vunpack.c.l.b16 %v945
      %v989 = vunpack.c.l.b16 %v946
      %v990 = vunpack.c.l.b16 %v947
      %v991 = vunpack.c.l.b16 %v948
      %v992 = vunpack.c.l.b16 %v949
      %v993 = vunpack.c.l.b16 %v950
      %v994 = vunpack.c.l.b16 %v951
      %v995 = vunpack.c.l.b16 %v952
      %v996 = vunpack.c.l.b16 %v953
      %v997 = vunpack.c.l.b16 %v954
      %v998 = vunpack.c.l.b16 %v955
      %v999 = vunpack.c.l.b16 %v956
      %v1000 = vunpack.c.l.b16 %v957
      %v1001 = vunpack.c.l.b16 %v958
      %v1002 = vunpack.c.l.b16 %v959
      %v1003 = vpack.c.b16 %v988, %v987
      %v1004 = vpack.c.b16 %v990, %v989
      %v1005 = vpack.c.b16 %v992, %v991
      %v1006 = vpack.c.b16 %v994, %v993
      %v1007 = vpack.c.b16 %v996, %v995
      %v1008 = vpack.c.b16 %v998, %v997
      %v1009 = vpack.c.b16 %v1000, %v999
      %v1010 = vpack.c.b16 %v1002, %v1001
      %v1015 = vunpack.c.l.b16 %v960
      %v1016 = vunpack.c.l.b16 %v961
      %v1017 = vunpack.c.l.b16 %v962
      %v1018 = vunpack.c.l.b16 %v963
      %v1019 = vpack.c.b16 %v1016, %v1015
      %v1020 = vpack.c.b16 %v1018, %v1017
      %v1024 = vsel %vm622, %v1003, 0
      %v1027 = vsel %vm622, %v1004, 0
      %v1030 = vsel %vm622, %v1005, 0
      %v1033 = vsel %vm622, %v1006, 0
      %v1036 = vsel %vm622, %v1007, 0
      %v1039 = vsel %vm622, %v1008, 0
      %v1042 = vsel %vm622, %v1009, 0
      %v1045 = vsel %vm622, %v1010, 0
      %1047 = vmatprep.subr.bf16.mxu0 0
      %1048 = vmatpush1.bf16.msra.mxu0 %v1019
      %1049 = vmatprep.subr.bf16.mxu0 0
      %1050 = vmatpush1.bf16.msra.mxu0 %v1020
      %1051 = vmatprep.subr.bf16.mxu0 0
      %1052 = vmatpush1.bf16.msra.mxu0 0
      %1053 = vmatprep.subr.bf16.mxu0 0
      %1054 = vmatpush1.bf16.msra.mxu0 0
      %1055 = vmatprep.subr.bf16.mxu0 0
      %1056 = vmatpush1.bf16.msra.mxu0 0
      %1057 = vmatprep.subr.bf16.mxu0 0
      %1058 = vmatpush1.bf16.msra.mxu0 0
      %1059 = vmatprep.subr.bf16.mxu0 0
      %1060 = vmatpush1.bf16.msra.mxu0 0
      %1061 = vmatprep.subr.bf16.mxu0 0
      %1062 = vmatpush1.bf16.msra.mxu0 0
      %1063 = vmatprep.subr.bf16.mxu0 0
      %1064 = vmatpush1.bf16.msra.mxu0 0
      %1065 = vmatprep.subr.bf16.mxu0 0
      %1066 = vmatpush1.bf16.msra.mxu0 0
      %1067 = vmatprep.subr.bf16.mxu0 0
      %1068 = vmatpush1.bf16.msra.mxu0 0
      %1069 = vmatprep.subr.bf16.mxu0 0
      %1070 = vmatpush1.bf16.msra.mxu0 0
      %1071 = vmatprep.subr.bf16.mxu0 0
      %1072 = vmatpush1.bf16.msra.mxu0 0
      %1073 = vmatprep.subr.bf16.mxu0 0
      %1074 = vmatpush1.bf16.msra.mxu0 0
      %1075 = vmatprep.subr.bf16.mxu0 0
      %1076 = vmatpush1.bf16.msra.mxu0 0
      %1077 = vmatprep.subr.bf16.mxu0 0
      %1078 = vmatpush1.bf16.msra.mxu0 0
      %1079 = vmatprep.mubr.bf16.mxu0 0
      %1080 = vmatmul.mubr.bf16.gmra.mrb[0].mxu0 %v1024
      %v1081 = vpop.f32.mrb[0].mxu0
      %v1082 = vadd.f32 %v969, %v1081
      %v1083 = vpop.f32.mrb[0].mxu0
      %v1084 = vpop.f32.mrb[0].mxu0
      %v1085 = vadd.f32 %v969, %v1084
      %v1086 = vpop.f32.mrb[0].mxu0
      %1087 = vmatprep.mubr.bf16.mxu0 0
      %1088 = vmatmul.mubr.bf16.gmra.mrb[0].mxu0 %v1027
      %v1089 = vpop.f32.mrb[0].mxu0
      %v1090 = vadd.f32 %v969, %v1089
      %v1091 = vpop.f32.mrb[0].mxu0
      %v1092 = vpop.f32.mrb[0].mxu0
      %v1093 = vadd.f32 %v969, %v1092
      %v1094 = vpop.f32.mrb[0].mxu0
      %1095 = vmatprep.mubr.bf16.mxu0 0
      %1096 = vmatmul.mubr.bf16.gmra.mrb[0].mxu0 %v1030
      %v1097 = vpop.f32.mrb[0].mxu0
      %v1098 = vadd.f32 %v969, %v1097
      %v1099 = vpop.f32.mrb[0].mxu0
      %v1100 = vpop.f32.mrb[0].mxu0
      %v1101 = vadd.f32 %v969, %v1100
      %v1102 = vpop.f32.mrb[0].mxu0
      %1103 = vmatprep.mubr.bf16.mxu0 0
      %1104 = vmatmul.mubr.bf16.gmra.mrb[0].mxu0 %v1033
      %v1105 = vpop.f32.mrb[0].mxu0
      %v1106 = vadd.f32 %v969, %v1105
      %v1107 = vpop.f32.mrb[0].mxu0
      %v1108 = vpop.f32.mrb[0].mxu0
      %v1109 = vadd.f32 %v969, %v1108
      %v1110 = vpop.f32.mrb[0].mxu0
      %1111 = vmatprep.mubr.bf16.mxu0 0
      %1112 = vmatmul.mubr.bf16.gmra.mrb[0].mxu0 %v1036
      %v1113 = vpop.f32.mrb[0].mxu0
      %v1114 = vadd.f32 %v969, %v1113
      %v1115 = vpop.f32.mrb[0].mxu0
      %v1116 = vpop.f32.mrb[0].mxu0
      %v1117 = vadd.f32 %v969, %v1116
      %v1118 = vpop.f32.mrb[0].mxu0
      %1119 = vmatprep.mubr.bf16.mxu0 0
      %1120 = vmatmul.mubr.bf16.gmra.mrb[0].mxu0 %v1039
      %v1121 = vpop.f32.mrb[0].mxu0
      %v1122 = vadd.f32 %v969, %v1121
      %v1123 = vpop.f32.mrb[0].mxu0
      %v1124 = vpop.f32.mrb[0].mxu0
      %v1125 = vadd.f32 %v969, %v1124
      %v1126 = vpop.f32.mrb[0].mxu0
      %1127 = vmatprep.mubr.bf16.mxu0 0
      %1128 = vmatmul.mubr.bf16.gmra.mrb[0].mxu0 %v1042
      %v1129 = vpop.f32.mrb[0].mxu0
      %v1130 = vadd.f32 %v969, %v1129
      %v1131 = vpop.f32.mrb[0].mxu0
      %v1132 = vpop.f32.mrb[0].mxu0
      %v1133 = vadd.f32 %v969, %v1132
      %v1134 = vpop.f32.mrb[0].mxu0
      %1135 = vmatprep.mubr.bf16.mxu0 0
      %1136 = vmatmul.mubr.bf16.gmra.mrb[0].mxu0 %v1045
      %v1137 = vpop.f32.mrb[0].mxu0
      %v1138 = vadd.f32 %v969, %v1137
      %v1139 = vpop.f32.mrb[0].mxu0
      %v1140 = vpop.f32.mrb[0].mxu0
      %v1141 = vadd.f32 %v969, %v1140
      %v1142 = vpop.f32.mrb[0].mxu0
      %1143 = vdwg.mxu0
      %v1144 = vld [vmem:[%s531] sm:$0xff]
      %vm1145 = vcmp.eq.f32.partialorder %v1144, 0.0
      %v1146 = vsel %vm1145, -1e+09, 0.0
      %v1147 = vpack.c.bf16 %v685, %v682
      %v1148 = vpack.c.bf16 %v693, %v690
      %v1149 = vpack.c.bf16 %v701, %v698
      %v1150 = vpack.c.bf16 %v709, %v706
      %v1151 = vpack.c.bf16 %v717, %v714
      %v1152 = vpack.c.bf16 %v725, %v722
      %v1153 = vpack.c.bf16 %v733, %v730
      %v1154 = vpack.c.bf16 %v741, %v738
      %v1163 = vunpack.c.l.b16 %v1147
      %v1164 = vunpack.c.h.b16 %v1147
      %v1165 = vunpack.c.l.b16 %v1148
      %v1166 = vunpack.c.h.b16 %v1148
      %v1167 = vunpack.c.l.b16 %v1149
      %v1168 = vunpack.c.h.b16 %v1149
      %v1169 = vunpack.c.l.b16 %v1150
      %v1170 = vunpack.c.h.b16 %v1150
      %v1171 = vunpack.c.l.b16 %v1151
      %v1172 = vunpack.c.h.b16 %v1151
      %v1173 = vunpack.c.l.b16 %v1152
      %v1174 = vunpack.c.h.b16 %v1152
      %v1175 = vunpack.c.l.b16 %v1153
      %v1176 = vunpack.c.h.b16 %v1153
      %v1177 = vunpack.c.l.b16 %v1154
      %v1178 = vunpack.c.h.b16 %v1154
      %v1179 = vpack.c.b16 %v1163, %v1163
      %v1180 = vpack.c.b16 %v1164, %v1164
      %v1181 = vpack.c.b16 %v1165, %v1165
      %v1182 = vpack.c.b16 %v1166, %v1166
      %v1183 = vpack.c.b16 %v1167, %v1167
      %v1184 = vpack.c.b16 %v1168, %v1168
      %v1185 = vpack.c.b16 %v1169, %v1169
      %v1186 = vpack.c.b16 %v1170, %v1170
      %v1187 = vpack.c.b16 %v1171, %v1171
      %v1188 = vpack.c.b16 %v1172, %v1172
      %v1189 = vpack.c.b16 %v1173, %v1173
      %v1190 = vpack.c.b16 %v1174, %v1174
      %v1191 = vpack.c.b16 %v1175, %v1175
      %v1192 = vpack.c.b16 %v1176, %v1176
      %v1193 = vpack.c.b16 %v1177, %v1177
      %v1194 = vpack.c.b16 %v1178, %v1178
      %v1195 = vpack.c.bf16 %v885, %v882
      %v1196 = vpack.c.bf16 %v893, %v890
      %v1197 = vpack.c.bf16 %v901, %v898
      %v1198 = vpack.c.bf16 %v909, %v906
      %v1199 = vpack.c.bf16 %v917, %v914
      %v1200 = vpack.c.bf16 %v925, %v922
      %v1201 = vpack.c.bf16 %v933, %v930
      %v1202 = vpack.c.bf16 %v941, %v938
      %v1211 = vunpack.c.l.b16 %v1195
      %v1212 = vunpack.c.h.b16 %v1195
      %v1213 = vunpack.c.l.b16 %v1196
      %v1214 = vunpack.c.h.b16 %v1196
      %v1215 = vunpack.c.l.b16 %v1197
      %v1216 = vunpack.c.h.b16 %v1197
      %v1217 = vunpack.c.l.b16 %v1198
      %v1218 = vunpack.c.h.b16 %v1198
      %v1219 = vunpack.c.l.b16 %v1199
      %v1220 = vunpack.c.h.b16 %v1199
      %v1221 = vunpack.c.l.b16 %v1200
      %v1222 = vunpack.c.h.b16 %v1200
      %v1223 = vunpack.c.l.b16 %v1201
      %v1224 = vunpack.c.h.b16 %v1201
      %v1225 = vunpack.c.l.b16 %v1202
      %v1226 = vunpack.c.h.b16 %v1202
      %v1227 = vpack.c.b16 %v1211, %v1211
      %v1228 = vpack.c.b16 %v1212, %v1212
      %v1229 = vpack.c.b16 %v1213, %v1213
      %v1230 = vpack.c.b16 %v1214, %v1214
      %v1231 = vpack.c.b16 %v1215, %v1215
      %v1232 = vpack.c.b16 %v1216, %v1216
      %v1233 = vpack.c.b16 %v1217, %v1217
      %v1234 = vpack.c.b16 %v1218, %v1218
      %v1235 = vpack.c.b16 %v1219, %v1219
      %v1236 = vpack.c.b16 %v1220, %v1220
      %v1237 = vpack.c.b16 %v1221, %v1221
      %v1238 = vpack.c.b16 %v1222, %v1222
      %v1239 = vpack.c.b16 %v1223, %v1223
      %v1240 = vpack.c.b16 %v1224, %v1224
      %v1241 = vpack.c.b16 %v1225, %v1225
      %v1242 = vpack.c.b16 %v1226, %v1226
      %v1243 = vpack.c.bf16 %v1085, %v1082
      %v1244 = vpack.c.bf16 %v1093, %v1090
      %v1245 = vpack.c.bf16 %v1101, %v1098
      %v1246 = vpack.c.bf16 %v1109, %v1106
      %v1247 = vpack.c.bf16 %v1117, %v1114
      %v1248 = vpack.c.bf16 %v1125, %v1122
      %v1249 = vpack.c.bf16 %v1133, %v1130
      %v1250 = vpack.c.bf16 %v1141, %v1138
      %v1259 = vunpack.c.l.b16 %v1243
      %v1260 = vunpack.c.h.b16 %v1243
      %v1261 = vunpack.c.l.b16 %v1244
      %v1262 = vunpack.c.h.b16 %v1244
      %v1263 = vunpack.c.l.b16 %v1245
      %v1264 = vunpack.c.h.b16 %v1245
      %v1265 = vunpack.c.l.b16 %v1246
      %v1266 = vunpack.c.h.b16 %v1246
      %v1267 = vunpack.c.l.b16 %v1247
      %v1268 = vunpack.c.h.b16 %v1247
      %v1269 = vunpack.c.l.b16 %v1248
      %v1270 = vunpack.c.h.b16 %v1248
      %v1271 = vunpack.c.l.b16 %v1249
      %v1272 = vunpack.c.h.b16 %v1249
      %v1273 = vunpack.c.l.b16 %v1250
      %v1274 = vunpack.c.h.b16 %v1250
      %v1275 = vpack.c.b16 %v1259, %v1259
      %v1276 = vpack.c.b16 %v1260, %v1260
      %v1277 = vpack.c.b16 %v1261, %v1261
      %v1278 = vpack.c.b16 %v1262, %v1262
      %v1279 = vpack.c.b16 %v1263, %v1263
      %v1280 = vpack.c.b16 %v1264, %v1264
      %v1281 = vpack.c.b16 %v1265, %v1265
      %v1282 = vpack.c.b16 %v1266, %v1266
      %v1283 = vpack.c.b16 %v1267, %v1267
      %v1284 = vpack.c.b16 %v1268, %v1268
      %v1285 = vpack.c.b16 %v1269, %v1269
      %v1286 = vpack.c.b16 %v1270, %v1270
      %v1287 = vpack.c.b16 %v1271, %v1271
      %v1288 = vpack.c.b16 %v1272, %v1272
      %v1289 = vpack.c.b16 %v1273, %v1273
      %v1290 = vpack.c.b16 %v1274, %v1274
      %vm1291 = vcmask 64512
      %v1293 = vsel %vm1291, %v1179, 0
      %v1296 = vsel %vm1291, %v1227, 0
      %1298 = vmatprep.subr.bf16.mxu0 0
      %1299 = vmatpush1.bf16.xpose.msra.mxu0 %v1296
      %1300 = vmatprep.subr.bf16.mxu0 0
      %1301 = vmatpush1.bf16.xpose.msra.mxu0 0
      %1302 = vmatprep.subr.bf16.mxu0 0
      %1303 = vmatpush1.bf16.xpose.msra.mxu0 0
      %1304 = vmatprep.subr.bf16.mxu0 0
      %1305 = vmatpush1.bf16.xpose.msra.mxu0 0
      %1306 = vmatprep.subr.bf16.mxu0 0
      %1307 = vmatpush1.bf16.xpose.msra.mxu0 0
      %1308 = vmatprep.subr.bf16.mxu0 0
      %1309 = vmatpush1.bf16.xpose.msra.mxu0 0
      %1310 = vmatprep.subr.bf16.mxu0 0
      %1311 = vmatpush1.bf16.xpose.msra.mxu0 0
      %1312 = vmatprep.subr.bf16.mxu0 0
      %1313 = vmatpush1.bf16.xpose.msra.mxu0 0
      %1314 = vmatprep.subr.bf16.mxu0 0
      %1315 = vmatpush1.bf16.xpose.msra.mxu0 0
      %1316 = vmatprep.subr.bf16.mxu0 0
      %1317 = vmatpush1.bf16.xpose.msra.mxu0 0
      %1318 = vmatprep.subr.bf16.mxu0 0
      %1319 = vmatpush1.bf16.xpose.msra.mxu0 0
      %1320 = vmatprep.subr.bf16.mxu0 0
      %1321 = vmatpush1.bf16.xpose.msra.mxu0 0
      %1322 = vmatprep.subr.bf16.mxu0 0
      %1323 = vmatpush1.bf16.xpose.msra.mxu0 0
      %1324 = vmatprep.subr.bf16.mxu0 0
      %1325 = vmatpush1.bf16.xpose.msra.mxu0 0
      %1326 = vmatprep.subr.bf16.mxu0 0
      %1327 = vmatpush1.bf16.xpose.msra.mxu0 0
      %1328 = vmatprep.subr.bf16.mxu0 0
      %1329 = vmatpush1.bf16.xpose.msra.mxu0 0
      %1330 = vmatprep.mubr.bf16.mxu0 0
      %1331 = vmatmul.mubr.bf16.gmra.mrb[0].mxu0 %v1293
      %v1332 = vpop.f32.mrb[0].mxu0
      %v1333 = vadd.f32 %v1146, %v1332
      %v1334 = vpop.f32.mrb[0].mxu0
      %v1335 = vpop.f32.mrb[0].mxu0
      %v1336 = vpop.f32.mrb[0].mxu0
      %1337 = vdwg.mxu0
      %v1339 = vsel %vm1291, %v1180, 0
      %v1342 = vsel %vm1291, %v1228, 0
      %1344 = vmatprep.subr.bf16.mxu0 0
      %1345 = vmatpush1.bf16.xpose.msra.mxu0 %v1342
      %1346 = vmatprep.subr.bf16.mxu0 0
      %1347 = vmatpush1.bf16.xpose.msra.mxu0 0
      %1348 = vmatprep.subr.bf16.mxu0 0
      %1349 = vmatpush1.bf16.xpose.msra.mxu0 0
      %1350 = vmatprep.subr.bf16.mxu0 0
      %1351 = vmatpush1.bf16.xpose.msra.mxu0 0
      %1352 = vmatprep.subr.bf16.mxu0 0
      %1353 = vmatpush1.bf16.xpose.msra.mxu0 0
      %1354 = vmatprep.subr.bf16.mxu0 0
      %1355 = vmatpush1.bf16.xpose.msra.mxu0 0
      %1356 = vmatprep.subr.bf16.mxu0 0
      %1357 = vmatpush1.bf16.xpose.msra.mxu0 0
      %1358 = vmatprep.subr.bf16.mxu0 0
      %1359 = vmatpush1.bf16.xpose.msra.mxu0 0
      %1360 = vmatprep.subr.bf16.mxu0 0
      %1361 = vmatpush1.bf16.xpose.msra.mxu0 0
      %1362 = vmatprep.subr.bf16.mxu0 0
      %1363 = vmatpush1.bf16.xpose.msra.mxu0 0
      %1364 = vmatprep.subr.bf16.mxu0 0
      %1365 = vmatpush1.bf16.xpose.msra.mxu0 0
      %1366 = vmatprep.subr.bf16.mxu0 0
      %1367 = vmatpush1.bf16.xpose.msra.mxu0 0
      %1368 = vmatprep.subr.bf16.mxu0 0
      %1369 = vmatpush1.bf16.xpose.msra.mxu0 0
      %1370 = vmatprep.subr.bf16.mxu0 0
      %1371 = vmatpush1.bf16.xpose.msra.mxu0 0
      %1372 = vmatprep.subr.bf16.mxu0 0
      %1373 = vmatpush1.bf16.xpose.msra.mxu0 0
      %1374 = vmatprep.subr.bf16.mxu0 0
      %1375 = vmatpush1.bf16.xpose.msra.mxu0 0
      %1376 = vmatprep.mubr.bf16.mxu0 0
      %1377 = vmatmul.mubr.bf16.gmra.mrb[0].mxu0 %v1339
      %v1378 = vpop.f32.mrb[0].mxu0
      %v1379 = vadd.f32 %v1146, %v1378
      %v1380 = vpop.f32.mrb[0].mxu0
      %v1381 = vpop.f32.mrb[0].mxu0
      %v1382 = vpop.f32.mrb[0].mxu0
      %1383 = vdwg.mxu0
      %v1385 = vsel %vm1291, %v1181, 0
      %v1388 = vsel %vm1291, %v1229, 0
      %1390 = vmatprep.subr.bf16.mxu0 0
      %1391 = vmatpush1.bf16.xpose.msra.mxu0 %v1388
      %1392 = vmatprep.subr.bf16.mxu0 0
      %1393 = vmatpush1.bf16.xpose.msra.mxu0 0
      %1394 = vmatprep.subr.bf16.mxu0 0
      %1395 = vmatpush1.bf16.xpose.msra.mxu0 0
      %1396 = vmatprep.subr.bf16.mxu0 0
      %1397 = vmatpush1.bf16.xpose.msra.mxu0 0
      %1398 = vmatprep.subr.bf16.mxu0 0
      %1399 = vmatpush1.bf16.xpose.msra.mxu0 0
      %1400 = vmatprep.subr.bf16.mxu0 0
      %1401 = vmatpush1.bf16.xpose.msra.mxu0 0
      %1402 = vmatprep.subr.bf16.mxu0 0
      %1403 = vmatpush1.bf16.xpose.msra.mxu0 0
      %1404 = vmatprep.subr.bf16.mxu0 0
      %1405 = vmatpush1.bf16.xpose.msra.mxu0 0
      %1406 = vmatprep.subr.bf16.mxu0 0
      %1407 = vmatpush1.bf16.xpose.msra.mxu0 0
      %1408 = vmatprep.subr.bf16.mxu0 0
      %1409 = vmatpush1.bf16.xpose.msra.mxu0 0
      %1410 = vmatprep.subr.bf16.mxu0 0
      %1411 = vmatpush1.bf16.xpose.msra.mxu0 0
      %1412 = vmatprep.subr.bf16.mxu0 0
      %1413 = vmatpush1.bf16.xpose.msra.mxu0 0
      %1414 = vmatprep.subr.bf16.mxu0 0
      %1415 = vmatpush1.bf16.xpose.msra.mxu0 0
      %1416 = vmatprep.subr.bf16.mxu0 0
      %1417 = vmatpush1.bf16.xpose.msra.mxu0 0
      %1418 = vmatprep.subr.bf16.mxu0 0
      %1419 = vmatpush1.bf16.xpose.msra.mxu0 0
      %1420 = vmatprep.subr.bf16.mxu0 0
      %1421 = vmatpush1.bf16.xpose.msra.mxu0 0
      %1422 = vmatprep.mubr.bf16.mxu0 0
      %1423 = vmatmul.mubr.bf16.gmra.mrb[0].mxu0 %v1385
      %v1424 = vpop.f32.mrb[0].mxu0
      %v1425 = vadd.f32 %v1146, %v1424
      %v1426 = vpop.f32.mrb[0].mxu0
      %v1427 = vpop.f32.mrb[0].mxu0
      %v1428 = vpop.f32.mrb[0].mxu0
      %1429 = vdwg.mxu0
      %v1431 = vsel %vm1291, %v1182, 0
      %v1434 = vsel %vm1291, %v1230, 0
      %1436 = vmatprep.subr.bf16.mxu0 0
      %1437 = vmatpush1.bf16.xpose.msra.mxu0 %v1434
      %1438 = vmatprep.subr.bf16.mxu0 0
      %1439 = vmatpush1.bf16.xpose.msra.mxu0 0
      %1440 = vmatprep.subr.bf16.mxu0 0
      %1441 = vmatpush1.bf16.xpose.msra.mxu0 0
      %1442 = vmatprep.subr.bf16.mxu0 0
      %1443 = vmatpush1.bf16.xpose.msra.mxu0 0
      %1444 = vmatprep.subr.bf16.mxu0 0
      %1445 = vmatpush1.bf16.xpose.msra.mxu0 0
      %1446 = vmatprep.subr.bf16.mxu0 0
      %1447 = vmatpush1.bf16.xpose.msra.mxu0 0
      %1448 = vmatprep.subr.bf16.mxu0 0
      %1449 = vmatpush1.bf16.xpose.msra.mxu0 0
      %1450 = vmatprep.subr.bf16.mxu0 0
      %1451 = vmatpush1.bf16.xpose.msra.mxu0 0
      %1452 = vmatprep.subr.bf16.mxu0 0
      %1453 = vmatpush1.bf16.xpose.msra.mxu0 0
      %1454 = vmatprep.subr.bf16.mxu0 0
      %1455 = vmatpush1.bf16.xpose.msra.mxu0 0
      %1456 = vmatprep.subr.bf16.mxu0 0
      %1457 = vmatpush1.bf16.xpose.msra.mxu0 0
      %1458 = vmatprep.subr.bf16.mxu0 0
      %1459 = vmatpush1.bf16.xpose.msra.mxu0 0
      %1460 = vmatprep.subr.bf16.mxu0 0
      %1461 = vmatpush1.bf16.xpose.msra.mxu0 0
      %1462 = vmatprep.subr.bf16.mxu0 0
      %1463 = vmatpush1.bf16.xpose.msra.mxu0 0
      %1464 = vmatprep.subr.bf16.mxu0 0
      %1465 = vmatpush1.bf16.xpose.msra.mxu0 0
      %1466 = vmatprep.subr.bf16.mxu0 0
      %1467 = vmatpush1.bf16.xpose.msra.mxu0 0
      %1468 = vmatprep.mubr.bf16.mxu0 0
      %1469 = vmatmul.mubr.bf16.gmra.mrb[0].mxu0 %v1431
      %v1470 = vpop.f32.mrb[0].mxu0
      %v1471 = vadd.f32 %v1146, %v1470
      %v1472 = vpop.f32.mrb[0].mxu0
      %v1473 = vpop.f32.mrb[0].mxu0
      %v1474 = vpop.f32.mrb[0].mxu0
      %1475 = vdwg.mxu0
      %v1477 = vsel %vm1291, %v1183, 0
      %v1480 = vsel %vm1291, %v1231, 0
      %1482 = vmatprep.subr.bf16.mxu0 0
      %1483 = vmatpush1.bf16.xpose.msra.mxu0 %v1480
      %1484 = vmatprep.subr.bf16.mxu0 0
      %1485 = vmatpush1.bf16.xpose.msra.mxu0 0
      %1486 = vmatprep.subr.bf16.mxu0 0
      %1487 = vmatpush1.bf16.xpose.msra.mxu0 0
      %1488 = vmatprep.subr.bf16.mxu0 0
      %1489 = vmatpush1.bf16.xpose.msra.mxu0 0
      %1490 = vmatprep.subr.bf16.mxu0 0
      %1491 = vmatpush1.bf16.xpose.msra.mxu0 0
      %1492 = vmatprep.subr.bf16.mxu0 0
      %1493 = vmatpush1.bf16.xpose.msra.mxu0 0
      %1494 = vmatprep.subr.bf16.mxu0 0
      %1495 = vmatpush1.bf16.xpose.msra.mxu0 0
      %1496 = vmatprep.subr.bf16.mxu0 0
      %1497 = vmatpush1.bf16.xpose.msra.mxu0 0
      %1498 = vmatprep.subr.bf16.mxu0 0
      %1499 = vmatpush1.bf16.xpose.msra.mxu0 0
      %1500 = vmatprep.subr.bf16.mxu0 0
      %1501 = vmatpush1.bf16.xpose.msra.mxu0 0
      %1502 = vmatprep.subr.bf16.mxu0 0
      %1503 = vmatpush1.bf16.xpose.msra.mxu0 0
      %1504 = vmatprep.subr.bf16.mxu0 0
      %1505 = vmatpush1.bf16.xpose.msra.mxu0 0
      %1506 = vmatprep.subr.bf16.mxu0 0
      %1507 = vmatpush1.bf16.xpose.msra.mxu0 0
      %1508 = vmatprep.subr.bf16.mxu0 0
      %1509 = vmatpush1.bf16.xpose.msra.mxu0 0
      %1510 = vmatprep.subr.bf16.mxu0 0
      %1511 = vmatpush1.bf16.xpose.msra.mxu0 0
      %1512 = vmatprep.subr.bf16.mxu0 0
      %1513 = vmatpush1.bf16.xpose.msra.mxu0 0
      %1514 = vmatprep.mubr.bf16.mxu0 0
      %1515 = vmatmul.mubr.bf16.gmra.mrb[0].mxu0 %v1477
      %v1516 = vpop.f32.mrb[0].mxu0
      %v1517 = vadd.f32 %v1146, %v1516
      %v1518 = vpop.f32.mrb[0].mxu0
      %v1519 = vpop.f32.mrb[0].mxu0
      %v1520 = vpop.f32.mrb[0].mxu0
      %1521 = vdwg.mxu0
      %v1523 = vsel %vm1291, %v1184, 0
      %v1526 = vsel %vm1291, %v1232, 0
      %1528 = vmatprep.subr.bf16.mxu0 0
      %1529 = vmatpush1.bf16.xpose.msra.mxu0 %v1526
      %1530 = vmatprep.subr.bf16.mxu0 0
      %1531 = vmatpush1.bf16.xpose.msra.mxu0 0
      %1532 = vmatprep.subr.bf16.mxu0 0
      %1533 = vmatpush1.bf16.xpose.msra.mxu0 0
      %1534 = vmatprep.subr.bf16.mxu0 0
      %1535 = vmatpush1.bf16.xpose.msra.mxu0 0
      %1536 = vmatprep.subr.bf16.mxu0 0
      %1537 = vmatpush1.bf16.xpose.msra.mxu0 0
      %1538 = vmatprep.subr.bf16.mxu0 0
      %1539 = vmatpush1.bf16.xpose.msra.mxu0 0
      %1540 = vmatprep.subr.bf16.mxu0 0
      %1541 = vmatpush1.bf16.xpose.msra.mxu0 0
      %1542 = vmatprep.subr.bf16.mxu0 0
      %1543 = vmatpush1.bf16.xpose.msra.mxu0 0
      %1544 = vmatprep.subr.bf16.mxu0 0
      %1545 = vmatpush1.bf16.xpose.msra.mxu0 0
      %1546 = vmatprep.subr.bf16.mxu0 0
      %1547 = vmatpush1.bf16.xpose.msra.mxu0 0
      %1548 = vmatprep.subr.bf16.mxu0 0
      %1549 = vmatpush1.bf16.xpose.msra.mxu0 0
      %1550 = vmatprep.subr.bf16.mxu0 0
      %1551 = vmatpush1.bf16.xpose.msra.mxu0 0
      %1552 = vmatprep.subr.bf16.mxu0 0
      %1553 = vmatpush1.bf16.xpose.msra.mxu0 0
      %1554 = vmatprep.subr.bf16.mxu0 0
      %1555 = vmatpush1.bf16.xpose.msra.mxu0 0
      %1556 = vmatprep.subr.bf16.mxu0 0
      %1557 = vmatpush1.bf16.xpose.msra.mxu0 0
      %1558 = vmatprep.subr.bf16.mxu0 0
      %1559 = vmatpush1.bf16.xpose.msra.mxu0 0
      %1560 = vmatprep.mubr.bf16.mxu0 0
      %1561 = vmatmul.mubr.bf16.gmra.mrb[0].mxu0 %v1523
      %v1562 = vpop.f32.mrb[0].mxu0
      %v1563 = vadd.f32 %v1146, %v1562
      %v1564 = vpop.f32.mrb[0].mxu0
      %v1565 = vpop.f32.mrb[0].mxu0
      %v1566 = vpop.f32.mrb[0].mxu0
      %1567 = vdwg.mxu0
      %v1569 = vsel %vm1291, %v1185, 0
      %v1572 = vsel %vm1291, %v1233, 0
      %1574 = vmatprep.subr.bf16.mxu0 0
      %1575 = vmatpush1.bf16.xpose.msra.mxu0 %v1572
      %1576 = vmatprep.subr.bf16.mxu0 0
      %1577 = vmatpush1.bf16.xpose.msra.mxu0 0
      %1578 = vmatprep.subr.bf16.mxu0 0
      %1579 = vmatpush1.bf16.xpose.msra.mxu0 0
      %1580 = vmatprep.subr.bf16.mxu0 0
      %1581 = vmatpush1.bf16.xpose.msra.mxu0 0
      %1582 = vmatprep.subr.bf16.mxu0 0
      %1583 = vmatpush1.bf16.xpose.msra.mxu0 0
      %1584 = vmatprep.subr.bf16.mxu0 0
      %1585 = vmatpush1.bf16.xpose.msra.mxu0 0
      %1586 = vmatprep.subr.bf16.mxu0 0
      %1587 = vmatpush1.bf16.xpose.msra.mxu0 0
      %1588 = vmatprep.subr.bf16.mxu0 0
      %1589 = vmatpush1.bf16.xpose.msra.mxu0 0
      %1590 = vmatprep.subr.bf16.mxu0 0
      %1591 = vmatpush1.bf16.xpose.msra.mxu0 0
      %1592 = vmatprep.subr.bf16.mxu0 0
      %1593 = vmatpush1.bf16.xpose.msra.mxu0 0
      %1594 = vmatprep.subr.bf16.mxu0 0
      %1595 = vmatpush1.bf16.xpose.msra.mxu0 0
      %1596 = vmatprep.subr.bf16.mxu0 0
      %1597 = vmatpush1.bf16.xpose.msra.mxu0 0
      %1598 = vmatprep.subr.bf16.mxu0 0
      %1599 = vmatpush1.bf16.xpose.msra.mxu0 0
      %1600 = vmatprep.subr.bf16.mxu0 0
      %1601 = vmatpush1.bf16.xpose.msra.mxu0 0
      %1602 = vmatprep.subr.bf16.mxu0 0
      %1603 = vmatpush1.bf16.xpose.msra.mxu0 0
      %1604 = vmatprep.subr.bf16.mxu0 0
      %1605 = vmatpush1.bf16.xpose.msra.mxu0 0
      %1606 = vmatprep.mubr.bf16.mxu0 0
      %1607 = vmatmul.mubr.bf16.gmra.mrb[0].mxu0 %v1569
      %v1608 = vpop.f32.mrb[0].mxu0
      %v1609 = vadd.f32 %v1146, %v1608
      %v1610 = vpop.f32.mrb[0].mxu0
      %v1611 = vpop.f32.mrb[0].mxu0
      %v1612 = vpop.f32.mrb[0].mxu0
      %1613 = vdwg.mxu0
      %v1615 = vsel %vm1291, %v1186, 0
      %v1618 = vsel %vm1291, %v1234, 0
      %1620 = vmatprep.subr.bf16.mxu0 0
      %1621 = vmatpush1.bf16.xpose.msra.mxu0 %v1618
      %1622 = vmatprep.subr.bf16.mxu0 0
      %1623 = vmatpush1.bf16.xpose.msra.mxu0 0
      %1624 = vmatprep.subr.bf16.mxu0 0
      %1625 = vmatpush1.bf16.xpose.msra.mxu0 0
      %1626 = vmatprep.subr.bf16.mxu0 0
      %1627 = vmatpush1.bf16.xpose.msra.mxu0 0
      %1628 = vmatprep.subr.bf16.mxu0 0
      %1629 = vmatpush1.bf16.xpose.msra.mxu0 0
      %1630 = vmatprep.subr.bf16.mxu0 0
      %1631 = vmatpush1.bf16.xpose.msra.mxu0 0
      %1632 = vmatprep.subr.bf16.mxu0 0
      %1633 = vmatpush1.bf16.xpose.msra.mxu0 0
      %1634 = vmatprep.subr.bf16.mxu0 0
      %1635 = vmatpush1.bf16.xpose.msra.mxu0 0
      %1636 = vmatprep.subr.bf16.mxu0 0
      %1637 = vmatpush1.bf16.xpose.msra.mxu0 0
      %1638 = vmatprep.subr.bf16.mxu0 0
      %1639 = vmatpush1.bf16.xpose.msra.mxu0 0
      %1640 = vmatprep.subr.bf16.mxu0 0
      %1641 = vmatpush1.bf16.xpose.msra.mxu0 0
      %1642 = vmatprep.subr.bf16.mxu0 0
      %1643 = vmatpush1.bf16.xpose.msra.mxu0 0
      %1644 = vmatprep.subr.bf16.mxu0 0
      %1645 = vmatpush1.bf16.xpose.msra.mxu0 0
      %1646 = vmatprep.subr.bf16.mxu0 0
      %1647 = vmatpush1.bf16.xpose.msra.mxu0 0
      %1648 = vmatprep.subr.bf16.mxu0 0
      %1649 = vmatpush1.bf16.xpose.msra.mxu0 0
      %1650 = vmatprep.subr.bf16.mxu0 0
      %1651 = vmatpush1.bf16.xpose.msra.mxu0 0
      %1652 = vmatprep.mubr.bf16.mxu0 0
      %1653 = vmatmul.mubr.bf16.gmra.mrb[0].mxu0 %v1615
      %v1654 = vpop.f32.mrb[0].mxu0
      %v1655 = vadd.f32 %v1146, %v1654
      %v1656 = vpop.f32.mrb[0].mxu0
      %v1657 = vpop.f32.mrb[0].mxu0
      %v1658 = vpop.f32.mrb[0].mxu0
      %1659 = vdwg.mxu0
      %v1661 = vsel %vm1291, %v1187, 0
      %v1664 = vsel %vm1291, %v1235, 0
      %1666 = vmatprep.subr.bf16.mxu0 0
      %1667 = vmatpush1.bf16.xpose.msra.mxu0 %v1664
      %1668 = vmatprep.subr.bf16.mxu0 0
      %1669 = vmatpush1.bf16.xpose.msra.mxu0 0
      %1670 = vmatprep.subr.bf16.mxu0 0
      %1671 = vmatpush1.bf16.xpose.msra.mxu0 0
      %1672 = vmatprep.subr.bf16.mxu0 0
      %1673 = vmatpush1.bf16.xpose.msra.mxu0 0
      %1674 = vmatprep.subr.bf16.mxu0 0
      %1675 = vmatpush1.bf16.xpose.msra.mxu0 0
      %1676 = vmatprep.subr.bf16.mxu0 0
      %1677 = vmatpush1.bf16.xpose.msra.mxu0 0
      %1678 = vmatprep.subr.bf16.mxu0 0
      %1679 = vmatpush1.bf16.xpose.msra.mxu0 0
      %1680 = vmatprep.subr.bf16.mxu0 0
      %1681 = vmatpush1.bf16.xpose.msra.mxu0 0
      %1682 = vmatprep.subr.bf16.mxu0 0
      %1683 = vmatpush1.bf16.xpose.msra.mxu0 0
      %1684 = vmatprep.subr.bf16.mxu0 0
      %1685 = vmatpush1.bf16.xpose.msra.mxu0 0
      %1686 = vmatprep.subr.bf16.mxu0 0
      %1687 = vmatpush1.bf16.xpose.msra.mxu0 0
      %1688 = vmatprep.subr.bf16.mxu0 0
      %1689 = vmatpush1.bf16.xpose.msra.mxu0 0
      %1690 = vmatprep.subr.bf16.mxu0 0
      %1691 = vmatpush1.bf16.xpose.msra.mxu0 0
      %1692 = vmatprep.subr.bf16.mxu0 0
      %1693 = vmatpush1.bf16.xpose.msra.mxu0 0
      %1694 = vmatprep.subr.bf16.mxu0 0
      %1695 = vmatpush1.bf16.xpose.msra.mxu0 0
      %1696 = vmatprep.subr.bf16.mxu0 0
      %1697 = vmatpush1.bf16.xpose.msra.mxu0 0
      %1698 = vmatprep.mubr.bf16.mxu0 0
      %1699 = vmatmul.mubr.bf16.gmra.mrb[0].mxu0 %v1661
      %v1700 = vpop.f32.mrb[0].mxu0
      %v1701 = vadd.f32 %v1146, %v1700
      %v1702 = vpop.f32.mrb[0].mxu0
      %v1703 = vpop.f32.mrb[0].mxu0
      %v1704 = vpop.f32.mrb[0].mxu0
      %1705 = vdwg.mxu0
      %v1707 = vsel %vm1291, %v1188, 0
      %v1710 = vsel %vm1291, %v1236, 0
      %1712 = vmatprep.subr.bf16.mxu0 0
      %1713 = vmatpush1.bf16.xpose.msra.mxu0 %v1710
      %1714 = vmatprep.subr.bf16.mxu0 0
      %1715 = vmatpush1.bf16.xpose.msra.mxu0 0
      %1716 = vmatprep.subr.bf16.mxu0 0
      %1717 = vmatpush1.bf16.xpose.msra.mxu0 0
      %1718 = vmatprep.subr.bf16.mxu0 0
      %1719 = vmatpush1.bf16.xpose.msra.mxu0 0
      %1720 = vmatprep.subr.bf16.mxu0 0
      %1721 = vmatpush1.bf16.xpose.msra.mxu0 0
      %1722 = vmatprep.subr.bf16.mxu0 0
      %1723 = vmatpush1.bf16.xpose.msra.mxu0 0
      %1724 = vmatprep.subr.bf16.mxu0 0
      %1725 = vmatpush1.bf16.xpose.msra.mxu0 0
      %1726 = vmatprep.subr.bf16.mxu0 0
      %1727 = vmatpush1.bf16.xpose.msra.mxu0 0
      %1728 = vmatprep.subr.bf16.mxu0 0
      %1729 = vmatpush1.bf16.xpose.msra.mxu0 0
      %1730 = vmatprep.subr.bf16.mxu0 0
      %1731 = vmatpush1.bf16.xpose.msra.mxu0 0
      %1732 = vmatprep.subr.bf16.mxu0 0
      %1733 = vmatpush1.bf16.xpose.msra.mxu0 0
      %1734 = vmatprep.subr.bf16.mxu0 0
      %1735 = vmatpush1.bf16.xpose.msra.mxu0 0
      %1736 = vmatprep.subr.bf16.mxu0 0
      %1737 = vmatpush1.bf16.xpose.msra.mxu0 0
      %1738 = vmatprep.subr.bf16.mxu0 0
      %1739 = vmatpush1.bf16.xpose.msra.mxu0 0
      %1740 = vmatprep.subr.bf16.mxu0 0
      %1741 = vmatpush1.bf16.xpose.msra.mxu0 0
      %1742 = vmatprep.subr.bf16.mxu0 0
      %1743 = vmatpush1.bf16.xpose.msra.mxu0 0
      %1744 = vmatprep.mubr.bf16.mxu0 0
      %1745 = vmatmul.mubr.bf16.gmra.mrb[0].mxu0 %v1707
      %v1746 = vpop.f32.mrb[0].mxu0
      %v1747 = vadd.f32 %v1146, %v1746
      %v1748 = vpop.f32.mrb[0].mxu0
      %v1749 = vpop.f32.mrb[0].mxu0
      %v1750 = vpop.f32.mrb[0].mxu0
      %1751 = vdwg.mxu0
      %v1753 = vsel %vm1291, %v1189, 0
      %v1756 = vsel %vm1291, %v1237, 0
      %1758 = vmatprep.subr.bf16.mxu0 0
      %1759 = vmatpush1.bf16.xpose.msra.mxu0 %v1756
      %1760 = vmatprep.subr.bf16.mxu0 0
      %1761 = vmatpush1.bf16.xpose.msra.mxu0 0
      %1762 = vmatprep.subr.bf16.mxu0 0
      %1763 = vmatpush1.bf16.xpose.msra.mxu0 0
      %1764 = vmatprep.subr.bf16.mxu0 0
      %1765 = vmatpush1.bf16.xpose.msra.mxu0 0
      %1766 = vmatprep.subr.bf16.mxu0 0
      %1767 = vmatpush1.bf16.xpose.msra.mxu0 0
      %1768 = vmatprep.subr.bf16.mxu0 0
      %1769 = vmatpush1.bf16.xpose.msra.mxu0 0
      %1770 = vmatprep.subr.bf16.mxu0 0
      %1771 = vmatpush1.bf16.xpose.msra.mxu0 0
      %1772 = vmatprep.subr.bf16.mxu0 0
      %1773 = vmatpush1.bf16.xpose.msra.mxu0 0
      %1774 = vmatprep.subr.bf16.mxu0 0
      %1775 = vmatpush1.bf16.xpose.msra.mxu0 0
      %1776 = vmatprep.subr.bf16.mxu0 0
      %1777 = vmatpush1.bf16.xpose.msra.mxu0 0
      %1778 = vmatprep.subr.bf16.mxu0 0
      %1779 = vmatpush1.bf16.xpose.msra.mxu0 0
      %1780 = vmatprep.subr.bf16.mxu0 0
      %1781 = vmatpush1.bf16.xpose.msra.mxu0 0
      %1782 = vmatprep.subr.bf16.mxu0 0
      %1783 = vmatpush1.bf16.xpose.msra.mxu0 0
      %1784 = vmatprep.subr.bf16.mxu0 0
      %1785 = vmatpush1.bf16.xpose.msra.mxu0 0
      %1786 = vmatprep.subr.bf16.mxu0 0
      %1787 = vmatpush1.bf16.xpose.msra.mxu0 0
      %1788 = vmatprep.subr.bf16.mxu0 0
      %1789 = vmatpush1.bf16.xpose.msra.mxu0 0
      %1790 = vmatprep.mubr.bf16.mxu0 0
      %1791 = vmatmul.mubr.bf16.gmra.mrb[0].mxu0 %v1753
      %v1792 = vpop.f32.mrb[0].mxu0
      %v1793 = vadd.f32 %v1146, %v1792
      %v1794 = vpop.f32.mrb[0].mxu0
      %v1795 = vpop.f32.mrb[0].mxu0
      %v1796 = vpop.f32.mrb[0].mxu0
      %1797 = vdwg.mxu0
      %v1799 = vsel %vm1291, %v1190, 0
      %v1802 = vsel %vm1291, %v1238, 0
      %1804 = vmatprep.subr.bf16.mxu0 0
      %1805 = vmatpush1.bf16.xpose.msra.mxu0 %v1802
      %1806 = vmatprep.subr.bf16.mxu0 0
      %1807 = vmatpush1.bf16.xpose.msra.mxu0 0
      %1808 = vmatprep.subr.bf16.mxu0 0
      %1809 = vmatpush1.bf16.xpose.msra.mxu0 0
      %1810 = vmatprep.subr.bf16.mxu0 0
      %1811 = vmatpush1.bf16.xpose.msra.mxu0 0
      %1812 = vmatprep.subr.bf16.mxu0 0
      %1813 = vmatpush1.bf16.xpose.msra.mxu0 0
      %1814 = vmatprep.subr.bf16.mxu0 0
      %1815 = vmatpush1.bf16.xpose.msra.mxu0 0
      %1816 = vmatprep.subr.bf16.mxu0 0
      %1817 = vmatpush1.bf16.xpose.msra.mxu0 0
      %1818 = vmatprep.subr.bf16.mxu0 0
      %1819 = vmatpush1.bf16.xpose.msra.mxu0 0
      %1820 = vmatprep.subr.bf16.mxu0 0
      %1821 = vmatpush1.bf16.xpose.msra.mxu0 0
      %1822 = vmatprep.subr.bf16.mxu0 0
      %1823 = vmatpush1.bf16.xpose.msra.mxu0 0
      %1824 = vmatprep.subr.bf16.mxu0 0
      %1825 = vmatpush1.bf16.xpose.msra.mxu0 0
      %1826 = vmatprep.subr.bf16.mxu0 0
      %1827 = vmatpush1.bf16.xpose.msra.mxu0 0
      %1828 = vmatprep.subr.bf16.mxu0 0
      %1829 = vmatpush1.bf16.xpose.msra.mxu0 0
      %1830 = vmatprep.subr.bf16.mxu0 0
      %1831 = vmatpush1.bf16.xpose.msra.mxu0 0
      %1832 = vmatprep.subr.bf16.mxu0 0
      %1833 = vmatpush1.bf16.xpose.msra.mxu0 0
      %1834 = vmatprep.subr.bf16.mxu0 0
      %1835 = vmatpush1.bf16.xpose.msra.mxu0 0
      %1836 = vmatprep.mubr.bf16.mxu0 0
      %1837 = vmatmul.mubr.bf16.gmra.mrb[0].mxu0 %v1799
      %v1838 = vpop.f32.mrb[0].mxu0
      %v1839 = vadd.f32 %v1146, %v1838
      %v1840 = vpop.f32.mrb[0].mxu0
      %v1841 = vpop.f32.mrb[0].mxu0
      %v1842 = vpop.f32.mrb[0].mxu0
      %1843 = vdwg.mxu0
      %v1845 = vsel %vm1291, %v1191, 0
      %v1848 = vsel %vm1291, %v1239, 0
      %1850 = vmatprep.subr.bf16.mxu0 0
      %1851 = vmatpush1.bf16.xpose.msra.mxu0 %v1848
      %1852 = vmatprep.subr.bf16.mxu0 0
      %1853 = vmatpush1.bf16.xpose.msra.mxu0 0
      %1854 = vmatprep.subr.bf16.mxu0 0
      %1855 = vmatpush1.bf16.xpose.msra.mxu0 0
      %1856 = vmatprep.subr.bf16.mxu0 0
      %1857 = vmatpush1.bf16.xpose.msra.mxu0 0
      %1858 = vmatprep.subr.bf16.mxu0 0
      %1859 = vmatpush1.bf16.xpose.msra.mxu0 0
      %1860 = vmatprep.subr.bf16.mxu0 0
      %1861 = vmatpush1.bf16.xpose.msra.mxu0 0
      %1862 = vmatprep.subr.bf16.mxu0 0
      %1863 = vmatpush1.bf16.xpose.msra.mxu0 0
      %1864 = vmatprep.subr.bf16.mxu0 0
      %1865 = vmatpush1.bf16.xpose.msra.mxu0 0
      %1866 = vmatprep.subr.bf16.mxu0 0
      %1867 = vmatpush1.bf16.xpose.msra.mxu0 0
      %1868 = vmatprep.subr.bf16.mxu0 0
      %1869 = vmatpush1.bf16.xpose.msra.mxu0 0
      %1870 = vmatprep.subr.bf16.mxu0 0
      %1871 = vmatpush1.bf16.xpose.msra.mxu0 0
      %1872 = vmatprep.subr.bf16.mxu0 0
      %1873 = vmatpush1.bf16.xpose.msra.mxu0 0
      %1874 = vmatprep.subr.bf16.mxu0 0
      %1875 = vmatpush1.bf16.xpose.msra.mxu0 0
      %1876 = vmatprep.subr.bf16.mxu0 0
      %1877 = vmatpush1.bf16.xpose.msra.mxu0 0
      %1878 = vmatprep.subr.bf16.mxu0 0
      %1879 = vmatpush1.bf16.xpose.msra.mxu0 0
      %1880 = vmatprep.subr.bf16.mxu0 0
      %1881 = vmatpush1.bf16.xpose.msra.mxu0 0
      %1882 = vmatprep.mubr.bf16.mxu0 0
      %1883 = vmatmul.mubr.bf16.gmra.mrb[0].mxu0 %v1845
      %v1884 = vpop.f32.mrb[0].mxu0
      %v1885 = vadd.f32 %v1146, %v1884
      %v1886 = vpop.f32.mrb[0].mxu0
      %v1887 = vpop.f32.mrb[0].mxu0
      %v1888 = vpop.f32.mrb[0].mxu0
      %1889 = vdwg.mxu0
      %v1891 = vsel %vm1291, %v1192, 0
      %v1894 = vsel %vm1291, %v1240, 0
      %1896 = vmatprep.subr.bf16.mxu0 0
      %1897 = vmatpush1.bf16.xpose.msra.mxu0 %v1894
      %1898 = vmatprep.subr.bf16.mxu0 0
      %1899 = vmatpush1.bf16.xpose.msra.mxu0 0
      %1900 = vmatprep.subr.bf16.mxu0 0
      %1901 = vmatpush1.bf16.xpose.msra.mxu0 0
      %1902 = vmatprep.subr.bf16.mxu0 0
      %1903 = vmatpush1.bf16.xpose.msra.mxu0 0
      %1904 = vmatprep.subr.bf16.mxu0 0
      %1905 = vmatpush1.bf16.xpose.msra.mxu0 0
      %1906 = vmatprep.subr.bf16.mxu0 0
      %1907 = vmatpush1.bf16.xpose.msra.mxu0 0
      %1908 = vmatprep.subr.bf16.mxu0 0
      %1909 = vmatpush1.bf16.xpose.msra.mxu0 0
      %1910 = vmatprep.subr.bf16.mxu0 0
      %1911 = vmatpush1.bf16.xpose.msra.mxu0 0
      %1912 = vmatprep.subr.bf16.mxu0 0
      %1913 = vmatpush1.bf16.xpose.msra.mxu0 0
      %1914 = vmatprep.subr.bf16.mxu0 0
      %1915 = vmatpush1.bf16.xpose.msra.mxu0 0
      %1916 = vmatprep.subr.bf16.mxu0 0
      %1917 = vmatpush1.bf16.xpose.msra.mxu0 0
      %1918 = vmatprep.subr.bf16.mxu0 0
      %1919 = vmatpush1.bf16.xpose.msra.mxu0 0
      %1920 = vmatprep.subr.bf16.mxu0 0
      %1921 = vmatpush1.bf16.xpose.msra.mxu0 0
      %1922 = vmatprep.subr.bf16.mxu0 0
      %1923 = vmatpush1.bf16.xpose.msra.mxu0 0
      %1924 = vmatprep.subr.bf16.mxu0 0
      %1925 = vmatpush1.bf16.xpose.msra.mxu0 0
      %1926 = vmatprep.subr.bf16.mxu0 0
      %1927 = vmatpush1.bf16.xpose.msra.mxu0 0
      %1928 = vmatprep.mubr.bf16.mxu0 0
      %1929 = vmatmul.mubr.bf16.gmra.mrb[0].mxu0 %v1891
      %v1930 = vpop.f32.mrb[0].mxu0
      %v1931 = vadd.f32 %v1146, %v1930
      %v1932 = vpop.f32.mrb[0].mxu0
      %v1933 = vpop.f32.mrb[0].mxu0
      %v1934 = vpop.f32.mrb[0].mxu0
      %1935 = vdwg.mxu0
      %v1937 = vsel %vm1291, %v1193, 0
      %v1940 = vsel %vm1291, %v1241, 0
      %1942 = vmatprep.subr.bf16.mxu0 0
      %1943 = vmatpush1.bf16.xpose.msra.mxu0 %v1940
      %1944 = vmatprep.subr.bf16.mxu0 0
      %1945 = vmatpush1.bf16.xpose.msra.mxu0 0
      %1946 = vmatprep.subr.bf16.mxu0 0
      %1947 = vmatpush1.bf16.xpose.msra.mxu0 0
      %1948 = vmatprep.subr.bf16.mxu0 0
      %1949 = vmatpush1.bf16.xpose.msra.mxu0 0
      %1950 = vmatprep.subr.bf16.mxu0 0
      %1951 = vmatpush1.bf16.xpose.msra.mxu0 0
      %1952 = vmatprep.subr.bf16.mxu0 0
      %1953 = vmatpush1.bf16.xpose.msra.mxu0 0
      %1954 = vmatprep.subr.bf16.mxu0 0
      %1955 = vmatpush1.bf16.xpose.msra.mxu0 0
      %1956 = vmatprep.subr.bf16.mxu0 0
      %1957 = vmatpush1.bf16.xpose.msra.mxu0 0
      %1958 = vmatprep.subr.bf16.mxu0 0
      %1959 = vmatpush1.bf16.xpose.msra.mxu0 0
      %1960 = vmatprep.subr.bf16.mxu0 0
      %1961 = vmatpush1.bf16.xpose.msra.mxu0 0
      %1962 = vmatprep.subr.bf16.mxu0 0
      %1963 = vmatpush1.bf16.xpose.msra.mxu0 0
      %1964 = vmatprep.subr.bf16.mxu0 0
      %1965 = vmatpush1.bf16.xpose.msra.mxu0 0
      %1966 = vmatprep.subr.bf16.mxu0 0
      %1967 = vmatpush1.bf16.xpose.msra.mxu0 0
      %1968 = vmatprep.subr.bf16.mxu0 0
      %1969 = vmatpush1.bf16.xpose.msra.mxu0 0
      %1970 = vmatprep.subr.bf16.mxu0 0
      %1971 = vmatpush1.bf16.xpose.msra.mxu0 0
      %1972 = vmatprep.subr.bf16.mxu0 0
      %1973 = vmatpush1.bf16.xpose.msra.mxu0 0
      %1974 = vmatprep.mubr.bf16.mxu0 0
      %1975 = vmatmul.mubr.bf16.gmra.mrb[0].mxu0 %v1937
      %v1976 = vpop.f32.mrb[0].mxu0
      %v1977 = vadd.f32 %v1146, %v1976
      %v1978 = vpop.f32.mrb[0].mxu0
      %v1979 = vpop.f32.mrb[0].mxu0
      %v1980 = vpop.f32.mrb[0].mxu0
      %1981 = vdwg.mxu0
      %v1983 = vsel %vm1291, %v1194, 0
      %v1986 = vsel %vm1291, %v1242, 0
      %1988 = vmatprep.subr.bf16.mxu0 0
      %1989 = vmatpush1.bf16.xpose.msra.mxu0 %v1986
      %1990 = vmatprep.subr.bf16.mxu0 0
      %1991 = vmatpush1.bf16.xpose.msra.mxu0 0
      %1992 = vmatprep.subr.bf16.mxu0 0
      %1993 = vmatpush1.bf16.xpose.msra.mxu0 0
      %1994 = vmatprep.subr.bf16.mxu0 0
      %1995 = vmatpush1.bf16.xpose.msra.mxu0 0
      %1996 = vmatprep.subr.bf16.mxu0 0
      %1997 = vmatpush1.bf16.xpose.msra.mxu0 0
      %1998 = vmatprep.subr.bf16.mxu0 0
      %1999 = vmatpush1.bf16.xpose.msra.mxu0 0
      %2000 = vmatprep.subr.bf16.mxu0 0
      %2001 = vmatpush1.bf16.xpose.msra.mxu0 0
      %2002 = vmatprep.subr.bf16.mxu0 0
      %2003 = vmatpush1.bf16.xpose.msra.mxu0 0
      %2004 = vmatprep.subr.bf16.mxu0 0
      %2005 = vmatpush1.bf16.xpose.msra.mxu0 0
      %2006 = vmatprep.subr.bf16.mxu0 0
      %2007 = vmatpush1.bf16.xpose.msra.mxu0 0
      %2008 = vmatprep.subr.bf16.mxu0 0
      %2009 = vmatpush1.bf16.xpose.msra.mxu0 0
      %2010 = vmatprep.subr.bf16.mxu0 0
      %2011 = vmatpush1.bf16.xpose.msra.mxu0 0
      %2012 = vmatprep.subr.bf16.mxu0 0
      %2013 = vmatpush1.bf16.xpose.msra.mxu0 0
      %2014 = vmatprep.subr.bf16.mxu0 0
      %2015 = vmatpush1.bf16.xpose.msra.mxu0 0
      %2016 = vmatprep.subr.bf16.mxu0 0
      %2017 = vmatpush1.bf16.xpose.msra.mxu0 0
      %2018 = vmatprep.subr.bf16.mxu0 0
      %2019 = vmatpush1.bf16.xpose.msra.mxu0 0
      %2020 = vmatprep.mubr.bf16.mxu0 0
      %2021 = vmatmul.mubr.bf16.gmra.mrb[0].mxu0 %v1983
      %v2022 = vpop.f32.mrb[0].mxu0
      %v2023 = vadd.f32 %v1146, %v2022
      %v2024 = vpop.f32.mrb[0].mxu0
      %v2025 = vpop.f32.mrb[0].mxu0
      %v2026 = vpop.f32.mrb[0].mxu0
      %2027 = vdwg.mxu0
      %v2028 = vsel %vm1291, %v1333, -inf
      %2029 = vmax.xlane.f32.xlu0 %v2028
      %v2030 = vpop.xlane.xlu0 %2029
      %v2031 = vsel %vm1291, %v1379, -inf
      %2032 = vmax.xlane.f32.xlu0 %v2031
      %v2033 = vpop.xlane.xlu0 %2032
      %v2034 = vsel %vm1291, %v1425, -inf
      %2035 = vmax.xlane.f32.xlu0 %v2034
      %v2036 = vpop.xlane.xlu0 %2035
      %v2037 = vsel %vm1291, %v1471, -inf
      %2038 = vmax.xlane.f32.xlu0 %v2037
      %v2039 = vpop.xlane.xlu0 %2038
      %v2040 = vsel %vm1291, %v1517, -inf
      %2041 = vmax.xlane.f32.xlu0 %v2040
      %v2042 = vpop.xlane.xlu0 %2041
      %v2043 = vsel %vm1291, %v1563, -inf
      %2044 = vmax.xlane.f32.xlu0 %v2043
      %v2045 = vpop.xlane.xlu0 %2044
      %v2046 = vsel %vm1291, %v1609, -inf
      %2047 = vmax.xlane.f32.xlu0 %v2046
      %v2048 = vpop.xlane.xlu0 %2047
      %v2049 = vsel %vm1291, %v1655, -inf
      %2050 = vmax.xlane.f32.xlu0 %v2049
      %v2051 = vpop.xlane.xlu0 %2050
      %v2052 = vsel %vm1291, %v1701, -inf
      %2053 = vmax.xlane.f32.xlu0 %v2052
      %v2054 = vpop.xlane.xlu0 %2053
      %v2055 = vsel %vm1291, %v1747, -inf
      %2056 = vmax.xlane.f32.xlu0 %v2055
      %v2057 = vpop.xlane.xlu0 %2056
      %v2058 = vsel %vm1291, %v1793, -inf
      %2059 = vmax.xlane.f32.xlu0 %v2058
      %v2060 = vpop.xlane.xlu0 %2059
      %v2061 = vsel %vm1291, %v1839, -inf
      %2062 = vmax.xlane.f32.xlu0 %v2061
      %v2063 = vpop.xlane.xlu0 %2062
      %v2064 = vsel %vm1291, %v1885, -inf
      %2065 = vmax.xlane.f32.xlu0 %v2064
      %v2066 = vpop.xlane.xlu0 %2065
      %v2067 = vsel %vm1291, %v1931, -inf
      %2068 = vmax.xlane.f32.xlu0 %v2067
      %v2069 = vpop.xlane.xlu0 %2068
      %v2070 = vsel %vm1291, %v1977, -inf
      %2071 = vmax.xlane.f32.xlu0 %v2070
      %v2072 = vpop.xlane.xlu0 %2071
      %v2073 = vsel %vm1291, %v2023, -inf
      %2074 = vmax.xlane.f32.xlu0 %v2073
      %v2075 = vpop.xlane.xlu0 %2074
      %v2076 = vsub.f32 %v1333, %v2030
      %v2077 = vsub.f32 %v1379, %v2033
      %v2078 = vsub.f32 %v1425, %v2036
      %v2079 = vsub.f32 %v1471, %v2039
      %v2080 = vsub.f32 %v1517, %v2042
      %v2081 = vsub.f32 %v1563, %v2045
      %v2082 = vsub.f32 %v1609, %v2048
      %v2083 = vsub.f32 %v1655, %v2051
      %v2084 = vsub.f32 %v1701, %v2054
      %v2085 = vsub.f32 %v1747, %v2057
      %v2086 = vsub.f32 %v1793, %v2060
      %v2087 = vsub.f32 %v1839, %v2063
      %v2088 = vsub.f32 %v1885, %v2066
      %v2089 = vsub.f32 %v1931, %v2069
      %v2090 = vsub.f32 %v1977, %v2072
      %v2091 = vsub.f32 %v2023, %v2075
      %v2092 = vmul.f32 %v2076, 1.442695
      %v2093 = vpow.pop %v2092
      %v2094 = vmul.f32 %v2077, 1.442695
      %v2095 = vpow.pop %v2094
      %v2096 = vmul.f32 %v2078, 1.442695
      %v2097 = vpow.pop %v2096
      %v2098 = vmul.f32 %v2079, 1.442695
      %v2099 = vpow.pop %v2098
      %v2100 = vmul.f32 %v2080, 1.442695
      %v2101 = vpow.pop %v2100
      %v2102 = vmul.f32 %v2081, 1.442695
      %v2103 = vpow.pop %v2102
      %v2104 = vmul.f32 %v2082, 1.442695
      %v2105 = vpow.pop %v2104
      %v2106 = vmul.f32 %v2083, 1.442695
      %v2107 = vpow.pop %v2106
      %v2108 = vmul.f32 %v2084, 1.442695
      %v2109 = vpow.pop %v2108
      %v2110 = vmul.f32 %v2085, 1.442695
      %v2111 = vpow.pop %v2110
      %v2112 = vmul.f32 %v2086, 1.442695
      %v2113 = vpow.pop %v2112
      %v2114 = vmul.f32 %v2087, 1.442695
      %v2115 = vpow.pop %v2114
      %v2116 = vmul.f32 %v2088, 1.442695
      %v2117 = vpow.pop %v2116
      %v2118 = vmul.f32 %v2089, 1.442695
      %v2119 = vpow.pop %v2118
      %v2120 = vmul.f32 %v2090, 1.442695
      %v2121 = vpow.pop %v2120
      %v2122 = vmul.f32 %v2091, 1.442695
      %v2123 = vpow.pop %v2122
      %v2124 = vsel %vm1291, %v2093, 0.0
      %2125 = vadd.xlane.f32.xlu0 %v2124
      %v2126 = vpop.xlane.xlu0 %2125
      %v2127 = vsel %vm1291, %v2095, 0.0
      %2128 = vadd.xlane.f32.xlu0 %v2127
      %v2129 = vpop.xlane.xlu0 %2128
      %v2130 = vsel %vm1291, %v2097, 0.0
      %2131 = vadd.xlane.f32.xlu0 %v2130
      %v2132 = vpop.xlane.xlu0 %2131
      %v2133 = vsel %vm1291, %v2099, 0.0
      %2134 = vadd.xlane.f32.xlu0 %v2133
      %v2135 = vpop.xlane.xlu0 %2134
      %v2136 = vsel %vm1291, %v2101, 0.0
      %2137 = vadd.xlane.f32.xlu0 %v2136
      %v2138 = vpop.xlane.xlu0 %2137
      %v2139 = vsel %vm1291, %v2103, 0.0
      %2140 = vadd.xlane.f32.xlu0 %v2139
      %v2141 = vpop.xlane.xlu0 %2140
      %v2142 = vsel %vm1291, %v2105, 0.0
      %2143 = vadd.xlane.f32.xlu0 %v2142
      %v2144 = vpop.xlane.xlu0 %2143
      %v2145 = vsel %vm1291, %v2107, 0.0
      %2146 = vadd.xlane.f32.xlu0 %v2145
      %v2147 = vpop.xlane.xlu0 %2146
      %v2148 = vsel %vm1291, %v2109, 0.0
      %2149 = vadd.xlane.f32.xlu0 %v2148
      %v2150 = vpop.xlane.xlu0 %2149
      %v2151 = vsel %vm1291, %v2111, 0.0
      %2152 = vadd.xlane.f32.xlu0 %v2151
      %v2153 = vpop.xlane.xlu0 %2152
      %v2154 = vsel %vm1291, %v2113, 0.0
      %2155 = vadd.xlane.f32.xlu0 %v2154
      %v2156 = vpop.xlane.xlu0 %2155
      %v2157 = vsel %vm1291, %v2115, 0.0
      %2158 = vadd.xlane.f32.xlu0 %v2157
      %v2159 = vpop.xlane.xlu0 %2158
      %v2160 = vsel %vm1291, %v2117, 0.0
      %2161 = vadd.xlane.f32.xlu0 %v2160
      %v2162 = vpop.xlane.xlu0 %2161
      %v2163 = vsel %vm1291, %v2119, 0.0
      %2164 = vadd.xlane.f32.xlu0 %v2163
      %v2165 = vpop.xlane.xlu0 %2164
      %v2166 = vsel %vm1291, %v2121, 0.0
      %2167 = vadd.xlane.f32.xlu0 %v2166
      %v2168 = vpop.xlane.xlu0 %2167
      %v2169 = vsel %vm1291, %v2123, 0.0
      %2170 = vadd.xlane.f32.xlu0 %v2169
      %v2171 = vpop.xlane.xlu0 %2170
      %v2172 = vrcp.pop %v2126
      %v2173 = vrcp.pop %v2129
      %v2174 = vrcp.pop %v2132
      %v2175 = vrcp.pop %v2135
      %v2176 = vrcp.pop %v2138
      %v2177 = vrcp.pop %v2141
      %v2178 = vrcp.pop %v2144
      %v2179 = vrcp.pop %v2147
      %v2180 = vrcp.pop %v2150
      %v2181 = vrcp.pop %v2153
      %v2182 = vrcp.pop %v2156
      %v2183 = vrcp.pop %v2159
      %v2184 = vrcp.pop %v2162
      %v2185 = vrcp.pop %v2165
      %v2186 = vrcp.pop %v2168
      %v2187 = vrcp.pop %v2171
      %v2188 = vmul.f32 %v2093, %v2172
      %v2189 = vmul.f32 %v2095, %v2173
      %v2190 = vmul.f32 %v2097, %v2174
      %v2191 = vmul.f32 %v2099, %v2175
      %v2192 = vmul.f32 %v2101, %v2176
      %v2193 = vmul.f32 %v2103, %v2177
      %v2194 = vmul.f32 %v2105, %v2178
      %v2195 = vmul.f32 %v2107, %v2179
      %v2196 = vmul.f32 %v2109, %v2180
      %v2197 = vmul.f32 %v2111, %v2181
      %v2198 = vmul.f32 %v2113, %v2182
      %v2199 = vmul.f32 %v2115, %v2183
      %v2200 = vmul.f32 %v2117, %v2184
      %v2201 = vmul.f32 %v2119, %v2185
      %v2202 = vmul.f32 %v2121, %v2186
      %v2203 = vmul.f32 %v2123, %v2187
      %v2204 = vpack.c.bf16 %v2188, %v2188
      %v2205 = vpack.c.bf16 %v2189, %v2189
      %v2206 = vpack.c.bf16 %v2190, %v2190
      %v2207 = vpack.c.bf16 %v2191, %v2191
      %v2208 = vpack.c.bf16 %v2192, %v2192
      %v2209 = vpack.c.bf16 %v2193, %v2193
      %v2210 = vpack.c.bf16 %v2194, %v2194
      %v2211 = vpack.c.bf16 %v2195, %v2195
      %v2212 = vpack.c.bf16 %v2196, %v2196
      %v2213 = vpack.c.bf16 %v2197, %v2197
      %v2214 = vpack.c.bf16 %v2198, %v2198
      %v2215 = vpack.c.bf16 %v2199, %v2199
      %v2216 = vpack.c.bf16 %v2200, %v2200
      %v2217 = vpack.c.bf16 %v2201, %v2201
      %v2218 = vpack.c.bf16 %v2202, %v2202
      %v2219 = vpack.c.bf16 %v2203, %v2203
      %v2221 = vsel %vm1291, %v2204, 0
      %vm2223 = vcmask 1043456
      %v2225 = vsel %vm2223, %v1275, 0
      %2227 = vmatprep.subr.bf16.mxu0 0
      %2228 = vmatpush1.bf16.msra.mxu0 %v2225
      %2229 = vmatprep.subr.bf16.mxu0 0
      %2230 = vmatpush1.bf16.msra.mxu0 0
      %2231 = vmatprep.subr.bf16.mxu0 0
      %2232 = vmatpush1.bf16.msra.mxu0 0
      %2233 = vmatprep.subr.bf16.mxu0 0
      %2234 = vmatpush1.bf16.msra.mxu0 0
      %2235 = vmatprep.subr.bf16.mxu0 0
      %2236 = vmatpush1.bf16.msra.mxu0 0
      %2237 = vmatprep.subr.bf16.mxu0 0
      %2238 = vmatpush1.bf16.msra.mxu0 0
      %2239 = vmatprep.subr.bf16.mxu0 0
      %2240 = vmatpush1.bf16.msra.mxu0 0
      %2241 = vmatprep.subr.bf16.mxu0 0
      %2242 = vmatpush1.bf16.msra.mxu0 0
      %2243 = vmatprep.subr.bf16.mxu0 0
      %2244 = vmatpush1.bf16.msra.mxu0 0
      %2245 = vmatprep.subr.bf16.mxu0 0
      %2246 = vmatpush1.bf16.msra.mxu0 0
      %2247 = vmatprep.subr.bf16.mxu0 0
      %2248 = vmatpush1.bf16.msra.mxu0 0
      %2249 = vmatprep.subr.bf16.mxu0 0
      %2250 = vmatpush1.bf16.msra.mxu0 0
      %2251 = vmatprep.subr.bf16.mxu0 0
      %2252 = vmatpush1.bf16.msra.mxu0 0
      %2253 = vmatprep.subr.bf16.mxu0 0
      %2254 = vmatpush1.bf16.msra.mxu0 0
      %2255 = vmatprep.subr.bf16.mxu0 0
      %2256 = vmatpush1.bf16.msra.mxu0 0
      %2257 = vmatprep.subr.bf16.mxu0 0
      %2258 = vmatpush1.bf16.msra.mxu0 0
      %2259 = vmatprep.mubr.bf16.mxu0 0
      %2260 = vmatmul.mubr.bf16.gmra.mrb[0].mxu0 %v2221
      %v2261 = vpop.f32.mrb[0].mxu0
      %v2262 = vadd.f32 0.0, %v2261
      %v2263 = vpop.f32.mrb[0].mxu0
      %v2264 = vpop.f32.mrb[0].mxu0
      %v2265 = vpop.f32.mrb[0].mxu0
      %2266 = vdwg.mxu0
      %v2268 = vsel %vm1291, %v2205, 0
      %v2271 = vsel %vm2223, %v1276, 0
      %2273 = vmatprep.subr.bf16.mxu0 0
      %2274 = vmatpush1.bf16.msra.mxu0 %v2271
      %2275 = vmatprep.subr.bf16.mxu0 0
      %2276 = vmatpush1.bf16.msra.mxu0 0
      %2277 = vmatprep.subr.bf16.mxu0 0
      %2278 = vmatpush1.bf16.msra.mxu0 0
      %2279 = vmatprep.subr.bf16.mxu0 0
      %2280 = vmatpush1.bf16.msra.mxu0 0
      %2281 = vmatprep.subr.bf16.mxu0 0
      %2282 = vmatpush1.bf16.msra.mxu0 0
      %2283 = vmatprep.subr.bf16.mxu0 0
      %2284 = vmatpush1.bf16.msra.mxu0 0
      %2285 = vmatprep.subr.bf16.mxu0 0
      %2286 = vmatpush1.bf16.msra.mxu0 0
      %2287 = vmatprep.subr.bf16.mxu0 0
      %2288 = vmatpush1.bf16.msra.mxu0 0
      %2289 = vmatprep.subr.bf16.mxu0 0
      %2290 = vmatpush1.bf16.msra.mxu0 0
      %2291 = vmatprep.subr.bf16.mxu0 0
      %2292 = vmatpush1.bf16.msra.mxu0 0
      %2293 = vmatprep.subr.bf16.mxu0 0
      %2294 = vmatpush1.bf16.msra.mxu0 0
      %2295 = vmatprep.subr.bf16.mxu0 0
      %2296 = vmatpush1.bf16.msra.mxu0 0
      %2297 = vmatprep.subr.bf16.mxu0 0
      %2298 = vmatpush1.bf16.msra.mxu0 0
      %2299 = vmatprep.subr.bf16.mxu0 0
      %2300 = vmatpush1.bf16.msra.mxu0 0
      %2301 = vmatprep.subr.bf16.mxu0 0
      %2302 = vmatpush1.bf16.msra.mxu0 0
      %2303 = vmatprep.subr.bf16.mxu0 0
      %2304 = vmatpush1.bf16.msra.mxu0 0
      %2305 = vmatprep.mubr.bf16.mxu0 0
      %2306 = vmatmul.mubr.bf16.gmra.mrb[0].mxu0 %v2268
      %v2307 = vpop.f32.mrb[0].mxu0
      %v2308 = vadd.f32 0.0, %v2307
      %v2309 = vpop.f32.mrb[0].mxu0
      %v2310 = vpop.f32.mrb[0].mxu0
      %v2311 = vpop.f32.mrb[0].mxu0
      %2312 = vdwg.mxu0
      %v2314 = vsel %vm1291, %v2206, 0
      %v2317 = vsel %vm2223, %v1277, 0
      %2319 = vmatprep.subr.bf16.mxu0 0
      %2320 = vmatpush1.bf16.msra.mxu0 %v2317
      %2321 = vmatprep.subr.bf16.mxu0 0
      %2322 = vmatpush1.bf16.msra.mxu0 0
      %2323 = vmatprep.subr.bf16.mxu0 0
      %2324 = vmatpush1.bf16.msra.mxu0 0
      %2325 = vmatprep.subr.bf16.mxu0 0
      %2326 = vmatpush1.bf16.msra.mxu0 0
      %2327 = vmatprep.subr.bf16.mxu0 0
      %2328 = vmatpush1.bf16.msra.mxu0 0
      %2329 = vmatprep.subr.bf16.mxu0 0
      %2330 = vmatpush1.bf16.msra.mxu0 0
      %2331 = vmatprep.subr.bf16.mxu0 0
      %2332 = vmatpush1.bf16.msra.mxu0 0
      %2333 = vmatprep.subr.bf16.mxu0 0
      %2334 = vmatpush1.bf16.msra.mxu0 0
      %2335 = vmatprep.subr.bf16.mxu0 0
      %2336 = vmatpush1.bf16.msra.mxu0 0
      %2337 = vmatprep.subr.bf16.mxu0 0
      %2338 = vmatpush1.bf16.msra.mxu0 0
      %2339 = vmatprep.subr.bf16.mxu0 0
      %2340 = vmatpush1.bf16.msra.mxu0 0
      %2341 = vmatprep.subr.bf16.mxu0 0
      %2342 = vmatpush1.bf16.msra.mxu0 0
      %2343 = vmatprep.subr.bf16.mxu0 0
      %2344 = vmatpush1.bf16.msra.mxu0 0
      %2345 = vmatprep.subr.bf16.mxu0 0
      %2346 = vmatpush1.bf16.msra.mxu0 0
      %2347 = vmatprep.subr.bf16.mxu0 0
      %2348 = vmatpush1.bf16.msra.mxu0 0
      %2349 = vmatprep.subr.bf16.mxu0 0
      %2350 = vmatpush1.bf16.msra.mxu0 0
      %2351 = vmatprep.mubr.bf16.mxu0 0
      %2352 = vmatmul.mubr.bf16.gmra.mrb[0].mxu0 %v2314
      %v2353 = vpop.f32.mrb[0].mxu0
      %v2354 = vadd.f32 0.0, %v2353
      %v2355 = vpop.f32.mrb[0].mxu0
      %v2356 = vpop.f32.mrb[0].mxu0
      %v2357 = vpop.f32.mrb[0].mxu0
      %2358 = vdwg.mxu0
      %v2360 = vsel %vm1291, %v2207, 0
      %v2363 = vsel %vm2223, %v1278, 0
      %2365 = vmatprep.subr.bf16.mxu0 0
      %2366 = vmatpush1.bf16.msra.mxu0 %v2363
      %2367 = vmatprep.subr.bf16.mxu0 0
      %2368 = vmatpush1.bf16.msra.mxu0 0
      %2369 = vmatprep.subr.bf16.mxu0 0
      %2370 = vmatpush1.bf16.msra.mxu0 0
      %2371 = vmatprep.subr.bf16.mxu0 0
      %2372 = vmatpush1.bf16.msra.mxu0 0
      %2373 = vmatprep.subr.bf16.mxu0 0
      %2374 = vmatpush1.bf16.msra.mxu0 0
      %2375 = vmatprep.subr.bf16.mxu0 0
      %2376 = vmatpush1.bf16.msra.mxu0 0
      %2377 = vmatprep.subr.bf16.mxu0 0
      %2378 = vmatpush1.bf16.msra.mxu0 0
      %2379 = vmatprep.subr.bf16.mxu0 0
      %2380 = vmatpush1.bf16.msra.mxu0 0
      %2381 = vmatprep.subr.bf16.mxu0 0
      %2382 = vmatpush1.bf16.msra.mxu0 0
      %2383 = vmatprep.subr.bf16.mxu0 0
      %2384 = vmatpush1.bf16.msra.mxu0 0
      %2385 = vmatprep.subr.bf16.mxu0 0
      %2386 = vmatpush1.bf16.msra.mxu0 0
      %2387 = vmatprep.subr.bf16.mxu0 0
      %2388 = vmatpush1.bf16.msra.mxu0 0
      %2389 = vmatprep.subr.bf16.mxu0 0
      %2390 = vmatpush1.bf16.msra.mxu0 0
      %2391 = vmatprep.subr.bf16.mxu0 0
      %2392 = vmatpush1.bf16.msra.mxu0 0
      %2393 = vmatprep.subr.bf16.mxu0 0
      %2394 = vmatpush1.bf16.msra.mxu0 0
      %2395 = vmatprep.subr.bf16.mxu0 0
      %2396 = vmatpush1.bf16.msra.mxu0 0
      %2397 = vmatprep.mubr.bf16.mxu0 0
      %2398 = vmatmul.mubr.bf16.gmra.mrb[0].mxu0 %v2360
      %v2399 = vpop.f32.mrb[0].mxu0
      %v2400 = vadd.f32 0.0, %v2399
      %v2401 = vpop.f32.mrb[0].mxu0
      %v2402 = vpop.f32.mrb[0].mxu0
      %v2403 = vpop.f32.mrb[0].mxu0
      %2404 = vdwg.mxu0
      %v2406 = vsel %vm1291, %v2208, 0
      %v2409 = vsel %vm2223, %v1279, 0
      %2411 = vmatprep.subr.bf16.mxu0 0
      %2412 = vmatpush1.bf16.msra.mxu0 %v2409
      %2413 = vmatprep.subr.bf16.mxu0 0
      %2414 = vmatpush1.bf16.msra.mxu0 0
      %2415 = vmatprep.subr.bf16.mxu0 0
      %2416 = vmatpush1.bf16.msra.mxu0 0
      %2417 = vmatprep.subr.bf16.mxu0 0
      %2418 = vmatpush1.bf16.msra.mxu0 0
      %2419 = vmatprep.subr.bf16.mxu0 0
      %2420 = vmatpush1.bf16.msra.mxu0 0
      %2421 = vmatprep.subr.bf16.mxu0 0
      %2422 = vmatpush1.bf16.msra.mxu0 0
      %2423 = vmatprep.subr.bf16.mxu0 0
      %2424 = vmatpush1.bf16.msra.mxu0 0
      %2425 = vmatprep.subr.bf16.mxu0 0
      %2426 = vmatpush1.bf16.msra.mxu0 0
      %2427 = vmatprep.subr.bf16.mxu0 0
      %2428 = vmatpush1.bf16.msra.mxu0 0
      %2429 = vmatprep.subr.bf16.mxu0 0
      %2430 = vmatpush1.bf16.msra.mxu0 0
      %2431 = vmatprep.subr.bf16.mxu0 0
      %2432 = vmatpush1.bf16.msra.mxu0 0
      %2433 = vmatprep.subr.bf16.mxu0 0
      %2434 = vmatpush1.bf16.msra.mxu0 0
      %2435 = vmatprep.subr.bf16.mxu0 0
      %2436 = vmatpush1.bf16.msra.mxu0 0
      %2437 = vmatprep.subr.bf16.mxu0 0
      %2438 = vmatpush1.bf16.msra.mxu0 0
      %2439 = vmatprep.subr.bf16.mxu0 0
      %2440 = vmatpush1.bf16.msra.mxu0 0
      %2441 = vmatprep.subr.bf16.mxu0 0
      %2442 = vmatpush1.bf16.msra.mxu0 0
      %2443 = vmatprep.mubr.bf16.mxu0 0
      %2444 = vmatmul.mubr.bf16.gmra.mrb[0].mxu0 %v2406
      %v2445 = vpop.f32.mrb[0].mxu0
      %v2446 = vadd.f32 0.0, %v2445
      %v2447 = vpop.f32.mrb[0].mxu0
      %v2448 = vpop.f32.mrb[0].mxu0
      %v2449 = vpop.f32.mrb[0].mxu0
      %2450 = vdwg.mxu0
      %v2452 = vsel %vm1291, %v2209, 0
      %v2455 = vsel %vm2223, %v1280, 0
      %2457 = vmatprep.subr.bf16.mxu0 0
      %2458 = vmatpush1.bf16.msra.mxu0 %v2455
      %2459 = vmatprep.subr.bf16.mxu0 0
      %2460 = vmatpush1.bf16.msra.mxu0 0
      %2461 = vmatprep.subr.bf16.mxu0 0
      %2462 = vmatpush1.bf16.msra.mxu0 0
      %2463 = vmatprep.subr.bf16.mxu0 0
      %2464 = vmatpush1.bf16.msra.mxu0 0
      %2465 = vmatprep.subr.bf16.mxu0 0
      %2466 = vmatpush1.bf16.msra.mxu0 0
      %2467 = vmatprep.subr.bf16.mxu0 0
      %2468 = vmatpush1.bf16.msra.mxu0 0
      %2469 = vmatprep.subr.bf16.mxu0 0
      %2470 = vmatpush1.bf16.msra.mxu0 0
      %2471 = vmatprep.subr.bf16.mxu0 0
      %2472 = vmatpush1.bf16.msra.mxu0 0
      %2473 = vmatprep.subr.bf16.mxu0 0
      %2474 = vmatpush1.bf16.msra.mxu0 0
      %2475 = vmatprep.subr.bf16.mxu0 0
      %2476 = vmatpush1.bf16.msra.mxu0 0
      %2477 = vmatprep.subr.bf16.mxu0 0
      %2478 = vmatpush1.bf16.msra.mxu0 0
      %2479 = vmatprep.subr.bf16.mxu0 0
      %2480 = vmatpush1.bf16.msra.mxu0 0
      %2481 = vmatprep.subr.bf16.mxu0 0
      %2482 = vmatpush1.bf16.msra.mxu0 0
      %2483 = vmatprep.subr.bf16.mxu0 0
      %2484 = vmatpush1.bf16.msra.mxu0 0
      %2485 = vmatprep.subr.bf16.mxu0 0
      %2486 = vmatpush1.bf16.msra.mxu0 0
      %2487 = vmatprep.subr.bf16.mxu0 0
      %2488 = vmatpush1.bf16.msra.mxu0 0
      %2489 = vmatprep.mubr.bf16.mxu0 0
      %2490 = vmatmul.mubr.bf16.gmra.mrb[0].mxu0 %v2452
      %v2491 = vpop.f32.mrb[0].mxu0
      %v2492 = vadd.f32 0.0, %v2491
      %v2493 = vpop.f32.mrb[0].mxu0
      %v2494 = vpop.f32.mrb[0].mxu0
      %v2495 = vpop.f32.mrb[0].mxu0
      %2496 = vdwg.mxu0
      %v2498 = vsel %vm1291, %v2210, 0
      %v2501 = vsel %vm2223, %v1281, 0
      %2503 = vmatprep.subr.bf16.mxu0 0
      %2504 = vmatpush1.bf16.msra.mxu0 %v2501
      %2505 = vmatprep.subr.bf16.mxu0 0
      %2506 = vmatpush1.bf16.msra.mxu0 0
      %2507 = vmatprep.subr.bf16.mxu0 0
      %2508 = vmatpush1.bf16.msra.mxu0 0
      %2509 = vmatprep.subr.bf16.mxu0 0
      %2510 = vmatpush1.bf16.msra.mxu0 0
      %2511 = vmatprep.subr.bf16.mxu0 0
      %2512 = vmatpush1.bf16.msra.mxu0 0
      %2513 = vmatprep.subr.bf16.mxu0 0
      %2514 = vmatpush1.bf16.msra.mxu0 0
      %2515 = vmatprep.subr.bf16.mxu0 0
      %2516 = vmatpush1.bf16.msra.mxu0 0
      %2517 = vmatprep.subr.bf16.mxu0 0
      %2518 = vmatpush1.bf16.msra.mxu0 0
      %2519 = vmatprep.subr.bf16.mxu0 0
      %2520 = vmatpush1.bf16.msra.mxu0 0
      %2521 = vmatprep.subr.bf16.mxu0 0
      %2522 = vmatpush1.bf16.msra.mxu0 0
      %2523 = vmatprep.subr.bf16.mxu0 0
      %2524 = vmatpush1.bf16.msra.mxu0 0
      %2525 = vmatprep.subr.bf16.mxu0 0
      %2526 = vmatpush1.bf16.msra.mxu0 0
      %2527 = vmatprep.subr.bf16.mxu0 0
      %2528 = vmatpush1.bf16.msra.mxu0 0
      %2529 = vmatprep.subr.bf16.mxu0 0
      %2530 = vmatpush1.bf16.msra.mxu0 0
      %2531 = vmatprep.subr.bf16.mxu0 0
      %2532 = vmatpush1.bf16.msra.mxu0 0
      %2533 = vmatprep.subr.bf16.mxu0 0
      %2534 = vmatpush1.bf16.msra.mxu0 0
      %2535 = vmatprep.mubr.bf16.mxu0 0
      %2536 = vmatmul.mubr.bf16.gmra.mrb[0].mxu0 %v2498
      %v2537 = vpop.f32.mrb[0].mxu0
      %v2538 = vadd.f32 0.0, %v2537
      %v2539 = vpop.f32.mrb[0].mxu0
      %v2540 = vpop.f32.mrb[0].mxu0
      %v2541 = vpop.f32.mrb[0].mxu0
      %2542 = vdwg.mxu0
      %v2544 = vsel %vm1291, %v2211, 0
      %v2547 = vsel %vm2223, %v1282, 0
      %2549 = vmatprep.subr.bf16.mxu0 0
      %2550 = vmatpush1.bf16.msra.mxu0 %v2547
      %2551 = vmatprep.subr.bf16.mxu0 0
      %2552 = vmatpush1.bf16.msra.mxu0 0
      %2553 = vmatprep.subr.bf16.mxu0 0
      %2554 = vmatpush1.bf16.msra.mxu0 0
      %2555 = vmatprep.subr.bf16.mxu0 0
      %2556 = vmatpush1.bf16.msra.mxu0 0
      %2557 = vmatprep.subr.bf16.mxu0 0
      %2558 = vmatpush1.bf16.msra.mxu0 0
      %2559 = vmatprep.subr.bf16.mxu0 0
      %2560 = vmatpush1.bf16.msra.mxu0 0
      %2561 = vmatprep.subr.bf16.mxu0 0
      %2562 = vmatpush1.bf16.msra.mxu0 0
      %2563 = vmatprep.subr.bf16.mxu0 0
      %2564 = vmatpush1.bf16.msra.mxu0 0
      %2565 = vmatprep.subr.bf16.mxu0 0
      %2566 = vmatpush1.bf16.msra.mxu0 0
      %2567 = vmatprep.subr.bf16.mxu0 0
      %2568 = vmatpush1.bf16.msra.mxu0 0
      %2569 = vmatprep.subr.bf16.mxu0 0
      %2570 = vmatpush1.bf16.msra.mxu0 0
      %2571 = vmatprep.subr.bf16.mxu0 0
      %2572 = vmatpush1.bf16.msra.mxu0 0
      %2573 = vmatprep.subr.bf16.mxu0 0
      %2574 = vmatpush1.bf16.msra.mxu0 0
      %2575 = vmatprep.subr.bf16.mxu0 0
      %2576 = vmatpush1.bf16.msra.mxu0 0
      %2577 = vmatprep.subr.bf16.mxu0 0
      %2578 = vmatpush1.bf16.msra.mxu0 0
      %2579 = vmatprep.subr.bf16.mxu0 0
      %2580 = vmatpush1.bf16.msra.mxu0 0
      %2581 = vmatprep.mubr.bf16.mxu0 0
      %2582 = vmatmul.mubr.bf16.gmra.mrb[0].mxu0 %v2544
      %v2583 = vpop.f32.mrb[0].mxu0
      %v2584 = vadd.f32 0.0, %v2583
      %v2585 = vpop.f32.mrb[0].mxu0
      %v2586 = vpop.f32.mrb[0].mxu0
      %v2587 = vpop.f32.mrb[0].mxu0
      %2588 = vdwg.mxu0
      %v2590 = vsel %vm1291, %v2212, 0
      %v2593 = vsel %vm2223, %v1283, 0
      %2595 = vmatprep.subr.bf16.mxu0 0
      %2596 = vmatpush1.bf16.msra.mxu0 %v2593
      %2597 = vmatprep.subr.bf16.mxu0 0
      %2598 = vmatpush1.bf16.msra.mxu0 0
      %2599 = vmatprep.subr.bf16.mxu0 0
      %2600 = vmatpush1.bf16.msra.mxu0 0
      %2601 = vmatprep.subr.bf16.mxu0 0
      %2602 = vmatpush1.bf16.msra.mxu0 0
      %2603 = vmatprep.subr.bf16.mxu0 0
      %2604 = vmatpush1.bf16.msra.mxu0 0
      %2605 = vmatprep.subr.bf16.mxu0 0
      %2606 = vmatpush1.bf16.msra.mxu0 0
      %2607 = vmatprep.subr.bf16.mxu0 0
      %2608 = vmatpush1.bf16.msra.mxu0 0
      %2609 = vmatprep.subr.bf16.mxu0 0
      %2610 = vmatpush1.bf16.msra.mxu0 0
      %2611 = vmatprep.subr.bf16.mxu0 0
      %2612 = vmatpush1.bf16.msra.mxu0 0
      %2613 = vmatprep.subr.bf16.mxu0 0
      %2614 = vmatpush1.bf16.msra.mxu0 0
      %2615 = vmatprep.subr.bf16.mxu0 0
      %2616 = vmatpush1.bf16.msra.mxu0 0
      %2617 = vmatprep.subr.bf16.mxu0 0
      %2618 = vmatpush1.bf16.msra.mxu0 0
      %2619 = vmatprep.subr.bf16.mxu0 0
      %2620 = vmatpush1.bf16.msra.mxu0 0
      %2621 = vmatprep.subr.bf16.mxu0 0
      %2622 = vmatpush1.bf16.msra.mxu0 0
      %2623 = vmatprep.subr.bf16.mxu0 0
      %2624 = vmatpush1.bf16.msra.mxu0 0
      %2625 = vmatprep.subr.bf16.mxu0 0
      %2626 = vmatpush1.bf16.msra.mxu0 0
      %2627 = vmatprep.mubr.bf16.mxu0 0
      %2628 = vmatmul.mubr.bf16.gmra.mrb[0].mxu0 %v2590
      %v2629 = vpop.f32.mrb[0].mxu0
      %v2630 = vadd.f32 0.0, %v2629
      %v2631 = vpop.f32.mrb[0].mxu0
      %v2632 = vpop.f32.mrb[0].mxu0
      %v2633 = vpop.f32.mrb[0].mxu0
      %2634 = vdwg.mxu0
      %v2636 = vsel %vm1291, %v2213, 0
      %v2639 = vsel %vm2223, %v1284, 0
      %2641 = vmatprep.subr.bf16.mxu0 0
      %2642 = vmatpush1.bf16.msra.mxu0 %v2639
      %2643 = vmatprep.subr.bf16.mxu0 0
      %2644 = vmatpush1.bf16.msra.mxu0 0
      %2645 = vmatprep.subr.bf16.mxu0 0
      %2646 = vmatpush1.bf16.msra.mxu0 0
      %2647 = vmatprep.subr.bf16.mxu0 0
      %2648 = vmatpush1.bf16.msra.mxu0 0
      %2649 = vmatprep.subr.bf16.mxu0 0
      %2650 = vmatpush1.bf16.msra.mxu0 0
      %2651 = vmatprep.subr.bf16.mxu0 0
      %2652 = vmatpush1.bf16.msra.mxu0 0
      %2653 = vmatprep.subr.bf16.mxu0 0
      %2654 = vmatpush1.bf16.msra.mxu0 0
      %2655 = vmatprep.subr.bf16.mxu0 0
      %2656 = vmatpush1.bf16.msra.mxu0 0
      %2657 = vmatprep.subr.bf16.mxu0 0
      %2658 = vmatpush1.bf16.msra.mxu0 0
      %2659 = vmatprep.subr.bf16.mxu0 0
      %2660 = vmatpush1.bf16.msra.mxu0 0
      %2661 = vmatprep.subr.bf16.mxu0 0
      %2662 = vmatpush1.bf16.msra.mxu0 0
      %2663 = vmatprep.subr.bf16.mxu0 0
      %2664 = vmatpush1.bf16.msra.mxu0 0
      %2665 = vmatprep.subr.bf16.mxu0 0
      %2666 = vmatpush1.bf16.msra.mxu0 0
      %2667 = vmatprep.subr.bf16.mxu0 0
      %2668 = vmatpush1.bf16.msra.mxu0 0
      %2669 = vmatprep.subr.bf16.mxu0 0
      %2670 = vmatpush1.bf16.msra.mxu0 0
      %2671 = vmatprep.subr.bf16.mxu0 0
      %2672 = vmatpush1.bf16.msra.mxu0 0
      %2673 = vmatprep.mubr.bf16.mxu0 0
      %2674 = vmatmul.mubr.bf16.gmra.mrb[0].mxu0 %v2636
      %v2675 = vpop.f32.mrb[0].mxu0
      %v2676 = vadd.f32 0.0, %v2675
      %v2677 = vpop.f32.mrb[0].mxu0
      %v2678 = vpop.f32.mrb[0].mxu0
      %v2679 = vpop.f32.mrb[0].mxu0
      %2680 = vdwg.mxu0
      %v2682 = vsel %vm1291, %v2214, 0
      %v2685 = vsel %vm2223, %v1285, 0
      %2687 = vmatprep.subr.bf16.mxu0 0
      %2688 = vmatpush1.bf16.msra.mxu0 %v2685
      %2689 = vmatprep.subr.bf16.mxu0 0
      %2690 = vmatpush1.bf16.msra.mxu0 0
      %2691 = vmatprep.subr.bf16.mxu0 0
      %2692 = vmatpush1.bf16.msra.mxu0 0
      %2693 = vmatprep.subr.bf16.mxu0 0
      %2694 = vmatpush1.bf16.msra.mxu0 0
      %2695 = vmatprep.subr.bf16.mxu0 0
      %2696 = vmatpush1.bf16.msra.mxu0 0
      %2697 = vmatprep.subr.bf16.mxu0 0
      %2698 = vmatpush1.bf16.msra.mxu0 0
      %2699 = vmatprep.subr.bf16.mxu0 0
      %2700 = vmatpush1.bf16.msra.mxu0 0
      %2701 = vmatprep.subr.bf16.mxu0 0
      %2702 = vmatpush1.bf16.msra.mxu0 0
      %2703 = vmatprep.subr.bf16.mxu0 0
      %2704 = vmatpush1.bf16.msra.mxu0 0
      %2705 = vmatprep.subr.bf16.mxu0 0
      %2706 = vmatpush1.bf16.msra.mxu0 0
      %2707 = vmatprep.subr.bf16.mxu0 0
      %2708 = vmatpush1.bf16.msra.mxu0 0
      %2709 = vmatprep.subr.bf16.mxu0 0
      %2710 = vmatpush1.bf16.msra.mxu0 0
      %2711 = vmatprep.subr.bf16.mxu0 0
      %2712 = vmatpush1.bf16.msra.mxu0 0
      %2713 = vmatprep.subr.bf16.mxu0 0
      %2714 = vmatpush1.bf16.msra.mxu0 0
      %2715 = vmatprep.subr.bf16.mxu0 0
      %2716 = vmatpush1.bf16.msra.mxu0 0
      %2717 = vmatprep.subr.bf16.mxu0 0
      %2718 = vmatpush1.bf16.msra.mxu0 0
      %2719 = vmatprep.mubr.bf16.mxu0 0
      %2720 = vmatmul.mubr.bf16.gmra.mrb[0].mxu0 %v2682
      %v2721 = vpop.f32.mrb[0].mxu0
      %v2722 = vadd.f32 0.0, %v2721
      %v2723 = vpop.f32.mrb[0].mxu0
      %v2724 = vpop.f32.mrb[0].mxu0
      %v2725 = vpop.f32.mrb[0].mxu0
      %2726 = vdwg.mxu0
      %v2728 = vsel %vm1291, %v2215, 0
      %v2731 = vsel %vm2223, %v1286, 0
      %2733 = vmatprep.subr.bf16.mxu0 0
      %2734 = vmatpush1.bf16.msra.mxu0 %v2731
      %2735 = vmatprep.subr.bf16.mxu0 0
      %2736 = vmatpush1.bf16.msra.mxu0 0
      %2737 = vmatprep.subr.bf16.mxu0 0
      %2738 = vmatpush1.bf16.msra.mxu0 0
      %2739 = vmatprep.subr.bf16.mxu0 0
      %2740 = vmatpush1.bf16.msra.mxu0 0
      %2741 = vmatprep.subr.bf16.mxu0 0
      %2742 = vmatpush1.bf16.msra.mxu0 0
      %2743 = vmatprep.subr.bf16.mxu0 0
      %2744 = vmatpush1.bf16.msra.mxu0 0
      %2745 = vmatprep.subr.bf16.mxu0 0
      %2746 = vmatpush1.bf16.msra.mxu0 0
      %2747 = vmatprep.subr.bf16.mxu0 0
      %2748 = vmatpush1.bf16.msra.mxu0 0
      %2749 = vmatprep.subr.bf16.mxu0 0
      %2750 = vmatpush1.bf16.msra.mxu0 0
      %2751 = vmatprep.subr.bf16.mxu0 0
      %2752 = vmatpush1.bf16.msra.mxu0 0
      %2753 = vmatprep.subr.bf16.mxu0 0
      %2754 = vmatpush1.bf16.msra.mxu0 0
      %2755 = vmatprep.subr.bf16.mxu0 0
      %2756 = vmatpush1.bf16.msra.mxu0 0
      %2757 = vmatprep.subr.bf16.mxu0 0
      %2758 = vmatpush1.bf16.msra.mxu0 0
      %2759 = vmatprep.subr.bf16.mxu0 0
      %2760 = vmatpush1.bf16.msra.mxu0 0
      %2761 = vmatprep.subr.bf16.mxu0 0
      %2762 = vmatpush1.bf16.msra.mxu0 0
      %2763 = vmatprep.subr.bf16.mxu0 0
      %2764 = vmatpush1.bf16.msra.mxu0 0
      %2765 = vmatprep.mubr.bf16.mxu0 0
      %2766 = vmatmul.mubr.bf16.gmra.mrb[0].mxu0 %v2728
      %v2767 = vpop.f32.mrb[0].mxu0
      %v2768 = vadd.f32 0.0, %v2767
      %v2769 = vpop.f32.mrb[0].mxu0
      %v2770 = vpop.f32.mrb[0].mxu0
      %v2771 = vpop.f32.mrb[0].mxu0
      %2772 = vdwg.mxu0
      %v2774 = vsel %vm1291, %v2216, 0
      %v2777 = vsel %vm2223, %v1287, 0
      %2779 = vmatprep.subr.bf16.mxu0 0
      %2780 = vmatpush1.bf16.msra.mxu0 %v2777
      %2781 = vmatprep.subr.bf16.mxu0 0
      %2782 = vmatpush1.bf16.msra.mxu0 0
      %2783 = vmatprep.subr.bf16.mxu0 0
      %2784 = vmatpush1.bf16.msra.mxu0 0
      %2785 = vmatprep.subr.bf16.mxu0 0
      %2786 = vmatpush1.bf16.msra.mxu0 0
      %2787 = vmatprep.subr.bf16.mxu0 0
      %2788 = vmatpush1.bf16.msra.mxu0 0
      %2789 = vmatprep.subr.bf16.mxu0 0
      %2790 = vmatpush1.bf16.msra.mxu0 0
      %2791 = vmatprep.subr.bf16.mxu0 0
      %2792 = vmatpush1.bf16.msra.mxu0 0
      %2793 = vmatprep.subr.bf16.mxu0 0
      %2794 = vmatpush1.bf16.msra.mxu0 0
      %2795 = vmatprep.subr.bf16.mxu0 0
      %2796 = vmatpush1.bf16.msra.mxu0 0
      %2797 = vmatprep.subr.bf16.mxu0 0
      %2798 = vmatpush1.bf16.msra.mxu0 0
      %2799 = vmatprep.subr.bf16.mxu0 0
      %2800 = vmatpush1.bf16.msra.mxu0 0
      %2801 = vmatprep.subr.bf16.mxu0 0
      %2802 = vmatpush1.bf16.msra.mxu0 0
      %2803 = vmatprep.subr.bf16.mxu0 0
      %2804 = vmatpush1.bf16.msra.mxu0 0
      %2805 = vmatprep.subr.bf16.mxu0 0
      %2806 = vmatpush1.bf16.msra.mxu0 0
      %2807 = vmatprep.subr.bf16.mxu0 0
      %2808 = vmatpush1.bf16.msra.mxu0 0
      %2809 = vmatprep.subr.bf16.mxu0 0
      %2810 = vmatpush1.bf16.msra.mxu0 0
      %2811 = vmatprep.mubr.bf16.mxu0 0
      %2812 = vmatmul.mubr.bf16.gmra.mrb[0].mxu0 %v2774
      %v2813 = vpop.f32.mrb[0].mxu0
      %v2814 = vadd.f32 0.0, %v2813
      %v2815 = vpop.f32.mrb[0].mxu0
      %v2816 = vpop.f32.mrb[0].mxu0
      %v2817 = vpop.f32.mrb[0].mxu0
      %2818 = vdwg.mxu0
      %v2820 = vsel %vm1291, %v2217, 0
      %v2823 = vsel %vm2223, %v1288, 0
      %2825 = vmatprep.subr.bf16.mxu0 0
      %2826 = vmatpush1.bf16.msra.mxu0 %v2823
      %2827 = vmatprep.subr.bf16.mxu0 0
      %2828 = vmatpush1.bf16.msra.mxu0 0
      %2829 = vmatprep.subr.bf16.mxu0 0
      %2830 = vmatpush1.bf16.msra.mxu0 0
      %2831 = vmatprep.subr.bf16.mxu0 0
      %2832 = vmatpush1.bf16.msra.mxu0 0
      %2833 = vmatprep.subr.bf16.mxu0 0
      %2834 = vmatpush1.bf16.msra.mxu0 0
      %2835 = vmatprep.subr.bf16.mxu0 0
      %2836 = vmatpush1.bf16.msra.mxu0 0
      %2837 = vmatprep.subr.bf16.mxu0 0
      %2838 = vmatpush1.bf16.msra.mxu0 0
      %2839 = vmatprep.subr.bf16.mxu0 0
      %2840 = vmatpush1.bf16.msra.mxu0 0
      %2841 = vmatprep.subr.bf16.mxu0 0
      %2842 = vmatpush1.bf16.msra.mxu0 0
      %2843 = vmatprep.subr.bf16.mxu0 0
      %2844 = vmatpush1.bf16.msra.mxu0 0
      %2845 = vmatprep.subr.bf16.mxu0 0
      %2846 = vmatpush1.bf16.msra.mxu0 0
      %2847 = vmatprep.subr.bf16.mxu0 0
      %2848 = vmatpush1.bf16.msra.mxu0 0
      %2849 = vmatprep.subr.bf16.mxu0 0
      %2850 = vmatpush1.bf16.msra.mxu0 0
      %2851 = vmatprep.subr.bf16.mxu0 0
      %2852 = vmatpush1.bf16.msra.mxu0 0
      %2853 = vmatprep.subr.bf16.mxu0 0
      %2854 = vmatpush1.bf16.msra.mxu0 0
      %2855 = vmatprep.subr.bf16.mxu0 0
      %2856 = vmatpush1.bf16.msra.mxu0 0
      %2857 = vmatprep.mubr.bf16.mxu0 0
      %2858 = vmatmul.mubr.bf16.gmra.mrb[0].mxu0 %v2820
      %v2859 = vpop.f32.mrb[0].mxu0
      %v2860 = vadd.f32 0.0, %v2859
      %v2861 = vpop.f32.mrb[0].mxu0
      %v2862 = vpop.f32.mrb[0].mxu0
      %v2863 = vpop.f32.mrb[0].mxu0
      %2864 = vdwg.mxu0
      %v2866 = vsel %vm1291, %v2218, 0
      %v2869 = vsel %vm2223, %v1289, 0
      %2871 = vmatprep.subr.bf16.mxu0 0
      %2872 = vmatpush1.bf16.msra.mxu0 %v2869
      %2873 = vmatprep.subr.bf16.mxu0 0
      %2874 = vmatpush1.bf16.msra.mxu0 0
      %2875 = vmatprep.subr.bf16.mxu0 0
      %2876 = vmatpush1.bf16.msra.mxu0 0
      %2877 = vmatprep.subr.bf16.mxu0 0
      %2878 = vmatpush1.bf16.msra.mxu0 0
      %2879 = vmatprep.subr.bf16.mxu0 0
      %2880 = vmatpush1.bf16.msra.mxu0 0
      %2881 = vmatprep.subr.bf16.mxu0 0
      %2882 = vmatpush1.bf16.msra.mxu0 0
      %2883 = vmatprep.subr.bf16.mxu0 0
      %2884 = vmatpush1.bf16.msra.mxu0 0
      %2885 = vmatprep.subr.bf16.mxu0 0
      %2886 = vmatpush1.bf16.msra.mxu0 0
      %2887 = vmatprep.subr.bf16.mxu0 0
      %2888 = vmatpush1.bf16.msra.mxu0 0
      %2889 = vmatprep.subr.bf16.mxu0 0
      %2890 = vmatpush1.bf16.msra.mxu0 0
      %2891 = vmatprep.subr.bf16.mxu0 0
      %2892 = vmatpush1.bf16.msra.mxu0 0
      %2893 = vmatprep.subr.bf16.mxu0 0
      %2894 = vmatpush1.bf16.msra.mxu0 0
      %2895 = vmatprep.subr.bf16.mxu0 0
      %2896 = vmatpush1.bf16.msra.mxu0 0
      %2897 = vmatprep.subr.bf16.mxu0 0
      %2898 = vmatpush1.bf16.msra.mxu0 0
      %2899 = vmatprep.subr.bf16.mxu0 0
      %2900 = vmatpush1.bf16.msra.mxu0 0
      %2901 = vmatprep.subr.bf16.mxu0 0
      %2902 = vmatpush1.bf16.msra.mxu0 0
      %2903 = vmatprep.mubr.bf16.mxu0 0
      %2904 = vmatmul.mubr.bf16.gmra.mrb[0].mxu0 %v2866
      %v2905 = vpop.f32.mrb[0].mxu0
      %v2906 = vadd.f32 0.0, %v2905
      %v2907 = vpop.f32.mrb[0].mxu0
      %v2908 = vpop.f32.mrb[0].mxu0
      %v2909 = vpop.f32.mrb[0].mxu0
      %2910 = vdwg.mxu0
      %v2912 = vsel %vm1291, %v2219, 0
      %v2915 = vsel %vm2223, %v1290, 0
      %2917 = vmatprep.subr.bf16.mxu0 0
      %2918 = vmatpush1.bf16.msra.mxu0 %v2915
      %2919 = vmatprep.subr.bf16.mxu0 0
      %2920 = vmatpush1.bf16.msra.mxu0 0
      %2921 = vmatprep.subr.bf16.mxu0 0
      %2922 = vmatpush1.bf16.msra.mxu0 0
      %2923 = vmatprep.subr.bf16.mxu0 0
      %2924 = vmatpush1.bf16.msra.mxu0 0
      %2925 = vmatprep.subr.bf16.mxu0 0
      %2926 = vmatpush1.bf16.msra.mxu0 0
      %2927 = vmatprep.subr.bf16.mxu0 0
      %2928 = vmatpush1.bf16.msra.mxu0 0
      %2929 = vmatprep.subr.bf16.mxu0 0
      %2930 = vmatpush1.bf16.msra.mxu0 0
      %2931 = vmatprep.subr.bf16.mxu0 0
      %2932 = vmatpush1.bf16.msra.mxu0 0
      %2933 = vmatprep.subr.bf16.mxu0 0
      %2934 = vmatpush1.bf16.msra.mxu0 0
      %2935 = vmatprep.subr.bf16.mxu0 0
      %2936 = vmatpush1.bf16.msra.mxu0 0
      %2937 = vmatprep.subr.bf16.mxu0 0
      %2938 = vmatpush1.bf16.msra.mxu0 0
      %2939 = vmatprep.subr.bf16.mxu0 0
      %2940 = vmatpush1.bf16.msra.mxu0 0
      %2941 = vmatprep.subr.bf16.mxu0 0
      %2942 = vmatpush1.bf16.msra.mxu0 0
      %2943 = vmatprep.subr.bf16.mxu0 0
      %2944 = vmatpush1.bf16.msra.mxu0 0
      %2945 = vmatprep.subr.bf16.mxu0 0
      %2946 = vmatpush1.bf16.msra.mxu0 0
      %2947 = vmatprep.subr.bf16.mxu0 0
      %2948 = vmatpush1.bf16.msra.mxu0 0
      %2949 = vmatprep.mubr.bf16.mxu0 0
      %2950 = vmatmul.mubr.bf16.gmra.mrb[0].mxu0 %v2912
      %v2951 = vpop.f32.mrb[0].mxu0
      %v2952 = vadd.f32 0.0, %v2951
      %v2953 = vpop.f32.mrb[0].mxu0
      %v2954 = vpop.f32.mrb[0].mxu0
      %v2955 = vpop.f32.mrb[0].mxu0
      %2956 = vdwg.mxu0
      %v2957 = vpack.c.bf16 %v2308, %v2262
      %v2958 = vpack.c.bf16 %v2400, %v2354
      %v2959 = vpack.c.bf16 %v2492, %v2446
      %v2960 = vpack.c.bf16 %v2584, %v2538
      %v2961 = vpack.c.bf16 %v2676, %v2630
      %v2962 = vpack.c.bf16 %v2768, %v2722
      %v2963 = vpack.c.bf16 %v2860, %v2814
      %v2964 = vpack.c.bf16 %v2952, %v2906
      %v2965 = vld [vmem:[%s10] sm:$0xf]
      %2966 = vrot.lane.b32.xlu0 %v1179, 120
      %v2967 = vpop.permute.xlu0 %2966
      %2968 = vrot.lane.b32.xlu0 %v1227, 120
      %v2969 = vpop.permute.xlu0 %2968
      %v2971 = vsel %vm1291, %v2967, 0
      %v2974 = vsel %vm1291, %v2969, 0
      %2976 = vmatprep.subr.bf16.mxu0 0
      %2977 = vmatpush1.bf16.xpose.msra.mxu0 %v2974
      %2978 = vmatprep.subr.bf16.mxu0 0
      %2979 = vmatpush1.bf16.xpose.msra.mxu0 0
      %2980 = vmatprep.subr.bf16.mxu0 0
      %2981 = vmatpush1.bf16.xpose.msra.mxu0 0
      %2982 = vmatprep.subr.bf16.mxu0 0
      %2983 = vmatpush1.bf16.xpose.msra.mxu0 0
      %2984 = vmatprep.subr.bf16.mxu0 0
      %2985 = vmatpush1.bf16.xpose.msra.mxu0 0
      %2986 = vmatprep.subr.bf16.mxu0 0
      %2987 = vmatpush1.bf16.xpose.msra.mxu0 0
      %2988 = vmatprep.subr.bf16.mxu0 0
      %2989 = vmatpush1.bf16.xpose.msra.mxu0 0
      %2990 = vmatprep.subr.bf16.mxu0 0
      %2991 = vmatpush1.bf16.xpose.msra.mxu0 0
      %2992 = vmatprep.subr.bf16.mxu0 0
      %2993 = vmatpush1.bf16.xpose.msra.mxu0 0
      %2994 = vmatprep.subr.bf16.mxu0 0
      %2995 = vmatpush1.bf16.xpose.msra.mxu0 0
      %2996 = vmatprep.subr.bf16.mxu0 0
      %2997 = vmatpush1.bf16.xpose.msra.mxu0 0
      %2998 = vmatprep.subr.bf16.mxu0 0
      %2999 = vmatpush1.bf16.xpose.msra.mxu0 0
      %3000 = vmatprep.subr.bf16.mxu0 0
      %3001 = vmatpush1.bf16.xpose.msra.mxu0 0
      %3002 = vmatprep.subr.bf16.mxu0 0
      %3003 = vmatpush1.bf16.xpose.msra.mxu0 0
      %3004 = vmatprep.subr.bf16.mxu0 0
      %3005 = vmatpush1.bf16.xpose.msra.mxu0 0
      %3006 = vmatprep.subr.bf16.mxu0 0
      %3007 = vmatpush1.bf16.xpose.msra.mxu0 0
      %3008 = vmatprep.mubr.bf16.mxu0 0
      %3009 = vmatmul.mubr.bf16.gmra.mrb[0].mxu0 %v2971
      %v3010 = vpop.f32.mrb[0].mxu0
      %v3011 = vadd.f32 %v1146, %v3010
      %v3012 = vpop.f32.mrb[0].mxu0
      %v3013 = vpop.f32.mrb[0].mxu0
      %v3014 = vpop.f32.mrb[0].mxu0
      %3015 = vdwg.mxu0
      %3016 = vrot.lane.b32.xlu0 %v1180, 120
      %v3017 = vpop.permute.xlu0 %3016
      %3018 = vrot.lane.b32.xlu0 %v1228, 120
      %v3019 = vpop.permute.xlu0 %3018
      %v3021 = vsel %vm1291, %v3017, 0
      %v3024 = vsel %vm1291, %v3019, 0
      %3026 = vmatprep.subr.bf16.mxu0 0
      %3027 = vmatpush1.bf16.xpose.msra.mxu0 %v3024
      %3028 = vmatprep.subr.bf16.mxu0 0
      %3029 = vmatpush1.bf16.xpose.msra.mxu0 0
      %3030 = vmatprep.subr.bf16.mxu0 0
      %3031 = vmatpush1.bf16.xpose.msra.mxu0 0
      %3032 = vmatprep.subr.bf16.mxu0 0
      %3033 = vmatpush1.bf16.xpose.msra.mxu0 0
      %3034 = vmatprep.subr.bf16.mxu0 0
      %3035 = vmatpush1.bf16.xpose.msra.mxu0 0
      %3036 = vmatprep.subr.bf16.mxu0 0
      %3037 = vmatpush1.bf16.xpose.msra.mxu0 0
      %3038 = vmatprep.subr.bf16.mxu0 0
      %3039 = vmatpush1.bf16.xpose.msra.mxu0 0
      %3040 = vmatprep.subr.bf16.mxu0 0
      %3041 = vmatpush1.bf16.xpose.msra.mxu0 0
      %3042 = vmatprep.subr.bf16.mxu0 0
      %3043 = vmatpush1.bf16.xpose.msra.mxu0 0
      %3044 = vmatprep.subr.bf16.mxu0 0
      %3045 = vmatpush1.bf16.xpose.msra.mxu0 0
      %3046 = vmatprep.subr.bf16.mxu0 0
      %3047 = vmatpush1.bf16.xpose.msra.mxu0 0
      %3048 = vmatprep.subr.bf16.mxu0 0
      %3049 = vmatpush1.bf16.xpose.msra.mxu0 0
      %3050 = vmatprep.subr.bf16.mxu0 0
      %3051 = vmatpush1.bf16.xpose.msra.mxu0 0
      %3052 = vmatprep.subr.bf16.mxu0 0
      %3053 = vmatpush1.bf16.xpose.msra.mxu0 0
      %3054 = vmatprep.subr.bf16.mxu0 0
      %3055 = vmatpush1.bf16.xpose.msra.mxu0 0
      %3056 = vmatprep.subr.bf16.mxu0 0
      %3057 = vmatpush1.bf16.xpose.msra.mxu0 0
      %3058 = vmatprep.mubr.bf16.mxu0 0
      %3059 = vmatmul.mubr.bf16.gmra.mrb[0].mxu0 %v3021
      %v3060 = vpop.f32.mrb[0].mxu0
      %v3061 = vadd.f32 %v1146, %v3060
      %v3062 = vpop.f32.mrb[0].mxu0
      %v3063 = vpop.f32.mrb[0].mxu0
      %v3064 = vpop.f32.mrb[0].mxu0
      %3065 = vdwg.mxu0
      %3066 = vrot.lane.b32.xlu0 %v1181, 120
      %v3067 = vpop.permute.xlu0 %3066
      %3068 = vrot.lane.b32.xlu0 %v1229, 120
      %v3069 = vpop.permute.xlu0 %3068
      %v3071 = vsel %vm1291, %v3067, 0
      %v3074 = vsel %vm1291, %v3069, 0
      %3076 = vmatprep.subr.bf16.mxu0 0
      %3077 = vmatpush1.bf16.xpose.msra.mxu0 %v3074
      %3078 = vmatprep.subr.bf16.mxu0 0
      %3079 = vmatpush1.bf16.xpose.msra.mxu0 0
      %3080 = vmatprep.subr.bf16.mxu0 0
      %3081 = vmatpush1.bf16.xpose.msra.mxu0 0
      %3082 = vmatprep.subr.bf16.mxu0 0
      %3083 = vmatpush1.bf16.xpose.msra.mxu0 0
      %3084 = vmatprep.subr.bf16.mxu0 0
      %3085 = vmatpush1.bf16.xpose.msra.mxu0 0
      %3086 = vmatprep.subr.bf16.mxu0 0
      %3087 = vmatpush1.bf16.xpose.msra.mxu0 0
      %3088 = vmatprep.subr.bf16.mxu0 0
      %3089 = vmatpush1.bf16.xpose.msra.mxu0 0
      %3090 = vmatprep.subr.bf16.mxu0 0
      %3091 = vmatpush1.bf16.xpose.msra.mxu0 0
      %3092 = vmatprep.subr.bf16.mxu0 0
      %3093 = vmatpush1.bf16.xpose.msra.mxu0 0
      %3094 = vmatprep.subr.bf16.mxu0 0
      %3095 = vmatpush1.bf16.xpose.msra.mxu0 0
      %3096 = vmatprep.subr.bf16.mxu0 0
      %3097 = vmatpush1.bf16.xpose.msra.mxu0 0
      %3098 = vmatprep.subr.bf16.mxu0 0
      %3099 = vmatpush1.bf16.xpose.msra.mxu0 0
      %3100 = vmatprep.subr.bf16.mxu0 0
      %3101 = vmatpush1.bf16.xpose.msra.mxu0 0
      %3102 = vmatprep.subr.bf16.mxu0 0
      %3103 = vmatpush1.bf16.xpose.msra.mxu0 0
      %3104 = vmatprep.subr.bf16.mxu0 0
      %3105 = vmatpush1.bf16.xpose.msra.mxu0 0
      %3106 = vmatprep.subr.bf16.mxu0 0
      %3107 = vmatpush1.bf16.xpose.msra.mxu0 0
      %3108 = vmatprep.mubr.bf16.mxu0 0
      %3109 = vmatmul.mubr.bf16.gmra.mrb[0].mxu0 %v3071
      %v3110 = vpop.f32.mrb[0].mxu0
      %v3111 = vadd.f32 %v1146, %v3110
      %v3112 = vpop.f32.mrb[0].mxu0
      %v3113 = vpop.f32.mrb[0].mxu0
      %v3114 = vpop.f32.mrb[0].mxu0
      %3115 = vdwg.mxu0
      %3116 = vrot.lane.b32.xlu0 %v1182, 120
      %v3117 = vpop.permute.xlu0 %3116
      %3118 = vrot.lane.b32.xlu0 %v1230, 120
      %v3119 = vpop.permute.xlu0 %3118
      %v3121 = vsel %vm1291, %v3117, 0
      %v3124 = vsel %vm1291, %v3119, 0
      %3126 = vmatprep.subr.bf16.mxu0 0
      %3127 = vmatpush1.bf16.xpose.msra.mxu0 %v3124
      %3128 = vmatprep.subr.bf16.mxu0 0
      %3129 = vmatpush1.bf16.xpose.msra.mxu0 0
      %3130 = vmatprep.subr.bf16.mxu0 0
      %3131 = vmatpush1.bf16.xpose.msra.mxu0 0
      %3132 = vmatprep.subr.bf16.mxu0 0
      %3133 = vmatpush1.bf16.xpose.msra.mxu0 0
      %3134 = vmatprep.subr.bf16.mxu0 0
      %3135 = vmatpush1.bf16.xpose.msra.mxu0 0
      %3136 = vmatprep.subr.bf16.mxu0 0
      %3137 = vmatpush1.bf16.xpose.msra.mxu0 0
      %3138 = vmatprep.subr.bf16.mxu0 0
      %3139 = vmatpush1.bf16.xpose.msra.mxu0 0
      %3140 = vmatprep.subr.bf16.mxu0 0
      %3141 = vmatpush1.bf16.xpose.msra.mxu0 0
      %3142 = vmatprep.subr.bf16.mxu0 0
      %3143 = vmatpush1.bf16.xpose.msra.mxu0 0
      %3144 = vmatprep.subr.bf16.mxu0 0
      %3145 = vmatpush1.bf16.xpose.msra.mxu0 0
      %3146 = vmatprep.subr.bf16.mxu0 0
      %3147 = vmatpush1.bf16.xpose.msra.mxu0 0
      %3148 = vmatprep.subr.bf16.mxu0 0
      %3149 = vmatpush1.bf16.xpose.msra.mxu0 0
      %3150 = vmatprep.subr.bf16.mxu0 0
      %3151 = vmatpush1.bf16.xpose.msra.mxu0 0
      %3152 = vmatprep.subr.bf16.mxu0 0
      %3153 = vmatpush1.bf16.xpose.msra.mxu0 0
      %3154 = vmatprep.subr.bf16.mxu0 0
      %3155 = vmatpush1.bf16.xpose.msra.mxu0 0
      %3156 = vmatprep.subr.bf16.mxu0 0
      %3157 = vmatpush1.bf16.xpose.msra.mxu0 0
      %3158 = vmatprep.mubr.bf16.mxu0 0
      %3159 = vmatmul.mubr.bf16.gmra.mrb[0].mxu0 %v3121
      %v3160 = vpop.f32.mrb[0].mxu0
      %v3161 = vadd.f32 %v1146, %v3160
      %v3162 = vpop.f32.mrb[0].mxu0
      %v3163 = vpop.f32.mrb[0].mxu0
      %v3164 = vpop.f32.mrb[0].mxu0
      %3165 = vdwg.mxu0
      %3166 = vrot.lane.b32.xlu0 %v1183, 120
      %v3167 = vpop.permute.xlu0 %3166
      %3168 = vrot.lane.b32.xlu0 %v1231, 120
      %v3169 = vpop.permute.xlu0 %3168
      %v3171 = vsel %vm1291, %v3167, 0
      %v3174 = vsel %vm1291, %v3169, 0
      %3176 = vmatprep.subr.bf16.mxu0 0
      %3177 = vmatpush1.bf16.xpose.msra.mxu0 %v3174
      %3178 = vmatprep.subr.bf16.mxu0 0
      %3179 = vmatpush1.bf16.xpose.msra.mxu0 0
      %3180 = vmatprep.subr.bf16.mxu0 0
      %3181 = vmatpush1.bf16.xpose.msra.mxu0 0
      %3182 = vmatprep.subr.bf16.mxu0 0
      %3183 = vmatpush1.bf16.xpose.msra.mxu0 0
      %3184 = vmatprep.subr.bf16.mxu0 0
      %3185 = vmatpush1.bf16.xpose.msra.mxu0 0
      %3186 = vmatprep.subr.bf16.mxu0 0
      %3187 = vmatpush1.bf16.xpose.msra.mxu0 0
      %3188 = vmatprep.subr.bf16.mxu0 0
      %3189 = vmatpush1.bf16.xpose.msra.mxu0 0
      %3190 = vmatprep.subr.bf16.mxu0 0
      %3191 = vmatpush1.bf16.xpose.msra.mxu0 0
      %3192 = vmatprep.subr.bf16.mxu0 0
      %3193 = vmatpush1.bf16.xpose.msra.mxu0 0
      %3194 = vmatprep.subr.bf16.mxu0 0
      %3195 = vmatpush1.bf16.xpose.msra.mxu0 0
      %3196 = vmatprep.subr.bf16.mxu0 0
      %3197 = vmatpush1.bf16.xpose.msra.mxu0 0
      %3198 = vmatprep.subr.bf16.mxu0 0
      %3199 = vmatpush1.bf16.xpose.msra.mxu0 0
      %3200 = vmatprep.subr.bf16.mxu0 0
      %3201 = vmatpush1.bf16.xpose.msra.mxu0 0
      %3202 = vmatprep.subr.bf16.mxu0 0
      %3203 = vmatpush1.bf16.xpose.msra.mxu0 0
      %3204 = vmatprep.subr.bf16.mxu0 0
      %3205 = vmatpush1.bf16.xpose.msra.mxu0 0
      %3206 = vmatprep.subr.bf16.mxu0 0
      %3207 = vmatpush1.bf16.xpose.msra.mxu0 0
      %3208 = vmatprep.mubr.bf16.mxu0 0
      %3209 = vmatmul.mubr.bf16.gmra.mrb[0].mxu0 %v3171
      %v3210 = vpop.f32.mrb[0].mxu0
      %v3211 = vadd.f32 %v1146, %v3210
      %v3212 = vpop.f32.mrb[0].mxu0
      %v3213 = vpop.f32.mrb[0].mxu0
      %v3214 = vpop.f32.mrb[0].mxu0
      %3215 = vdwg.mxu0
      %3216 = vrot.lane.b32.xlu0 %v1184, 120
      %v3217 = vpop.permute.xlu0 %3216
      %3218 = vrot.lane.b32.xlu0 %v1232, 120
      %v3219 = vpop.permute.xlu0 %3218
      %v3221 = vsel %vm1291, %v3217, 0
      %v3224 = vsel %vm1291, %v3219, 0
      %3226 = vmatprep.subr.bf16.mxu0 0
      %3227 = vmatpush1.bf16.xpose.msra.mxu0 %v3224
      %3228 = vmatprep.subr.bf16.mxu0 0
      %3229 = vmatpush1.bf16.xpose.msra.mxu0 0
      %3230 = vmatprep.subr.bf16.mxu0 0
      %3231 = vmatpush1.bf16.xpose.msra.mxu0 0
      %3232 = vmatprep.subr.bf16.mxu0 0
      %3233 = vmatpush1.bf16.xpose.msra.mxu0 0
      %3234 = vmatprep.subr.bf16.mxu0 0
      %3235 = vmatpush1.bf16.xpose.msra.mxu0 0
      %3236 = vmatprep.subr.bf16.mxu0 0
      %3237 = vmatpush1.bf16.xpose.msra.mxu0 0
      %3238 = vmatprep.subr.bf16.mxu0 0
      %3239 = vmatpush1.bf16.xpose.msra.mxu0 0
      %3240 = vmatprep.subr.bf16.mxu0 0
      %3241 = vmatpush1.bf16.xpose.msra.mxu0 0
      %3242 = vmatprep.subr.bf16.mxu0 0
      %3243 = vmatpush1.bf16.xpose.msra.mxu0 0
      %3244 = vmatprep.subr.bf16.mxu0 0
      %3245 = vmatpush1.bf16.xpose.msra.mxu0 0
      %3246 = vmatprep.subr.bf16.mxu0 0
      %3247 = vmatpush1.bf16.xpose.msra.mxu0 0
      %3248 = vmatprep.subr.bf16.mxu0 0
      %3249 = vmatpush1.bf16.xpose.msra.mxu0 0
      %3250 = vmatprep.subr.bf16.mxu0 0
      %3251 = vmatpush1.bf16.xpose.msra.mxu0 0
      %3252 = vmatprep.subr.bf16.mxu0 0
      %3253 = vmatpush1.bf16.xpose.msra.mxu0 0
      %3254 = vmatprep.subr.bf16.mxu0 0
      %3255 = vmatpush1.bf16.xpose.msra.mxu0 0
      %3256 = vmatprep.subr.bf16.mxu0 0
      %3257 = vmatpush1.bf16.xpose.msra.mxu0 0
      %3258 = vmatprep.mubr.bf16.mxu0 0
      %3259 = vmatmul.mubr.bf16.gmra.mrb[0].mxu0 %v3221
      %v3260 = vpop.f32.mrb[0].mxu0
      %v3261 = vadd.f32 %v1146, %v3260
      %v3262 = vpop.f32.mrb[0].mxu0
      %v3263 = vpop.f32.mrb[0].mxu0
      %v3264 = vpop.f32.mrb[0].mxu0
      %3265 = vdwg.mxu0
      %3266 = vrot.lane.b32.xlu0 %v1185, 120
      %v3267 = vpop.permute.xlu0 %3266
      %3268 = vrot.lane.b32.xlu0 %v1233, 120
      %v3269 = vpop.permute.xlu0 %3268
      %v3271 = vsel %vm1291, %v3267, 0
      %v3274 = vsel %vm1291, %v3269, 0
      %3276 = vmatprep.subr.bf16.mxu0 0
      %3277 = vmatpush1.bf16.xpose.msra.mxu0 %v3274
      %3278 = vmatprep.subr.bf16.mxu0 0
      %3279 = vmatpush1.bf16.xpose.msra.mxu0 0
      %3280 = vmatprep.subr.bf16.mxu0 0
      %3281 = vmatpush1.bf16.xpose.msra.mxu0 0
      %3282 = vmatprep.subr.bf16.mxu0 0
      %3283 = vmatpush1.bf16.xpose.msra.mxu0 0
      %3284 = vmatprep.subr.bf16.mxu0 0
      %3285 = vmatpush1.bf16.xpose.msra.mxu0 0
      %3286 = vmatprep.subr.bf16.mxu0 0
      %3287 = vmatpush1.bf16.xpose.msra.mxu0 0
      %3288 = vmatprep.subr.bf16.mxu0 0
      %3289 = vmatpush1.bf16.xpose.msra.mxu0 0
      %3290 = vmatprep.subr.bf16.mxu0 0
      %3291 = vmatpush1.bf16.xpose.msra.mxu0 0
      %3292 = vmatprep.subr.bf16.mxu0 0
      %3293 = vmatpush1.bf16.xpose.msra.mxu0 0
      %3294 = vmatprep.subr.bf16.mxu0 0
      %3295 = vmatpush1.bf16.xpose.msra.mxu0 0
      %3296 = vmatprep.subr.bf16.mxu0 0
      %3297 = vmatpush1.bf16.xpose.msra.mxu0 0
      %3298 = vmatprep.subr.bf16.mxu0 0
      %3299 = vmatpush1.bf16.xpose.msra.mxu0 0
      %3300 = vmatprep.subr.bf16.mxu0 0
      %3301 = vmatpush1.bf16.xpose.msra.mxu0 0
      %3302 = vmatprep.subr.bf16.mxu0 0
      %3303 = vmatpush1.bf16.xpose.msra.mxu0 0
      %3304 = vmatprep.subr.bf16.mxu0 0
      %3305 = vmatpush1.bf16.xpose.msra.mxu0 0
      %3306 = vmatprep.subr.bf16.mxu0 0
      %3307 = vmatpush1.bf16.xpose.msra.mxu0 0
      %3308 = vmatprep.mubr.bf16.mxu0 0
      %3309 = vmatmul.mubr.bf16.gmra.mrb[0].mxu0 %v3271
      %v3310 = vpop.f32.mrb[0].mxu0
      %v3311 = vadd.f32 %v1146, %v3310
      %v3312 = vpop.f32.mrb[0].mxu0
      %v3313 = vpop.f32.mrb[0].mxu0
      %v3314 = vpop.f32.mrb[0].mxu0
      %3315 = vdwg.mxu0
      %3316 = vrot.lane.b32.xlu0 %v1186, 120
      %v3317 = vpop.permute.xlu0 %3316
      %3318 = vrot.lane.b32.xlu0 %v1234, 120
      %v3319 = vpop.permute.xlu0 %3318
      %v3321 = vsel %vm1291, %v3317, 0
      %v3324 = vsel %vm1291, %v3319, 0
      %3326 = vmatprep.subr.bf16.mxu0 0
      %3327 = vmatpush1.bf16.xpose.msra.mxu0 %v3324
      %3328 = vmatprep.subr.bf16.mxu0 0
      %3329 = vmatpush1.bf16.xpose.msra.mxu0 0
      %3330 = vmatprep.subr.bf16.mxu0 0
      %3331 = vmatpush1.bf16.xpose.msra.mxu0 0
      %3332 = vmatprep.subr.bf16.mxu0 0
      %3333 = vmatpush1.bf16.xpose.msra.mxu0 0
      %3334 = vmatprep.subr.bf16.mxu0 0
      %3335 = vmatpush1.bf16.xpose.msra.mxu0 0
      %3336 = vmatprep.subr.bf16.mxu0 0
      %3337 = vmatpush1.bf16.xpose.msra.mxu0 0
      %3338 = vmatprep.subr.bf16.mxu0 0
      %3339 = vmatpush1.bf16.xpose.msra.mxu0 0
      %3340 = vmatprep.subr.bf16.mxu0 0
      %3341 = vmatpush1.bf16.xpose.msra.mxu0 0
      %3342 = vmatprep.subr.bf16.mxu0 0
      %3343 = vmatpush1.bf16.xpose.msra.mxu0 0
      %3344 = vmatprep.subr.bf16.mxu0 0
      %3345 = vmatpush1.bf16.xpose.msra.mxu0 0
      %3346 = vmatprep.subr.bf16.mxu0 0
      %3347 = vmatpush1.bf16.xpose.msra.mxu0 0
      %3348 = vmatprep.subr.bf16.mxu0 0
      %3349 = vmatpush1.bf16.xpose.msra.mxu0 0
      %3350 = vmatprep.subr.bf16.mxu0 0
      %3351 = vmatpush1.bf16.xpose.msra.mxu0 0
      %3352 = vmatprep.subr.bf16.mxu0 0
      %3353 = vmatpush1.bf16.xpose.msra.mxu0 0
      %3354 = vmatprep.subr.bf16.mxu0 0
      %3355 = vmatpush1.bf16.xpose.msra.mxu0 0
      %3356 = vmatprep.subr.bf16.mxu0 0
      %3357 = vmatpush1.bf16.xpose.msra.mxu0 0
      %3358 = vmatprep.mubr.bf16.mxu0 0
      %3359 = vmatmul.mubr.bf16.gmra.mrb[0].mxu0 %v3321
      %v3360 = vpop.f32.mrb[0].mxu0
      %v3361 = vadd.f32 %v1146, %v3360
      %v3362 = vpop.f32.mrb[0].mxu0
      %v3363 = vpop.f32.mrb[0].mxu0
      %v3364 = vpop.f32.mrb[0].mxu0
      %3365 = vdwg.mxu0
      %3366 = vrot.lane.b32.xlu0 %v1187, 120
      %v3367 = vpop.permute.xlu0 %3366
      %3368 = vrot.lane.b32.xlu0 %v1235, 120
      %v3369 = vpop.permute.xlu0 %3368
      %v3371 = vsel %vm1291, %v3367, 0
      %v3374 = vsel %vm1291, %v3369, 0
      %3376 = vmatprep.subr.bf16.mxu0 0
      %3377 = vmatpush1.bf16.xpose.msra.mxu0 %v3374
      %3378 = vmatprep.subr.bf16.mxu0 0
      %3379 = vmatpush1.bf16.xpose.msra.mxu0 0
      %3380 = vmatprep.subr.bf16.mxu0 0
      %3381 = vmatpush1.bf16.xpose.msra.mxu0 0
      %3382 = vmatprep.subr.bf16.mxu0 0
      %3383 = vmatpush1.bf16.xpose.msra.mxu0 0
      %3384 = vmatprep.subr.bf16.mxu0 0
      %3385 = vmatpush1.bf16.xpose.msra.mxu0 0
      %3386 = vmatprep.subr.bf16.mxu0 0
      %3387 = vmatpush1.bf16.xpose.msra.mxu0 0
      %3388 = vmatprep.subr.bf16.mxu0 0
      %3389 = vmatpush1.bf16.xpose.msra.mxu0 0
      %3390 = vmatprep.subr.bf16.mxu0 0
      %3391 = vmatpush1.bf16.xpose.msra.mxu0 0
      %3392 = vmatprep.subr.bf16.mxu0 0
      %3393 = vmatpush1.bf16.xpose.msra.mxu0 0
      %3394 = vmatprep.subr.bf16.mxu0 0
      %3395 = vmatpush1.bf16.xpose.msra.mxu0 0
      %3396 = vmatprep.subr.bf16.mxu0 0
      %3397 = vmatpush1.bf16.xpose.msra.mxu0 0
      %3398 = vmatprep.subr.bf16.mxu0 0
      %3399 = vmatpush1.bf16.xpose.msra.mxu0 0
      %3400 = vmatprep.subr.bf16.mxu0 0
      %3401 = vmatpush1.bf16.xpose.msra.mxu0 0
      %3402 = vmatprep.subr.bf16.mxu0 0
      %3403 = vmatpush1.bf16.xpose.msra.mxu0 0
      %3404 = vmatprep.subr.bf16.mxu0 0
      %3405 = vmatpush1.bf16.xpose.msra.mxu0 0
      %3406 = vmatprep.subr.bf16.mxu0 0
      %3407 = vmatpush1.bf16.xpose.msra.mxu0 0
      %3408 = vmatprep.mubr.bf16.mxu0 0
      %3409 = vmatmul.mubr.bf16.gmra.mrb[0].mxu0 %v3371
      %v3410 = vpop.f32.mrb[0].mxu0
      %v3411 = vadd.f32 %v1146, %v3410
      %v3412 = vpop.f32.mrb[0].mxu0
      %v3413 = vpop.f32.mrb[0].mxu0
      %v3414 = vpop.f32.mrb[0].mxu0
      %3415 = vdwg.mxu0
      %3416 = vrot.lane.b32.xlu0 %v1188, 120
      %v3417 = vpop.permute.xlu0 %3416
      %3418 = vrot.lane.b32.xlu0 %v1236, 120
      %v3419 = vpop.permute.xlu0 %3418
      %v3421 = vsel %vm1291, %v3417, 0
      %v3424 = vsel %vm1291, %v3419, 0
      %3426 = vmatprep.subr.bf16.mxu0 0
      %3427 = vmatpush1.bf16.xpose.msra.mxu0 %v3424
      %3428 = vmatprep.subr.bf16.mxu0 0
      %3429 = vmatpush1.bf16.xpose.msra.mxu0 0
      %3430 = vmatprep.subr.bf16.mxu0 0
      %3431 = vmatpush1.bf16.xpose.msra.mxu0 0
      %3432 = vmatprep.subr.bf16.mxu0 0
      %3433 = vmatpush1.bf16.xpose.msra.mxu0 0
      %3434 = vmatprep.subr.bf16.mxu0 0
      %3435 = vmatpush1.bf16.xpose.msra.mxu0 0
      %3436 = vmatprep.subr.bf16.mxu0 0
      %3437 = vmatpush1.bf16.xpose.msra.mxu0 0
      %3438 = vmatprep.subr.bf16.mxu0 0
      %3439 = vmatpush1.bf16.xpose.msra.mxu0 0
      %3440 = vmatprep.subr.bf16.mxu0 0
      %3441 = vmatpush1.bf16.xpose.msra.mxu0 0
      %3442 = vmatprep.subr.bf16.mxu0 0
      %3443 = vmatpush1.bf16.xpose.msra.mxu0 0
      %3444 = vmatprep.subr.bf16.mxu0 0
      %3445 = vmatpush1.bf16.xpose.msra.mxu0 0
      %3446 = vmatprep.subr.bf16.mxu0 0
      %3447 = vmatpush1.bf16.xpose.msra.mxu0 0
      %3448 = vmatprep.subr.bf16.mxu0 0
      %3449 = vmatpush1.bf16.xpose.msra.mxu0 0
      %3450 = vmatprep.subr.bf16.mxu0 0
      %3451 = vmatpush1.bf16.xpose.msra.mxu0 0
      %3452 = vmatprep.subr.bf16.mxu0 0
      %3453 = vmatpush1.bf16.xpose.msra.mxu0 0
      %3454 = vmatprep.subr.bf16.mxu0 0
      %3455 = vmatpush1.bf16.xpose.msra.mxu0 0
      %3456 = vmatprep.subr.bf16.mxu0 0
      %3457 = vmatpush1.bf16.xpose.msra.mxu0 0
      %3458 = vmatprep.mubr.bf16.mxu0 0
      %3459 = vmatmul.mubr.bf16.gmra.mrb[0].mxu0 %v3421
      %v3460 = vpop.f32.mrb[0].mxu0
      %v3461 = vadd.f32 %v1146, %v3460
      %v3462 = vpop.f32.mrb[0].mxu0
      %v3463 = vpop.f32.mrb[0].mxu0
      %v3464 = vpop.f32.mrb[0].mxu0
      %3465 = vdwg.mxu0
      %3466 = vrot.lane.b32.xlu0 %v1189, 120
      %v3467 = vpop.permute.xlu0 %3466
      %3468 = vrot.lane.b32.xlu0 %v1237, 120
      %v3469 = vpop.permute.xlu0 %3468
      %v3471 = vsel %vm1291, %v3467, 0
      %v3474 = vsel %vm1291, %v3469, 0
      %3476 = vmatprep.subr.bf16.mxu0 0
      %3477 = vmatpush1.bf16.xpose.msra.mxu0 %v3474
      %3478 = vmatprep.subr.bf16.mxu0 0
      %3479 = vmatpush1.bf16.xpose.msra.mxu0 0
      %3480 = vmatprep.subr.bf16.mxu0 0
      %3481 = vmatpush1.bf16.xpose.msra.mxu0 0
      %3482 = vmatprep.subr.bf16.mxu0 0
      %3483 = vmatpush1.bf16.xpose.msra.mxu0 0
      %3484 = vmatprep.subr.bf16.mxu0 0
      %3485 = vmatpush1.bf16.xpose.msra.mxu0 0
      %3486 = vmatprep.subr.bf16.mxu0 0
      %3487 = vmatpush1.bf16.xpose.msra.mxu0 0
      %3488 = vmatprep.subr.bf16.mxu0 0
      %3489 = vmatpush1.bf16.xpose.msra.mxu0 0
      %3490 = vmatprep.subr.bf16.mxu0 0
      %3491 = vmatpush1.bf16.xpose.msra.mxu0 0
      %3492 = vmatprep.subr.bf16.mxu0 0
      %3493 = vmatpush1.bf16.xpose.msra.mxu0 0
      %3494 = vmatprep.subr.bf16.mxu0 0
      %3495 = vmatpush1.bf16.xpose.msra.mxu0 0
      %3496 = vmatprep.subr.bf16.mxu0 0
      %3497 = vmatpush1.bf16.xpose.msra.mxu0 0
      %3498 = vmatprep.subr.bf16.mxu0 0
      %3499 = vmatpush1.bf16.xpose.msra.mxu0 0
      %3500 = vmatprep.subr.bf16.mxu0 0
      %3501 = vmatpush1.bf16.xpose.msra.mxu0 0
      %3502 = vmatprep.subr.bf16.mxu0 0
      %3503 = vmatpush1.bf16.xpose.msra.mxu0 0
      %3504 = vmatprep.subr.bf16.mxu0 0
      %3505 = vmatpush1.bf16.xpose.msra.mxu0 0
      %3506 = vmatprep.subr.bf16.mxu0 0
      %3507 = vmatpush1.bf16.xpose.msra.mxu0 0
      %3508 = vmatprep.mubr.bf16.mxu0 0
      %3509 = vmatmul.mubr.bf16.gmra.mrb[0].mxu0 %v3471
      %v3510 = vpop.f32.mrb[0].mxu0
      %v3511 = vadd.f32 %v1146, %v3510
      %v3512 = vpop.f32.mrb[0].mxu0
      %v3513 = vpop.f32.mrb[0].mxu0
      %v3514 = vpop.f32.mrb[0].mxu0
      %3515 = vdwg.mxu0
      %3516 = vrot.lane.b32.xlu0 %v1190, 120
      %v3517 = vpop.permute.xlu0 %3516
      %3518 = vrot.lane.b32.xlu0 %v1238, 120
      %v3519 = vpop.permute.xlu0 %3518
      %v3521 = vsel %vm1291, %v3517, 0
      %v3524 = vsel %vm1291, %v3519, 0
      %3526 = vmatprep.subr.bf16.mxu0 0
      %3527 = vmatpush1.bf16.xpose.msra.mxu0 %v3524
      %3528 = vmatprep.subr.bf16.mxu0 0
      %3529 = vmatpush1.bf16.xpose.msra.mxu0 0
      %3530 = vmatprep.subr.bf16.mxu0 0
      %3531 = vmatpush1.bf16.xpose.msra.mxu0 0
      %3532 = vmatprep.subr.bf16.mxu0 0
      %3533 = vmatpush1.bf16.xpose.msra.mxu0 0
      %3534 = vmatprep.subr.bf16.mxu0 0
      %3535 = vmatpush1.bf16.xpose.msra.mxu0 0
      %3536 = vmatprep.subr.bf16.mxu0 0
      %3537 = vmatpush1.bf16.xpose.msra.mxu0 0
      %3538 = vmatprep.subr.bf16.mxu0 0
      %3539 = vmatpush1.bf16.xpose.msra.mxu0 0
      %3540 = vmatprep.subr.bf16.mxu0 0
      %3541 = vmatpush1.bf16.xpose.msra.mxu0 0
      %3542 = vmatprep.subr.bf16.mxu0 0
      %3543 = vmatpush1.bf16.xpose.msra.mxu0 0
      %3544 = vmatprep.subr.bf16.mxu0 0
      %3545 = vmatpush1.bf16.xpose.msra.mxu0 0
      %3546 = vmatprep.subr.bf16.mxu0 0
      %3547 = vmatpush1.bf16.xpose.msra.mxu0 0
      %3548 = vmatprep.subr.bf16.mxu0 0
      %3549 = vmatpush1.bf16.xpose.msra.mxu0 0
      %3550 = vmatprep.subr.bf16.mxu0 0
      %3551 = vmatpush1.bf16.xpose.msra.mxu0 0
      %3552 = vmatprep.subr.bf16.mxu0 0
      %3553 = vmatpush1.bf16.xpose.msra.mxu0 0
      %3554 = vmatprep.subr.bf16.mxu0 0
      %3555 = vmatpush1.bf16.xpose.msra.mxu0 0
      %3556 = vmatprep.subr.bf16.mxu0 0
      %3557 = vmatpush1.bf16.xpose.msra.mxu0 0
      %3558 = vmatprep.mubr.bf16.mxu0 0
      %3559 = vmatmul.mubr.bf16.gmra.mrb[0].mxu0 %v3521
      %v3560 = vpop.f32.mrb[0].mxu0
      %v3561 = vadd.f32 %v1146, %v3560
      %v3562 = vpop.f32.mrb[0].mxu0
      %v3563 = vpop.f32.mrb[0].mxu0
      %v3564 = vpop.f32.mrb[0].mxu0
      %3565 = vdwg.mxu0
      %3566 = vrot.lane.b32.xlu0 %v1191, 120
      %v3567 = vpop.permute.xlu0 %3566
      %3568 = vrot.lane.b32.xlu0 %v1239, 120
      %v3569 = vpop.permute.xlu0 %3568
      %v3571 = vsel %vm1291, %v3567, 0
      %v3574 = vsel %vm1291, %v3569, 0
      %3576 = vmatprep.subr.bf16.mxu0 0
      %3577 = vmatpush1.bf16.xpose.msra.mxu0 %v3574
      %3578 = vmatprep.subr.bf16.mxu0 0
      %3579 = vmatpush1.bf16.xpose.msra.mxu0 0
      %3580 = vmatprep.subr.bf16.mxu0 0
      %3581 = vmatpush1.bf16.xpose.msra.mxu0 0
      %3582 = vmatprep.subr.bf16.mxu0 0
      %3583 = vmatpush1.bf16.xpose.msra.mxu0 0
      %3584 = vmatprep.subr.bf16.mxu0 0
      %3585 = vmatpush1.bf16.xpose.msra.mxu0 0
      %3586 = vmatprep.subr.bf16.mxu0 0
      %3587 = vmatpush1.bf16.xpose.msra.mxu0 0
      %3588 = vmatprep.subr.bf16.mxu0 0
      %3589 = vmatpush1.bf16.xpose.msra.mxu0 0
      %3590 = vmatprep.subr.bf16.mxu0 0
      %3591 = vmatpush1.bf16.xpose.msra.mxu0 0
      %3592 = vmatprep.subr.bf16.mxu0 0
      %3593 = vmatpush1.bf16.xpose.msra.mxu0 0
      %3594 = vmatprep.subr.bf16.mxu0 0
      %3595 = vmatpush1.bf16.xpose.msra.mxu0 0
      %3596 = vmatprep.subr.bf16.mxu0 0
      %3597 = vmatpush1.bf16.xpose.msra.mxu0 0
      %3598 = vmatprep.subr.bf16.mxu0 0
      %3599 = vmatpush1.bf16.xpose.msra.mxu0 0
      %3600 = vmatprep.subr.bf16.mxu0 0
      %3601 = vmatpush1.bf16.xpose.msra.mxu0 0
      %3602 = vmatprep.subr.bf16.mxu0 0
      %3603 = vmatpush1.bf16.xpose.msra.mxu0 0
      %3604 = vmatprep.subr.bf16.mxu0 0
      %3605 = vmatpush1.bf16.xpose.msra.mxu0 0
      %3606 = vmatprep.subr.bf16.mxu0 0
      %3607 = vmatpush1.bf16.xpose.msra.mxu0 0
      %3608 = vmatprep.mubr.bf16.mxu0 0
      %3609 = vmatmul.mubr.bf16.gmra.mrb[0].mxu0 %v3571
      %v3610 = vpop.f32.mrb[0].mxu0
      %v3611 = vadd.f32 %v1146, %v3610
      %v3612 = vpop.f32.mrb[0].mxu0
      %v3613 = vpop.f32.mrb[0].mxu0
      %v3614 = vpop.f32.mrb[0].mxu0
      %3615 = vdwg.mxu0
      %3616 = vrot.lane.b32.xlu0 %v1192, 120
      %v3617 = vpop.permute.xlu0 %3616
      %3618 = vrot.lane.b32.xlu0 %v1240, 120
      %v3619 = vpop.permute.xlu0 %3618
      %v3621 = vsel %vm1291, %v3617, 0
      %v3624 = vsel %vm1291, %v3619, 0
      %3626 = vmatprep.subr.bf16.mxu0 0
      %3627 = vmatpush1.bf16.xpose.msra.mxu0 %v3624
      %3628 = vmatprep.subr.bf16.mxu0 0
      %3629 = vmatpush1.bf16.xpose.msra.mxu0 0
      %3630 = vmatprep.subr.bf16.mxu0 0
      %3631 = vmatpush1.bf16.xpose.msra.mxu0 0
      %3632 = vmatprep.subr.bf16.mxu0 0
      %3633 = vmatpush1.bf16.xpose.msra.mxu0 0
      %3634 = vmatprep.subr.bf16.mxu0 0
      %3635 = vmatpush1.bf16.xpose.msra.mxu0 0
      %3636 = vmatprep.subr.bf16.mxu0 0
      %3637 = vmatpush1.bf16.xpose.msra.mxu0 0
      %3638 = vmatprep.subr.bf16.mxu0 0
      %3639 = vmatpush1.bf16.xpose.msra.mxu0 0
      %3640 = vmatprep.subr.bf16.mxu0 0
      %3641 = vmatpush1.bf16.xpose.msra.mxu0 0
      %3642 = vmatprep.subr.bf16.mxu0 0
      %3643 = vmatpush1.bf16.xpose.msra.mxu0 0
      %3644 = vmatprep.subr.bf16.mxu0 0
      %3645 = vmatpush1.bf16.xpose.msra.mxu0 0
      %3646 = vmatprep.subr.bf16.mxu0 0
      %3647 = vmatpush1.bf16.xpose.msra.mxu0 0
      %3648 = vmatprep.subr.bf16.mxu0 0
      %3649 = vmatpush1.bf16.xpose.msra.mxu0 0
      %3650 = vmatprep.subr.bf16.mxu0 0
      %3651 = vmatpush1.bf16.xpose.msra.mxu0 0
      %3652 = vmatprep.subr.bf16.mxu0 0
      %3653 = vmatpush1.bf16.xpose.msra.mxu0 0
      %3654 = vmatprep.subr.bf16.mxu0 0
      %3655 = vmatpush1.bf16.xpose.msra.mxu0 0
      %3656 = vmatprep.subr.bf16.mxu0 0
      %3657 = vmatpush1.bf16.xpose.msra.mxu0 0
      %3658 = vmatprep.mubr.bf16.mxu0 0
      %3659 = vmatmul.mubr.bf16.gmra.mrb[0].mxu0 %v3621
      %v3660 = vpop.f32.mrb[0].mxu0
      %v3661 = vadd.f32 %v1146, %v3660
      %v3662 = vpop.f32.mrb[0].mxu0
      %v3663 = vpop.f32.mrb[0].mxu0
      %v3664 = vpop.f32.mrb[0].mxu0
      %3665 = vdwg.mxu0
      %3666 = vrot.lane.b32.xlu0 %v1193, 120
      %v3667 = vpop.permute.xlu0 %3666
      %3668 = vrot.lane.b32.xlu0 %v1241, 120
      %v3669 = vpop.permute.xlu0 %3668
      %v3671 = vsel %vm1291, %v3667, 0
      %v3674 = vsel %vm1291, %v3669, 0
      %3676 = vmatprep.subr.bf16.mxu0 0
      %3677 = vmatpush1.bf16.xpose.msra.mxu0 %v3674
      %3678 = vmatprep.subr.bf16.mxu0 0
      %3679 = vmatpush1.bf16.xpose.msra.mxu0 0
      %3680 = vmatprep.subr.bf16.mxu0 0
      %3681 = vmatpush1.bf16.xpose.msra.mxu0 0
      %3682 = vmatprep.subr.bf16.mxu0 0
      %3683 = vmatpush1.bf16.xpose.msra.mxu0 0
      %3684 = vmatprep.subr.bf16.mxu0 0
      %3685 = vmatpush1.bf16.xpose.msra.mxu0 0
      %3686 = vmatprep.subr.bf16.mxu0 0
      %3687 = vmatpush1.bf16.xpose.msra.mxu0 0
      %3688 = vmatprep.subr.bf16.mxu0 0
      %3689 = vmatpush1.bf16.xpose.msra.mxu0 0
      %3690 = vmatprep.subr.bf16.mxu0 0
      %3691 = vmatpush1.bf16.xpose.msra.mxu0 0
      %3692 = vmatprep.subr.bf16.mxu0 0
      %3693 = vmatpush1.bf16.xpose.msra.mxu0 0
      %3694 = vmatprep.subr.bf16.mxu0 0
      %3695 = vmatpush1.bf16.xpose.msra.mxu0 0
      %3696 = vmatprep.subr.bf16.mxu0 0
      %3697 = vmatpush1.bf16.xpose.msra.mxu0 0
      %3698 = vmatprep.subr.bf16.mxu0 0
      %3699 = vmatpush1.bf16.xpose.msra.mxu0 0
      %3700 = vmatprep.subr.bf16.mxu0 0
      %3701 = vmatpush1.bf16.xpose.msra.mxu0 0
      %3702 = vmatprep.subr.bf16.mxu0 0
      %3703 = vmatpush1.bf16.xpose.msra.mxu0 0
      %3704 = vmatprep.subr.bf16.mxu0 0
      %3705 = vmatpush1.bf16.xpose.msra.mxu0 0
      %3706 = vmatprep.subr.bf16.mxu0 0
      %3707 = vmatpush1.bf16.xpose.msra.mxu0 0
      %3708 = vmatprep.mubr.bf16.mxu0 0
      %3709 = vmatmul.mubr.bf16.gmra.mrb[0].mxu0 %v3671
      %v3710 = vpop.f32.mrb[0].mxu0
      %v3711 = vadd.f32 %v1146, %v3710
      %v3712 = vpop.f32.mrb[0].mxu0
      %v3713 = vpop.f32.mrb[0].mxu0
      %v3714 = vpop.f32.mrb[0].mxu0
      %3715 = vdwg.mxu0
      %3716 = vrot.lane.b32.xlu0 %v1194, 120
      %v3717 = vpop.permute.xlu0 %3716
      %3718 = vrot.lane.b32.xlu0 %v1242, 120
      %v3719 = vpop.permute.xlu0 %3718
      %v3721 = vsel %vm1291, %v3717, 0
      %v3724 = vsel %vm1291, %v3719, 0
      %3726 = vmatprep.subr.bf16.mxu0 0
      %3727 = vmatpush1.bf16.xpose.msra.mxu0 %v3724
      %3728 = vmatprep.subr.bf16.mxu0 0
      %3729 = vmatpush1.bf16.xpose.msra.mxu0 0
      %3730 = vmatprep.subr.bf16.mxu0 0
      %3731 = vmatpush1.bf16.xpose.msra.mxu0 0
      %3732 = vmatprep.subr.bf16.mxu0 0
      %3733 = vmatpush1.bf16.xpose.msra.mxu0 0
      %3734 = vmatprep.subr.bf16.mxu0 0
      %3735 = vmatpush1.bf16.xpose.msra.mxu0 0
      %3736 = vmatprep.subr.bf16.mxu0 0
      %3737 = vmatpush1.bf16.xpose.msra.mxu0 0
      %3738 = vmatprep.subr.bf16.mxu0 0
      %3739 = vmatpush1.bf16.xpose.msra.mxu0 0
      %3740 = vmatprep.subr.bf16.mxu0 0
      %3741 = vmatpush1.bf16.xpose.msra.mxu0 0
      %3742 = vmatprep.subr.bf16.mxu0 0
      %3743 = vmatpush1.bf16.xpose.msra.mxu0 0
      %3744 = vmatprep.subr.bf16.mxu0 0
      %3745 = vmatpush1.bf16.xpose.msra.mxu0 0
      %3746 = vmatprep.subr.bf16.mxu0 0
      %3747 = vmatpush1.bf16.xpose.msra.mxu0 0
      %3748 = vmatprep.subr.bf16.mxu0 0
      %3749 = vmatpush1.bf16.xpose.msra.mxu0 0
      %3750 = vmatprep.subr.bf16.mxu0 0
      %3751 = vmatpush1.bf16.xpose.msra.mxu0 0
      %3752 = vmatprep.subr.bf16.mxu0 0
      %3753 = vmatpush1.bf16.xpose.msra.mxu0 0
      %3754 = vmatprep.subr.bf16.mxu0 0
      %3755 = vmatpush1.bf16.xpose.msra.mxu0 0
      %3756 = vmatprep.subr.bf16.mxu0 0
      %3757 = vmatpush1.bf16.xpose.msra.mxu0 0
      %3758 = vmatprep.mubr.bf16.mxu0 0
      %3759 = vmatmul.mubr.bf16.gmra.mrb[0].mxu0 %v3721
      %v3760 = vpop.f32.mrb[0].mxu0
      %v3761 = vadd.f32 %v1146, %v3760
      %v3762 = vpop.f32.mrb[0].mxu0
      %v3763 = vpop.f32.mrb[0].mxu0
      %v3764 = vpop.f32.mrb[0].mxu0
      %3765 = vdwg.mxu0
      %v3766 = vsel %vm1291, %v3011, -inf
      %3767 = vmax.xlane.f32.xlu0 %v3766
      %v3768 = vpop.xlane.xlu0 %3767
      %v3769 = vsel %vm1291, %v3061, -inf
      %3770 = vmax.xlane.f32.xlu0 %v3769
      %v3771 = vpop.xlane.xlu0 %3770
      %v3772 = vsel %vm1291, %v3111, -inf
      %3773 = vmax.xlane.f32.xlu0 %v3772
      %v3774 = vpop.xlane.xlu0 %3773
      %v3775 = vsel %vm1291, %v3161, -inf
      %3776 = vmax.xlane.f32.xlu0 %v3775
      %v3777 = vpop.xlane.xlu0 %3776
      %v3778 = vsel %vm1291, %v3211, -inf
      %3779 = vmax.xlane.f32.xlu0 %v3778
      %v3780 = vpop.xlane.xlu0 %3779
      %v3781 = vsel %vm1291, %v3261, -inf
      %3782 = vmax.xlane.f32.xlu0 %v3781
      %v3783 = vpop.xlane.xlu0 %3782
      %v3784 = vsel %vm1291, %v3311, -inf
      %3785 = vmax.xlane.f32.xlu0 %v3784
      %v3786 = vpop.xlane.xlu0 %3785
      %v3787 = vsel %vm1291, %v3361, -inf
      %3788 = vmax.xlane.f32.xlu0 %v3787
      %v3789 = vpop.xlane.xlu0 %3788
      %v3790 = vsel %vm1291, %v3411, -inf
      %3791 = vmax.xlane.f32.xlu0 %v3790
      %v3792 = vpop.xlane.xlu0 %3791
      %v3793 = vsel %vm1291, %v3461, -inf
      %3794 = vmax.xlane.f32.xlu0 %v3793
      %v3795 = vpop.xlane.xlu0 %3794
      %v3796 = vsel %vm1291, %v3511, -inf
      %3797 = vmax.xlane.f32.xlu0 %v3796
      %v3798 = vpop.xlane.xlu0 %3797
      %v3799 = vsel %vm1291, %v3561, -inf
      %3800 = vmax.xlane.f32.xlu0 %v3799
      %v3801 = vpop.xlane.xlu0 %3800
      %v3802 = vsel %vm1291, %v3611, -inf
      %3803 = vmax.xlane.f32.xlu0 %v3802
      %v3804 = vpop.xlane.xlu0 %3803
      %v3805 = vsel %vm1291, %v3661, -inf
      %3806 = vmax.xlane.f32.xlu0 %v3805
      %v3807 = vpop.xlane.xlu0 %3806
      %v3808 = vsel %vm1291, %v3711, -inf
      %3809 = vmax.xlane.f32.xlu0 %v3808
      %v3810 = vpop.xlane.xlu0 %3809
      %v3811 = vsel %vm1291, %v3761, -inf
      %3812 = vmax.xlane.f32.xlu0 %v3811
      %v3813 = vpop.xlane.xlu0 %3812
      %v3814 = vsub.f32 %v3011, %v3768
      %v3815 = vsub.f32 %v3061, %v3771
      %v3816 = vsub.f32 %v3111, %v3774
      %v3817 = vsub.f32 %v3161, %v3777
      %v3818 = vsub.f32 %v3211, %v3780
      %v3819 = vsub.f32 %v3261, %v3783
      %v3820 = vsub.f32 %v3311, %v3786
      %v3821 = vsub.f32 %v3361, %v3789
      %v3822 = vsub.f32 %v3411, %v3792
      %v3823 = vsub.f32 %v3461, %v3795
      %v3824 = vsub.f32 %v3511, %v3798
      %v3825 = vsub.f32 %v3561, %v3801
      %v3826 = vsub.f32 %v3611, %v3804
      %v3827 = vsub.f32 %v3661, %v3807
      %v3828 = vsub.f32 %v3711, %v3810
      %v3829 = vsub.f32 %v3761, %v3813
      %v3830 = vmul.f32 %v3814, 1.442695
      %v3831 = vpow.pop %v3830
      %v3832 = vmul.f32 %v3815, 1.442695
      %v3833 = vpow.pop %v3832
      %v3834 = vmul.f32 %v3816, 1.442695
      %v3835 = vpow.pop %v3834
      %v3836 = vmul.f32 %v3817, 1.442695
      %v3837 = vpow.pop %v3836
      %v3838 = vmul.f32 %v3818, 1.442695
      %v3839 = vpow.pop %v3838
      %v3840 = vmul.f32 %v3819, 1.442695
      %v3841 = vpow.pop %v3840
      %v3842 = vmul.f32 %v3820, 1.442695
      %v3843 = vpow.pop %v3842
      %v3844 = vmul.f32 %v3821, 1.442695
      %v3845 = vpow.pop %v3844
      %v3846 = vmul.f32 %v3822, 1.442695
      %v3847 = vpow.pop %v3846
      %v3848 = vmul.f32 %v3823, 1.442695
      %v3849 = vpow.pop %v3848
      %v3850 = vmul.f32 %v3824, 1.442695
      %v3851 = vpow.pop %v3850
      %v3852 = vmul.f32 %v3825, 1.442695
      %v3853 = vpow.pop %v3852
      %v3854 = vmul.f32 %v3826, 1.442695
      %v3855 = vpow.pop %v3854
      %v3856 = vmul.f32 %v3827, 1.442695
      %v3857 = vpow.pop %v3856
      %v3858 = vmul.f32 %v3828, 1.442695
      %v3859 = vpow.pop %v3858
      %v3860 = vmul.f32 %v3829, 1.442695
      %v3861 = vpow.pop %v3860
      %v3862 = vsel %vm1291, %v3831, 0.0
      %3863 = vadd.xlane.f32.xlu0 %v3862
      %v3864 = vpop.xlane.xlu0 %3863
      %v3865 = vsel %vm1291, %v3833, 0.0
      %3866 = vadd.xlane.f32.xlu0 %v3865
      %v3867 = vpop.xlane.xlu0 %3866
      %v3868 = vsel %vm1291, %v3835, 0.0
      %3869 = vadd.xlane.f32.xlu0 %v3868
      %v3870 = vpop.xlane.xlu0 %3869
      %v3871 = vsel %vm1291, %v3837, 0.0
      %3872 = vadd.xlane.f32.xlu0 %v3871
      %v3873 = vpop.xlane.xlu0 %3872
      %v3874 = vsel %vm1291, %v3839, 0.0
      %3875 = vadd.xlane.f32.xlu0 %v3874
      %v3876 = vpop.xlane.xlu0 %3875
      %v3877 = vsel %vm1291, %v3841, 0.0
      %3878 = vadd.xlane.f32.xlu0 %v3877
      %v3879 = vpop.xlane.xlu0 %3878
      %v3880 = vsel %vm1291, %v3843, 0.0
      %3881 = vadd.xlane.f32.xlu0 %v3880
      %v3882 = vpop.xlane.xlu0 %3881
      %v3883 = vsel %vm1291, %v3845, 0.0
      %3884 = vadd.xlane.f32.xlu0 %v3883
      %v3885 = vpop.xlane.xlu0 %3884
      %v3886 = vsel %vm1291, %v3847, 0.0
      %3887 = vadd.xlane.f32.xlu0 %v3886
      %v3888 = vpop.xlane.xlu0 %3887
      %v3889 = vsel %vm1291, %v3849, 0.0
      %3890 = vadd.xlane.f32.xlu0 %v3889
      %v3891 = vpop.xlane.xlu0 %3890
      %v3892 = vsel %vm1291, %v3851, 0.0
      %3893 = vadd.xlane.f32.xlu0 %v3892
      %v3894 = vpop.xlane.xlu0 %3893
      %v3895 = vsel %vm1291, %v3853, 0.0
      %3896 = vadd.xlane.f32.xlu0 %v3895
      %v3897 = vpop.xlane.xlu0 %3896
      %v3898 = vsel %vm1291, %v3855, 0.0
      %3899 = vadd.xlane.f32.xlu0 %v3898
      %v3900 = vpop.xlane.xlu0 %3899
      %v3901 = vsel %vm1291, %v3857, 0.0
      %3902 = vadd.xlane.f32.xlu0 %v3901
      %v3903 = vpop.xlane.xlu0 %3902
      %v3904 = vsel %vm1291, %v3859, 0.0
      %3905 = vadd.xlane.f32.xlu0 %v3904
      %v3906 = vpop.xlane.xlu0 %3905
      %v3907 = vsel %vm1291, %v3861, 0.0
      %3908 = vadd.xlane.f32.xlu0 %v3907
      %v3909 = vpop.xlane.xlu0 %3908
      %v3910 = vrcp.pop %v3864
      %v3911 = vrcp.pop %v3867
      %v3912 = vrcp.pop %v3870
      %v3913 = vrcp.pop %v3873
      %v3914 = vrcp.pop %v3876
      %v3915 = vrcp.pop %v3879
      %v3916 = vrcp.pop %v3882
      %v3917 = vrcp.pop %v3885
      %v3918 = vrcp.pop %v3888
      %v3919 = vrcp.pop %v3891
      %v3920 = vrcp.pop %v3894
      %v3921 = vrcp.pop %v3897
      %v3922 = vrcp.pop %v3900
      %v3923 = vrcp.pop %v3903
      %v3924 = vrcp.pop %v3906
      %v3925 = vrcp.pop %v3909
      %v3926 = vmul.f32 %v3831, %v3910
      %v3927 = vmul.f32 %v3833, %v3911
      %v3928 = vmul.f32 %v3835, %v3912
      %v3929 = vmul.f32 %v3837, %v3913
      %v3930 = vmul.f32 %v3839, %v3914
      %v3931 = vmul.f32 %v3841, %v3915
      %v3932 = vmul.f32 %v3843, %v3916
      %v3933 = vmul.f32 %v3845, %v3917
      %v3934 = vmul.f32 %v3847, %v3918
      %v3935 = vmul.f32 %v3849, %v3919
      %v3936 = vmul.f32 %v3851, %v3920
      %v3937 = vmul.f32 %v3853, %v3921
      %v3938 = vmul.f32 %v3855, %v3922
      %v3939 = vmul.f32 %v3857, %v3923
      %v3940 = vmul.f32 %v3859, %v3924
      %v3941 = vmul.f32 %v3861, %v3925
      %v3942 = vpack.c.bf16 %v3926, %v3926
      %v3943 = vpack.c.bf16 %v3927, %v3927
      %v3944 = vpack.c.bf16 %v3928, %v3928
      %v3945 = vpack.c.bf16 %v3929, %v3929
      %v3946 = vpack.c.bf16 %v3930, %v3930
      %v3947 = vpack.c.bf16 %v3931, %v3931
      %v3948 = vpack.c.bf16 %v3932, %v3932
      %v3949 = vpack.c.bf16 %v3933, %v3933
      %v3950 = vpack.c.bf16 %v3934, %v3934
      %v3951 = vpack.c.bf16 %v3935, %v3935
      %v3952 = vpack.c.bf16 %v3936, %v3936
      %v3953 = vpack.c.bf16 %v3937, %v3937
      %v3954 = vpack.c.bf16 %v3938, %v3938
      %v3955 = vpack.c.bf16 %v3939, %v3939
      %v3956 = vpack.c.bf16 %v3940, %v3940
      %v3957 = vpack.c.bf16 %v3941, %v3941
      %3958 = vrot.lane.b32.xlu0 %v1275, 120
      %v3959 = vpop.permute.xlu0 %3958
      %v3961 = vsel %vm1291, %v3942, 0
      %v3964 = vsel %vm2223, %v3959, 0
      %3966 = vmatprep.subr.bf16.mxu0 0
      %3967 = vmatpush1.bf16.msra.mxu0 %v3964
      %3968 = vmatprep.subr.bf16.mxu0 0
      %3969 = vmatpush1.bf16.msra.mxu0 0
      %3970 = vmatprep.subr.bf16.mxu0 0
      %3971 = vmatpush1.bf16.msra.mxu0 0
      %3972 = vmatprep.subr.bf16.mxu0 0
      %3973 = vmatpush1.bf16.msra.mxu0 0
      %3974 = vmatprep.subr.bf16.mxu0 0
      %3975 = vmatpush1.bf16.msra.mxu0 0
      %3976 = vmatprep.subr.bf16.mxu0 0
      %3977 = vmatpush1.bf16.msra.mxu0 0
      %3978 = vmatprep.subr.bf16.mxu0 0
      %3979 = vmatpush1.bf16.msra.mxu0 0
      %3980 = vmatprep.subr.bf16.mxu0 0
      %3981 = vmatpush1.bf16.msra.mxu0 0
      %3982 = vmatprep.subr.bf16.mxu0 0
      %3983 = vmatpush1.bf16.msra.mxu0 0
      %3984 = vmatprep.subr.bf16.mxu0 0
      %3985 = vmatpush1.bf16.msra.mxu0 0
      %3986 = vmatprep.subr.bf16.mxu0 0
      %3987 = vmatpush1.bf16.msra.mxu0 0
      %3988 = vmatprep.subr.bf16.mxu0 0
      %3989 = vmatpush1.bf16.msra.mxu0 0
      %3990 = vmatprep.subr.bf16.mxu0 0
      %3991 = vmatpush1.bf16.msra.mxu0 0
      %3992 = vmatprep.subr.bf16.mxu0 0
      %3993 = vmatpush1.bf16.msra.mxu0 0
      %3994 = vmatprep.subr.bf16.mxu0 0
      %3995 = vmatpush1.bf16.msra.mxu0 0
      %3996 = vmatprep.subr.bf16.mxu0 0
      %3997 = vmatpush1.bf16.msra.mxu0 0
      %3998 = vmatprep.mubr.bf16.mxu0 0
      %3999 = vmatmul.mubr.bf16.gmra.mrb[0].mxu0 %v3961
      %v4000 = vpop.f32.mrb[0].mxu0
      %v4001 = vadd.f32 0.0, %v4000
      %v4002 = vpop.f32.mrb[0].mxu0
      %v4003 = vpop.f32.mrb[0].mxu0
      %v4004 = vpop.f32.mrb[0].mxu0
      %4005 = vdwg.mxu0
      %4006 = vrot.lane.b32.xlu0 %v1276, 120
      %v4007 = vpop.permute.xlu0 %4006
      %v4009 = vsel %vm1291, %v3943, 0
      %v4012 = vsel %vm2223, %v4007, 0
      %4014 = vmatprep.subr.bf16.mxu0 0
      %4015 = vmatpush1.bf16.msra.mxu0 %v4012
      %4016 = vmatprep.subr.bf16.mxu0 0
      %4017 = vmatpush1.bf16.msra.mxu0 0
      %4018 = vmatprep.subr.bf16.mxu0 0
      %4019 = vmatpush1.bf16.msra.mxu0 0
      %4020 = vmatprep.subr.bf16.mxu0 0
      %4021 = vmatpush1.bf16.msra.mxu0 0
      %4022 = vmatprep.subr.bf16.mxu0 0
      %4023 = vmatpush1.bf16.msra.mxu0 0
      %4024 = vmatprep.subr.bf16.mxu0 0
      %4025 = vmatpush1.bf16.msra.mxu0 0
      %4026 = vmatprep.subr.bf16.mxu0 0
      %4027 = vmatpush1.bf16.msra.mxu0 0
      %4028 = vmatprep.subr.bf16.mxu0 0
      %4029 = vmatpush1.bf16.msra.mxu0 0
      %4030 = vmatprep.subr.bf16.mxu0 0
      %4031 = vmatpush1.bf16.msra.mxu0 0
      %4032 = vmatprep.subr.bf16.mxu0 0
      %4033 = vmatpush1.bf16.msra.mxu0 0
      %4034 = vmatprep.subr.bf16.mxu0 0
      %4035 = vmatpush1.bf16.msra.mxu0 0
      %4036 = vmatprep.subr.bf16.mxu0 0
      %4037 = vmatpush1.bf16.msra.mxu0 0
      %4038 = vmatprep.subr.bf16.mxu0 0
      %4039 = vmatpush1.bf16.msra.mxu0 0
      %4040 = vmatprep.subr.bf16.mxu0 0
      %4041 = vmatpush1.bf16.msra.mxu0 0
      %4042 = vmatprep.subr.bf16.mxu0 0
      %4043 = vmatpush1.bf16.msra.mxu0 0
      %4044 = vmatprep.subr.bf16.mxu0 0
      %4045 = vmatpush1.bf16.msra.mxu0 0
      %4046 = vmatprep.mubr.bf16.mxu0 0
      %4047 = vmatmul.mubr.bf16.gmra.mrb[0].mxu0 %v4009
      %v4048 = vpop.f32.mrb[0].mxu0
      %v4049 = vadd.f32 0.0, %v4048
      %v4050 = vpop.f32.mrb[0].mxu0
      %v4051 = vpop.f32.mrb[0].mxu0
      %v4052 = vpop.f32.mrb[0].mxu0
      %4053 = vdwg.mxu0
      %4054 = vrot.lane.b32.xlu0 %v1277, 120
      %v4055 = vpop.permute.xlu0 %4054
      %v4057 = vsel %vm1291, %v3944, 0
      %v4060 = vsel %vm2223, %v4055, 0
      %4062 = vmatprep.subr.bf16.mxu0 0
      %4063 = vmatpush1.bf16.msra.mxu0 %v4060
      %4064 = vmatprep.subr.bf16.mxu0 0
      %4065 = vmatpush1.bf16.msra.mxu0 0
      %4066 = vmatprep.subr.bf16.mxu0 0
      %4067 = vmatpush1.bf16.msra.mxu0 0
      %4068 = vmatprep.subr.bf16.mxu0 0
      %4069 = vmatpush1.bf16.msra.mxu0 0
      %4070 = vmatprep.subr.bf16.mxu0 0
      %4071 = vmatpush1.bf16.msra.mxu0 0
      %4072 = vmatprep.subr.bf16.mxu0 0
      %4073 = vmatpush1.bf16.msra.mxu0 0
      %4074 = vmatprep.subr.bf16.mxu0 0
      %4075 = vmatpush1.bf16.msra.mxu0 0
      %4076 = vmatprep.subr.bf16.mxu0 0
      %4077 = vmatpush1.bf16.msra.mxu0 0
      %4078 = vmatprep.subr.bf16.mxu0 0
      %4079 = vmatpush1.bf16.msra.mxu0 0
      %4080 = vmatprep.subr.bf16.mxu0 0
      %4081 = vmatpush1.bf16.msra.mxu0 0
      %4082 = vmatprep.subr.bf16.mxu0 0
      %4083 = vmatpush1.bf16.msra.mxu0 0
      %4084 = vmatprep.subr.bf16.mxu0 0
      %4085 = vmatpush1.bf16.msra.mxu0 0
      %4086 = vmatprep.subr.bf16.mxu0 0
      %4087 = vmatpush1.bf16.msra.mxu0 0
      %4088 = vmatprep.subr.bf16.mxu0 0
      %4089 = vmatpush1.bf16.msra.mxu0 0
      %4090 = vmatprep.subr.bf16.mxu0 0
      %4091 = vmatpush1.bf16.msra.mxu0 0
      %4092 = vmatprep.subr.bf16.mxu0 0
      %4093 = vmatpush1.bf16.msra.mxu0 0
      %4094 = vmatprep.mubr.bf16.mxu0 0
      %4095 = vmatmul.mubr.bf16.gmra.mrb[0].mxu0 %v4057
      %v4096 = vpop.f32.mrb[0].mxu0
      %v4097 = vadd.f32 0.0, %v4096
      %v4098 = vpop.f32.mrb[0].mxu0
      %v4099 = vpop.f32.mrb[0].mxu0
      %v4100 = vpop.f32.mrb[0].mxu0
      %4101 = vdwg.mxu0
      %4102 = vrot.lane.b32.xlu0 %v1278, 120
      %v4103 = vpop.permute.xlu0 %4102
      %v4105 = vsel %vm1291, %v3945, 0
      %v4108 = vsel %vm2223, %v4103, 0
      %4110 = vmatprep.subr.bf16.mxu0 0
      %4111 = vmatpush1.bf16.msra.mxu0 %v4108
      %4112 = vmatprep.subr.bf16.mxu0 0
      %4113 = vmatpush1.bf16.msra.mxu0 0
      %4114 = vmatprep.subr.bf16.mxu0 0
      %4115 = vmatpush1.bf16.msra.mxu0 0
      %4116 = vmatprep.subr.bf16.mxu0 0
      %4117 = vmatpush1.bf16.msra.mxu0 0
      %4118 = vmatprep.subr.bf16.mxu0 0
      %4119 = vmatpush1.bf16.msra.mxu0 0
      %4120 = vmatprep.subr.bf16.mxu0 0
      %4121 = vmatpush1.bf16.msra.mxu0 0
      %4122 = vmatprep.subr.bf16.mxu0 0
      %4123 = vmatpush1.bf16.msra.mxu0 0
      %4124 = vmatprep.subr.bf16.mxu0 0
      %4125 = vmatpush1.bf16.msra.mxu0 0
      %4126 = vmatprep.subr.bf16.mxu0 0
      %4127 = vmatpush1.bf16.msra.mxu0 0
      %4128 = vmatprep.subr.bf16.mxu0 0
      %4129 = vmatpush1.bf16.msra.mxu0 0
      %4130 = vmatprep.subr.bf16.mxu0 0
      %4131 = vmatpush1.bf16.msra.mxu0 0
      %4132 = vmatprep.subr.bf16.mxu0 0
      %4133 = vmatpush1.bf16.msra.mxu0 0
      %4134 = vmatprep.subr.bf16.mxu0 0
      %4135 = vmatpush1.bf16.msra.mxu0 0
      %4136 = vmatprep.subr.bf16.mxu0 0
      %4137 = vmatpush1.bf16.msra.mxu0 0
      %4138 = vmatprep.subr.bf16.mxu0 0
      %4139 = vmatpush1.bf16.msra.mxu0 0
      %4140 = vmatprep.subr.bf16.mxu0 0
      %4141 = vmatpush1.bf16.msra.mxu0 0
      %4142 = vmatprep.mubr.bf16.mxu0 0
      %4143 = vmatmul.mubr.bf16.gmra.mrb[0].mxu0 %v4105
      %v4144 = vpop.f32.mrb[0].mxu0
      %v4145 = vadd.f32 0.0, %v4144
      %v4146 = vpop.f32.mrb[0].mxu0
      %v4147 = vpop.f32.mrb[0].mxu0
      %v4148 = vpop.f32.mrb[0].mxu0
      %4149 = vdwg.mxu0
      %4150 = vrot.lane.b32.xlu0 %v1279, 120
      %v4151 = vpop.permute.xlu0 %4150
      %v4153 = vsel %vm1291, %v3946, 0
      %v4156 = vsel %vm2223, %v4151, 0
      %4158 = vmatprep.subr.bf16.mxu0 0
      %4159 = vmatpush1.bf16.msra.mxu0 %v4156
      %4160 = vmatprep.subr.bf16.mxu0 0
      %4161 = vmatpush1.bf16.msra.mxu0 0
      %4162 = vmatprep.subr.bf16.mxu0 0
      %4163 = vmatpush1.bf16.msra.mxu0 0
      %4164 = vmatprep.subr.bf16.mxu0 0
      %4165 = vmatpush1.bf16.msra.mxu0 0
      %4166 = vmatprep.subr.bf16.mxu0 0
      %4167 = vmatpush1.bf16.msra.mxu0 0
      %4168 = vmatprep.subr.bf16.mxu0 0
      %4169 = vmatpush1.bf16.msra.mxu0 0
      %4170 = vmatprep.subr.bf16.mxu0 0
      %4171 = vmatpush1.bf16.msra.mxu0 0
      %4172 = vmatprep.subr.bf16.mxu0 0
      %4173 = vmatpush1.bf16.msra.mxu0 0
      %4174 = vmatprep.subr.bf16.mxu0 0
      %4175 = vmatpush1.bf16.msra.mxu0 0
      %4176 = vmatprep.subr.bf16.mxu0 0
      %4177 = vmatpush1.bf16.msra.mxu0 0
      %4178 = vmatprep.subr.bf16.mxu0 0
      %4179 = vmatpush1.bf16.msra.mxu0 0
      %4180 = vmatprep.subr.bf16.mxu0 0
      %4181 = vmatpush1.bf16.msra.mxu0 0
      %4182 = vmatprep.subr.bf16.mxu0 0
      %4183 = vmatpush1.bf16.msra.mxu0 0
      %4184 = vmatprep.subr.bf16.mxu0 0
      %4185 = vmatpush1.bf16.msra.mxu0 0
      %4186 = vmatprep.subr.bf16.mxu0 0
      %4187 = vmatpush1.bf16.msra.mxu0 0
      %4188 = vmatprep.subr.bf16.mxu0 0
      %4189 = vmatpush1.bf16.msra.mxu0 0
      %4190 = vmatprep.mubr.bf16.mxu0 0
      %4191 = vmatmul.mubr.bf16.gmra.mrb[0].mxu0 %v4153
      %v4192 = vpop.f32.mrb[0].mxu0
      %v4193 = vadd.f32 0.0, %v4192
      %v4194 = vpop.f32.mrb[0].mxu0
      %v4195 = vpop.f32.mrb[0].mxu0
      %v4196 = vpop.f32.mrb[0].mxu0
      %4197 = vdwg.mxu0
      %4198 = vrot.lane.b32.xlu0 %v1280, 120
      %v4199 = vpop.permute.xlu0 %4198
      %v4201 = vsel %vm1291, %v3947, 0
      %v4204 = vsel %vm2223, %v4199, 0
      %4206 = vmatprep.subr.bf16.mxu0 0
      %4207 = vmatpush1.bf16.msra.mxu0 %v4204
      %4208 = vmatprep.subr.bf16.mxu0 0
      %4209 = vmatpush1.bf16.msra.mxu0 0
      %4210 = vmatprep.subr.bf16.mxu0 0
      %4211 = vmatpush1.bf16.msra.mxu0 0
      %4212 = vmatprep.subr.bf16.mxu0 0
      %4213 = vmatpush1.bf16.msra.mxu0 0
      %4214 = vmatprep.subr.bf16.mxu0 0
      %4215 = vmatpush1.bf16.msra.mxu0 0
      %4216 = vmatprep.subr.bf16.mxu0 0
      %4217 = vmatpush1.bf16.msra.mxu0 0
      %4218 = vmatprep.subr.bf16.mxu0 0
      %4219 = vmatpush1.bf16.msra.mxu0 0
      %4220 = vmatprep.subr.bf16.mxu0 0
      %4221 = vmatpush1.bf16.msra.mxu0 0
      %4222 = vmatprep.subr.bf16.mxu0 0
      %4223 = vmatpush1.bf16.msra.mxu0 0
      %4224 = vmatprep.subr.bf16.mxu0 0
      %4225 = vmatpush1.bf16.msra.mxu0 0
      %4226 = vmatprep.subr.bf16.mxu0 0
      %4227 = vmatpush1.bf16.msra.mxu0 0
      %4228 = vmatprep.subr.bf16.mxu0 0
      %4229 = vmatpush1.bf16.msra.mxu0 0
      %4230 = vmatprep.subr.bf16.mxu0 0
      %4231 = vmatpush1.bf16.msra.mxu0 0
      %4232 = vmatprep.subr.bf16.mxu0 0
      %4233 = vmatpush1.bf16.msra.mxu0 0
      %4234 = vmatprep.subr.bf16.mxu0 0
      %4235 = vmatpush1.bf16.msra.mxu0 0
      %4236 = vmatprep.subr.bf16.mxu0 0
      %4237 = vmatpush1.bf16.msra.mxu0 0
      %4238 = vmatprep.mubr.bf16.mxu0 0
      %4239 = vmatmul.mubr.bf16.gmra.mrb[0].mxu0 %v4201
      %v4240 = vpop.f32.mrb[0].mxu0
      %v4241 = vadd.f32 0.0, %v4240
      %v4242 = vpop.f32.mrb[0].mxu0
      %v4243 = vpop.f32.mrb[0].mxu0
      %v4244 = vpop.f32.mrb[0].mxu0
      %4245 = vdwg.mxu0
      %4246 = vrot.lane.b32.xlu0 %v1281, 120
      %v4247 = vpop.permute.xlu0 %4246
      %v4249 = vsel %vm1291, %v3948, 0
      %v4252 = vsel %vm2223, %v4247, 0
      %4254 = vmatprep.subr.bf16.mxu0 0
      %4255 = vmatpush1.bf16.msra.mxu0 %v4252
      %4256 = vmatprep.subr.bf16.mxu0 0
      %4257 = vmatpush1.bf16.msra.mxu0 0
      %4258 = vmatprep.subr.bf16.mxu0 0
      %4259 = vmatpush1.bf16.msra.mxu0 0
      %4260 = vmatprep.subr.bf16.mxu0 0
      %4261 = vmatpush1.bf16.msra.mxu0 0
      %4262 = vmatprep.subr.bf16.mxu0 0
      %4263 = vmatpush1.bf16.msra.mxu0 0
      %4264 = vmatprep.subr.bf16.mxu0 0
      %4265 = vmatpush1.bf16.msra.mxu0 0
      %4266 = vmatprep.subr.bf16.mxu0 0
      %4267 = vmatpush1.bf16.msra.mxu0 0
      %4268 = vmatprep.subr.bf16.mxu0 0
      %4269 = vmatpush1.bf16.msra.mxu0 0
      %4270 = vmatprep.subr.bf16.mxu0 0
      %4271 = vmatpush1.bf16.msra.mxu0 0
      %4272 = vmatprep.subr.bf16.mxu0 0
      %4273 = vmatpush1.bf16.msra.mxu0 0
      %4274 = vmatprep.subr.bf16.mxu0 0
      %4275 = vmatpush1.bf16.msra.mxu0 0
      %4276 = vmatprep.subr.bf16.mxu0 0
      %4277 = vmatpush1.bf16.msra.mxu0 0
      %4278 = vmatprep.subr.bf16.mxu0 0
      %4279 = vmatpush1.bf16.msra.mxu0 0
      %4280 = vmatprep.subr.bf16.mxu0 0
      %4281 = vmatpush1.bf16.msra.mxu0 0
      %4282 = vmatprep.subr.bf16.mxu0 0
      %4283 = vmatpush1.bf16.msra.mxu0 0
      %4284 = vmatprep.subr.bf16.mxu0 0
      %4285 = vmatpush1.bf16.msra.mxu0 0
      %4286 = vmatprep.mubr.bf16.mxu0 0
      %4287 = vmatmul.mubr.bf16.gmra.mrb[0].mxu0 %v4249
      %v4288 = vpop.f32.mrb[0].mxu0
      %v4289 = vadd.f32 0.0, %v4288
      %v4290 = vpop.f32.mrb[0].mxu0
      %v4291 = vpop.f32.mrb[0].mxu0
      %v4292 = vpop.f32.mrb[0].mxu0
      %4293 = vdwg.mxu0
      %4294 = vrot.lane.b32.xlu0 %v1282, 120
      %v4295 = vpop.permute.xlu0 %4294
      %v4297 = vsel %vm1291, %v3949, 0
      %v4300 = vsel %vm2223, %v4295, 0
      %4302 = vmatprep.subr.bf16.mxu0 0
      %4303 = vmatpush1.bf16.msra.mxu0 %v4300
      %4304 = vmatprep.subr.bf16.mxu0 0
      %4305 = vmatpush1.bf16.msra.mxu0 0
      %4306 = vmatprep.subr.bf16.mxu0 0
      %4307 = vmatpush1.bf16.msra.mxu0 0
      %4308 = vmatprep.subr.bf16.mxu0 0
      %4309 = vmatpush1.bf16.msra.mxu0 0
      %4310 = vmatprep.subr.bf16.mxu0 0
      %4311 = vmatpush1.bf16.msra.mxu0 0
      %4312 = vmatprep.subr.bf16.mxu0 0
      %4313 = vmatpush1.bf16.msra.mxu0 0
      %4314 = vmatprep.subr.bf16.mxu0 0
      %4315 = vmatpush1.bf16.msra.mxu0 0
      %4316 = vmatprep.subr.bf16.mxu0 0
      %4317 = vmatpush1.bf16.msra.mxu0 0
      %4318 = vmatprep.subr.bf16.mxu0 0
      %4319 = vmatpush1.bf16.msra.mxu0 0
      %4320 = vmatprep.subr.bf16.mxu0 0
      %4321 = vmatpush1.bf16.msra.mxu0 0
      %4322 = vmatprep.subr.bf16.mxu0 0
      %4323 = vmatpush1.bf16.msra.mxu0 0
      %4324 = vmatprep.subr.bf16.mxu0 0
      %4325 = vmatpush1.bf16.msra.mxu0 0
      %4326 = vmatprep.subr.bf16.mxu0 0
      %4327 = vmatpush1.bf16.msra.mxu0 0
      %4328 = vmatprep.subr.bf16.mxu0 0
      %4329 = vmatpush1.bf16.msra.mxu0 0
      %4330 = vmatprep.subr.bf16.mxu0 0
      %4331 = vmatpush1.bf16.msra.mxu0 0
      %4332 = vmatprep.subr.bf16.mxu0 0
      %4333 = vmatpush1.bf16.msra.mxu0 0
      %4334 = vmatprep.mubr.bf16.mxu0 0
      %4335 = vmatmul.mubr.bf16.gmra.mrb[0].mxu0 %v4297
      %v4336 = vpop.f32.mrb[0].mxu0
      %v4337 = vadd.f32 0.0, %v4336
      %v4338 = vpop.f32.mrb[0].mxu0
      %v4339 = vpop.f32.mrb[0].mxu0
      %v4340 = vpop.f32.mrb[0].mxu0
      %4341 = vdwg.mxu0
      %4342 = vrot.lane.b32.xlu0 %v1283, 120
      %v4343 = vpop.permute.xlu0 %4342
      %v4345 = vsel %vm1291, %v3950, 0
      %v4348 = vsel %vm2223, %v4343, 0
      %4350 = vmatprep.subr.bf16.mxu0 0
      %4351 = vmatpush1.bf16.msra.mxu0 %v4348
      %4352 = vmatprep.subr.bf16.mxu0 0
      %4353 = vmatpush1.bf16.msra.mxu0 0
      %4354 = vmatprep.subr.bf16.mxu0 0
      %4355 = vmatpush1.bf16.msra.mxu0 0
      %4356 = vmatprep.subr.bf16.mxu0 0
      %4357 = vmatpush1.bf16.msra.mxu0 0
      %4358 = vmatprep.subr.bf16.mxu0 0
      %4359 = vmatpush1.bf16.msra.mxu0 0
      %4360 = vmatprep.subr.bf16.mxu0 0
      %4361 = vmatpush1.bf16.msra.mxu0 0
      %4362 = vmatprep.subr.bf16.mxu0 0
      %4363 = vmatpush1.bf16.msra.mxu0 0
      %4364 = vmatprep.subr.bf16.mxu0 0
      %4365 = vmatpush1.bf16.msra.mxu0 0
      %4366 = vmatprep.subr.bf16.mxu0 0
      %4367 = vmatpush1.bf16.msra.mxu0 0
      %4368 = vmatprep.subr.bf16.mxu0 0
      %4369 = vmatpush1.bf16.msra.mxu0 0
      %4370 = vmatprep.subr.bf16.mxu0 0
      %4371 = vmatpush1.bf16.msra.mxu0 0
      %4372 = vmatprep.subr.bf16.mxu0 0
      %4373 = vmatpush1.bf16.msra.mxu0 0
      %4374 = vmatprep.subr.bf16.mxu0 0
      %4375 = vmatpush1.bf16.msra.mxu0 0
      %4376 = vmatprep.subr.bf16.mxu0 0
      %4377 = vmatpush1.bf16.msra.mxu0 0
      %4378 = vmatprep.subr.bf16.mxu0 0
      %4379 = vmatpush1.bf16.msra.mxu0 0
      %4380 = vmatprep.subr.bf16.mxu0 0
      %4381 = vmatpush1.bf16.msra.mxu0 0
      %4382 = vmatprep.mubr.bf16.mxu0 0
      %4383 = vmatmul.mubr.bf16.gmra.mrb[0].mxu0 %v4345
      %v4384 = vpop.f32.mrb[0].mxu0
      %v4385 = vadd.f32 0.0, %v4384
      %v4386 = vpop.f32.mrb[0].mxu0
      %v4387 = vpop.f32.mrb[0].mxu0
      %v4388 = vpop.f32.mrb[0].mxu0
      %4389 = vdwg.mxu0
      %4390 = vrot.lane.b32.xlu0 %v1284, 120
      %v4391 = vpop.permute.xlu0 %4390
      %v4393 = vsel %vm1291, %v3951, 0
      %v4396 = vsel %vm2223, %v4391, 0
      %4398 = vmatprep.subr.bf16.mxu0 0
      %4399 = vmatpush1.bf16.msra.mxu0 %v4396
      %4400 = vmatprep.subr.bf16.mxu0 0
      %4401 = vmatpush1.bf16.msra.mxu0 0
      %4402 = vmatprep.subr.bf16.mxu0 0
      %4403 = vmatpush1.bf16.msra.mxu0 0
      %4404 = vmatprep.subr.bf16.mxu0 0
      %4405 = vmatpush1.bf16.msra.mxu0 0
      %4406 = vmatprep.subr.bf16.mxu0 0
      %4407 = vmatpush1.bf16.msra.mxu0 0
      %4408 = vmatprep.subr.bf16.mxu0 0
      %4409 = vmatpush1.bf16.msra.mxu0 0
      %4410 = vmatprep.subr.bf16.mxu0 0
      %4411 = vmatpush1.bf16.msra.mxu0 0
      %4412 = vmatprep.subr.bf16.mxu0 0
      %4413 = vmatpush1.bf16.msra.mxu0 0
      %4414 = vmatprep.subr.bf16.mxu0 0
      %4415 = vmatpush1.bf16.msra.mxu0 0
      %4416 = vmatprep.subr.bf16.mxu0 0
      %4417 = vmatpush1.bf16.msra.mxu0 0
      %4418 = vmatprep.subr.bf16.mxu0 0
      %4419 = vmatpush1.bf16.msra.mxu0 0
      %4420 = vmatprep.subr.bf16.mxu0 0
      %4421 = vmatpush1.bf16.msra.mxu0 0
      %4422 = vmatprep.subr.bf16.mxu0 0
      %4423 = vmatpush1.bf16.msra.mxu0 0
      %4424 = vmatprep.subr.bf16.mxu0 0
      %4425 = vmatpush1.bf16.msra.mxu0 0
      %4426 = vmatprep.subr.bf16.mxu0 0
      %4427 = vmatpush1.bf16.msra.mxu0 0
      %4428 = vmatprep.subr.bf16.mxu0 0
      %4429 = vmatpush1.bf16.msra.mxu0 0
      %4430 = vmatprep.mubr.bf16.mxu0 0
      %4431 = vmatmul.mubr.bf16.gmra.mrb[0].mxu0 %v4393
      %v4432 = vpop.f32.mrb[0].mxu0
      %v4433 = vadd.f32 0.0, %v4432
      %v4434 = vpop.f32.mrb[0].mxu0
      %v4435 = vpop.f32.mrb[0].mxu0
      %v4436 = vpop.f32.mrb[0].mxu0
      %4437 = vdwg.mxu0
      %4438 = vrot.lane.b32.xlu0 %v1285, 120
      %v4439 = vpop.permute.xlu0 %4438
      %v4441 = vsel %vm1291, %v3952, 0
      %v4444 = vsel %vm2223, %v4439, 0
      %4446 = vmatprep.subr.bf16.mxu0 0
      %4447 = vmatpush1.bf16.msra.mxu0 %v4444
      %4448 = vmatprep.subr.bf16.mxu0 0
      %4449 = vmatpush1.bf16.msra.mxu0 0
      %4450 = vmatprep.subr.bf16.mxu0 0
      %4451 = vmatpush1.bf16.msra.mxu0 0
      %4452 = vmatprep.subr.bf16.mxu0 0
      %4453 = vmatpush1.bf16.msra.mxu0 0
      %4454 = vmatprep.subr.bf16.mxu0 0
      %4455 = vmatpush1.bf16.msra.mxu0 0
      %4456 = vmatprep.subr.bf16.mxu0 0
      %4457 = vmatpush1.bf16.msra.mxu0 0
      %4458 = vmatprep.subr.bf16.mxu0 0
      %4459 = vmatpush1.bf16.msra.mxu0 0
      %4460 = vmatprep.subr.bf16.mxu0 0
      %4461 = vmatpush1.bf16.msra.mxu0 0
      %4462 = vmatprep.subr.bf16.mxu0 0
      %4463 = vmatpush1.bf16.msra.mxu0 0
      %4464 = vmatprep.subr.bf16.mxu0 0
      %4465 = vmatpush1.bf16.msra.mxu0 0
      %4466 = vmatprep.subr.bf16.mxu0 0
      %4467 = vmatpush1.bf16.msra.mxu0 0
      %4468 = vmatprep.subr.bf16.mxu0 0
      %4469 = vmatpush1.bf16.msra.mxu0 0
      %4470 = vmatprep.subr.bf16.mxu0 0
      %4471 = vmatpush1.bf16.msra.mxu0 0
      %4472 = vmatprep.subr.bf16.mxu0 0
      %4473 = vmatpush1.bf16.msra.mxu0 0
      %4474 = vmatprep.subr.bf16.mxu0 0
      %4475 = vmatpush1.bf16.msra.mxu0 0
      %4476 = vmatprep.subr.bf16.mxu0 0
      %4477 = vmatpush1.bf16.msra.mxu0 0
      %4478 = vmatprep.mubr.bf16.mxu0 0
      %4479 = vmatmul.mubr.bf16.gmra.mrb[0].mxu0 %v4441
      %v4480 = vpop.f32.mrb[0].mxu0
      %v4481 = vadd.f32 0.0, %v4480
      %v4482 = vpop.f32.mrb[0].mxu0
      %v4483 = vpop.f32.mrb[0].mxu0
      %v4484 = vpop.f32.mrb[0].mxu0
      %4485 = vdwg.mxu0
      %4486 = vrot.lane.b32.xlu0 %v1286, 120
      %v4487 = vpop.permute.xlu0 %4486
      %v4489 = vsel %vm1291, %v3953, 0
      %v4492 = vsel %vm2223, %v4487, 0
      %4494 = vmatprep.subr.bf16.mxu0 0
      %4495 = vmatpush1.bf16.msra.mxu0 %v4492
      %4496 = vmatprep.subr.bf16.mxu0 0
      %4497 = vmatpush1.bf16.msra.mxu0 0
      %4498 = vmatprep.subr.bf16.mxu0 0
      %4499 = vmatpush1.bf16.msra.mxu0 0
      %4500 = vmatprep.subr.bf16.mxu0 0
      %4501 = vmatpush1.bf16.msra.mxu0 0
      %4502 = vmatprep.subr.bf16.mxu0 0
      %4503 = vmatpush1.bf16.msra.mxu0 0
      %4504 = vmatprep.subr.bf16.mxu0 0
      %4505 = vmatpush1.bf16.msra.mxu0 0
      %4506 = vmatprep.subr.bf16.mxu0 0
      %4507 = vmatpush1.bf16.msra.mxu0 0
      %4508 = vmatprep.subr.bf16.mxu0 0
      %4509 = vmatpush1.bf16.msra.mxu0 0
      %4510 = vmatprep.subr.bf16.mxu0 0
      %4511 = vmatpush1.bf16.msra.mxu0 0
      %4512 = vmatprep.subr.bf16.mxu0 0
      %4513 = vmatpush1.bf16.msra.mxu0 0
      %4514 = vmatprep.subr.bf16.mxu0 0
      %4515 = vmatpush1.bf16.msra.mxu0 0
      %4516 = vmatprep.subr.bf16.mxu0 0
      %4517 = vmatpush1.bf16.msra.mxu0 0
      %4518 = vmatprep.subr.bf16.mxu0 0
      %4519 = vmatpush1.bf16.msra.mxu0 0
      %4520 = vmatprep.subr.bf16.mxu0 0
      %4521 = vmatpush1.bf16.msra.mxu0 0
      %4522 = vmatprep.subr.bf16.mxu0 0
      %4523 = vmatpush1.bf16.msra.mxu0 0
      %4524 = vmatprep.subr.bf16.mxu0 0
      %4525 = vmatpush1.bf16.msra.mxu0 0
      %4526 = vmatprep.mubr.bf16.mxu0 0
      %4527 = vmatmul.mubr.bf16.gmra.mrb[0].mxu0 %v4489
      %v4528 = vpop.f32.mrb[0].mxu0
      %v4529 = vadd.f32 0.0, %v4528
      %v4530 = vpop.f32.mrb[0].mxu0
      %v4531 = vpop.f32.mrb[0].mxu0
      %v4532 = vpop.f32.mrb[0].mxu0
      %4533 = vdwg.mxu0
      %4534 = vrot.lane.b32.xlu0 %v1287, 120
      %v4535 = vpop.permute.xlu0 %4534
      %v4537 = vsel %vm1291, %v3954, 0
      %v4540 = vsel %vm2223, %v4535, 0
      %4542 = vmatprep.subr.bf16.mxu0 0
      %4543 = vmatpush1.bf16.msra.mxu0 %v4540
      %4544 = vmatprep.subr.bf16.mxu0 0
      %4545 = vmatpush1.bf16.msra.mxu0 0
      %4546 = vmatprep.subr.bf16.mxu0 0
      %4547 = vmatpush1.bf16.msra.mxu0 0
      %4548 = vmatprep.subr.bf16.mxu0 0
      %4549 = vmatpush1.bf16.msra.mxu0 0
      %4550 = vmatprep.subr.bf16.mxu0 0
      %4551 = vmatpush1.bf16.msra.mxu0 0
      %4552 = vmatprep.subr.bf16.mxu0 0
      %4553 = vmatpush1.bf16.msra.mxu0 0
      %4554 = vmatprep.subr.bf16.mxu0 0
      %4555 = vmatpush1.bf16.msra.mxu0 0
      %4556 = vmatprep.subr.bf16.mxu0 0
      %4557 = vmatpush1.bf16.msra.mxu0 0
      %4558 = vmatprep.subr.bf16.mxu0 0
      %4559 = vmatpush1.bf16.msra.mxu0 0
      %4560 = vmatprep.subr.bf16.mxu0 0
      %4561 = vmatpush1.bf16.msra.mxu0 0
      %4562 = vmatprep.subr.bf16.mxu0 0
      %4563 = vmatpush1.bf16.msra.mxu0 0
      %4564 = vmatprep.subr.bf16.mxu0 0
      %4565 = vmatpush1.bf16.msra.mxu0 0
      %4566 = vmatprep.subr.bf16.mxu0 0
      %4567 = vmatpush1.bf16.msra.mxu0 0
      %4568 = vmatprep.subr.bf16.mxu0 0
      %4569 = vmatpush1.bf16.msra.mxu0 0
      %4570 = vmatprep.subr.bf16.mxu0 0
      %4571 = vmatpush1.bf16.msra.mxu0 0
      %4572 = vmatprep.subr.bf16.mxu0 0
      %4573 = vmatpush1.bf16.msra.mxu0 0
      %4574 = vmatprep.mubr.bf16.mxu0 0
      %4575 = vmatmul.mubr.bf16.gmra.mrb[0].mxu0 %v4537
      %v4576 = vpop.f32.mrb[0].mxu0
      %v4577 = vadd.f32 0.0, %v4576
      %v4578 = vpop.f32.mrb[0].mxu0
      %v4579 = vpop.f32.mrb[0].mxu0
      %v4580 = vpop.f32.mrb[0].mxu0
      %4581 = vdwg.mxu0
      %4582 = vrot.lane.b32.xlu0 %v1288, 120
      %v4583 = vpop.permute.xlu0 %4582
      %v4585 = vsel %vm1291, %v3955, 0
      %v4588 = vsel %vm2223, %v4583, 0
      %4590 = vmatprep.subr.bf16.mxu0 0
      %4591 = vmatpush1.bf16.msra.mxu0 %v4588
      %4592 = vmatprep.subr.bf16.mxu0 0
      %4593 = vmatpush1.bf16.msra.mxu0 0
      %4594 = vmatprep.subr.bf16.mxu0 0
      %4595 = vmatpush1.bf16.msra.mxu0 0
      %4596 = vmatprep.subr.bf16.mxu0 0
      %4597 = vmatpush1.bf16.msra.mxu0 0
      %4598 = vmatprep.subr.bf16.mxu0 0
      %4599 = vmatpush1.bf16.msra.mxu0 0
      %4600 = vmatprep.subr.bf16.mxu0 0
      %4601 = vmatpush1.bf16.msra.mxu0 0
      %4602 = vmatprep.subr.bf16.mxu0 0
      %4603 = vmatpush1.bf16.msra.mxu0 0
      %4604 = vmatprep.subr.bf16.mxu0 0
      %4605 = vmatpush1.bf16.msra.mxu0 0
      %4606 = vmatprep.subr.bf16.mxu0 0
      %4607 = vmatpush1.bf16.msra.mxu0 0
      %4608 = vmatprep.subr.bf16.mxu0 0
      %4609 = vmatpush1.bf16.msra.mxu0 0
      %4610 = vmatprep.subr.bf16.mxu0 0
      %4611 = vmatpush1.bf16.msra.mxu0 0
      %4612 = vmatprep.subr.bf16.mxu0 0
      %4613 = vmatpush1.bf16.msra.mxu0 0
      %4614 = vmatprep.subr.bf16.mxu0 0
      %4615 = vmatpush1.bf16.msra.mxu0 0
      %4616 = vmatprep.subr.bf16.mxu0 0
      %4617 = vmatpush1.bf16.msra.mxu0 0
      %4618 = vmatprep.subr.bf16.mxu0 0
      %4619 = vmatpush1.bf16.msra.mxu0 0
      %4620 = vmatprep.subr.bf16.mxu0 0
      %4621 = vmatpush1.bf16.msra.mxu0 0
      %4622 = vmatprep.mubr.bf16.mxu0 0
      %4623 = vmatmul.mubr.bf16.gmra.mrb[0].mxu0 %v4585
      %v4624 = vpop.f32.mrb[0].mxu0
      %v4625 = vadd.f32 0.0, %v4624
      %v4626 = vpop.f32.mrb[0].mxu0
      %v4627 = vpop.f32.mrb[0].mxu0
      %v4628 = vpop.f32.mrb[0].mxu0
      %4629 = vdwg.mxu0
      %4630 = vrot.lane.b32.xlu0 %v1289, 120
      %v4631 = vpop.permute.xlu0 %4630
      %v4633 = vsel %vm1291, %v3956, 0
      %v4636 = vsel %vm2223, %v4631, 0
      %4638 = vmatprep.subr.bf16.mxu0 0
      %4639 = vmatpush1.bf16.msra.mxu0 %v4636
      %4640 = vmatprep.subr.bf16.mxu0 0
      %4641 = vmatpush1.bf16.msra.mxu0 0
      %4642 = vmatprep.subr.bf16.mxu0 0
      %4643 = vmatpush1.bf16.msra.mxu0 0
      %4644 = vmatprep.subr.bf16.mxu0 0
      %4645 = vmatpush1.bf16.msra.mxu0 0
      %4646 = vmatprep.subr.bf16.mxu0 0
      %4647 = vmatpush1.bf16.msra.mxu0 0
      %4648 = vmatprep.subr.bf16.mxu0 0
      %4649 = vmatpush1.bf16.msra.mxu0 0
      %4650 = vmatprep.subr.bf16.mxu0 0
      %4651 = vmatpush1.bf16.msra.mxu0 0
      %4652 = vmatprep.subr.bf16.mxu0 0
      %4653 = vmatpush1.bf16.msra.mxu0 0
      %4654 = vmatprep.subr.bf16.mxu0 0
      %4655 = vmatpush1.bf16.msra.mxu0 0
      %4656 = vmatprep.subr.bf16.mxu0 0
      %4657 = vmatpush1.bf16.msra.mxu0 0
      %4658 = vmatprep.subr.bf16.mxu0 0
      %4659 = vmatpush1.bf16.msra.mxu0 0
      %4660 = vmatprep.subr.bf16.mxu0 0
      %4661 = vmatpush1.bf16.msra.mxu0 0
      %4662 = vmatprep.subr.bf16.mxu0 0
      %4663 = vmatpush1.bf16.msra.mxu0 0
      %4664 = vmatprep.subr.bf16.mxu0 0
      %4665 = vmatpush1.bf16.msra.mxu0 0
      %4666 = vmatprep.subr.bf16.mxu0 0
      %4667 = vmatpush1.bf16.msra.mxu0 0
      %4668 = vmatprep.subr.bf16.mxu0 0
      %4669 = vmatpush1.bf16.msra.mxu0 0
      %4670 = vmatprep.mubr.bf16.mxu0 0
      %4671 = vmatmul.mubr.bf16.gmra.mrb[0].mxu0 %v4633
      %v4672 = vpop.f32.mrb[0].mxu0
      %v4673 = vadd.f32 0.0, %v4672
      %v4674 = vpop.f32.mrb[0].mxu0
      %v4675 = vpop.f32.mrb[0].mxu0
      %v4676 = vpop.f32.mrb[0].mxu0
      %4677 = vdwg.mxu0
      %4678 = vrot.lane.b32.xlu0 %v1290, 120
      %v4679 = vpop.permute.xlu0 %4678
      %v4681 = vsel %vm1291, %v3957, 0
      %v4684 = vsel %vm2223, %v4679, 0
      %4686 = vmatprep.subr.bf16.mxu0 0
      %4687 = vmatpush1.bf16.msra.mxu0 %v4684
      %4688 = vmatprep.subr.bf16.mxu0 0
      %4689 = vmatpush1.bf16.msra.mxu0 0
      %4690 = vmatprep.subr.bf16.mxu0 0
      %4691 = vmatpush1.bf16.msra.mxu0 0
      %4692 = vmatprep.subr.bf16.mxu0 0
      %4693 = vmatpush1.bf16.msra.mxu0 0
      %4694 = vmatprep.subr.bf16.mxu0 0
      %4695 = vmatpush1.bf16.msra.mxu0 0
      %4696 = vmatprep.subr.bf16.mxu0 0
      %4697 = vmatpush1.bf16.msra.mxu0 0
      %4698 = vmatprep.subr.bf16.mxu0 0
      %4699 = vmatpush1.bf16.msra.mxu0 0
      %4700 = vmatprep.subr.bf16.mxu0 0
      %4701 = vmatpush1.bf16.msra.mxu0 0
      %4702 = vmatprep.subr.bf16.mxu0 0
      %4703 = vmatpush1.bf16.msra.mxu0 0
      %4704 = vmatprep.subr.bf16.mxu0 0
      %4705 = vmatpush1.bf16.msra.mxu0 0
      %4706 = vmatprep.subr.bf16.mxu0 0
      %4707 = vmatpush1.bf16.msra.mxu0 0
      %4708 = vmatprep.subr.bf16.mxu0 0
      %4709 = vmatpush1.bf16.msra.mxu0 0
      %4710 = vmatprep.subr.bf16.mxu0 0
      %4711 = vmatpush1.bf16.msra.mxu0 0
      %4712 = vmatprep.subr.bf16.mxu0 0
      %4713 = vmatpush1.bf16.msra.mxu0 0
      %4714 = vmatprep.subr.bf16.mxu0 0
      %4715 = vmatpush1.bf16.msra.mxu0 0
      %4716 = vmatprep.subr.bf16.mxu0 0
      %4717 = vmatpush1.bf16.msra.mxu0 0
      %4718 = vmatprep.mubr.bf16.mxu0 0
      %4719 = vmatmul.mubr.bf16.gmra.mrb[0].mxu0 %v4681
      %v4720 = vpop.f32.mrb[0].mxu0
      %v4721 = vadd.f32 0.0, %v4720
      %v4722 = vpop.f32.mrb[0].mxu0
      %v4723 = vpop.f32.mrb[0].mxu0
      %v4724 = vpop.f32.mrb[0].mxu0
      %4725 = vdwg.mxu0
      %v4726 = vpack.c.bf16 %v4049, %v4001
      %v4727 = vpack.c.bf16 %v4145, %v4097
      %v4728 = vpack.c.bf16 %v4241, %v4193
      %v4729 = vpack.c.bf16 %v4337, %v4289
      %v4730 = vpack.c.bf16 %v4433, %v4385
      %v4731 = vpack.c.bf16 %v4529, %v4481
      %v4732 = vpack.c.bf16 %v4625, %v4577
      %v4733 = vpack.c.bf16 %v4721, %v4673
      %v4734 = vld [vmem:[%s10 + $0x4] sm:$0xf]
      %v4736 = vsel %vm1291, %v4726, 0
      %v4739 = vsel %vm1291, %v4727, 0
      %v4742 = vsel %vm1291, %v4728, 0
      %v4745 = vsel %vm1291, %v4729, 0
      %v4748 = vsel %vm1291, %v4730, 0
      %v4751 = vsel %vm1291, %v4731, 0
      %v4754 = vsel %vm1291, %v4732, 0
      %v4757 = vsel %vm1291, %v4733, 0
      %v4760 = vsel %vm2223, %v4734, 0
      %4762 = vmatprep.subr.bf16.mxu0 0
      %4763 = vmatpush1.bf16.msra.mxu0 %v4760
      %4764 = vmatprep.subr.bf16.mxu0 0
      %4765 = vmatpush1.bf16.msra.mxu0 0
      %4766 = vmatprep.subr.bf16.mxu0 0
      %4767 = vmatpush1.bf16.msra.mxu0 0
      %4768 = vmatprep.subr.bf16.mxu0 0
      %4769 = vmatpush1.bf16.msra.mxu0 0
      %4770 = vmatprep.subr.bf16.mxu0 0
      %4771 = vmatpush1.bf16.msra.mxu0 0
      %4772 = vmatprep.subr.bf16.mxu0 0
      %4773 = vmatpush1.bf16.msra.mxu0 0
      %4774 = vmatprep.subr.bf16.mxu0 0
      %4775 = vmatpush1.bf16.msra.mxu0 0
      %4776 = vmatprep.subr.bf16.mxu0 0
      %4777 = vmatpush1.bf16.msra.mxu0 0
      %4778 = vmatprep.subr.bf16.mxu0 0
      %4779 = vmatpush1.bf16.msra.mxu0 0
      %4780 = vmatprep.subr.bf16.mxu0 0
      %4781 = vmatpush1.bf16.msra.mxu0 0
      %4782 = vmatprep.subr.bf16.mxu0 0
      %4783 = vmatpush1.bf16.msra.mxu0 0
      %4784 = vmatprep.subr.bf16.mxu0 0
      %4785 = vmatpush1.bf16.msra.mxu0 0
      %4786 = vmatprep.subr.bf16.mxu0 0
      %4787 = vmatpush1.bf16.msra.mxu0 0
      %4788 = vmatprep.subr.bf16.mxu0 0
      %4789 = vmatpush1.bf16.msra.mxu0 0
      %4790 = vmatprep.subr.bf16.mxu0 0
      %4791 = vmatpush1.bf16.msra.mxu0 0
      %4792 = vmatprep.subr.bf16.mxu0 0
      %4793 = vmatpush1.bf16.msra.mxu0 0
      %4794 = vmatprep.mubr.bf16.mxu0 0
      %4795 = vmatmul.mubr.bf16.gmra.mrb[0].mxu0 %v4736
      %v4796 = vpop.f32.mrb[0].mxu0
      %v4797 = vadd.f32 0.0, %v4796
      %v4798 = vpop.f32.mrb[0].mxu0
      %v4799 = vpop.f32.mrb[0].mxu0
      %v4800 = vadd.f32 0.0, %v4799
      %v4801 = vpop.f32.mrb[0].mxu0
      %4802 = vmatprep.mubr.bf16.mxu0 0
      %4803 = vmatmul.mubr.bf16.gmra.mrb[0].mxu0 %v4739
      %v4804 = vpop.f32.mrb[0].mxu0
      %v4805 = vadd.f32 0.0, %v4804
      %v4806 = vpop.f32.mrb[0].mxu0
      %v4807 = vpop.f32.mrb[0].mxu0
      %v4808 = vadd.f32 0.0, %v4807
      %v4809 = vpop.f32.mrb[0].mxu0
      %4810 = vmatprep.mubr.bf16.mxu0 0
      %4811 = vmatmul.mubr.bf16.gmra.mrb[0].mxu0 %v4742
      %v4812 = vpop.f32.mrb[0].mxu0
      %v4813 = vadd.f32 0.0, %v4812
      %v4814 = vpop.f32.mrb[0].mxu0
      %v4815 = vpop.f32.mrb[0].mxu0
      %v4816 = vadd.f32 0.0, %v4815
      %v4817 = vpop.f32.mrb[0].mxu0
      %4818 = vmatprep.mubr.bf16.mxu0 0
      %4819 = vmatmul.mubr.bf16.gmra.mrb[0].mxu0 %v4745
      %v4820 = vpop.f32.mrb[0].mxu0
      %v4821 = vadd.f32 0.0, %v4820
      %v4822 = vpop.f32.mrb[0].mxu0
      %v4823 = vpop.f32.mrb[0].mxu0
      %v4824 = vadd.f32 0.0, %v4823
      %v4825 = vpop.f32.mrb[0].mxu0
      %4826 = vmatprep.mubr.bf16.mxu0 0
      %4827 = vmatmul.mubr.bf16.gmra.mrb[0].mxu0 %v4748
      %v4828 = vpop.f32.mrb[0].mxu0
      %v4829 = vadd.f32 0.0, %v4828
      %v4830 = vpop.f32.mrb[0].mxu0
      %v4831 = vpop.f32.mrb[0].mxu0
      %v4832 = vadd.f32 0.0, %v4831
      %v4833 = vpop.f32.mrb[0].mxu0
      %4834 = vmatprep.mubr.bf16.mxu0 0
      %4835 = vmatmul.mubr.bf16.gmra.mrb[0].mxu0 %v4751
      %v4836 = vpop.f32.mrb[0].mxu0
      %v4837 = vadd.f32 0.0, %v4836
      %v4838 = vpop.f32.mrb[0].mxu0
      %v4839 = vpop.f32.mrb[0].mxu0
      %v4840 = vadd.f32 0.0, %v4839
      %v4841 = vpop.f32.mrb[0].mxu0
      %4842 = vmatprep.mubr.bf16.mxu0 0
      %4843 = vmatmul.mubr.bf16.gmra.mrb[0].mxu0 %v4754
      %v4844 = vpop.f32.mrb[0].mxu0
      %v4845 = vadd.f32 0.0, %v4844
      %v4846 = vpop.f32.mrb[0].mxu0
      %v4847 = vpop.f32.mrb[0].mxu0
      %v4848 = vadd.f32 0.0, %v4847
      %v4849 = vpop.f32.mrb[0].mxu0
      %4850 = vmatprep.mubr.bf16.mxu0 0
      %4851 = vmatmul.mubr.bf16.gmra.mrb[0].mxu0 %v4757
      %v4852 = vpop.f32.mrb[0].mxu0
      %v4853 = vadd.f32 0.0, %v4852
      %v4854 = vpop.f32.mrb[0].mxu0
      %v4855 = vpop.f32.mrb[0].mxu0
      %v4856 = vadd.f32 0.0, %v4855
      %v4857 = vpop.f32.mrb[0].mxu0
      %4858 = vdwg.mxu0
      %v4860 = vsel %vm1291, %v2957, 0
      %v4863 = vsel %vm1291, %v2958, 0
      %v4866 = vsel %vm1291, %v2959, 0
      %v4869 = vsel %vm1291, %v2960, 0
      %v4872 = vsel %vm1291, %v2961, 0
      %v4875 = vsel %vm1291, %v2962, 0
      %v4878 = vsel %vm1291, %v2963, 0
      %v4881 = vsel %vm1291, %v2964, 0
      %v4884 = vsel %vm2223, %v2965, 0
      %4886 = vmatprep.subr.bf16.mxu0 0
      %4887 = vmatpush1.bf16.msra.mxu0 %v4884
      %4888 = vmatprep.subr.bf16.mxu0 0
      %4889 = vmatpush1.bf16.msra.mxu0 0
      %4890 = vmatprep.subr.bf16.mxu0 0
      %4891 = vmatpush1.bf16.msra.mxu0 0
      %4892 = vmatprep.subr.bf16.mxu0 0
      %4893 = vmatpush1.bf16.msra.mxu0 0
      %4894 = vmatprep.subr.bf16.mxu0 0
      %4895 = vmatpush1.bf16.msra.mxu0 0
      %4896 = vmatprep.subr.bf16.mxu0 0
      %4897 = vmatpush1.bf16.msra.mxu0 0
      %4898 = vmatprep.subr.bf16.mxu0 0
      %4899 = vmatpush1.bf16.msra.mxu0 0
      %4900 = vmatprep.subr.bf16.mxu0 0
      %4901 = vmatpush1.bf16.msra.mxu0 0
      %4902 = vmatprep.subr.bf16.mxu0 0
      %4903 = vmatpush1.bf16.msra.mxu0 0
      %4904 = vmatprep.subr.bf16.mxu0 0
      %4905 = vmatpush1.bf16.msra.mxu0 0
      %4906 = vmatprep.subr.bf16.mxu0 0
      %4907 = vmatpush1.bf16.msra.mxu0 0
      %4908 = vmatprep.subr.bf16.mxu0 0
      %4909 = vmatpush1.bf16.msra.mxu0 0
      %4910 = vmatprep.subr.bf16.mxu0 0
      %4911 = vmatpush1.bf16.msra.mxu0 0
      %4912 = vmatprep.subr.bf16.mxu0 0
      %4913 = vmatpush1.bf16.msra.mxu0 0
      %4914 = vmatprep.subr.bf16.mxu0 0
      %4915 = vmatpush1.bf16.msra.mxu0 0
      %4916 = vmatprep.subr.bf16.mxu0 0
      %4917 = vmatpush1.bf16.msra.mxu0 0
      %4918 = vmatprep.mubr.bf16.mxu0 0
      %4919 = vmatmul.mubr.bf16.gmra.mrb[0].mxu0 %v4860
      %v4920 = vpop.f32.mrb[0].mxu0
      %v4921 = vadd.f32 %v4797, %v4920
      %v4922 = vpop.f32.mrb[0].mxu0
      %v4923 = vpop.f32.mrb[0].mxu0
      %v4924 = vadd.f32 %v4800, %v4923
      %v4925 = vpop.f32.mrb[0].mxu0
      %4926 = vmatprep.mubr.bf16.mxu0 0
      %4927 = vmatmul.mubr.bf16.gmra.mrb[0].mxu0 %v4863
      %v4928 = vpop.f32.mrb[0].mxu0
      %v4929 = vadd.f32 %v4805, %v4928
      %v4930 = vpop.f32.mrb[0].mxu0
      %v4931 = vpop.f32.mrb[0].mxu0
      %v4932 = vadd.f32 %v4808, %v4931
      %v4933 = vpop.f32.mrb[0].mxu0
      %4934 = vmatprep.mubr.bf16.mxu0 0
      %4935 = vmatmul.mubr.bf16.gmra.mrb[0].mxu0 %v4866
      %v4936 = vpop.f32.mrb[0].mxu0
      %v4937 = vadd.f32 %v4813, %v4936
      %v4938 = vpop.f32.mrb[0].mxu0
      %v4939 = vpop.f32.mrb[0].mxu0
      %v4940 = vadd.f32 %v4816, %v4939
      %v4941 = vpop.f32.mrb[0].mxu0
      %4942 = vmatprep.mubr.bf16.mxu0 0
      %4943 = vmatmul.mubr.bf16.gmra.mrb[0].mxu0 %v4869
      %v4944 = vpop.f32.mrb[0].mxu0
      %v4945 = vadd.f32 %v4821, %v4944
      %v4946 = vpop.f32.mrb[0].mxu0
      %v4947 = vpop.f32.mrb[0].mxu0
      %v4948 = vadd.f32 %v4824, %v4947
      %v4949 = vpop.f32.mrb[0].mxu0
      %4950 = vmatprep.mubr.bf16.mxu0 0
      %4951 = vmatmul.mubr.bf16.gmra.mrb[0].mxu0 %v4872
      %v4952 = vpop.f32.mrb[0].mxu0
      %v4953 = vadd.f32 %v4829, %v4952
      %v4954 = vpop.f32.mrb[0].mxu0
      %v4955 = vpop.f32.mrb[0].mxu0
      %v4956 = vadd.f32 %v4832, %v4955
      %v4957 = vpop.f32.mrb[0].mxu0
      %4958 = vmatprep.mubr.bf16.mxu0 0
      %4959 = vmatmul.mubr.bf16.gmra.mrb[0].mxu0 %v4875
      %v4960 = vpop.f32.mrb[0].mxu0
      %v4961 = vadd.f32 %v4837, %v4960
      %v4962 = vpop.f32.mrb[0].mxu0
      %v4963 = vpop.f32.mrb[0].mxu0
      %v4964 = vadd.f32 %v4840, %v4963
      %v4965 = vpop.f32.mrb[0].mxu0
      %4966 = vmatprep.mubr.bf16.mxu0 0
      %4967 = vmatmul.mubr.bf16.gmra.mrb[0].mxu0 %v4878
      %v4968 = vpop.f32.mrb[0].mxu0
      %v4969 = vadd.f32 %v4845, %v4968
      %v4970 = vpop.f32.mrb[0].mxu0
      %v4971 = vpop.f32.mrb[0].mxu0
      %v4972 = vadd.f32 %v4848, %v4971
      %v4973 = vpop.f32.mrb[0].mxu0
      %4974 = vmatprep.mubr.bf16.mxu0 0
      %4975 = vmatmul.mubr.bf16.gmra.mrb[0].mxu0 %v4881
      %v4976 = vpop.f32.mrb[0].mxu0
      %v4977 = vadd.f32 %v4853, %v4976
      %v4978 = vpop.f32.mrb[0].mxu0
      %v4979 = vpop.f32.mrb[0].mxu0
      %v4980 = vadd.f32 %v4856, %v4979
      %v4981 = vpop.f32.mrb[0].mxu0
      %4982 = vdwg.mxu0
      %4983 = vrot.lane.b32.xlu0 %v1179, 112
      %v4984 = vpop.permute.xlu0 %4983
      %4985 = vrot.lane.b32.xlu0 %v1227, 112
      %v4986 = vpop.permute.xlu0 %4985
      %v4988 = vsel %vm1291, %v4984, 0
      %v4991 = vsel %vm1291, %v4986, 0
      %4993 = vmatprep.subr.bf16.mxu0 0
      %4994 = vmatpush1.bf16.xpose.msra.mxu0 %v4991
      %4995 = vmatprep.subr.bf16.mxu0 0
      %4996 = vmatpush1.bf16.xpose.msra.mxu0 0
      %4997 = vmatprep.subr.bf16.mxu0 0
      %4998 = vmatpush1.bf16.xpose.msra.mxu0 0
      %4999 = vmatprep.subr.bf16.mxu0 0
      %5000 = vmatpush1.bf16.xpose.msra.mxu0 0
      %5001 = vmatprep.subr.bf16.mxu0 0
      %5002 = vmatpush1.bf16.xpose.msra.mxu0 0
      %5003 = vmatprep.subr.bf16.mxu0 0
      %5004 = vmatpush1.bf16.xpose.msra.mxu0 0
      %5005 = vmatprep.subr.bf16.mxu0 0
      %5006 = vmatpush1.bf16.xpose.msra.mxu0 0
      %5007 = vmatprep.subr.bf16.mxu0 0
      %5008 = vmatpush1.bf16.xpose.msra.mxu0 0
      %5009 = vmatprep.subr.bf16.mxu0 0
      %5010 = vmatpush1.bf16.xpose.msra.mxu0 0
      %5011 = vmatprep.subr.bf16.mxu0 0
      %5012 = vmatpush1.bf16.xpose.msra.mxu0 0
      %5013 = vmatprep.subr.bf16.mxu0 0
      %5014 = vmatpush1.bf16.xpose.msra.mxu0 0
      %5015 = vmatprep.subr.bf16.mxu0 0
      %5016 = vmatpush1.bf16.xpose.msra.mxu0 0
      %5017 = vmatprep.subr.bf16.mxu0 0
      %5018 = vmatpush1.bf16.xpose.msra.mxu0 0
      %5019 = vmatprep.subr.bf16.mxu0 0
      %5020 = vmatpush1.bf16.xpose.msra.mxu0 0
      %5021 = vmatprep.subr.bf16.mxu0 0
      %5022 = vmatpush1.bf16.xpose.msra.mxu0 0
      %5023 = vmatprep.subr.bf16.mxu0 0
      %5024 = vmatpush1.bf16.xpose.msra.mxu0 0
      %5025 = vmatprep.mubr.bf16.mxu0 0
      %5026 = vmatmul.mubr.bf16.gmra.mrb[0].mxu0 %v4988
      %v5027 = vpop.f32.mrb[0].mxu0
      %v5028 = vadd.f32 %v1146, %v5027
      %v5029 = vpop.f32.mrb[0].mxu0
      %v5030 = vpop.f32.mrb[0].mxu0
      %v5031 = vpop.f32.mrb[0].mxu0
      %5032 = vdwg.mxu0
      %5033 = vrot.lane.b32.xlu0 %v1180, 112
      %v5034 = vpop.permute.xlu0 %5033
      %5035 = vrot.lane.b32.xlu0 %v1228, 112
      %v5036 = vpop.permute.xlu0 %5035
      %v5038 = vsel %vm1291, %v5034, 0
      %v5041 = vsel %vm1291, %v5036, 0
      %5043 = vmatprep.subr.bf16.mxu0 0
      %5044 = vmatpush1.bf16.xpose.msra.mxu0 %v5041
      %5045 = vmatprep.subr.bf16.mxu0 0
      %5046 = vmatpush1.bf16.xpose.msra.mxu0 0
      %5047 = vmatprep.subr.bf16.mxu0 0
      %5048 = vmatpush1.bf16.xpose.msra.mxu0 0
      %5049 = vmatprep.subr.bf16.mxu0 0
      %5050 = vmatpush1.bf16.xpose.msra.mxu0 0
      %5051 = vmatprep.subr.bf16.mxu0 0
      %5052 = vmatpush1.bf16.xpose.msra.mxu0 0
      %5053 = vmatprep.subr.bf16.mxu0 0
      %5054 = vmatpush1.bf16.xpose.msra.mxu0 0
      %5055 = vmatprep.subr.bf16.mxu0 0
      %5056 = vmatpush1.bf16.xpose.msra.mxu0 0
      %5057 = vmatprep.subr.bf16.mxu0 0
      %5058 = vmatpush1.bf16.xpose.msra.mxu0 0
      %5059 = vmatprep.subr.bf16.mxu0 0
      %5060 = vmatpush1.bf16.xpose.msra.mxu0 0
      %5061 = vmatprep.subr.bf16.mxu0 0
      %5062 = vmatpush1.bf16.xpose.msra.mxu0 0
      %5063 = vmatprep.subr.bf16.mxu0 0
      %5064 = vmatpush1.bf16.xpose.msra.mxu0 0
      %5065 = vmatprep.subr.bf16.mxu0 0
      %5066 = vmatpush1.bf16.xpose.msra.mxu0 0
      %5067 = vmatprep.subr.bf16.mxu0 0
      %5068 = vmatpush1.bf16.xpose.msra.mxu0 0
      %5069 = vmatprep.subr.bf16.mxu0 0
      %5070 = vmatpush1.bf16.xpose.msra.mxu0 0
      %5071 = vmatprep.subr.bf16.mxu0 0
      %5072 = vmatpush1.bf16.xpose.msra.mxu0 0
      %5073 = vmatprep.subr.bf16.mxu0 0
      %5074 = vmatpush1.bf16.xpose.msra.mxu0 0
      %5075 = vmatprep.mubr.bf16.mxu0 0
      %5076 = vmatmul.mubr.bf16.gmra.mrb[0].mxu0 %v5038
      %v5077 = vpop.f32.mrb[0].mxu0
      %v5078 = vadd.f32 %v1146, %v5077
      %v5079 = vpop.f32.mrb[0].mxu0
      %v5080 = vpop.f32.mrb[0].mxu0
      %v5081 = vpop.f32.mrb[0].mxu0
      %5082 = vdwg.mxu0
      %5083 = vrot.lane.b32.xlu0 %v1181, 112
      %v5084 = vpop.permute.xlu0 %5083
      %5085 = vrot.lane.b32.xlu0 %v1229, 112
      %v5086 = vpop.permute.xlu0 %5085
      %v5088 = vsel %vm1291, %v5084, 0
      %v5091 = vsel %vm1291, %v5086, 0
      %5093 = vmatprep.subr.bf16.mxu0 0
      %5094 = vmatpush1.bf16.xpose.msra.mxu0 %v5091
      %5095 = vmatprep.subr.bf16.mxu0 0
      %5096 = vmatpush1.bf16.xpose.msra.mxu0 0
      %5097 = vmatprep.subr.bf16.mxu0 0
      %5098 = vmatpush1.bf16.xpose.msra.mxu0 0
      %5099 = vmatprep.subr.bf16.mxu0 0
      %5100 = vmatpush1.bf16.xpose.msra.mxu0 0
      %5101 = vmatprep.subr.bf16.mxu0 0
      %5102 = vmatpush1.bf16.xpose.msra.mxu0 0
      %5103 = vmatprep.subr.bf16.mxu0 0
      %5104 = vmatpush1.bf16.xpose.msra.mxu0 0
      %5105 = vmatprep.subr.bf16.mxu0 0
      %5106 = vmatpush1.bf16.xpose.msra.mxu0 0
      %5107 = vmatprep.subr.bf16.mxu0 0
      %5108 = vmatpush1.bf16.xpose.msra.mxu0 0
      %5109 = vmatprep.subr.bf16.mxu0 0
      %5110 = vmatpush1.bf16.xpose.msra.mxu0 0
      %5111 = vmatprep.subr.bf16.mxu0 0
      %5112 = vmatpush1.bf16.xpose.msra.mxu0 0
      %5113 = vmatprep.subr.bf16.mxu0 0
      %5114 = vmatpush1.bf16.xpose.msra.mxu0 0
      %5115 = vmatprep.subr.bf16.mxu0 0
      %5116 = vmatpush1.bf16.xpose.msra.mxu0 0
      %5117 = vmatprep.subr.bf16.mxu0 0
      %5118 = vmatpush1.bf16.xpose.msra.mxu0 0
      %5119 = vmatprep.subr.bf16.mxu0 0
      %5120 = vmatpush1.bf16.xpose.msra.mxu0 0
      %5121 = vmatprep.subr.bf16.mxu0 0
      %5122 = vmatpush1.bf16.xpose.msra.mxu0 0
      %5123 = vmatprep.subr.bf16.mxu0 0
      %5124 = vmatpush1.bf16.xpose.msra.mxu0 0
      %5125 = vmatprep.mubr.bf16.mxu0 0
      %5126 = vmatmul.mubr.bf16.gmra.mrb[0].mxu0 %v5088
      %v5127 = vpop.f32.mrb[0].mxu0
      %v5128 = vadd.f32 %v1146, %v5127
      %v5129 = vpop.f32.mrb[0].mxu0
      %v5130 = vpop.f32.mrb[0].mxu0
      %v5131 = vpop.f32.mrb[0].mxu0
      %5132 = vdwg.mxu0
      %5133 = vrot.lane.b32.xlu0 %v1182, 112
      %v5134 = vpop.permute.xlu0 %5133
      %5135 = vrot.lane.b32.xlu0 %v1230, 112
      %v5136 = vpop.permute.xlu0 %5135
      %v5138 = vsel %vm1291, %v5134, 0
      %v5141 = vsel %vm1291, %v5136, 0
      %5143 = vmatprep.subr.bf16.mxu0 0
      %5144 = vmatpush1.bf16.xpose.msra.mxu0 %v5141
      %5145 = vmatprep.subr.bf16.mxu0 0
      %5146 = vmatpush1.bf16.xpose.msra.mxu0 0
      %5147 = vmatprep.subr.bf16.mxu0 0
      %5148 = vmatpush1.bf16.xpose.msra.mxu0 0
      %5149 = vmatprep.subr.bf16.mxu0 0
      %5150 = vmatpush1.bf16.xpose.msra.mxu0 0
      %5151 = vmatprep.subr.bf16.mxu0 0
      %5152 = vmatpush1.bf16.xpose.msra.mxu0 0
      %5153 = vmatprep.subr.bf16.mxu0 0
      %5154 = vmatpush1.bf16.xpose.msra.mxu0 0
      %5155 = vmatprep.subr.bf16.mxu0 0
      %5156 = vmatpush1.bf16.xpose.msra.mxu0 0
      %5157 = vmatprep.subr.bf16.mxu0 0
      %5158 = vmatpush1.bf16.xpose.msra.mxu0 0
      %5159 = vmatprep.subr.bf16.mxu0 0
      %5160 = vmatpush1.bf16.xpose.msra.mxu0 0
      %5161 = vmatprep.subr.bf16.mxu0 0
      %5162 = vmatpush1.bf16.xpose.msra.mxu0 0
      %5163 = vmatprep.subr.bf16.mxu0 0
      %5164 = vmatpush1.bf16.xpose.msra.mxu0 0
      %5165 = vmatprep.subr.bf16.mxu0 0
      %5166 = vmatpush1.bf16.xpose.msra.mxu0 0
      %5167 = vmatprep.subr.bf16.mxu0 0
      %5168 = vmatpush1.bf16.xpose.msra.mxu0 0
      %5169 = vmatprep.subr.bf16.mxu0 0
      %5170 = vmatpush1.bf16.xpose.msra.mxu0 0
      %5171 = vmatprep.subr.bf16.mxu0 0
      %5172 = vmatpush1.bf16.xpose.msra.mxu0 0
      %5173 = vmatprep.subr.bf16.mxu0 0
      %5174 = vmatpush1.bf16.xpose.msra.mxu0 0
      %5175 = vmatprep.mubr.bf16.mxu0 0
      %5176 = vmatmul.mubr.bf16.gmra.mrb[0].mxu0 %v5138
      %v5177 = vpop.f32.mrb[0].mxu0
      %v5178 = vadd.f32 %v1146, %v5177
      %v5179 = vpop.f32.mrb[0].mxu0
      %v5180 = vpop.f32.mrb[0].mxu0
      %v5181 = vpop.f32.mrb[0].mxu0
      %5182 = vdwg.mxu0
      %5183 = vrot.lane.b32.xlu0 %v1183, 112
      %v5184 = vpop.permute.xlu0 %5183
      %5185 = vrot.lane.b32.xlu0 %v1231, 112
      %v5186 = vpop.permute.xlu0 %5185
      %v5188 = vsel %vm1291, %v5184, 0
      %v5191 = vsel %vm1291, %v5186, 0
      %5193 = vmatprep.subr.bf16.mxu0 0
      %5194 = vmatpush1.bf16.xpose.msra.mxu0 %v5191
      %5195 = vmatprep.subr.bf16.mxu0 0
      %5196 = vmatpush1.bf16.xpose.msra.mxu0 0
      %5197 = vmatprep.subr.bf16.mxu0 0
      %5198 = vmatpush1.bf16.xpose.msra.mxu0 0
      %5199 = vmatprep.subr.bf16.mxu0 0
      %5200 = vmatpush1.bf16.xpose.msra.mxu0 0
      %5201 = vmatprep.subr.bf16.mxu0 0
      %5202 = vmatpush1.bf16.xpose.msra.mxu0 0
      %5203 = vmatprep.subr.bf16.mxu0 0
      %5204 = vmatpush1.bf16.xpose.msra.mxu0 0
      %5205 = vmatprep.subr.bf16.mxu0 0
      %5206 = vmatpush1.bf16.xpose.msra.mxu0 0
      %5207 = vmatprep.subr.bf16.mxu0 0
      %5208 = vmatpush1.bf16.xpose.msra.mxu0 0
      %5209 = vmatprep.subr.bf16.mxu0 0
      %5210 = vmatpush1.bf16.xpose.msra.mxu0 0
      %5211 = vmatprep.subr.bf16.mxu0 0
      %5212 = vmatpush1.bf16.xpose.msra.mxu0 0
      %5213 = vmatprep.subr.bf16.mxu0 0
      %5214 = vmatpush1.bf16.xpose.msra.mxu0 0
      %5215 = vmatprep.subr.bf16.mxu0 0
      %5216 = vmatpush1.bf16.xpose.msra.mxu0 0
      %5217 = vmatprep.subr.bf16.mxu0 0
      %5218 = vmatpush1.bf16.xpose.msra.mxu0 0
      %5219 = vmatprep.subr.bf16.mxu0 0
      %5220 = vmatpush1.bf16.xpose.msra.mxu0 0
      %5221 = vmatprep.subr.bf16.mxu0 0
      %5222 = vmatpush1.bf16.xpose.msra.mxu0 0
      %5223 = vmatprep.subr.bf16.mxu0 0
      %5224 = vmatpush1.bf16.xpose.msra.mxu0 0
      %5225 = vmatprep.mubr.bf16.mxu0 0
      %5226 = vmatmul.mubr.bf16.gmra.mrb[0].mxu0 %v5188
      %v5227 = vpop.f32.mrb[0].mxu0
      %v5228 = vadd.f32 %v1146, %v5227
      %v5229 = vpop.f32.mrb[0].mxu0
      %v5230 = vpop.f32.mrb[0].mxu0
      %v5231 = vpop.f32.mrb[0].mxu0
      %5232 = vdwg.mxu0
      %5233 = vrot.lane.b32.xlu0 %v1184, 112
      %v5234 = vpop.permute.xlu0 %5233
      %5235 = vrot.lane.b32.xlu0 %v1232, 112
      %v5236 = vpop.permute.xlu0 %5235
      %v5238 = vsel %vm1291, %v5234, 0
      %v5241 = vsel %vm1291, %v5236, 0
      %5243 = vmatprep.subr.bf16.mxu0 0
      %5244 = vmatpush1.bf16.xpose.msra.mxu0 %v5241
      %5245 = vmatprep.subr.bf16.mxu0 0
      %5246 = vmatpush1.bf16.xpose.msra.mxu0 0
      %5247 = vmatprep.subr.bf16.mxu0 0
      %5248 = vmatpush1.bf16.xpose.msra.mxu0 0
      %5249 = vmatprep.subr.bf16.mxu0 0
      %5250 = vmatpush1.bf16.xpose.msra.mxu0 0
      %5251 = vmatprep.subr.bf16.mxu0 0
      %5252 = vmatpush1.bf16.xpose.msra.mxu0 0
      %5253 = vmatprep.subr.bf16.mxu0 0
      %5254 = vmatpush1.bf16.xpose.msra.mxu0 0
      %5255 = vmatprep.subr.bf16.mxu0 0
      %5256 = vmatpush1.bf16.xpose.msra.mxu0 0
      %5257 = vmatprep.subr.bf16.mxu0 0
      %5258 = vmatpush1.bf16.xpose.msra.mxu0 0
      %5259 = vmatprep.subr.bf16.mxu0 0
      %5260 = vmatpush1.bf16.xpose.msra.mxu0 0
      %5261 = vmatprep.subr.bf16.mxu0 0
      %5262 = vmatpush1.bf16.xpose.msra.mxu0 0
      %5263 = vmatprep.subr.bf16.mxu0 0
      %5264 = vmatpush1.bf16.xpose.msra.mxu0 0
      %5265 = vmatprep.subr.bf16.mxu0 0
      %5266 = vmatpush1.bf16.xpose.msra.mxu0 0
      %5267 = vmatprep.subr.bf16.mxu0 0
      %5268 = vmatpush1.bf16.xpose.msra.mxu0 0
      %5269 = vmatprep.subr.bf16.mxu0 0
      %5270 = vmatpush1.bf16.xpose.msra.mxu0 0
      %5271 = vmatprep.subr.bf16.mxu0 0
      %5272 = vmatpush1.bf16.xpose.msra.mxu0 0
      %5273 = vmatprep.subr.bf16.mxu0 0
      %5274 = vmatpush1.bf16.xpose.msra.mxu0 0
      %5275 = vmatprep.mubr.bf16.mxu0 0
      %5276 = vmatmul.mubr.bf16.gmra.mrb[0].mxu0 %v5238
      %v5277 = vpop.f32.mrb[0].mxu0
      %v5278 = vadd.f32 %v1146, %v5277
      %v5279 = vpop.f32.mrb[0].mxu0
      %v5280 = vpop.f32.mrb[0].mxu0
      %v5281 = vpop.f32.mrb[0].mxu0
      %5282 = vdwg.mxu0
      %5283 = vrot.lane.b32.xlu0 %v1185, 112
      %v5284 = vpop.permute.xlu0 %5283
      %5285 = vrot.lane.b32.xlu0 %v1233, 112
      %v5286 = vpop.permute.xlu0 %5285
      %v5288 = vsel %vm1291, %v5284, 0
      %v5291 = vsel %vm1291, %v5286, 0
      %5293 = vmatprep.subr.bf16.mxu0 0
      %5294 = vmatpush1.bf16.xpose.msra.mxu0 %v5291
      %5295 = vmatprep.subr.bf16.mxu0 0
      %5296 = vmatpush1.bf16.xpose.msra.mxu0 0
      %5297 = vmatprep.subr.bf16.mxu0 0
      %5298 = vmatpush1.bf16.xpose.msra.mxu0 0
      %5299 = vmatprep.subr.bf16.mxu0 0
      %5300 = vmatpush1.bf16.xpose.msra.mxu0 0
      %5301 = vmatprep.subr.bf16.mxu0 0
      %5302 = vmatpush1.bf16.xpose.msra.mxu0 0
      %5303 = vmatprep.subr.bf16.mxu0 0
      %5304 = vmatpush1.bf16.xpose.msra.mxu0 0
      %5305 = vmatprep.subr.bf16.mxu0 0
      %5306 = vmatpush1.bf16.xpose.msra.mxu0 0
      %5307 = vmatprep.subr.bf16.mxu0 0
      %5308 = vmatpush1.bf16.xpose.msra.mxu0 0
      %5309 = vmatprep.subr.bf16.mxu0 0
      %5310 = vmatpush1.bf16.xpose.msra.mxu0 0
      %5311 = vmatprep.subr.bf16.mxu0 0
      %5312 = vmatpush1.bf16.xpose.msra.mxu0 0
      %5313 = vmatprep.subr.bf16.mxu0 0
      %5314 = vmatpush1.bf16.xpose.msra.mxu0 0
      %5315 = vmatprep.subr.bf16.mxu0 0
      %5316 = vmatpush1.bf16.xpose.msra.mxu0 0
      %5317 = vmatprep.subr.bf16.mxu0 0
      %5318 = vmatpush1.bf16.xpose.msra.mxu0 0
      %5319 = vmatprep.subr.bf16.mxu0 0
      %5320 = vmatpush1.bf16.xpose.msra.mxu0 0
      %5321 = vmatprep.subr.bf16.mxu0 0
      %5322 = vmatpush1.bf16.xpose.msra.mxu0 0
      %5323 = vmatprep.subr.bf16.mxu0 0
      %5324 = vmatpush1.bf16.xpose.msra.mxu0 0
      %5325 = vmatprep.mubr.bf16.mxu0 0
      %5326 = vmatmul.mubr.bf16.gmra.mrb[0].mxu0 %v5288
      %v5327 = vpop.f32.mrb[0].mxu0
      %v5328 = vadd.f32 %v1146, %v5327
      %v5329 = vpop.f32.mrb[0].mxu0
      %v5330 = vpop.f32.mrb[0].mxu0
      %v5331 = vpop.f32.mrb[0].mxu0
      %5332 = vdwg.mxu0
      %5333 = vrot.lane.b32.xlu0 %v1186, 112
      %v5334 = vpop.permute.xlu0 %5333
      %5335 = vrot.lane.b32.xlu0 %v1234, 112
      %v5336 = vpop.permute.xlu0 %5335
      %v5338 = vsel %vm1291, %v5334, 0
      %v5341 = vsel %vm1291, %v5336, 0
      %5343 = vmatprep.subr.bf16.mxu0 0
      %5344 = vmatpush1.bf16.xpose.msra.mxu0 %v5341
      %5345 = vmatprep.subr.bf16.mxu0 0
      %5346 = vmatpush1.bf16.xpose.msra.mxu0 0
      %5347 = vmatprep.subr.bf16.mxu0 0
      %5348 = vmatpush1.bf16.xpose.msra.mxu0 0
      %5349 = vmatprep.subr.bf16.mxu0 0
      %5350 = vmatpush1.bf16.xpose.msra.mxu0 0
      %5351 = vmatprep.subr.bf16.mxu0 0
      %5352 = vmatpush1.bf16.xpose.msra.mxu0 0
      %5353 = vmatprep.subr.bf16.mxu0 0
      %5354 = vmatpush1.bf16.xpose.msra.mxu0 0
      %5355 = vmatprep.subr.bf16.mxu0 0
      %5356 = vmatpush1.bf16.xpose.msra.mxu0 0
      %5357 = vmatprep.subr.bf16.mxu0 0
      %5358 = vmatpush1.bf16.xpose.msra.mxu0 0
      %5359 = vmatprep.subr.bf16.mxu0 0
      %5360 = vmatpush1.bf16.xpose.msra.mxu0 0
      %5361 = vmatprep.subr.bf16.mxu0 0
      %5362 = vmatpush1.bf16.xpose.msra.mxu0 0
      %5363 = vmatprep.subr.bf16.mxu0 0
      %5364 = vmatpush1.bf16.xpose.msra.mxu0 0
      %5365 = vmatprep.subr.bf16.mxu0 0
      %5366 = vmatpush1.bf16.xpose.msra.mxu0 0
      %5367 = vmatprep.subr.bf16.mxu0 0
      %5368 = vmatpush1.bf16.xpose.msra.mxu0 0
      %5369 = vmatprep.subr.bf16.mxu0 0
      %5370 = vmatpush1.bf16.xpose.msra.mxu0 0
      %5371 = vmatprep.subr.bf16.mxu0 0
      %5372 = vmatpush1.bf16.xpose.msra.mxu0 0
      %5373 = vmatprep.subr.bf16.mxu0 0
      %5374 = vmatpush1.bf16.xpose.msra.mxu0 0
      %5375 = vmatprep.mubr.bf16.mxu0 0
      %5376 = vmatmul.mubr.bf16.gmra.mrb[0].mxu0 %v5338
      %v5377 = vpop.f32.mrb[0].mxu0
      %v5378 = vadd.f32 %v1146, %v5377
      %v5379 = vpop.f32.mrb[0].mxu0
      %v5380 = vpop.f32.mrb[0].mxu0
      %v5381 = vpop.f32.mrb[0].mxu0
      %5382 = vdwg.mxu0
      %5383 = vrot.lane.b32.xlu0 %v1187, 112
      %v5384 = vpop.permute.xlu0 %5383
      %5385 = vrot.lane.b32.xlu0 %v1235, 112
      %v5386 = vpop.permute.xlu0 %5385
      %v5388 = vsel %vm1291, %v5384, 0
      %v5391 = vsel %vm1291, %v5386, 0
      %5393 = vmatprep.subr.bf16.mxu0 0
      %5394 = vmatpush1.bf16.xpose.msra.mxu0 %v5391
      %5395 = vmatprep.subr.bf16.mxu0 0
      %5396 = vmatpush1.bf16.xpose.msra.mxu0 0
      %5397 = vmatprep.subr.bf16.mxu0 0
      %5398 = vmatpush1.bf16.xpose.msra.mxu0 0
      %5399 = vmatprep.subr.bf16.mxu0 0
      %5400 = vmatpush1.bf16.xpose.msra.mxu0 0
      %5401 = vmatprep.subr.bf16.mxu0 0
      %5402 = vmatpush1.bf16.xpose.msra.mxu0 0
      %5403 = vmatprep.subr.bf16.mxu0 0
      %5404 = vmatpush1.bf16.xpose.msra.mxu0 0
      %5405 = vmatprep.subr.bf16.mxu0 0
      %5406 = vmatpush1.bf16.xpose.msra.mxu0 0
      %5407 = vmatprep.subr.bf16.mxu0 0
      %5408 = vmatpush1.bf16.xpose.msra.mxu0 0
      %5409 = vmatprep.subr.bf16.mxu0 0
      %5410 = vmatpush1.bf16.xpose.msra.mxu0 0
      %5411 = vmatprep.subr.bf16.mxu0 0
      %5412 = vmatpush1.bf16.xpose.msra.mxu0 0
      %5413 = vmatprep.subr.bf16.mxu0 0
      %5414 = vmatpush1.bf16.xpose.msra.mxu0 0
      %5415 = vmatprep.subr.bf16.mxu0 0
      %5416 = vmatpush1.bf16.xpose.msra.mxu0 0
      %5417 = vmatprep.subr.bf16.mxu0 0
      %5418 = vmatpush1.bf16.xpose.msra.mxu0 0
      %5419 = vmatprep.subr.bf16.mxu0 0
      %5420 = vmatpush1.bf16.xpose.msra.mxu0 0
      %5421 = vmatprep.subr.bf16.mxu0 0
      %5422 = vmatpush1.bf16.xpose.msra.mxu0 0
      %5423 = vmatprep.subr.bf16.mxu0 0
      %5424 = vmatpush1.bf16.xpose.msra.mxu0 0
      %5425 = vmatprep.mubr.bf16.mxu0 0
      %5426 = vmatmul.mubr.bf16.gmra.mrb[0].mxu0 %v5388
      %v5427 = vpop.f32.mrb[0].mxu0
      %v5428 = vadd.f32 %v1146, %v5427
      %v5429 = vpop.f32.mrb[0].mxu0
      %v5430 = vpop.f32.mrb[0].mxu0
      %v5431 = vpop.f32.mrb[0].mxu0
      %5432 = vdwg.mxu0
      %5433 = vrot.lane.b32.xlu0 %v1188, 112
      %v5434 = vpop.permute.xlu0 %5433
      %5435 = vrot.lane.b32.xlu0 %v1236, 112
      %v5436 = vpop.permute.xlu0 %5435
      %v5438 = vsel %vm1291, %v5434, 0
      %v5441 = vsel %vm1291, %v5436, 0
      %5443 = vmatprep.subr.bf16.mxu0 0
      %5444 = vmatpush1.bf16.xpose.msra.mxu0 %v5441
      %5445 = vmatprep.subr.bf16.mxu0 0
      %5446 = vmatpush1.bf16.xpose.msra.mxu0 0
      %5447 = vmatprep.subr.bf16.mxu0 0
      %5448 = vmatpush1.bf16.xpose.msra.mxu0 0
      %5449 = vmatprep.subr.bf16.mxu0 0
      %5450 = vmatpush1.bf16.xpose.msra.mxu0 0
      %5451 = vmatprep.subr.bf16.mxu0 0
      %5452 = vmatpush1.bf16.xpose.msra.mxu0 0
      %5453 = vmatprep.subr.bf16.mxu0 0
      %5454 = vmatpush1.bf16.xpose.msra.mxu0 0
      %5455 = vmatprep.subr.bf16.mxu0 0
      %5456 = vmatpush1.bf16.xpose.msra.mxu0 0
      %5457 = vmatprep.subr.bf16.mxu0 0
      %5458 = vmatpush1.bf16.xpose.msra.mxu0 0
      %5459 = vmatprep.subr.bf16.mxu0 0
      %5460 = vmatpush1.bf16.xpose.msra.mxu0 0
      %5461 = vmatprep.subr.bf16.mxu0 0
      %5462 = vmatpush1.bf16.xpose.msra.mxu0 0
      %5463 = vmatprep.subr.bf16.mxu0 0
      %5464 = vmatpush1.bf16.xpose.msra.mxu0 0
      %5465 = vmatprep.subr.bf16.mxu0 0
      %5466 = vmatpush1.bf16.xpose.msra.mxu0 0
      %5467 = vmatprep.subr.bf16.mxu0 0
      %5468 = vmatpush1.bf16.xpose.msra.mxu0 0
      %5469 = vmatprep.subr.bf16.mxu0 0
      %5470 = vmatpush1.bf16.xpose.msra.mxu0 0
      %5471 = vmatprep.subr.bf16.mxu0 0
      %5472 = vmatpush1.bf16.xpose.msra.mxu0 0
      %5473 = vmatprep.subr.bf16.mxu0 0
      %5474 = vmatpush1.bf16.xpose.msra.mxu0 0
      %5475 = vmatprep.mubr.bf16.mxu0 0
      %5476 = vmatmul.mubr.bf16.gmra.mrb[0].mxu0 %v5438
      %v5477 = vpop.f32.mrb[0].mxu0
      %v5478 = vadd.f32 %v1146, %v5477
      %v5479 = vpop.f32.mrb[0].mxu0
      %v5480 = vpop.f32.mrb[0].mxu0
      %v5481 = vpop.f32.mrb[0].mxu0
      %5482 = vdwg.mxu0
      %5483 = vrot.lane.b32.xlu0 %v1189, 112
      %v5484 = vpop.permute.xlu0 %5483
      %5485 = vrot.lane.b32.xlu0 %v1237, 112
      %v5486 = vpop.permute.xlu0 %5485
      %v5488 = vsel %vm1291, %v5484, 0
      %v5491 = vsel %vm1291, %v5486, 0
      %5493 = vmatprep.subr.bf16.mxu0 0
      %5494 = vmatpush1.bf16.xpose.msra.mxu0 %v5491
      %5495 = vmatprep.subr.bf16.mxu0 0
      %5496 = vmatpush1.bf16.xpose.msra.mxu0 0
      %5497 = vmatprep.subr.bf16.mxu0 0
      %5498 = vmatpush1.bf16.xpose.msra.mxu0 0
      %5499 = vmatprep.subr.bf16.mxu0 0
      %5500 = vmatpush1.bf16.xpose.msra.mxu0 0
      %5501 = vmatprep.subr.bf16.mxu0 0
      %5502 = vmatpush1.bf16.xpose.msra.mxu0 0
      %5503 = vmatprep.subr.bf16.mxu0 0
      %5504 = vmatpush1.bf16.xpose.msra.mxu0 0
      %5505 = vmatprep.subr.bf16.mxu0 0
      %5506 = vmatpush1.bf16.xpose.msra.mxu0 0
      %5507 = vmatprep.subr.bf16.mxu0 0
      %5508 = vmatpush1.bf16.xpose.msra.mxu0 0
      %5509 = vmatprep.subr.bf16.mxu0 0
      %5510 = vmatpush1.bf16.xpose.msra.mxu0 0
      %5511 = vmatprep.subr.bf16.mxu0 0
      %5512 = vmatpush1.bf16.xpose.msra.mxu0 0
      %5513 = vmatprep.subr.bf16.mxu0 0
      %5514 = vmatpush1.bf16.xpose.msra.mxu0 0
      %5515 = vmatprep.subr.bf16.mxu0 0
      %5516 = vmatpush1.bf16.xpose.msra.mxu0 0
      %5517 = vmatprep.subr.bf16.mxu0 0
      %5518 = vmatpush1.bf16.xpose.msra.mxu0 0
      %5519 = vmatprep.subr.bf16.mxu0 0
      %5520 = vmatpush1.bf16.xpose.msra.mxu0 0
      %5521 = vmatprep.subr.bf16.mxu0 0
      %5522 = vmatpush1.bf16.xpose.msra.mxu0 0
      %5523 = vmatprep.subr.bf16.mxu0 0
      %5524 = vmatpush1.bf16.xpose.msra.mxu0 0
      %5525 = vmatprep.mubr.bf16.mxu0 0
      %5526 = vmatmul.mubr.bf16.gmra.mrb[0].mxu0 %v5488
      %v5527 = vpop.f32.mrb[0].mxu0
      %v5528 = vadd.f32 %v1146, %v5527
      %v5529 = vpop.f32.mrb[0].mxu0
      %v5530 = vpop.f32.mrb[0].mxu0
      %v5531 = vpop.f32.mrb[0].mxu0
      %5532 = vdwg.mxu0
      %5533 = vrot.lane.b32.xlu0 %v1190, 112
      %v5534 = vpop.permute.xlu0 %5533
      %5535 = vrot.lane.b32.xlu0 %v1238, 112
      %v5536 = vpop.permute.xlu0 %5535
      %v5538 = vsel %vm1291, %v5534, 0
      %v5541 = vsel %vm1291, %v5536, 0
      %5543 = vmatprep.subr.bf16.mxu0 0
      %5544 = vmatpush1.bf16.xpose.msra.mxu0 %v5541
      %5545 = vmatprep.subr.bf16.mxu0 0
      %5546 = vmatpush1.bf16.xpose.msra.mxu0 0
      %5547 = vmatprep.subr.bf16.mxu0 0
      %5548 = vmatpush1.bf16.xpose.msra.mxu0 0
      %5549 = vmatprep.subr.bf16.mxu0 0
      %5550 = vmatpush1.bf16.xpose.msra.mxu0 0
      %5551 = vmatprep.subr.bf16.mxu0 0
      %5552 = vmatpush1.bf16.xpose.msra.mxu0 0
      %5553 = vmatprep.subr.bf16.mxu0 0
      %5554 = vmatpush1.bf16.xpose.msra.mxu0 0
      %5555 = vmatprep.subr.bf16.mxu0 0
      %5556 = vmatpush1.bf16.xpose.msra.mxu0 0
      %5557 = vmatprep.subr.bf16.mxu0 0
      %5558 = vmatpush1.bf16.xpose.msra.mxu0 0
      %5559 = vmatprep.subr.bf16.mxu0 0
      %5560 = vmatpush1.bf16.xpose.msra.mxu0 0
      %5561 = vmatprep.subr.bf16.mxu0 0
      %5562 = vmatpush1.bf16.xpose.msra.mxu0 0
      %5563 = vmatprep.subr.bf16.mxu0 0
      %5564 = vmatpush1.bf16.xpose.msra.mxu0 0
      %5565 = vmatprep.subr.bf16.mxu0 0
      %5566 = vmatpush1.bf16.xpose.msra.mxu0 0
      %5567 = vmatprep.subr.bf16.mxu0 0
      %5568 = vmatpush1.bf16.xpose.msra.mxu0 0
      %5569 = vmatprep.subr.bf16.mxu0 0
      %5570 = vmatpush1.bf16.xpose.msra.mxu0 0
      %5571 = vmatprep.subr.bf16.mxu0 0
      %5572 = vmatpush1.bf16.xpose.msra.mxu0 0
      %5573 = vmatprep.subr.bf16.mxu0 0
      %5574 = vmatpush1.bf16.xpose.msra.mxu0 0
      %5575 = vmatprep.mubr.bf16.mxu0 0
      %5576 = vmatmul.mubr.bf16.gmra.mrb[0].mxu0 %v5538
      %v5577 = vpop.f32.mrb[0].mxu0
      %v5578 = vadd.f32 %v1146, %v5577
      %v5579 = vpop.f32.mrb[0].mxu0
      %v5580 = vpop.f32.mrb[0].mxu0
      %v5581 = vpop.f32.mrb[0].mxu0
      %5582 = vdwg.mxu0
      %5583 = vrot.lane.b32.xlu0 %v1191, 112
      %v5584 = vpop.permute.xlu0 %5583
      %5585 = vrot.lane.b32.xlu0 %v1239, 112
      %v5586 = vpop.permute.xlu0 %5585
      %v5588 = vsel %vm1291, %v5584, 0
      %v5591 = vsel %vm1291, %v5586, 0
      %5593 = vmatprep.subr.bf16.mxu0 0
      %5594 = vmatpush1.bf16.xpose.msra.mxu0 %v5591
      %5595 = vmatprep.subr.bf16.mxu0 0
      %5596 = vmatpush1.bf16.xpose.msra.mxu0 0
      %5597 = vmatprep.subr.bf16.mxu0 0
      %5598 = vmatpush1.bf16.xpose.msra.mxu0 0
      %5599 = vmatprep.subr.bf16.mxu0 0
      %5600 = vmatpush1.bf16.xpose.msra.mxu0 0
      %5601 = vmatprep.subr.bf16.mxu0 0
      %5602 = vmatpush1.bf16.xpose.msra.mxu0 0
      %5603 = vmatprep.subr.bf16.mxu0 0
      %5604 = vmatpush1.bf16.xpose.msra.mxu0 0
      %5605 = vmatprep.subr.bf16.mxu0 0
      %5606 = vmatpush1.bf16.xpose.msra.mxu0 0
      %5607 = vmatprep.subr.bf16.mxu0 0
      %5608 = vmatpush1.bf16.xpose.msra.mxu0 0
      %5609 = vmatprep.subr.bf16.mxu0 0
      %5610 = vmatpush1.bf16.xpose.msra.mxu0 0
      %5611 = vmatprep.subr.bf16.mxu0 0
      %5612 = vmatpush1.bf16.xpose.msra.mxu0 0
      %5613 = vmatprep.subr.bf16.mxu0 0
      %5614 = vmatpush1.bf16.xpose.msra.mxu0 0
      %5615 = vmatprep.subr.bf16.mxu0 0
      %5616 = vmatpush1.bf16.xpose.msra.mxu0 0
      %5617 = vmatprep.subr.bf16.mxu0 0
      %5618 = vmatpush1.bf16.xpose.msra.mxu0 0
      %5619 = vmatprep.subr.bf16.mxu0 0
      %5620 = vmatpush1.bf16.xpose.msra.mxu0 0
      %5621 = vmatprep.subr.bf16.mxu0 0
      %5622 = vmatpush1.bf16.xpose.msra.mxu0 0
      %5623 = vmatprep.subr.bf16.mxu0 0
      %5624 = vmatpush1.bf16.xpose.msra.mxu0 0
      %5625 = vmatprep.mubr.bf16.mxu0 0
      %5626 = vmatmul.mubr.bf16.gmra.mrb[0].mxu0 %v5588
      %v5627 = vpop.f32.mrb[0].mxu0
      %v5628 = vadd.f32 %v1146, %v5627
      %v5629 = vpop.f32.mrb[0].mxu0
      %v5630 = vpop.f32.mrb[0].mxu0
      %v5631 = vpop.f32.mrb[0].mxu0
      %5632 = vdwg.mxu0
      %5633 = vrot.lane.b32.xlu0 %v1192, 112
      %v5634 = vpop.permute.xlu0 %5633
      %5635 = vrot.lane.b32.xlu0 %v1240, 112
      %v5636 = vpop.permute.xlu0 %5635
      %v5638 = vsel %vm1291, %v5634, 0
      %v5641 = vsel %vm1291, %v5636, 0
      %5643 = vmatprep.subr.bf16.mxu0 0
      %5644 = vmatpush1.bf16.xpose.msra.mxu0 %v5641
      %5645 = vmatprep.subr.bf16.mxu0 0
      %5646 = vmatpush1.bf16.xpose.msra.mxu0 0
      %5647 = vmatprep.subr.bf16.mxu0 0
      %5648 = vmatpush1.bf16.xpose.msra.mxu0 0
      %5649 = vmatprep.subr.bf16.mxu0 0
      %5650 = vmatpush1.bf16.xpose.msra.mxu0 0
      %5651 = vmatprep.subr.bf16.mxu0 0
      %5652 = vmatpush1.bf16.xpose.msra.mxu0 0
      %5653 = vmatprep.subr.bf16.mxu0 0
      %5654 = vmatpush1.bf16.xpose.msra.mxu0 0
      %5655 = vmatprep.subr.bf16.mxu0 0
      %5656 = vmatpush1.bf16.xpose.msra.mxu0 0
      %5657 = vmatprep.subr.bf16.mxu0 0
      %5658 = vmatpush1.bf16.xpose.msra.mxu0 0
      %5659 = vmatprep.subr.bf16.mxu0 0
      %5660 = vmatpush1.bf16.xpose.msra.mxu0 0
      %5661 = vmatprep.subr.bf16.mxu0 0
      %5662 = vmatpush1.bf16.xpose.msra.mxu0 0
      %5663 = vmatprep.subr.bf16.mxu0 0
      %5664 = vmatpush1.bf16.xpose.msra.mxu0 0
      %5665 = vmatprep.subr.bf16.mxu0 0
      %5666 = vmatpush1.bf16.xpose.msra.mxu0 0
      %5667 = vmatprep.subr.bf16.mxu0 0
      %5668 = vmatpush1.bf16.xpose.msra.mxu0 0
      %5669 = vmatprep.subr.bf16.mxu0 0
      %5670 = vmatpush1.bf16.xpose.msra.mxu0 0
      %5671 = vmatprep.subr.bf16.mxu0 0
      %5672 = vmatpush1.bf16.xpose.msra.mxu0 0
      %5673 = vmatprep.subr.bf16.mxu0 0
      %5674 = vmatpush1.bf16.xpose.msra.mxu0 0
      %5675 = vmatprep.mubr.bf16.mxu0 0
      %5676 = vmatmul.mubr.bf16.gmra.mrb[0].mxu0 %v5638
      %v5677 = vpop.f32.mrb[0].mxu0
      %v5678 = vadd.f32 %v1146, %v5677
      %v5679 = vpop.f32.mrb[0].mxu0
      %v5680 = vpop.f32.mrb[0].mxu0
      %v5681 = vpop.f32.mrb[0].mxu0
      %5682 = vdwg.mxu0
      %5683 = vrot.lane.b32.xlu0 %v1193, 112
      %v5684 = vpop.permute.xlu0 %5683
      %5685 = vrot.lane.b32.xlu0 %v1241, 112
      %v5686 = vpop.permute.xlu0 %5685
      %v5688 = vsel %vm1291, %v5684, 0
      %v5691 = vsel %vm1291, %v5686, 0
      %5693 = vmatprep.subr.bf16.mxu0 0
      %5694 = vmatpush1.bf16.xpose.msra.mxu0 %v5691
      %5695 = vmatprep.subr.bf16.mxu0 0
      %5696 = vmatpush1.bf16.xpose.msra.mxu0 0
      %5697 = vmatprep.subr.bf16.mxu0 0
      %5698 = vmatpush1.bf16.xpose.msra.mxu0 0
      %5699 = vmatprep.subr.bf16.mxu0 0
      %5700 = vmatpush1.bf16.xpose.msra.mxu0 0
      %5701 = vmatprep.subr.bf16.mxu0 0
      %5702 = vmatpush1.bf16.xpose.msra.mxu0 0
      %5703 = vmatprep.subr.bf16.mxu0 0
      %5704 = vmatpush1.bf16.xpose.msra.mxu0 0
      %5705 = vmatprep.subr.bf16.mxu0 0
      %5706 = vmatpush1.bf16.xpose.msra.mxu0 0
      %5707 = vmatprep.subr.bf16.mxu0 0
      %5708 = vmatpush1.bf16.xpose.msra.mxu0 0
      %5709 = vmatprep.subr.bf16.mxu0 0
      %5710 = vmatpush1.bf16.xpose.msra.mxu0 0
      %5711 = vmatprep.subr.bf16.mxu0 0
      %5712 = vmatpush1.bf16.xpose.msra.mxu0 0
      %5713 = vmatprep.subr.bf16.mxu0 0
      %5714 = vmatpush1.bf16.xpose.msra.mxu0 0
      %5715 = vmatprep.subr.bf16.mxu0 0
      %5716 = vmatpush1.bf16.xpose.msra.mxu0 0
      %5717 = vmatprep.subr.bf16.mxu0 0
      %5718 = vmatpush1.bf16.xpose.msra.mxu0 0
      %5719 = vmatprep.subr.bf16.mxu0 0
      %5720 = vmatpush1.bf16.xpose.msra.mxu0 0
      %5721 = vmatprep.subr.bf16.mxu0 0
      %5722 = vmatpush1.bf16.xpose.msra.mxu0 0
      %5723 = vmatprep.subr.bf16.mxu0 0
      %5724 = vmatpush1.bf16.xpose.msra.mxu0 0
      %5725 = vmatprep.mubr.bf16.mxu0 0
      %5726 = vmatmul.mubr.bf16.gmra.mrb[0].mxu0 %v5688
      %v5727 = vpop.f32.mrb[0].mxu0
      %v5728 = vadd.f32 %v1146, %v5727
      %v5729 = vpop.f32.mrb[0].mxu0
      %v5730 = vpop.f32.mrb[0].mxu0
      %v5731 = vpop.f32.mrb[0].mxu0
      %5732 = vdwg.mxu0
      %5733 = vrot.lane.b32.xlu0 %v1194, 112
      %v5734 = vpop.permute.xlu0 %5733
      %5735 = vrot.lane.b32.xlu0 %v1242, 112
      %v5736 = vpop.permute.xlu0 %5735
      %v5738 = vsel %vm1291, %v5734, 0
      %v5741 = vsel %vm1291, %v5736, 0
      %5743 = vmatprep.subr.bf16.mxu0 0
      %5744 = vmatpush1.bf16.xpose.msra.mxu0 %v5741
      %5745 = vmatprep.subr.bf16.mxu0 0
      %5746 = vmatpush1.bf16.xpose.msra.mxu0 0
      %5747 = vmatprep.subr.bf16.mxu0 0
      %5748 = vmatpush1.bf16.xpose.msra.mxu0 0
      %5749 = vmatprep.subr.bf16.mxu0 0
      %5750 = vmatpush1.bf16.xpose.msra.mxu0 0
      %5751 = vmatprep.subr.bf16.mxu0 0
      %5752 = vmatpush1.bf16.xpose.msra.mxu0 0
      %5753 = vmatprep.subr.bf16.mxu0 0
      %5754 = vmatpush1.bf16.xpose.msra.mxu0 0
      %5755 = vmatprep.subr.bf16.mxu0 0
      %5756 = vmatpush1.bf16.xpose.msra.mxu0 0
      %5757 = vmatprep.subr.bf16.mxu0 0
      %5758 = vmatpush1.bf16.xpose.msra.mxu0 0
      %5759 = vmatprep.subr.bf16.mxu0 0
      %5760 = vmatpush1.bf16.xpose.msra.mxu0 0
      %5761 = vmatprep.subr.bf16.mxu0 0
      %5762 = vmatpush1.bf16.xpose.msra.mxu0 0
      %5763 = vmatprep.subr.bf16.mxu0 0
      %5764 = vmatpush1.bf16.xpose.msra.mxu0 0
      %5765 = vmatprep.subr.bf16.mxu0 0
      %5766 = vmatpush1.bf16.xpose.msra.mxu0 0
      %5767 = vmatprep.subr.bf16.mxu0 0
      %5768 = vmatpush1.bf16.xpose.msra.mxu0 0
      %5769 = vmatprep.subr.bf16.mxu0 0
      %5770 = vmatpush1.bf16.xpose.msra.mxu0 0
      %5771 = vmatprep.subr.bf16.mxu0 0
      %5772 = vmatpush1.bf16.xpose.msra.mxu0 0
      %5773 = vmatprep.subr.bf16.mxu0 0
      %5774 = vmatpush1.bf16.xpose.msra.mxu0 0
      %5775 = vmatprep.mubr.bf16.mxu0 0
      %5776 = vmatmul.mubr.bf16.gmra.mrb[0].mxu0 %v5738
      %v5777 = vpop.f32.mrb[0].mxu0
      %v5778 = vadd.f32 %v1146, %v5777
      %v5779 = vpop.f32.mrb[0].mxu0
      %v5780 = vpop.f32.mrb[0].mxu0
      %v5781 = vpop.f32.mrb[0].mxu0
      %5782 = vdwg.mxu0
      %v5783 = vsel %vm1291, %v5028, -inf
      %5784 = vmax.xlane.f32.xlu0 %v5783
      %v5785 = vpop.xlane.xlu0 %5784
      %v5786 = vsel %vm1291, %v5078, -inf
      %5787 = vmax.xlane.f32.xlu0 %v5786
      %v5788 = vpop.xlane.xlu0 %5787
      %v5789 = vsel %vm1291, %v5128, -inf
      %5790 = vmax.xlane.f32.xlu0 %v5789
      %v5791 = vpop.xlane.xlu0 %5790
      %v5792 = vsel %vm1291, %v5178, -inf
      %5793 = vmax.xlane.f32.xlu0 %v5792
      %v5794 = vpop.xlane.xlu0 %5793
      %v5795 = vsel %vm1291, %v5228, -inf
      %5796 = vmax.xlane.f32.xlu0 %v5795
      %v5797 = vpop.xlane.xlu0 %5796
      %v5798 = vsel %vm1291, %v5278, -inf
      %5799 = vmax.xlane.f32.xlu0 %v5798
      %v5800 = vpop.xlane.xlu0 %5799
      %v5801 = vsel %vm1291, %v5328, -inf
      %5802 = vmax.xlane.f32.xlu0 %v5801
      %v5803 = vpop.xlane.xlu0 %5802
      %v5804 = vsel %vm1291, %v5378, -inf
      %5805 = vmax.xlane.f32.xlu0 %v5804
      %v5806 = vpop.xlane.xlu0 %5805
      %v5807 = vsel %vm1291, %v5428, -inf
      %5808 = vmax.xlane.f32.xlu0 %v5807
      %v5809 = vpop.xlane.xlu0 %5808
      %v5810 = vsel %vm1291, %v5478, -inf
      %5811 = vmax.xlane.f32.xlu0 %v5810
      %v5812 = vpop.xlane.xlu0 %5811
      %v5813 = vsel %vm1291, %v5528, -inf
      %5814 = vmax.xlane.f32.xlu0 %v5813
      %v5815 = vpop.xlane.xlu0 %5814
      %v5816 = vsel %vm1291, %v5578, -inf
      %5817 = vmax.xlane.f32.xlu0 %v5816
      %v5818 = vpop.xlane.xlu0 %5817
      %v5819 = vsel %vm1291, %v5628, -inf
      %5820 = vmax.xlane.f32.xlu0 %v5819
      %v5821 = vpop.xlane.xlu0 %5820
      %v5822 = vsel %vm1291, %v5678, -inf
      %5823 = vmax.xlane.f32.xlu0 %v5822
      %v5824 = vpop.xlane.xlu0 %5823
      %v5825 = vsel %vm1291, %v5728, -inf
      %5826 = vmax.xlane.f32.xlu0 %v5825
      %v5827 = vpop.xlane.xlu0 %5826
      %v5828 = vsel %vm1291, %v5778, -inf
      %5829 = vmax.xlane.f32.xlu0 %v5828
      %v5830 = vpop.xlane.xlu0 %5829
      %v5831 = vsub.f32 %v5028, %v5785
      %v5832 = vsub.f32 %v5078, %v5788
      %v5833 = vsub.f32 %v5128, %v5791
      %v5834 = vsub.f32 %v5178, %v5794
      %v5835 = vsub.f32 %v5228, %v5797
      %v5836 = vsub.f32 %v5278, %v5800
      %v5837 = vsub.f32 %v5328, %v5803
      %v5838 = vsub.f32 %v5378, %v5806
      %v5839 = vsub.f32 %v5428, %v5809
      %v5840 = vsub.f32 %v5478, %v5812
      %v5841 = vsub.f32 %v5528, %v5815
      %v5842 = vsub.f32 %v5578, %v5818
      %v5843 = vsub.f32 %v5628, %v5821
      %v5844 = vsub.f32 %v5678, %v5824
      %v5845 = vsub.f32 %v5728, %v5827
      %v5846 = vsub.f32 %v5778, %v5830
      %v5847 = vmul.f32 %v5831, 1.442695
      %v5848 = vpow.pop %v5847
      %v5849 = vmul.f32 %v5832, 1.442695
      %v5850 = vpow.pop %v5849
      %v5851 = vmul.f32 %v5833, 1.442695
      %v5852 = vpow.pop %v5851
      %v5853 = vmul.f32 %v5834, 1.442695
      %v5854 = vpow.pop %v5853
      %v5855 = vmul.f32 %v5835, 1.442695
      %v5856 = vpow.pop %v5855
      %v5857 = vmul.f32 %v5836, 1.442695
      %v5858 = vpow.pop %v5857
      %v5859 = vmul.f32 %v5837, 1.442695
      %v5860 = vpow.pop %v5859
      %v5861 = vmul.f32 %v5838, 1.442695
      %v5862 = vpow.pop %v5861
      %v5863 = vmul.f32 %v5839, 1.442695
      %v5864 = vpow.pop %v5863
      %v5865 = vmul.f32 %v5840, 1.442695
      %v5866 = vpow.pop %v5865
      %v5867 = vmul.f32 %v5841, 1.442695
      %v5868 = vpow.pop %v5867
      %v5869 = vmul.f32 %v5842, 1.442695
      %v5870 = vpow.pop %v5869
      %v5871 = vmul.f32 %v5843, 1.442695
      %v5872 = vpow.pop %v5871
      %v5873 = vmul.f32 %v5844, 1.442695
      %v5874 = vpow.pop %v5873
      %v5875 = vmul.f32 %v5845, 1.442695
      %v5876 = vpow.pop %v5875
      %v5877 = vmul.f32 %v5846, 1.442695
      %v5878 = vpow.pop %v5877
      %v5879 = vsel %vm1291, %v5848, 0.0
      %5880 = vadd.xlane.f32.xlu0 %v5879
      %v5881 = vpop.xlane.xlu0 %5880
      %v5882 = vsel %vm1291, %v5850, 0.0
      %5883 = vadd.xlane.f32.xlu0 %v5882
      %v5884 = vpop.xlane.xlu0 %5883
      %v5885 = vsel %vm1291, %v5852, 0.0
      %5886 = vadd.xlane.f32.xlu0 %v5885
      %v5887 = vpop.xlane.xlu0 %5886
      %v5888 = vsel %vm1291, %v5854, 0.0
      %5889 = vadd.xlane.f32.xlu0 %v5888
      %v5890 = vpop.xlane.xlu0 %5889
      %v5891 = vsel %vm1291, %v5856, 0.0
      %5892 = vadd.xlane.f32.xlu0 %v5891
      %v5893 = vpop.xlane.xlu0 %5892
      %v5894 = vsel %vm1291, %v5858, 0.0
      %5895 = vadd.xlane.f32.xlu0 %v5894
      %v5896 = vpop.xlane.xlu0 %5895
      %v5897 = vsel %vm1291, %v5860, 0.0
      %5898 = vadd.xlane.f32.xlu0 %v5897
      %v5899 = vpop.xlane.xlu0 %5898
      %v5900 = vsel %vm1291, %v5862, 0.0
      %5901 = vadd.xlane.f32.xlu0 %v5900
      %v5902 = vpop.xlane.xlu0 %5901
      %v5903 = vsel %vm1291, %v5864, 0.0
      %5904 = vadd.xlane.f32.xlu0 %v5903
      %v5905 = vpop.xlane.xlu0 %5904
      %v5906 = vsel %vm1291, %v5866, 0.0
      %5907 = vadd.xlane.f32.xlu0 %v5906
      %v5908 = vpop.xlane.xlu0 %5907
      %v5909 = vsel %vm1291, %v5868, 0.0
      %5910 = vadd.xlane.f32.xlu0 %v5909
      %v5911 = vpop.xlane.xlu0 %5910
      %v5912 = vsel %vm1291, %v5870, 0.0
      %5913 = vadd.xlane.f32.xlu0 %v5912
      %v5914 = vpop.xlane.xlu0 %5913
      %v5915 = vsel %vm1291, %v5872, 0.0
      %5916 = vadd.xlane.f32.xlu0 %v5915
      %v5917 = vpop.xlane.xlu0 %5916
      %v5918 = vsel %vm1291, %v5874, 0.0
      %5919 = vadd.xlane.f32.xlu0 %v5918
      %v5920 = vpop.xlane.xlu0 %5919
      %v5921 = vsel %vm1291, %v5876, 0.0
      %5922 = vadd.xlane.f32.xlu0 %v5921
      %v5923 = vpop.xlane.xlu0 %5922
      %v5924 = vsel %vm1291, %v5878, 0.0
      %5925 = vadd.xlane.f32.xlu0 %v5924
      %v5926 = vpop.xlane.xlu0 %5925
      %v5927 = vrcp.pop %v5881
      %v5928 = vrcp.pop %v5884
      %v5929 = vrcp.pop %v5887
      %v5930 = vrcp.pop %v5890
      %v5931 = vrcp.pop %v5893
      %v5932 = vrcp.pop %v5896
      %v5933 = vrcp.pop %v5899
      %v5934 = vrcp.pop %v5902
      %v5935 = vrcp.pop %v5905
      %v5936 = vrcp.pop %v5908
      %v5937 = vrcp.pop %v5911
      %v5938 = vrcp.pop %v5914
      %v5939 = vrcp.pop %v5917
      %v5940 = vrcp.pop %v5920
      %v5941 = vrcp.pop %v5923
      %v5942 = vrcp.pop %v5926
      %v5943 = vmul.f32 %v5848, %v5927
      %v5944 = vmul.f32 %v5850, %v5928
      %v5945 = vmul.f32 %v5852, %v5929
      %v5946 = vmul.f32 %v5854, %v5930
      %v5947 = vmul.f32 %v5856, %v5931
      %v5948 = vmul.f32 %v5858, %v5932
      %v5949 = vmul.f32 %v5860, %v5933
      %v5950 = vmul.f32 %v5862, %v5934
      %v5951 = vmul.f32 %v5864, %v5935
      %v5952 = vmul.f32 %v5866, %v5936
      %v5953 = vmul.f32 %v5868, %v5937
      %v5954 = vmul.f32 %v5870, %v5938
      %v5955 = vmul.f32 %v5872, %v5939
      %v5956 = vmul.f32 %v5874, %v5940
      %v5957 = vmul.f32 %v5876, %v5941
      %v5958 = vmul.f32 %v5878, %v5942
      %v5959 = vpack.c.bf16 %v5943, %v5943
      %v5960 = vpack.c.bf16 %v5944, %v5944
      %v5961 = vpack.c.bf16 %v5945, %v5945
      %v5962 = vpack.c.bf16 %v5946, %v5946
      %v5963 = vpack.c.bf16 %v5947, %v5947
      %v5964 = vpack.c.bf16 %v5948, %v5948
      %v5965 = vpack.c.bf16 %v5949, %v5949
      %v5966 = vpack.c.bf16 %v5950, %v5950
      %v5967 = vpack.c.bf16 %v5951, %v5951
      %v5968 = vpack.c.bf16 %v5952, %v5952
      %v5969 = vpack.c.bf16 %v5953, %v5953
      %v5970 = vpack.c.bf16 %v5954, %v5954
      %v5971 = vpack.c.bf16 %v5955, %v5955
      %v5972 = vpack.c.bf16 %v5956, %v5956
      %v5973 = vpack.c.bf16 %v5957, %v5957
      %v5974 = vpack.c.bf16 %v5958, %v5958
      %5975 = vrot.lane.b32.xlu0 %v1275, 112
      %v5976 = vpop.permute.xlu0 %5975
      %v5978 = vsel %vm1291, %v5959, 0
      %v5981 = vsel %vm2223, %v5976, 0
      %5983 = vmatprep.subr.bf16.mxu0 0
      %5984 = vmatpush1.bf16.msra.mxu0 %v5981
      %5985 = vmatprep.subr.bf16.mxu0 0
      %5986 = vmatpush1.bf16.msra.mxu0 0
      %5987 = vmatprep.subr.bf16.mxu0 0
      %5988 = vmatpush1.bf16.msra.mxu0 0
      %5989 = vmatprep.subr.bf16.mxu0 0
      %5990 = vmatpush1.bf16.msra.mxu0 0
      %5991 = vmatprep.subr.bf16.mxu0 0
      %5992 = vmatpush1.bf16.msra.mxu0 0
      %5993 = vmatprep.subr.bf16.mxu0 0
      %5994 = vmatpush1.bf16.msra.mxu0 0
      %5995 = vmatprep.subr.bf16.mxu0 0
      %5996 = vmatpush1.bf16.msra.mxu0 0
      %5997 = vmatprep.subr.bf16.mxu0 0
      %5998 = vmatpush1.bf16.msra.mxu0 0
      %5999 = vmatprep.subr.bf16.mxu0 0
      %6000 = vmatpush1.bf16.msra.mxu0 0
      %6001 = vmatprep.subr.bf16.mxu0 0
      %6002 = vmatpush1.bf16.msra.mxu0 0
      %6003 = vmatprep.subr.bf16.mxu0 0
      %6004 = vmatpush1.bf16.msra.mxu0 0
      %6005 = vmatprep.subr.bf16.mxu0 0
      %6006 = vmatpush1.bf16.msra.mxu0 0
      %6007 = vmatprep.subr.bf16.mxu0 0
      %6008 = vmatpush1.bf16.msra.mxu0 0
      %6009 = vmatprep.subr.bf16.mxu0 0
      %6010 = vmatpush1.bf16.msra.mxu0 0
      %6011 = vmatprep.subr.bf16.mxu0 0
      %6012 = vmatpush1.bf16.msra.mxu0 0
      %6013 = vmatprep.subr.bf16.mxu0 0
      %6014 = vmatpush1.bf16.msra.mxu0 0
      %6015 = vmatprep.mubr.bf16.mxu0 0
      %6016 = vmatmul.mubr.bf16.gmra.mrb[0].mxu0 %v5978
      %v6017 = vpop.f32.mrb[0].mxu0
      %v6018 = vadd.f32 0.0, %v6017
      %v6019 = vpop.f32.mrb[0].mxu0
      %v6020 = vpop.f32.mrb[0].mxu0
      %v6021 = vpop.f32.mrb[0].mxu0
      %6022 = vdwg.mxu0
      %6023 = vrot.lane.b32.xlu0 %v1276, 112
      %v6024 = vpop.permute.xlu0 %6023
      %v6026 = vsel %vm1291, %v5960, 0
      %v6029 = vsel %vm2223, %v6024, 0
      %6031 = vmatprep.subr.bf16.mxu0 0
      %6032 = vmatpush1.bf16.msra.mxu0 %v6029
      %6033 = vmatprep.subr.bf16.mxu0 0
      %6034 = vmatpush1.bf16.msra.mxu0 0
      %6035 = vmatprep.subr.bf16.mxu0 0
      %6036 = vmatpush1.bf16.msra.mxu0 0
      %6037 = vmatprep.subr.bf16.mxu0 0
      %6038 = vmatpush1.bf16.msra.mxu0 0
      %6039 = vmatprep.subr.bf16.mxu0 0
      %6040 = vmatpush1.bf16.msra.mxu0 0
      %6041 = vmatprep.subr.bf16.mxu0 0
      %6042 = vmatpush1.bf16.msra.mxu0 0
      %6043 = vmatprep.subr.bf16.mxu0 0
      %6044 = vmatpush1.bf16.msra.mxu0 0
      %6045 = vmatprep.subr.bf16.mxu0 0
      %6046 = vmatpush1.bf16.msra.mxu0 0
      %6047 = vmatprep.subr.bf16.mxu0 0
      %6048 = vmatpush1.bf16.msra.mxu0 0
      %6049 = vmatprep.subr.bf16.mxu0 0
      %6050 = vmatpush1.bf16.msra.mxu0 0
      %6051 = vmatprep.subr.bf16.mxu0 0
      %6052 = vmatpush1.bf16.msra.mxu0 0
      %6053 = vmatprep.subr.bf16.mxu0 0
      %6054 = vmatpush1.bf16.msra.mxu0 0
      %6055 = vmatprep.subr.bf16.mxu0 0
      %6056 = vmatpush1.bf16.msra.mxu0 0
      %6057 = vmatprep.subr.bf16.mxu0 0
      %6058 = vmatpush1.bf16.msra.mxu0 0
      %6059 = vmatprep.subr.bf16.mxu0 0
      %6060 = vmatpush1.bf16.msra.mxu0 0
      %6061 = vmatprep.subr.bf16.mxu0 0
      %6062 = vmatpush1.bf16.msra.mxu0 0
      %6063 = vmatprep.mubr.bf16.mxu0 0
      %6064 = vmatmul.mubr.bf16.gmra.mrb[0].mxu0 %v6026
      %v6065 = vpop.f32.mrb[0].mxu0
      %v6066 = vadd.f32 0.0, %v6065
      %v6067 = vpop.f32.mrb[0].mxu0
      %v6068 = vpop.f32.mrb[0].mxu0
      %v6069 = vpop.f32.mrb[0].mxu0
      %6070 = vdwg.mxu0
      %6071 = vrot.lane.b32.xlu0 %v1277, 112
      %v6072 = vpop.permute.xlu0 %6071
      %v6074 = vsel %vm1291, %v5961, 0
      %v6077 = vsel %vm2223, %v6072, 0
      %6079 = vmatprep.subr.bf16.mxu0 0
      %6080 = vmatpush1.bf16.msra.mxu0 %v6077
      %6081 = vmatprep.subr.bf16.mxu0 0
      %6082 = vmatpush1.bf16.msra.mxu0 0
      %6083 = vmatprep.subr.bf16.mxu0 0
      %6084 = vmatpush1.bf16.msra.mxu0 0
      %6085 = vmatprep.subr.bf16.mxu0 0
      %6086 = vmatpush1.bf16.msra.mxu0 0
      %6087 = vmatprep.subr.bf16.mxu0 0
      %6088 = vmatpush1.bf16.msra.mxu0 0
      %6089 = vmatprep.subr.bf16.mxu0 0
      %6090 = vmatpush1.bf16.msra.mxu0 0
      %6091 = vmatprep.subr.bf16.mxu0 0
      %6092 = vmatpush1.bf16.msra.mxu0 0
      %6093 = vmatprep.subr.bf16.mxu0 0
      %6094 = vmatpush1.bf16.msra.mxu0 0
      %6095 = vmatprep.subr.bf16.mxu0 0
      %6096 = vmatpush1.bf16.msra.mxu0 0
      %6097 = vmatprep.subr.bf16.mxu0 0
      %6098 = vmatpush1.bf16.msra.mxu0 0
      %6099 = vmatprep.subr.bf16.mxu0 0
      %6100 = vmatpush1.bf16.msra.mxu0 0
      %6101 = vmatprep.subr.bf16.mxu0 0
      %6102 = vmatpush1.bf16.msra.mxu0 0
      %6103 = vmatprep.subr.bf16.mxu0 0
      %6104 = vmatpush1.bf16.msra.mxu0 0
      %6105 = vmatprep.subr.bf16.mxu0 0
      %6106 = vmatpush1.bf16.msra.mxu0 0
      %6107 = vmatprep.subr.bf16.mxu0 0
      %6108 = vmatpush1.bf16.msra.mxu0 0
      %6109 = vmatprep.subr.bf16.mxu0 0
      %6110 = vmatpush1.bf16.msra.mxu0 0
      %6111 = vmatprep.mubr.bf16.mxu0 0
      %6112 = vmatmul.mubr.bf16.gmra.mrb[0].mxu0 %v6074
      %v6113 = vpop.f32.mrb[0].mxu0
      %v6114 = vadd.f32 0.0, %v6113
      %v6115 = vpop.f32.mrb[0].mxu0
      %v6116 = vpop.f32.mrb[0].mxu0
      %v6117 = vpop.f32.mrb[0].mxu0
      %6118 = vdwg.mxu0
      %6119 = vrot.lane.b32.xlu0 %v1278, 112
      %v6120 = vpop.permute.xlu0 %6119
      %v6122 = vsel %vm1291, %v5962, 0
      %v6125 = vsel %vm2223, %v6120, 0
      %6127 = vmatprep.subr.bf16.mxu0 0
      %6128 = vmatpush1.bf16.msra.mxu0 %v6125
      %6129 = vmatprep.subr.bf16.mxu0 0
      %6130 = vmatpush1.bf16.msra.mxu0 0
      %6131 = vmatprep.subr.bf16.mxu0 0
      %6132 = vmatpush1.bf16.msra.mxu0 0
      %6133 = vmatprep.subr.bf16.mxu0 0
      %6134 = vmatpush1.bf16.msra.mxu0 0
      %6135 = vmatprep.subr.bf16.mxu0 0
      %6136 = vmatpush1.bf16.msra.mxu0 0
      %6137 = vmatprep.subr.bf16.mxu0 0
      %6138 = vmatpush1.bf16.msra.mxu0 0
      %6139 = vmatprep.subr.bf16.mxu0 0
      %6140 = vmatpush1.bf16.msra.mxu0 0
      %6141 = vmatprep.subr.bf16.mxu0 0
      %6142 = vmatpush1.bf16.msra.mxu0 0
      %6143 = vmatprep.subr.bf16.mxu0 0
      %6144 = vmatpush1.bf16.msra.mxu0 0
      %6145 = vmatprep.subr.bf16.mxu0 0
      %6146 = vmatpush1.bf16.msra.mxu0 0
      %6147 = vmatprep.subr.bf16.mxu0 0
      %6148 = vmatpush1.bf16.msra.mxu0 0
      %6149 = vmatprep.subr.bf16.mxu0 0
      %6150 = vmatpush1.bf16.msra.mxu0 0
      %6151 = vmatprep.subr.bf16.mxu0 0
      %6152 = vmatpush1.bf16.msra.mxu0 0
      %6153 = vmatprep.subr.bf16.mxu0 0
      %6154 = vmatpush1.bf16.msra.mxu0 0
      %6155 = vmatprep.subr.bf16.mxu0 0
      %6156 = vmatpush1.bf16.msra.mxu0 0
      %6157 = vmatprep.subr.bf16.mxu0 0
      %6158 = vmatpush1.bf16.msra.mxu0 0
      %6159 = vmatprep.mubr.bf16.mxu0 0
      %6160 = vmatmul.mubr.bf16.gmra.mrb[0].mxu0 %v6122
      %v6161 = vpop.f32.mrb[0].mxu0
      %v6162 = vadd.f32 0.0, %v6161
      %v6163 = vpop.f32.mrb[0].mxu0
      %v6164 = vpop.f32.mrb[0].mxu0
      %v6165 = vpop.f32.mrb[0].mxu0
      %6166 = vdwg.mxu0
      %6167 = vrot.lane.b32.xlu0 %v1279, 112
      %v6168 = vpop.permute.xlu0 %6167
      %v6170 = vsel %vm1291, %v5963, 0
      %v6173 = vsel %vm2223, %v6168, 0
      %6175 = vmatprep.subr.bf16.mxu0 0
      %6176 = vmatpush1.bf16.msra.mxu0 %v6173
      %6177 = vmatprep.subr.bf16.mxu0 0
      %6178 = vmatpush1.bf16.msra.mxu0 0
      %6179 = vmatprep.subr.bf16.mxu0 0
      %6180 = vmatpush1.bf16.msra.mxu0 0
      %6181 = vmatprep.subr.bf16.mxu0 0
      %6182 = vmatpush1.bf16.msra.mxu0 0
      %6183 = vmatprep.subr.bf16.mxu0 0
      %6184 = vmatpush1.bf16.msra.mxu0 0
      %6185 = vmatprep.subr.bf16.mxu0 0
      %6186 = vmatpush1.bf16.msra.mxu0 0
      %6187 = vmatprep.subr.bf16.mxu0 0
      %6188 = vmatpush1.bf16.msra.mxu0 0
      %6189 = vmatprep.subr.bf16.mxu0 0
      %6190 = vmatpush1.bf16.msra.mxu0 0
      %6191 = vmatprep.subr.bf16.mxu0 0
      %6192 = vmatpush1.bf16.msra.mxu0 0
      %6193 = vmatprep.subr.bf16.mxu0 0
      %6194 = vmatpush1.bf16.msra.mxu0 0
      %6195 = vmatprep.subr.bf16.mxu0 0
      %6196 = vmatpush1.bf16.msra.mxu0 0
      %6197 = vmatprep.subr.bf16.mxu0 0
      %6198 = vmatpush1.bf16.msra.mxu0 0
      %6199 = vmatprep.subr.bf16.mxu0 0
      %6200 = vmatpush1.bf16.msra.mxu0 0
      %6201 = vmatprep.subr.bf16.mxu0 0
      %6202 = vmatpush1.bf16.msra.mxu0 0
      %6203 = vmatprep.subr.bf16.mxu0 0
      %6204 = vmatpush1.bf16.msra.mxu0 0
      %6205 = vmatprep.subr.bf16.mxu0 0
      %6206 = vmatpush1.bf16.msra.mxu0 0
      %6207 = vmatprep.mubr.bf16.mxu0 0
      %6208 = vmatmul.mubr.bf16.gmra.mrb[0].mxu0 %v6170
      %v6209 = vpop.f32.mrb[0].mxu0
      %v6210 = vadd.f32 0.0, %v6209
      %v6211 = vpop.f32.mrb[0].mxu0
      %v6212 = vpop.f32.mrb[0].mxu0
      %v6213 = vpop.f32.mrb[0].mxu0
      %6214 = vdwg.mxu0
      %6215 = vrot.lane.b32.xlu0 %v1280, 112
      %v6216 = vpop.permute.xlu0 %6215
      %v6218 = vsel %vm1291, %v5964, 0
      %v6221 = vsel %vm2223, %v6216, 0
      %6223 = vmatprep.subr.bf16.mxu0 0
      %6224 = vmatpush1.bf16.msra.mxu0 %v6221
      %6225 = vmatprep.subr.bf16.mxu0 0
      %6226 = vmatpush1.bf16.msra.mxu0 0
      %6227 = vmatprep.subr.bf16.mxu0 0
      %6228 = vmatpush1.bf16.msra.mxu0 0
      %6229 = vmatprep.subr.bf16.mxu0 0
      %6230 = vmatpush1.bf16.msra.mxu0 0
      %6231 = vmatprep.subr.bf16.mxu0 0
      %6232 = vmatpush1.bf16.msra.mxu0 0
      %6233 = vmatprep.subr.bf16.mxu0 0
      %6234 = vmatpush1.bf16.msra.mxu0 0
      %6235 = vmatprep.subr.bf16.mxu0 0
      %6236 = vmatpush1.bf16.msra.mxu0 0
      %6237 = vmatprep.subr.bf16.mxu0 0
      %6238 = vmatpush1.bf16.msra.mxu0 0
      %6239 = vmatprep.subr.bf16.mxu0 0
      %6240 = vmatpush1.bf16.msra.mxu0 0
      %6241 = vmatprep.subr.bf16.mxu0 0
      %6242 = vmatpush1.bf16.msra.mxu0 0
      %6243 = vmatprep.subr.bf16.mxu0 0
      %6244 = vmatpush1.bf16.msra.mxu0 0
      %6245 = vmatprep.subr.bf16.mxu0 0
      %6246 = vmatpush1.bf16.msra.mxu0 0
      %6247 = vmatprep.subr.bf16.mxu0 0
      %6248 = vmatpush1.bf16.msra.mxu0 0
      %6249 = vmatprep.subr.bf16.mxu0 0
      %6250 = vmatpush1.bf16.msra.mxu0 0
      %6251 = vmatprep.subr.bf16.mxu0 0
      %6252 = vmatpush1.bf16.msra.mxu0 0
      %6253 = vmatprep.subr.bf16.mxu0 0
      %6254 = vmatpush1.bf16.msra.mxu0 0
      %6255 = vmatprep.mubr.bf16.mxu0 0
      %6256 = vmatmul.mubr.bf16.gmra.mrb[0].mxu0 %v6218
      %v6257 = vpop.f32.mrb[0].mxu0
      %v6258 = vadd.f32 0.0, %v6257
      %v6259 = vpop.f32.mrb[0].mxu0
      %v6260 = vpop.f32.mrb[0].mxu0
      %v6261 = vpop.f32.mrb[0].mxu0
      %6262 = vdwg.mxu0
      %6263 = vrot.lane.b32.xlu0 %v1281, 112
      %v6264 = vpop.permute.xlu0 %6263
      %v6266 = vsel %vm1291, %v5965, 0
      %v6269 = vsel %vm2223, %v6264, 0
      %6271 = vmatprep.subr.bf16.mxu0 0
      %6272 = vmatpush1.bf16.msra.mxu0 %v6269
      %6273 = vmatprep.subr.bf16.mxu0 0
      %6274 = vmatpush1.bf16.msra.mxu0 0
      %6275 = vmatprep.subr.bf16.mxu0 0
      %6276 = vmatpush1.bf16.msra.mxu0 0
      %6277 = vmatprep.subr.bf16.mxu0 0
      %6278 = vmatpush1.bf16.msra.mxu0 0
      %6279 = vmatprep.subr.bf16.mxu0 0
      %6280 = vmatpush1.bf16.msra.mxu0 0
      %6281 = vmatprep.subr.bf16.mxu0 0
      %6282 = vmatpush1.bf16.msra.mxu0 0
      %6283 = vmatprep.subr.bf16.mxu0 0
      %6284 = vmatpush1.bf16.msra.mxu0 0
      %6285 = vmatprep.subr.bf16.mxu0 0
      %6286 = vmatpush1.bf16.msra.mxu0 0
      %6287 = vmatprep.subr.bf16.mxu0 0
      %6288 = vmatpush1.bf16.msra.mxu0 0
      %6289 = vmatprep.subr.bf16.mxu0 0
      %6290 = vmatpush1.bf16.msra.mxu0 0
      %6291 = vmatprep.subr.bf16.mxu0 0
      %6292 = vmatpush1.bf16.msra.mxu0 0
      %6293 = vmatprep.subr.bf16.mxu0 0
      %6294 = vmatpush1.bf16.msra.mxu0 0
      %6295 = vmatprep.subr.bf16.mxu0 0
      %6296 = vmatpush1.bf16.msra.mxu0 0
      %6297 = vmatprep.subr.bf16.mxu0 0
      %6298 = vmatpush1.bf16.msra.mxu0 0
      %6299 = vmatprep.subr.bf16.mxu0 0
      %6300 = vmatpush1.bf16.msra.mxu0 0
      %6301 = vmatprep.subr.bf16.mxu0 0
      %6302 = vmatpush1.bf16.msra.mxu0 0
      %6303 = vmatprep.mubr.bf16.mxu0 0
      %6304 = vmatmul.mubr.bf16.gmra.mrb[0].mxu0 %v6266
      %v6305 = vpop.f32.mrb[0].mxu0
      %v6306 = vadd.f32 0.0, %v6305
      %v6307 = vpop.f32.mrb[0].mxu0
      %v6308 = vpop.f32.mrb[0].mxu0
      %v6309 = vpop.f32.mrb[0].mxu0
      %6310 = vdwg.mxu0
      %6311 = vrot.lane.b32.xlu0 %v1282, 112
      %v6312 = vpop.permute.xlu0 %6311
      %v6314 = vsel %vm1291, %v5966, 0
      %v6317 = vsel %vm2223, %v6312, 0
      %6319 = vmatprep.subr.bf16.mxu0 0
      %6320 = vmatpush1.bf16.msra.mxu0 %v6317
      %6321 = vmatprep.subr.bf16.mxu0 0
      %6322 = vmatpush1.bf16.msra.mxu0 0
      %6323 = vmatprep.subr.bf16.mxu0 0
      %6324 = vmatpush1.bf16.msra.mxu0 0
      %6325 = vmatprep.subr.bf16.mxu0 0
      %6326 = vmatpush1.bf16.msra.mxu0 0
      %6327 = vmatprep.subr.bf16.mxu0 0
      %6328 = vmatpush1.bf16.msra.mxu0 0
      %6329 = vmatprep.subr.bf16.mxu0 0
      %6330 = vmatpush1.bf16.msra.mxu0 0
      %6331 = vmatprep.subr.bf16.mxu0 0
      %6332 = vmatpush1.bf16.msra.mxu0 0
      %6333 = vmatprep.subr.bf16.mxu0 0
      %6334 = vmatpush1.bf16.msra.mxu0 0
      %6335 = vmatprep.subr.bf16.mxu0 0
      %6336 = vmatpush1.bf16.msra.mxu0 0
      %6337 = vmatprep.subr.bf16.mxu0 0
      %6338 = vmatpush1.bf16.msra.mxu0 0
      %6339 = vmatprep.subr.bf16.mxu0 0
      %6340 = vmatpush1.bf16.msra.mxu0 0
      %6341 = vmatprep.subr.bf16.mxu0 0
      %6342 = vmatpush1.bf16.msra.mxu0 0
      %6343 = vmatprep.subr.bf16.mxu0 0
      %6344 = vmatpush1.bf16.msra.mxu0 0
      %6345 = vmatprep.subr.bf16.mxu0 0
      %6346 = vmatpush1.bf16.msra.mxu0 0
      %6347 = vmatprep.subr.bf16.mxu0 0
      %6348 = vmatpush1.bf16.msra.mxu0 0
      %6349 = vmatprep.subr.bf16.mxu0 0
      %6350 = vmatpush1.bf16.msra.mxu0 0
      %6351 = vmatprep.mubr.bf16.mxu0 0
      %6352 = vmatmul.mubr.bf16.gmra.mrb[0].mxu0 %v6314
      %v6353 = vpop.f32.mrb[0].mxu0
      %v6354 = vadd.f32 0.0, %v6353
      %v6355 = vpop.f32.mrb[0].mxu0
      %v6356 = vpop.f32.mrb[0].mxu0
      %v6357 = vpop.f32.mrb[0].mxu0
      %6358 = vdwg.mxu0
      %6359 = vrot.lane.b32.xlu0 %v1283, 112
      %v6360 = vpop.permute.xlu0 %6359
      %v6362 = vsel %vm1291, %v5967, 0
      %v6365 = vsel %vm2223, %v6360, 0
      %6367 = vmatprep.subr.bf16.mxu0 0
      %6368 = vmatpush1.bf16.msra.mxu0 %v6365
      %6369 = vmatprep.subr.bf16.mxu0 0
      %6370 = vmatpush1.bf16.msra.mxu0 0
      %6371 = vmatprep.subr.bf16.mxu0 0
      %6372 = vmatpush1.bf16.msra.mxu0 0
      %6373 = vmatprep.subr.bf16.mxu0 0
      %6374 = vmatpush1.bf16.msra.mxu0 0
      %6375 = vmatprep.subr.bf16.mxu0 0
      %6376 = vmatpush1.bf16.msra.mxu0 0
      %6377 = vmatprep.subr.bf16.mxu0 0
      %6378 = vmatpush1.bf16.msra.mxu0 0
      %6379 = vmatprep.subr.bf16.mxu0 0
      %6380 = vmatpush1.bf16.msra.mxu0 0
      %6381 = vmatprep.subr.bf16.mxu0 0
      %6382 = vmatpush1.bf16.msra.mxu0 0
      %6383 = vmatprep.subr.bf16.mxu0 0
      %6384 = vmatpush1.bf16.msra.mxu0 0
      %6385 = vmatprep.subr.bf16.mxu0 0
      %6386 = vmatpush1.bf16.msra.mxu0 0
      %6387 = vmatprep.subr.bf16.mxu0 0
      %6388 = vmatpush1.bf16.msra.mxu0 0
      %6389 = vmatprep.subr.bf16.mxu0 0
      %6390 = vmatpush1.bf16.msra.mxu0 0
      %6391 = vmatprep.subr.bf16.mxu0 0
      %6392 = vmatpush1.bf16.msra.mxu0 0
      %6393 = vmatprep.subr.bf16.mxu0 0
      %6394 = vmatpush1.bf16.msra.mxu0 0
      %6395 = vmatprep.subr.bf16.mxu0 0
      %6396 = vmatpush1.bf16.msra.mxu0 0
      %6397 = vmatprep.subr.bf16.mxu0 0
      %6398 = vmatpush1.bf16.msra.mxu0 0
      %6399 = vmatprep.mubr.bf16.mxu0 0
      %6400 = vmatmul.mubr.bf16.gmra.mrb[0].mxu0 %v6362
      %v6401 = vpop.f32.mrb[0].mxu0
      %v6402 = vadd.f32 0.0, %v6401
      %v6403 = vpop.f32.mrb[0].mxu0
      %v6404 = vpop.f32.mrb[0].mxu0
      %v6405 = vpop.f32.mrb[0].mxu0
      %6406 = vdwg.mxu0
      %6407 = vrot.lane.b32.xlu0 %v1284, 112
      %v6408 = vpop.permute.xlu0 %6407
      %v6410 = vsel %vm1291, %v5968, 0
      %v6413 = vsel %vm2223, %v6408, 0
      %6415 = vmatprep.subr.bf16.mxu0 0
      %6416 = vmatpush1.bf16.msra.mxu0 %v6413
      %6417 = vmatprep.subr.bf16.mxu0 0
      %6418 = vmatpush1.bf16.msra.mxu0 0
      %6419 = vmatprep.subr.bf16.mxu0 0
      %6420 = vmatpush1.bf16.msra.mxu0 0
      %6421 = vmatprep.subr.bf16.mxu0 0
      %6422 = vmatpush1.bf16.msra.mxu0 0
      %6423 = vmatprep.subr.bf16.mxu0 0
      %6424 = vmatpush1.bf16.msra.mxu0 0
      %6425 = vmatprep.subr.bf16.mxu0 0
      %6426 = vmatpush1.bf16.msra.mxu0 0
      %6427 = vmatprep.subr.bf16.mxu0 0
      %6428 = vmatpush1.bf16.msra.mxu0 0
      %6429 = vmatprep.subr.bf16.mxu0 0
      %6430 = vmatpush1.bf16.msra.mxu0 0
      %6431 = vmatprep.subr.bf16.mxu0 0
      %6432 = vmatpush1.bf16.msra.mxu0 0
      %6433 = vmatprep.subr.bf16.mxu0 0
      %6434 = vmatpush1.bf16.msra.mxu0 0
      %6435 = vmatprep.subr.bf16.mxu0 0
      %6436 = vmatpush1.bf16.msra.mxu0 0
      %6437 = vmatprep.subr.bf16.mxu0 0
      %6438 = vmatpush1.bf16.msra.mxu0 0
      %6439 = vmatprep.subr.bf16.mxu0 0
      %6440 = vmatpush1.bf16.msra.mxu0 0
      %6441 = vmatprep.subr.bf16.mxu0 0
      %6442 = vmatpush1.bf16.msra.mxu0 0
      %6443 = vmatprep.subr.bf16.mxu0 0
      %6444 = vmatpush1.bf16.msra.mxu0 0
      %6445 = vmatprep.subr.bf16.mxu0 0
      %6446 = vmatpush1.bf16.msra.mxu0 0
      %6447 = vmatprep.mubr.bf16.mxu0 0
      %6448 = vmatmul.mubr.bf16.gmra.mrb[0].mxu0 %v6410
      %v6449 = vpop.f32.mrb[0].mxu0
      %v6450 = vadd.f32 0.0, %v6449
      %v6451 = vpop.f32.mrb[0].mxu0
      %v6452 = vpop.f32.mrb[0].mxu0
      %v6453 = vpop.f32.mrb[0].mxu0
      %6454 = vdwg.mxu0
      %6455 = vrot.lane.b32.xlu0 %v1285, 112
      %v6456 = vpop.permute.xlu0 %6455
      %v6458 = vsel %vm1291, %v5969, 0
      %v6461 = vsel %vm2223, %v6456, 0
      %6463 = vmatprep.subr.bf16.mxu0 0
      %6464 = vmatpush1.bf16.msra.mxu0 %v6461
      %6465 = vmatprep.subr.bf16.mxu0 0
      %6466 = vmatpush1.bf16.msra.mxu0 0
      %6467 = vmatprep.subr.bf16.mxu0 0
      %6468 = vmatpush1.bf16.msra.mxu0 0
      %6469 = vmatprep.subr.bf16.mxu0 0
      %6470 = vmatpush1.bf16.msra.mxu0 0
      %6471 = vmatprep.subr.bf16.mxu0 0
      %6472 = vmatpush1.bf16.msra.mxu0 0
      %6473 = vmatprep.subr.bf16.mxu0 0
      %6474 = vmatpush1.bf16.msra.mxu0 0
      %6475 = vmatprep.subr.bf16.mxu0 0
      %6476 = vmatpush1.bf16.msra.mxu0 0
      %6477 = vmatprep.subr.bf16.mxu0 0
      %6478 = vmatpush1.bf16.msra.mxu0 0
      %6479 = vmatprep.subr.bf16.mxu0 0
      %6480 = vmatpush1.bf16.msra.mxu0 0
      %6481 = vmatprep.subr.bf16.mxu0 0
      %6482 = vmatpush1.bf16.msra.mxu0 0
      %6483 = vmatprep.subr.bf16.mxu0 0
      %6484 = vmatpush1.bf16.msra.mxu0 0
      %6485 = vmatprep.subr.bf16.mxu0 0
      %6486 = vmatpush1.bf16.msra.mxu0 0
      %6487 = vmatprep.subr.bf16.mxu0 0
      %6488 = vmatpush1.bf16.msra.mxu0 0
      %6489 = vmatprep.subr.bf16.mxu0 0
      %6490 = vmatpush1.bf16.msra.mxu0 0
      %6491 = vmatprep.subr.bf16.mxu0 0
      %6492 = vmatpush1.bf16.msra.mxu0 0
      %6493 = vmatprep.subr.bf16.mxu0 0
      %6494 = vmatpush1.bf16.msra.mxu0 0
      %6495 = vmatprep.mubr.bf16.mxu0 0
      %6496 = vmatmul.mubr.bf16.gmra.mrb[0].mxu0 %v6458
      %v6497 = vpop.f32.mrb[0].mxu0
      %v6498 = vadd.f32 0.0, %v6497
      %v6499 = vpop.f32.mrb[0].mxu0
      %v6500 = vpop.f32.mrb[0].mxu0
      %v6501 = vpop.f32.mrb[0].mxu0
      %6502 = vdwg.mxu0
      %6503 = vrot.lane.b32.xlu0 %v1286, 112
      %v6504 = vpop.permute.xlu0 %6503
      %v6506 = vsel %vm1291, %v5970, 0
      %v6509 = vsel %vm2223, %v6504, 0
      %6511 = vmatprep.subr.bf16.mxu0 0
      %6512 = vmatpush1.bf16.msra.mxu0 %v6509
      %6513 = vmatprep.subr.bf16.mxu0 0
      %6514 = vmatpush1.bf16.msra.mxu0 0
      %6515 = vmatprep.subr.bf16.mxu0 0
      %6516 = vmatpush1.bf16.msra.mxu0 0
      %6517 = vmatprep.subr.bf16.mxu0 0
      %6518 = vmatpush1.bf16.msra.mxu0 0
      %6519 = vmatprep.subr.bf16.mxu0 0
      %6520 = vmatpush1.bf16.msra.mxu0 0
      %6521 = vmatprep.subr.bf16.mxu0 0
      %6522 = vmatpush1.bf16.msra.mxu0 0
      %6523 = vmatprep.subr.bf16.mxu0 0
      %6524 = vmatpush1.bf16.msra.mxu0 0
      %6525 = vmatprep.subr.bf16.mxu0 0
      %6526 = vmatpush1.bf16.msra.mxu0 0
      %6527 = vmatprep.subr.bf16.mxu0 0
      %6528 = vmatpush1.bf16.msra.mxu0 0
      %6529 = vmatprep.subr.bf16.mxu0 0
      %6530 = vmatpush1.bf16.msra.mxu0 0
      %6531 = vmatprep.subr.bf16.mxu0 0
      %6532 = vmatpush1.bf16.msra.mxu0 0
      %6533 = vmatprep.subr.bf16.mxu0 0
      %6534 = vmatpush1.bf16.msra.mxu0 0
      %6535 = vmatprep.subr.bf16.mxu0 0
      %6536 = vmatpush1.bf16.msra.mxu0 0
      %6537 = vmatprep.subr.bf16.mxu0 0
      %6538 = vmatpush1.bf16.msra.mxu0 0
      %6539 = vmatprep.subr.bf16.mxu0 0
      %6540 = vmatpush1.bf16.msra.mxu0 0
      %6541 = vmatprep.subr.bf16.mxu0 0
      %6542 = vmatpush1.bf16.msra.mxu0 0
      %6543 = vmatprep.mubr.bf16.mxu0 0
      %6544 = vmatmul.mubr.bf16.gmra.mrb[0].mxu0 %v6506
      %v6545 = vpop.f32.mrb[0].mxu0
      %v6546 = vadd.f32 0.0, %v6545
      %v6547 = vpop.f32.mrb[0].mxu0
      %v6548 = vpop.f32.mrb[0].mxu0
      %v6549 = vpop.f32.mrb[0].mxu0
      %6550 = vdwg.mxu0
      %6551 = vrot.lane.b32.xlu0 %v1287, 112
      %v6552 = vpop.permute.xlu0 %6551
      %v6554 = vsel %vm1291, %v5971, 0
      %v6557 = vsel %vm2223, %v6552, 0
      %6559 = vmatprep.subr.bf16.mxu0 0
      %6560 = vmatpush1.bf16.msra.mxu0 %v6557
      %6561 = vmatprep.subr.bf16.mxu0 0
      %6562 = vmatpush1.bf16.msra.mxu0 0
      %6563 = vmatprep.subr.bf16.mxu0 0
      %6564 = vmatpush1.bf16.msra.mxu0 0
      %6565 = vmatprep.subr.bf16.mxu0 0
      %6566 = vmatpush1.bf16.msra.mxu0 0
      %6567 = vmatprep.subr.bf16.mxu0 0
      %6568 = vmatpush1.bf16.msra.mxu0 0
      %6569 = vmatprep.subr.bf16.mxu0 0
      %6570 = vmatpush1.bf16.msra.mxu0 0
      %6571 = vmatprep.subr.bf16.mxu0 0
      %6572 = vmatpush1.bf16.msra.mxu0 0
      %6573 = vmatprep.subr.bf16.mxu0 0
      %6574 = vmatpush1.bf16.msra.mxu0 0
      %6575 = vmatprep.subr.bf16.mxu0 0
      %6576 = vmatpush1.bf16.msra.mxu0 0
      %6577 = vmatprep.subr.bf16.mxu0 0
      %6578 = vmatpush1.bf16.msra.mxu0 0
      %6579 = vmatprep.subr.bf16.mxu0 0
      %6580 = vmatpush1.bf16.msra.mxu0 0
      %6581 = vmatprep.subr.bf16.mxu0 0
      %6582 = vmatpush1.bf16.msra.mxu0 0
      %6583 = vmatprep.subr.bf16.mxu0 0
      %6584 = vmatpush1.bf16.msra.mxu0 0
      %6585 = vmatprep.subr.bf16.mxu0 0
      %6586 = vmatpush1.bf16.msra.mxu0 0
      %6587 = vmatprep.subr.bf16.mxu0 0
      %6588 = vmatpush1.bf16.msra.mxu0 0
      %6589 = vmatprep.subr.bf16.mxu0 0
      %6590 = vmatpush1.bf16.msra.mxu0 0
      %6591 = vmatprep.mubr.bf16.mxu0 0
      %6592 = vmatmul.mubr.bf16.gmra.mrb[0].mxu0 %v6554
      %v6593 = vpop.f32.mrb[0].mxu0
      %v6594 = vadd.f32 0.0, %v6593
      %v6595 = vpop.f32.mrb[0].mxu0
      %v6596 = vpop.f32.mrb[0].mxu0
      %v6597 = vpop.f32.mrb[0].mxu0
      %6598 = vdwg.mxu0
      %6599 = vrot.lane.b32.xlu0 %v1288, 112
      %v6600 = vpop.permute.xlu0 %6599
      %v6602 = vsel %vm1291, %v5972, 0
      %v6605 = vsel %vm2223, %v6600, 0
      %6607 = vmatprep.subr.bf16.mxu0 0
      %6608 = vmatpush1.bf16.msra.mxu0 %v6605
      %6609 = vmatprep.subr.bf16.mxu0 0
      %6610 = vmatpush1.bf16.msra.mxu0 0
      %6611 = vmatprep.subr.bf16.mxu0 0
      %6612 = vmatpush1.bf16.msra.mxu0 0
      %6613 = vmatprep.subr.bf16.mxu0 0
      %6614 = vmatpush1.bf16.msra.mxu0 0
      %6615 = vmatprep.subr.bf16.mxu0 0
      %6616 = vmatpush1.bf16.msra.mxu0 0
      %6617 = vmatprep.subr.bf16.mxu0 0
      %6618 = vmatpush1.bf16.msra.mxu0 0
      %6619 = vmatprep.subr.bf16.mxu0 0
      %6620 = vmatpush1.bf16.msra.mxu0 0
      %6621 = vmatprep.subr.bf16.mxu0 0
      %6622 = vmatpush1.bf16.msra.mxu0 0
      %6623 = vmatprep.subr.bf16.mxu0 0
      %6624 = vmatpush1.bf16.msra.mxu0 0
      %6625 = vmatprep.subr.bf16.mxu0 0
      %6626 = vmatpush1.bf16.msra.mxu0 0
      %6627 = vmatprep.subr.bf16.mxu0 0
      %6628 = vmatpush1.bf16.msra.mxu0 0
      %6629 = vmatprep.subr.bf16.mxu0 0
      %6630 = vmatpush1.bf16.msra.mxu0 0
      %6631 = vmatprep.subr.bf16.mxu0 0
      %6632 = vmatpush1.bf16.msra.mxu0 0
      %6633 = vmatprep.subr.bf16.mxu0 0
      %6634 = vmatpush1.bf16.msra.mxu0 0
      %6635 = vmatprep.subr.bf16.mxu0 0
      %6636 = vmatpush1.bf16.msra.mxu0 0
      %6637 = vmatprep.subr.bf16.mxu0 0
      %6638 = vmatpush1.bf16.msra.mxu0 0
      %6639 = vmatprep.mubr.bf16.mxu0 0
      %6640 = vmatmul.mubr.bf16.gmra.mrb[0].mxu0 %v6602
      %v6641 = vpop.f32.mrb[0].mxu0
      %v6642 = vadd.f32 0.0, %v6641
      %v6643 = vpop.f32.mrb[0].mxu0
      %v6644 = vpop.f32.mrb[0].mxu0
      %v6645 = vpop.f32.mrb[0].mxu0
      %6646 = vdwg.mxu0
      %6647 = vrot.lane.b32.xlu0 %v1289, 112
      %v6648 = vpop.permute.xlu0 %6647
      %v6650 = vsel %vm1291, %v5973, 0
      %v6653 = vsel %vm2223, %v6648, 0
      %6655 = vmatprep.subr.bf16.mxu0 0
      %6656 = vmatpush1.bf16.msra.mxu0 %v6653
      %6657 = vmatprep.subr.bf16.mxu0 0
      %6658 = vmatpush1.bf16.msra.mxu0 0
      %6659 = vmatprep.subr.bf16.mxu0 0
      %6660 = vmatpush1.bf16.msra.mxu0 0
      %6661 = vmatprep.subr.bf16.mxu0 0
      %6662 = vmatpush1.bf16.msra.mxu0 0
      %6663 = vmatprep.subr.bf16.mxu0 0
      %6664 = vmatpush1.bf16.msra.mxu0 0
      %6665 = vmatprep.subr.bf16.mxu0 0
      %6666 = vmatpush1.bf16.msra.mxu0 0
      %6667 = vmatprep.subr.bf16.mxu0 0
      %6668 = vmatpush1.bf16.msra.mxu0 0
      %6669 = vmatprep.subr.bf16.mxu0 0
      %6670 = vmatpush1.bf16.msra.mxu0 0
      %6671 = vmatprep.subr.bf16.mxu0 0
      %6672 = vmatpush1.bf16.msra.mxu0 0
      %6673 = vmatprep.subr.bf16.mxu0 0
      %6674 = vmatpush1.bf16.msra.mxu0 0
      %6675 = vmatprep.subr.bf16.mxu0 0
      %6676 = vmatpush1.bf16.msra.mxu0 0
      %6677 = vmatprep.subr.bf16.mxu0 0
      %6678 = vmatpush1.bf16.msra.mxu0 0
      %6679 = vmatprep.subr.bf16.mxu0 0
      %6680 = vmatpush1.bf16.msra.mxu0 0
      %6681 = vmatprep.subr.bf16.mxu0 0
      %6682 = vmatpush1.bf16.msra.mxu0 0
      %6683 = vmatprep.subr.bf16.mxu0 0
      %6684 = vmatpush1.bf16.msra.mxu0 0
      %6685 = vmatprep.subr.bf16.mxu0 0
      %6686 = vmatpush1.bf16.msra.mxu0 0
      %6687 = vmatprep.mubr.bf16.mxu0 0
      %6688 = vmatmul.mubr.bf16.gmra.mrb[0].mxu0 %v6650
      %v6689 = vpop.f32.mrb[0].mxu0
      %v6690 = vadd.f32 0.0, %v6689
      %v6691 = vpop.f32.mrb[0].mxu0
      %v6692 = vpop.f32.mrb[0].mxu0
      %v6693 = vpop.f32.mrb[0].mxu0
      %6694 = vdwg.mxu0
      %6695 = vrot.lane.b32.xlu0 %v1290, 112
      %v6696 = vpop.permute.xlu0 %6695
      %v6698 = vsel %vm1291, %v5974, 0
      %v6701 = vsel %vm2223, %v6696, 0
      %6703 = vmatprep.subr.bf16.mxu0 0
      %6704 = vmatpush1.bf16.msra.mxu0 %v6701
      %6705 = vmatprep.subr.bf16.mxu0 0
      %6706 = vmatpush1.bf16.msra.mxu0 0
      %6707 = vmatprep.subr.bf16.mxu0 0
      %6708 = vmatpush1.bf16.msra.mxu0 0
      %6709 = vmatprep.subr.bf16.mxu0 0
      %6710 = vmatpush1.bf16.msra.mxu0 0
      %6711 = vmatprep.subr.bf16.mxu0 0
      %6712 = vmatpush1.bf16.msra.mxu0 0
      %6713 = vmatprep.subr.bf16.mxu0 0
      %6714 = vmatpush1.bf16.msra.mxu0 0
      %6715 = vmatprep.subr.bf16.mxu0 0
      %6716 = vmatpush1.bf16.msra.mxu0 0
      %6717 = vmatprep.subr.bf16.mxu0 0
      %6718 = vmatpush1.bf16.msra.mxu0 0
      %6719 = vmatprep.subr.bf16.mxu0 0
      %6720 = vmatpush1.bf16.msra.mxu0 0
      %6721 = vmatprep.subr.bf16.mxu0 0
      %6722 = vmatpush1.bf16.msra.mxu0 0
      %6723 = vmatprep.subr.bf16.mxu0 0
      %6724 = vmatpush1.bf16.msra.mxu0 0
      %6725 = vmatprep.subr.bf16.mxu0 0
      %6726 = vmatpush1.bf16.msra.mxu0 0
      %6727 = vmatprep.subr.bf16.mxu0 0
      %6728 = vmatpush1.bf16.msra.mxu0 0
      %6729 = vmatprep.subr.bf16.mxu0 0
      %6730 = vmatpush1.bf16.msra.mxu0 0
      %6731 = vmatprep.subr.bf16.mxu0 0
      %6732 = vmatpush1.bf16.msra.mxu0 0
      %6733 = vmatprep.subr.bf16.mxu0 0
      %6734 = vmatpush1.bf16.msra.mxu0 0
      %6735 = vmatprep.mubr.bf16.mxu0 0
      %6736 = vmatmul.mubr.bf16.gmra.mrb[0].mxu0 %v6698
      %v6737 = vpop.f32.mrb[0].mxu0
      %v6738 = vadd.f32 0.0, %v6737
      %v6739 = vpop.f32.mrb[0].mxu0
      %v6740 = vpop.f32.mrb[0].mxu0
      %v6741 = vpop.f32.mrb[0].mxu0
      %6742 = vdwg.mxu0
      %v6743 = vpack.c.bf16 %v6066, %v6018
      %v6744 = vpack.c.bf16 %v6162, %v6114
      %v6745 = vpack.c.bf16 %v6258, %v6210
      %v6746 = vpack.c.bf16 %v6354, %v6306
      %v6747 = vpack.c.bf16 %v6450, %v6402
      %v6748 = vpack.c.bf16 %v6546, %v6498
      %v6749 = vpack.c.bf16 %v6642, %v6594
      %v6750 = vpack.c.bf16 %v6738, %v6690
      %v6751 = vld [vmem:[%s10 + $0x8] sm:$0xf]
      %v6753 = vsel %vm1291, %v6743, 0
      %v6756 = vsel %vm1291, %v6744, 0
      %v6759 = vsel %vm1291, %v6745, 0
      %v6762 = vsel %vm1291, %v6746, 0
      %v6765 = vsel %vm1291, %v6747, 0
      %v6768 = vsel %vm1291, %v6748, 0
      %v6771 = vsel %vm1291, %v6749, 0
      %v6774 = vsel %vm1291, %v6750, 0
      %v6777 = vsel %vm2223, %v6751, 0
      %6779 = vmatprep.subr.bf16.mxu0 0
      %6780 = vmatpush1.bf16.msra.mxu0 %v6777
      %6781 = vmatprep.subr.bf16.mxu0 0
      %6782 = vmatpush1.bf16.msra.mxu0 0
      %6783 = vmatprep.subr.bf16.mxu0 0
      %6784 = vmatpush1.bf16.msra.mxu0 0
      %6785 = vmatprep.subr.bf16.mxu0 0
      %6786 = vmatpush1.bf16.msra.mxu0 0
      %6787 = vmatprep.subr.bf16.mxu0 0
      %6788 = vmatpush1.bf16.msra.mxu0 0
      %6789 = vmatprep.subr.bf16.mxu0 0
      %6790 = vmatpush1.bf16.msra.mxu0 0
      %6791 = vmatprep.subr.bf16.mxu0 0
      %6792 = vmatpush1.bf16.msra.mxu0 0
      %6793 = vmatprep.subr.bf16.mxu0 0
      %6794 = vmatpush1.bf16.msra.mxu0 0
      %6795 = vmatprep.subr.bf16.mxu0 0
      %6796 = vmatpush1.bf16.msra.mxu0 0
      %6797 = vmatprep.subr.bf16.mxu0 0
      %6798 = vmatpush1.bf16.msra.mxu0 0
      %6799 = vmatprep.subr.bf16.mxu0 0
      %6800 = vmatpush1.bf16.msra.mxu0 0
      %6801 = vmatprep.subr.bf16.mxu0 0
      %6802 = vmatpush1.bf16.msra.mxu0 0
      %6803 = vmatprep.subr.bf16.mxu0 0
      %6804 = vmatpush1.bf16.msra.mxu0 0
      %6805 = vmatprep.subr.bf16.mxu0 0
      %6806 = vmatpush1.bf16.msra.mxu0 0
      %6807 = vmatprep.subr.bf16.mxu0 0
      %6808 = vmatpush1.bf16.msra.mxu0 0
      %6809 = vmatprep.subr.bf16.mxu0 0
      %6810 = vmatpush1.bf16.msra.mxu0 0
      %6811 = vmatprep.mubr.bf16.mxu0 0
      %6812 = vmatmul.mubr.bf16.gmra.mrb[0].mxu0 %v6753
      %v6813 = vpop.f32.mrb[0].mxu0
      %v6814 = vadd.f32 0.0, %v6813
      %v6815 = vpop.f32.mrb[0].mxu0
      %v6816 = vpop.f32.mrb[0].mxu0
      %v6817 = vadd.f32 0.0, %v6816
      %v6818 = vpop.f32.mrb[0].mxu0
      %6819 = vmatprep.mubr.bf16.mxu0 0
      %6820 = vmatmul.mubr.bf16.gmra.mrb[0].mxu0 %v6756
      %v6821 = vpop.f32.mrb[0].mxu0
      %v6822 = vadd.f32 0.0, %v6821
      %v6823 = vpop.f32.mrb[0].mxu0
      %v6824 = vpop.f32.mrb[0].mxu0
      %v6825 = vadd.f32 0.0, %v6824
      %v6826 = vpop.f32.mrb[0].mxu0
      %6827 = vmatprep.mubr.bf16.mxu0 0
      %6828 = vmatmul.mubr.bf16.gmra.mrb[0].mxu0 %v6759
      %v6829 = vpop.f32.mrb[0].mxu0
      %v6830 = vadd.f32 0.0, %v6829
      %v6831 = vpop.f32.mrb[0].mxu0
      %v6832 = vpop.f32.mrb[0].mxu0
      %v6833 = vadd.f32 0.0, %v6832
      %v6834 = vpop.f32.mrb[0].mxu0
      %6835 = vmatprep.mubr.bf16.mxu0 0
      %6836 = vmatmul.mubr.bf16.gmra.mrb[0].mxu0 %v6762
      %v6837 = vpop.f32.mrb[0].mxu0
      %v6838 = vadd.f32 0.0, %v6837
      %v6839 = vpop.f32.mrb[0].mxu0
      %v6840 = vpop.f32.mrb[0].mxu0
      %v6841 = vadd.f32 0.0, %v6840
      %v6842 = vpop.f32.mrb[0].mxu0
      %6843 = vmatprep.mubr.bf16.mxu0 0
      %6844 = vmatmul.mubr.bf16.gmra.mrb[0].mxu0 %v6765
      %v6845 = vpop.f32.mrb[0].mxu0
      %v6846 = vadd.f32 0.0, %v6845
      %v6847 = vpop.f32.mrb[0].mxu0
      %v6848 = vpop.f32.mrb[0].mxu0
      %v6849 = vadd.f32 0.0, %v6848
      %v6850 = vpop.f32.mrb[0].mxu0
      %6851 = vmatprep.mubr.bf16.mxu0 0
      %6852 = vmatmul.mubr.bf16.gmra.mrb[0].mxu0 %v6768
      %v6853 = vpop.f32.mrb[0].mxu0
      %v6854 = vadd.f32 0.0, %v6853
      %v6855 = vpop.f32.mrb[0].mxu0
      %v6856 = vpop.f32.mrb[0].mxu0
      %v6857 = vadd.f32 0.0, %v6856
      %v6858 = vpop.f32.mrb[0].mxu0
      %6859 = vmatprep.mubr.bf16.mxu0 0
      %6860 = vmatmul.mubr.bf16.gmra.mrb[0].mxu0 %v6771
      %v6861 = vpop.f32.mrb[0].mxu0
      %v6862 = vadd.f32 0.0, %v6861
      %v6863 = vpop.f32.mrb[0].mxu0
      %v6864 = vpop.f32.mrb[0].mxu0
      %v6865 = vadd.f32 0.0, %v6864
      %v6866 = vpop.f32.mrb[0].mxu0
      %6867 = vmatprep.mubr.bf16.mxu0 0
      %6868 = vmatmul.mubr.bf16.gmra.mrb[0].mxu0 %v6774
      %v6869 = vpop.f32.mrb[0].mxu0
      %v6870 = vadd.f32 0.0, %v6869
      %v6871 = vpop.f32.mrb[0].mxu0
      %v6872 = vpop.f32.mrb[0].mxu0
      %v6873 = vadd.f32 0.0, %v6872
      %v6874 = vpop.f32.mrb[0].mxu0
      %6875 = vdwg.mxu0
      %v6876 = vadd.f32 %v4921, %v6814
      %v6877 = vadd.f32 %v4924, %v6817
      %v6878 = vadd.f32 %v4929, %v6822
      %v6879 = vadd.f32 %v4932, %v6825
      %v6880 = vadd.f32 %v4937, %v6830
      %v6881 = vadd.f32 %v4940, %v6833
      %v6882 = vadd.f32 %v4945, %v6838
      %v6883 = vadd.f32 %v4948, %v6841
      %v6884 = vadd.f32 %v4953, %v6846
      %v6885 = vadd.f32 %v4956, %v6849
      %v6886 = vadd.f32 %v4961, %v6854
      %v6887 = vadd.f32 %v4964, %v6857
      %v6888 = vadd.f32 %v4969, %v6862
      %v6889 = vadd.f32 %v4972, %v6865
      %v6890 = vadd.f32 %v4977, %v6870
      %v6891 = vadd.f32 %v4980, %v6873
      %6892 = vrot.lane.b32.xlu0 %v1179, 104
      %v6893 = vpop.permute.xlu0 %6892
      %6894 = vrot.lane.b32.xlu0 %v1227, 104
      %v6895 = vpop.permute.xlu0 %6894
      %v6897 = vsel %vm1291, %v6893, 0
      %v6900 = vsel %vm1291, %v6895, 0
      %6902 = vmatprep.subr.bf16.mxu0 0
      %6903 = vmatpush1.bf16.xpose.msra.mxu0 %v6900
      %6904 = vmatprep.subr.bf16.mxu0 0
      %6905 = vmatpush1.bf16.xpose.msra.mxu0 0
      %6906 = vmatprep.subr.bf16.mxu0 0
      %6907 = vmatpush1.bf16.xpose.msra.mxu0 0
      %6908 = vmatprep.subr.bf16.mxu0 0
      %6909 = vmatpush1.bf16.xpose.msra.mxu0 0
      %6910 = vmatprep.subr.bf16.mxu0 0
      %6911 = vmatpush1.bf16.xpose.msra.mxu0 0
      %6912 = vmatprep.subr.bf16.mxu0 0
      %6913 = vmatpush1.bf16.xpose.msra.mxu0 0
      %6914 = vmatprep.subr.bf16.mxu0 0
      %6915 = vmatpush1.bf16.xpose.msra.mxu0 0
      %6916 = vmatprep.subr.bf16.mxu0 0
      %6917 = vmatpush1.bf16.xpose.msra.mxu0 0
      %6918 = vmatprep.subr.bf16.mxu0 0
      %6919 = vmatpush1.bf16.xpose.msra.mxu0 0
      %6920 = vmatprep.subr.bf16.mxu0 0
      %6921 = vmatpush1.bf16.xpose.msra.mxu0 0
      %6922 = vmatprep.subr.bf16.mxu0 0
      %6923 = vmatpush1.bf16.xpose.msra.mxu0 0
      %6924 = vmatprep.subr.bf16.mxu0 0
      %6925 = vmatpush1.bf16.xpose.msra.mxu0 0
      %6926 = vmatprep.subr.bf16.mxu0 0
      %6927 = vmatpush1.bf16.xpose.msra.mxu0 0
      %6928 = vmatprep.subr.bf16.mxu0 0
      %6929 = vmatpush1.bf16.xpose.msra.mxu0 0
      %6930 = vmatprep.subr.bf16.mxu0 0
      %6931 = vmatpush1.bf16.xpose.msra.mxu0 0
      %6932 = vmatprep.subr.bf16.mxu0 0
      %6933 = vmatpush1.bf16.xpose.msra.mxu0 0
      %6934 = vmatprep.mubr.bf16.mxu0 0
      %6935 = vmatmul.mubr.bf16.gmra.mrb[0].mxu0 %v6897
      %v6936 = vpop.f32.mrb[0].mxu0
      %v6937 = vadd.f32 %v1146, %v6936
      %v6938 = vpop.f32.mrb[0].mxu0
      %v6939 = vpop.f32.mrb[0].mxu0
      %v6940 = vpop.f32.mrb[0].mxu0
      %6941 = vdwg.mxu0
      %6942 = vrot.lane.b32.xlu0 %v1180, 104
      %v6943 = vpop.permute.xlu0 %6942
      %6944 = vrot.lane.b32.xlu0 %v1228, 104
      %v6945 = vpop.permute.xlu0 %6944
      %v6947 = vsel %vm1291, %v6943, 0
      %v6950 = vsel %vm1291, %v6945, 0
      %6952 = vmatprep.subr.bf16.mxu0 0
      %6953 = vmatpush1.bf16.xpose.msra.mxu0 %v6950
      %6954 = vmatprep.subr.bf16.mxu0 0
      %6955 = vmatpush1.bf16.xpose.msra.mxu0 0
      %6956 = vmatprep.subr.bf16.mxu0 0
      %6957 = vmatpush1.bf16.xpose.msra.mxu0 0
      %6958 = vmatprep.subr.bf16.mxu0 0
      %6959 = vmatpush1.bf16.xpose.msra.mxu0 0
      %6960 = vmatprep.subr.bf16.mxu0 0
      %6961 = vmatpush1.bf16.xpose.msra.mxu0 0
      %6962 = vmatprep.subr.bf16.mxu0 0
      %6963 = vmatpush1.bf16.xpose.msra.mxu0 0
      %6964 = vmatprep.subr.bf16.mxu0 0
      %6965 = vmatpush1.bf16.xpose.msra.mxu0 0
      %6966 = vmatprep.subr.bf16.mxu0 0
      %6967 = vmatpush1.bf16.xpose.msra.mxu0 0
      %6968 = vmatprep.subr.bf16.mxu0 0
      %6969 = vmatpush1.bf16.xpose.msra.mxu0 0
      %6970 = vmatprep.subr.bf16.mxu0 0
      %6971 = vmatpush1.bf16.xpose.msra.mxu0 0
      %6972 = vmatprep.subr.bf16.mxu0 0
      %6973 = vmatpush1.bf16.xpose.msra.mxu0 0
      %6974 = vmatprep.subr.bf16.mxu0 0
      %6975 = vmatpush1.bf16.xpose.msra.mxu0 0
      %6976 = vmatprep.subr.bf16.mxu0 0
      %6977 = vmatpush1.bf16.xpose.msra.mxu0 0
      %6978 = vmatprep.subr.bf16.mxu0 0
      %6979 = vmatpush1.bf16.xpose.msra.mxu0 0
      %6980 = vmatprep.subr.bf16.mxu0 0
      %6981 = vmatpush1.bf16.xpose.msra.mxu0 0
      %6982 = vmatprep.subr.bf16.mxu0 0
      %6983 = vmatpush1.bf16.xpose.msra.mxu0 0
      %6984 = vmatprep.mubr.bf16.mxu0 0
      %6985 = vmatmul.mubr.bf16.gmra.mrb[0].mxu0 %v6947
      %v6986 = vpop.f32.mrb[0].mxu0
      %v6987 = vadd.f32 %v1146, %v6986
      %v6988 = vpop.f32.mrb[0].mxu0
      %v6989 = vpop.f32.mrb[0].mxu0
      %v6990 = vpop.f32.mrb[0].mxu0
      %6991 = vdwg.mxu0
      %6992 = vrot.lane.b32.xlu0 %v1181, 104
      %v6993 = vpop.permute.xlu0 %6992
      %6994 = vrot.lane.b32.xlu0 %v1229, 104
      %v6995 = vpop.permute.xlu0 %6994
      %v6997 = vsel %vm1291, %v6993, 0
      %v7000 = vsel %vm1291, %v6995, 0
      %7002 = vmatprep.subr.bf16.mxu0 0
      %7003 = vmatpush1.bf16.xpose.msra.mxu0 %v7000
      %7004 = vmatprep.subr.bf16.mxu0 0
      %7005 = vmatpush1.bf16.xpose.msra.mxu0 0
      %7006 = vmatprep.subr.bf16.mxu0 0
      %7007 = vmatpush1.bf16.xpose.msra.mxu0 0
      %7008 = vmatprep.subr.bf16.mxu0 0
      %7009 = vmatpush1.bf16.xpose.msra.mxu0 0
      %7010 = vmatprep.subr.bf16.mxu0 0
      %7011 = vmatpush1.bf16.xpose.msra.mxu0 0
      %7012 = vmatprep.subr.bf16.mxu0 0
      %7013 = vmatpush1.bf16.xpose.msra.mxu0 0
      %7014 = vmatprep.subr.bf16.mxu0 0
      %7015 = vmatpush1.bf16.xpose.msra.mxu0 0
      %7016 = vmatprep.subr.bf16.mxu0 0
      %7017 = vmatpush1.bf16.xpose.msra.mxu0 0
      %7018 = vmatprep.subr.bf16.mxu0 0
      %7019 = vmatpush1.bf16.xpose.msra.mxu0 0
      %7020 = vmatprep.subr.bf16.mxu0 0
      %7021 = vmatpush1.bf16.xpose.msra.mxu0 0
      %7022 = vmatprep.subr.bf16.mxu0 0
      %7023 = vmatpush1.bf16.xpose.msra.mxu0 0
      %7024 = vmatprep.subr.bf16.mxu0 0
      %7025 = vmatpush1.bf16.xpose.msra.mxu0 0
      %7026 = vmatprep.subr.bf16.mxu0 0
      %7027 = vmatpush1.bf16.xpose.msra.mxu0 0
      %7028 = vmatprep.subr.bf16.mxu0 0
      %7029 = vmatpush1.bf16.xpose.msra.mxu0 0
      %7030 = vmatprep.subr.bf16.mxu0 0
      %7031 = vmatpush1.bf16.xpose.msra.mxu0 0
      %7032 = vmatprep.subr.bf16.mxu0 0
      %7033 = vmatpush1.bf16.xpose.msra.mxu0 0
      %7034 = vmatprep.mubr.bf16.mxu0 0
      %7035 = vmatmul.mubr.bf16.gmra.mrb[0].mxu0 %v6997
      %v7036 = vpop.f32.mrb[0].mxu0
      %v7037 = vadd.f32 %v1146, %v7036
      %v7038 = vpop.f32.mrb[0].mxu0
      %v7039 = vpop.f32.mrb[0].mxu0
      %v7040 = vpop.f32.mrb[0].mxu0
      %7041 = vdwg.mxu0
      %7042 = vrot.lane.b32.xlu0 %v1182, 104
      %v7043 = vpop.permute.xlu0 %7042
      %7044 = vrot.lane.b32.xlu0 %v1230, 104
      %v7045 = vpop.permute.xlu0 %7044
      %v7047 = vsel %vm1291, %v7043, 0
      %v7050 = vsel %vm1291, %v7045, 0
      %7052 = vmatprep.subr.bf16.mxu0 0
      %7053 = vmatpush1.bf16.xpose.msra.mxu0 %v7050
      %7054 = vmatprep.subr.bf16.mxu0 0
      %7055 = vmatpush1.bf16.xpose.msra.mxu0 0
      %7056 = vmatprep.subr.bf16.mxu0 0
      %7057 = vmatpush1.bf16.xpose.msra.mxu0 0
      %7058 = vmatprep.subr.bf16.mxu0 0
      %7059 = vmatpush1.bf16.xpose.msra.mxu0 0
      %7060 = vmatprep.subr.bf16.mxu0 0
      %7061 = vmatpush1.bf16.xpose.msra.mxu0 0
      %7062 = vmatprep.subr.bf16.mxu0 0
      %7063 = vmatpush1.bf16.xpose.msra.mxu0 0
      %7064 = vmatprep.subr.bf16.mxu0 0
      %7065 = vmatpush1.bf16.xpose.msra.mxu0 0
      %7066 = vmatprep.subr.bf16.mxu0 0
      %7067 = vmatpush1.bf16.xpose.msra.mxu0 0
      %7068 = vmatprep.subr.bf16.mxu0 0
      %7069 = vmatpush1.bf16.xpose.msra.mxu0 0
      %7070 = vmatprep.subr.bf16.mxu0 0
      %7071 = vmatpush1.bf16.xpose.msra.mxu0 0
      %7072 = vmatprep.subr.bf16.mxu0 0
      %7073 = vmatpush1.bf16.xpose.msra.mxu0 0
      %7074 = vmatprep.subr.bf16.mxu0 0
      %7075 = vmatpush1.bf16.xpose.msra.mxu0 0
      %7076 = vmatprep.subr.bf16.mxu0 0
      %7077 = vmatpush1.bf16.xpose.msra.mxu0 0
      %7078 = vmatprep.subr.bf16.mxu0 0
      %7079 = vmatpush1.bf16.xpose.msra.mxu0 0
      %7080 = vmatprep.subr.bf16.mxu0 0
      %7081 = vmatpush1.bf16.xpose.msra.mxu0 0
      %7082 = vmatprep.subr.bf16.mxu0 0
      %7083 = vmatpush1.bf16.xpose.msra.mxu0 0
      %7084 = vmatprep.mubr.bf16.mxu0 0
      %7085 = vmatmul.mubr.bf16.gmra.mrb[0].mxu0 %v7047
      %v7086 = vpop.f32.mrb[0].mxu0
      %v7087 = vadd.f32 %v1146, %v7086
      %v7088 = vpop.f32.mrb[0].mxu0
      %v7089 = vpop.f32.mrb[0].mxu0
      %v7090 = vpop.f32.mrb[0].mxu0
      %7091 = vdwg.mxu0
      %7092 = vrot.lane.b32.xlu0 %v1183, 104
      %v7093 = vpop.permute.xlu0 %7092
      %7094 = vrot.lane.b32.xlu0 %v1231, 104
      %v7095 = vpop.permute.xlu0 %7094
      %v7097 = vsel %vm1291, %v7093, 0
      %v7100 = vsel %vm1291, %v7095, 0
      %7102 = vmatprep.subr.bf16.mxu0 0
      %7103 = vmatpush1.bf16.xpose.msra.mxu0 %v7100
      %7104 = vmatprep.subr.bf16.mxu0 0
      %7105 = vmatpush1.bf16.xpose.msra.mxu0 0
      %7106 = vmatprep.subr.bf16.mxu0 0
      %7107 = vmatpush1.bf16.xpose.msra.mxu0 0
      %7108 = vmatprep.subr.bf16.mxu0 0
      %7109 = vmatpush1.bf16.xpose.msra.mxu0 0
      %7110 = vmatprep.subr.bf16.mxu0 0
      %7111 = vmatpush1.bf16.xpose.msra.mxu0 0
      %7112 = vmatprep.subr.bf16.mxu0 0
      %7113 = vmatpush1.bf16.xpose.msra.mxu0 0
      %7114 = vmatprep.subr.bf16.mxu0 0
      %7115 = vmatpush1.bf16.xpose.msra.mxu0 0
      %7116 = vmatprep.subr.bf16.mxu0 0
      %7117 = vmatpush1.bf16.xpose.msra.mxu0 0
      %7118 = vmatprep.subr.bf16.mxu0 0
      %7119 = vmatpush1.bf16.xpose.msra.mxu0 0
      %7120 = vmatprep.subr.bf16.mxu0 0
      %7121 = vmatpush1.bf16.xpose.msra.mxu0 0
      %7122 = vmatprep.subr.bf16.mxu0 0
      %7123 = vmatpush1.bf16.xpose.msra.mxu0 0
      %7124 = vmatprep.subr.bf16.mxu0 0
      %7125 = vmatpush1.bf16.xpose.msra.mxu0 0
      %7126 = vmatprep.subr.bf16.mxu0 0
      %7127 = vmatpush1.bf16.xpose.msra.mxu0 0
      %7128 = vmatprep.subr.bf16.mxu0 0
      %7129 = vmatpush1.bf16.xpose.msra.mxu0 0
      %7130 = vmatprep.subr.bf16.mxu0 0
      %7131 = vmatpush1.bf16.xpose.msra.mxu0 0
      %7132 = vmatprep.subr.bf16.mxu0 0
      %7133 = vmatpush1.bf16.xpose.msra.mxu0 0
      %7134 = vmatprep.mubr.bf16.mxu0 0
      %7135 = vmatmul.mubr.bf16.gmra.mrb[0].mxu0 %v7097
      %v7136 = vpop.f32.mrb[0].mxu0
      %v7137 = vadd.f32 %v1146, %v7136
      %v7138 = vpop.f32.mrb[0].mxu0
      %v7139 = vpop.f32.mrb[0].mxu0
      %v7140 = vpop.f32.mrb[0].mxu0
      %7141 = vdwg.mxu0
      %7142 = vrot.lane.b32.xlu0 %v1184, 104
      %v7143 = vpop.permute.xlu0 %7142
      %7144 = vrot.lane.b32.xlu0 %v1232, 104
      %v7145 = vpop.permute.xlu0 %7144
      %v7147 = vsel %vm1291, %v7143, 0
      %v7150 = vsel %vm1291, %v7145, 0
      %7152 = vmatprep.subr.bf16.mxu0 0
      %7153 = vmatpush1.bf16.xpose.msra.mxu0 %v7150
      %7154 = vmatprep.subr.bf16.mxu0 0
      %7155 = vmatpush1.bf16.xpose.msra.mxu0 0
      %7156 = vmatprep.subr.bf16.mxu0 0
      %7157 = vmatpush1.bf16.xpose.msra.mxu0 0
      %7158 = vmatprep.subr.bf16.mxu0 0
      %7159 = vmatpush1.bf16.xpose.msra.mxu0 0
      %7160 = vmatprep.subr.bf16.mxu0 0
      %7161 = vmatpush1.bf16.xpose.msra.mxu0 0
      %7162 = vmatprep.subr.bf16.mxu0 0
      %7163 = vmatpush1.bf16.xpose.msra.mxu0 0
      %7164 = vmatprep.subr.bf16.mxu0 0
      %7165 = vmatpush1.bf16.xpose.msra.mxu0 0
      %7166 = vmatprep.subr.bf16.mxu0 0
      %7167 = vmatpush1.bf16.xpose.msra.mxu0 0
      %7168 = vmatprep.subr.bf16.mxu0 0
      %7169 = vmatpush1.bf16.xpose.msra.mxu0 0
      %7170 = vmatprep.subr.bf16.mxu0 0
      %7171 = vmatpush1.bf16.xpose.msra.mxu0 0
      %7172 = vmatprep.subr.bf16.mxu0 0
      %7173 = vmatpush1.bf16.xpose.msra.mxu0 0
      %7174 = vmatprep.subr.bf16.mxu0 0
      %7175 = vmatpush1.bf16.xpose.msra.mxu0 0
      %7176 = vmatprep.subr.bf16.mxu0 0
      %7177 = vmatpush1.bf16.xpose.msra.mxu0 0
      %7178 = vmatprep.subr.bf16.mxu0 0
      %7179 = vmatpush1.bf16.xpose.msra.mxu0 0
      %7180 = vmatprep.subr.bf16.mxu0 0
      %7181 = vmatpush1.bf16.xpose.msra.mxu0 0
      %7182 = vmatprep.subr.bf16.mxu0 0
      %7183 = vmatpush1.bf16.xpose.msra.mxu0 0
      %7184 = vmatprep.mubr.bf16.mxu0 0
      %7185 = vmatmul.mubr.bf16.gmra.mrb[0].mxu0 %v7147
      %v7186 = vpop.f32.mrb[0].mxu0
      %v7187 = vadd.f32 %v1146, %v7186
      %v7188 = vpop.f32.mrb[0].mxu0
      %v7189 = vpop.f32.mrb[0].mxu0
      %v7190 = vpop.f32.mrb[0].mxu0
      %7191 = vdwg.mxu0
      %7192 = vrot.lane.b32.xlu0 %v1185, 104
      %v7193 = vpop.permute.xlu0 %7192
      %7194 = vrot.lane.b32.xlu0 %v1233, 104
      %v7195 = vpop.permute.xlu0 %7194
      %v7197 = vsel %vm1291, %v7193, 0
      %v7200 = vsel %vm1291, %v7195, 0
      %7202 = vmatprep.subr.bf16.mxu0 0
      %7203 = vmatpush1.bf16.xpose.msra.mxu0 %v7200
      %7204 = vmatprep.subr.bf16.mxu0 0
      %7205 = vmatpush1.bf16.xpose.msra.mxu0 0
      %7206 = vmatprep.subr.bf16.mxu0 0
      %7207 = vmatpush1.bf16.xpose.msra.mxu0 0
      %7208 = vmatprep.subr.bf16.mxu0 0
      %7209 = vmatpush1.bf16.xpose.msra.mxu0 0
      %7210 = vmatprep.subr.bf16.mxu0 0
      %7211 = vmatpush1.bf16.xpose.msra.mxu0 0
      %7212 = vmatprep.subr.bf16.mxu0 0
      %7213 = vmatpush1.bf16.xpose.msra.mxu0 0
      %7214 = vmatprep.subr.bf16.mxu0 0
      %7215 = vmatpush1.bf16.xpose.msra.mxu0 0
      %7216 = vmatprep.subr.bf16.mxu0 0
      %7217 = vmatpush1.bf16.xpose.msra.mxu0 0
      %7218 = vmatprep.subr.bf16.mxu0 0
      %7219 = vmatpush1.bf16.xpose.msra.mxu0 0
      %7220 = vmatprep.subr.bf16.mxu0 0
      %7221 = vmatpush1.bf16.xpose.msra.mxu0 0
      %7222 = vmatprep.subr.bf16.mxu0 0
      %7223 = vmatpush1.bf16.xpose.msra.mxu0 0
      %7224 = vmatprep.subr.bf16.mxu0 0
      %7225 = vmatpush1.bf16.xpose.msra.mxu0 0
      %7226 = vmatprep.subr.bf16.mxu0 0
      %7227 = vmatpush1.bf16.xpose.msra.mxu0 0
      %7228 = vmatprep.subr.bf16.mxu0 0
      %7229 = vmatpush1.bf16.xpose.msra.mxu0 0
      %7230 = vmatprep.subr.bf16.mxu0 0
      %7231 = vmatpush1.bf16.xpose.msra.mxu0 0
      %7232 = vmatprep.subr.bf16.mxu0 0
      %7233 = vmatpush1.bf16.xpose.msra.mxu0 0
      %7234 = vmatprep.mubr.bf16.mxu0 0
      %7235 = vmatmul.mubr.bf16.gmra.mrb[0].mxu0 %v7197
      %v7236 = vpop.f32.mrb[0].mxu0
      %v7237 = vadd.f32 %v1146, %v7236
      %v7238 = vpop.f32.mrb[0].mxu0
      %v7239 = vpop.f32.mrb[0].mxu0
      %v7240 = vpop.f32.mrb[0].mxu0
      %7241 = vdwg.mxu0
      %7242 = vrot.lane.b32.xlu0 %v1186, 104
      %v7243 = vpop.permute.xlu0 %7242
      %7244 = vrot.lane.b32.xlu0 %v1234, 104
      %v7245 = vpop.permute.xlu0 %7244
      %v7247 = vsel %vm1291, %v7243, 0
      %v7250 = vsel %vm1291, %v7245, 0
      %7252 = vmatprep.subr.bf16.mxu0 0
      %7253 = vmatpush1.bf16.xpose.msra.mxu0 %v7250
      %7254 = vmatprep.subr.bf16.mxu0 0
      %7255 = vmatpush1.bf16.xpose.msra.mxu0 0
      %7256 = vmatprep.subr.bf16.mxu0 0
      %7257 = vmatpush1.bf16.xpose.msra.mxu0 0
      %7258 = vmatprep.subr.bf16.mxu0 0
      %7259 = vmatpush1.bf16.xpose.msra.mxu0 0
      %7260 = vmatprep.subr.bf16.mxu0 0
      %7261 = vmatpush1.bf16.xpose.msra.mxu0 0
      %7262 = vmatprep.subr.bf16.mxu0 0
      %7263 = vmatpush1.bf16.xpose.msra.mxu0 0
      %7264 = vmatprep.subr.bf16.mxu0 0
      %7265 = vmatpush1.bf16.xpose.msra.mxu0 0
      %7266 = vmatprep.subr.bf16.mxu0 0
      %7267 = vmatpush1.bf16.xpose.msra.mxu0 0
      %7268 = vmatprep.subr.bf16.mxu0 0
      %7269 = vmatpush1.bf16.xpose.msra.mxu0 0
      %7270 = vmatprep.subr.bf16.mxu0 0
      %7271 = vmatpush1.bf16.xpose.msra.mxu0 0
      %7272 = vmatprep.subr.bf16.mxu0 0
      %7273 = vmatpush1.bf16.xpose.msra.mxu0 0
      %7274 = vmatprep.subr.bf16.mxu0 0
      %7275 = vmatpush1.bf16.xpose.msra.mxu0 0
      %7276 = vmatprep.subr.bf16.mxu0 0
      %7277 = vmatpush1.bf16.xpose.msra.mxu0 0
      %7278 = vmatprep.subr.bf16.mxu0 0
      %7279 = vmatpush1.bf16.xpose.msra.mxu0 0
      %7280 = vmatprep.subr.bf16.mxu0 0
      %7281 = vmatpush1.bf16.xpose.msra.mxu0 0
      %7282 = vmatprep.subr.bf16.mxu0 0
      %7283 = vmatpush1.bf16.xpose.msra.mxu0 0
      %7284 = vmatprep.mubr.bf16.mxu0 0
      %7285 = vmatmul.mubr.bf16.gmra.mrb[0].mxu0 %v7247
      %v7286 = vpop.f32.mrb[0].mxu0
      %v7287 = vadd.f32 %v1146, %v7286
      %v7288 = vpop.f32.mrb[0].mxu0
      %v7289 = vpop.f32.mrb[0].mxu0
      %v7290 = vpop.f32.mrb[0].mxu0
      %7291 = vdwg.mxu0
      %7292 = vrot.lane.b32.xlu0 %v1187, 104
      %v7293 = vpop.permute.xlu0 %7292
      %7294 = vrot.lane.b32.xlu0 %v1235, 104
      %v7295 = vpop.permute.xlu0 %7294
      %v7297 = vsel %vm1291, %v7293, 0
      %v7300 = vsel %vm1291, %v7295, 0
      %7302 = vmatprep.subr.bf16.mxu0 0
      %7303 = vmatpush1.bf16.xpose.msra.mxu0 %v7300
      %7304 = vmatprep.subr.bf16.mxu0 0
      %7305 = vmatpush1.bf16.xpose.msra.mxu0 0
      %7306 = vmatprep.subr.bf16.mxu0 0
      %7307 = vmatpush1.bf16.xpose.msra.mxu0 0
      %7308 = vmatprep.subr.bf16.mxu0 0
      %7309 = vmatpush1.bf16.xpose.msra.mxu0 0
      %7310 = vmatprep.subr.bf16.mxu0 0
      %7311 = vmatpush1.bf16.xpose.msra.mxu0 0
      %7312 = vmatprep.subr.bf16.mxu0 0
      %7313 = vmatpush1.bf16.xpose.msra.mxu0 0
      %7314 = vmatprep.subr.bf16.mxu0 0
      %7315 = vmatpush1.bf16.xpose.msra.mxu0 0
      %7316 = vmatprep.subr.bf16.mxu0 0
      %7317 = vmatpush1.bf16.xpose.msra.mxu0 0
      %7318 = vmatprep.subr.bf16.mxu0 0
      %7319 = vmatpush1.bf16.xpose.msra.mxu0 0
      %7320 = vmatprep.subr.bf16.mxu0 0
      %7321 = vmatpush1.bf16.xpose.msra.mxu0 0
      %7322 = vmatprep.subr.bf16.mxu0 0
      %7323 = vmatpush1.bf16.xpose.msra.mxu0 0
      %7324 = vmatprep.subr.bf16.mxu0 0
      %7325 = vmatpush1.bf16.xpose.msra.mxu0 0
      %7326 = vmatprep.subr.bf16.mxu0 0
      %7327 = vmatpush1.bf16.xpose.msra.mxu0 0
      %7328 = vmatprep.subr.bf16.mxu0 0
      %7329 = vmatpush1.bf16.xpose.msra.mxu0 0
      %7330 = vmatprep.subr.bf16.mxu0 0
      %7331 = vmatpush1.bf16.xpose.msra.mxu0 0
      %7332 = vmatprep.subr.bf16.mxu0 0
      %7333 = vmatpush1.bf16.xpose.msra.mxu0 0
      %7334 = vmatprep.mubr.bf16.mxu0 0
      %7335 = vmatmul.mubr.bf16.gmra.mrb[0].mxu0 %v7297
      %v7336 = vpop.f32.mrb[0].mxu0
      %v7337 = vadd.f32 %v1146, %v7336
      %v7338 = vpop.f32.mrb[0].mxu0
      %v7339 = vpop.f32.mrb[0].mxu0
      %v7340 = vpop.f32.mrb[0].mxu0
      %7341 = vdwg.mxu0
      %7342 = vrot.lane.b32.xlu0 %v1188, 104
      %v7343 = vpop.permute.xlu0 %7342
      %7344 = vrot.lane.b32.xlu0 %v1236, 104
      %v7345 = vpop.permute.xlu0 %7344
      %v7347 = vsel %vm1291, %v7343, 0
      %v7350 = vsel %vm1291, %v7345, 0
      %7352 = vmatprep.subr.bf16.mxu0 0
      %7353 = vmatpush1.bf16.xpose.msra.mxu0 %v7350
      %7354 = vmatprep.subr.bf16.mxu0 0
      %7355 = vmatpush1.bf16.xpose.msra.mxu0 0
      %7356 = vmatprep.subr.bf16.mxu0 0
      %7357 = vmatpush1.bf16.xpose.msra.mxu0 0
      %7358 = vmatprep.subr.bf16.mxu0 0
      %7359 = vmatpush1.bf16.xpose.msra.mxu0 0
      %7360 = vmatprep.subr.bf16.mxu0 0
      %7361 = vmatpush1.bf16.xpose.msra.mxu0 0
      %7362 = vmatprep.subr.bf16.mxu0 0
      %7363 = vmatpush1.bf16.xpose.msra.mxu0 0
      %7364 = vmatprep.subr.bf16.mxu0 0
      %7365 = vmatpush1.bf16.xpose.msra.mxu0 0
      %7366 = vmatprep.subr.bf16.mxu0 0
      %7367 = vmatpush1.bf16.xpose.msra.mxu0 0
      %7368 = vmatprep.subr.bf16.mxu0 0
      %7369 = vmatpush1.bf16.xpose.msra.mxu0 0
      %7370 = vmatprep.subr.bf16.mxu0 0
      %7371 = vmatpush1.bf16.xpose.msra.mxu0 0
      %7372 = vmatprep.subr.bf16.mxu0 0
      %7373 = vmatpush1.bf16.xpose.msra.mxu0 0
      %7374 = vmatprep.subr.bf16.mxu0 0
      %7375 = vmatpush1.bf16.xpose.msra.mxu0 0
      %7376 = vmatprep.subr.bf16.mxu0 0
      %7377 = vmatpush1.bf16.xpose.msra.mxu0 0
      %7378 = vmatprep.subr.bf16.mxu0 0
      %7379 = vmatpush1.bf16.xpose.msra.mxu0 0
      %7380 = vmatprep.subr.bf16.mxu0 0
      %7381 = vmatpush1.bf16.xpose.msra.mxu0 0
      %7382 = vmatprep.subr.bf16.mxu0 0
      %7383 = vmatpush1.bf16.xpose.msra.mxu0 0
      %7384 = vmatprep.mubr.bf16.mxu0 0
      %7385 = vmatmul.mubr.bf16.gmra.mrb[0].mxu0 %v7347
      %v7386 = vpop.f32.mrb[0].mxu0
      %v7387 = vadd.f32 %v1146, %v7386
      %v7388 = vpop.f32.mrb[0].mxu0
      %v7389 = vpop.f32.mrb[0].mxu0
      %v7390 = vpop.f32.mrb[0].mxu0
      %7391 = vdwg.mxu0
      %7392 = vrot.lane.b32.xlu0 %v1189, 104
      %v7393 = vpop.permute.xlu0 %7392
      %7394 = vrot.lane.b32.xlu0 %v1237, 104
      %v7395 = vpop.permute.xlu0 %7394
      %v7397 = vsel %vm1291, %v7393, 0
      %v7400 = vsel %vm1291, %v7395, 0
      %7402 = vmatprep.subr.bf16.mxu0 0
      %7403 = vmatpush1.bf16.xpose.msra.mxu0 %v7400
      %7404 = vmatprep.subr.bf16.mxu0 0
      %7405 = vmatpush1.bf16.xpose.msra.mxu0 0
      %7406 = vmatprep.subr.bf16.mxu0 0
      %7407 = vmatpush1.bf16.xpose.msra.mxu0 0
      %7408 = vmatprep.subr.bf16.mxu0 0
      %7409 = vmatpush1.bf16.xpose.msra.mxu0 0
      %7410 = vmatprep.subr.bf16.mxu0 0
      %7411 = vmatpush1.bf16.xpose.msra.mxu0 0
      %7412 = vmatprep.subr.bf16.mxu0 0
      %7413 = vmatpush1.bf16.xpose.msra.mxu0 0
      %7414 = vmatprep.subr.bf16.mxu0 0
      %7415 = vmatpush1.bf16.xpose.msra.mxu0 0
      %7416 = vmatprep.subr.bf16.mxu0 0
      %7417 = vmatpush1.bf16.xpose.msra.mxu0 0
      %7418 = vmatprep.subr.bf16.mxu0 0
      %7419 = vmatpush1.bf16.xpose.msra.mxu0 0
      %7420 = vmatprep.subr.bf16.mxu0 0
      %7421 = vmatpush1.bf16.xpose.msra.mxu0 0
      %7422 = vmatprep.subr.bf16.mxu0 0
      %7423 = vmatpush1.bf16.xpose.msra.mxu0 0
      %7424 = vmatprep.subr.bf16.mxu0 0
      %7425 = vmatpush1.bf16.xpose.msra.mxu0 0
      %7426 = vmatprep.subr.bf16.mxu0 0
      %7427 = vmatpush1.bf16.xpose.msra.mxu0 0
      %7428 = vmatprep.subr.bf16.mxu0 0
      %7429 = vmatpush1.bf16.xpose.msra.mxu0 0
      %7430 = vmatprep.subr.bf16.mxu0 0
      %7431 = vmatpush1.bf16.xpose.msra.mxu0 0
      %7432 = vmatprep.subr.bf16.mxu0 0
      %7433 = vmatpush1.bf16.xpose.msra.mxu0 0
      %7434 = vmatprep.mubr.bf16.mxu0 0
      %7435 = vmatmul.mubr.bf16.gmra.mrb[0].mxu0 %v7397
      %v7436 = vpop.f32.mrb[0].mxu0
      %v7437 = vadd.f32 %v1146, %v7436
      %v7438 = vpop.f32.mrb[0].mxu0
      %v7439 = vpop.f32.mrb[0].mxu0
      %v7440 = vpop.f32.mrb[0].mxu0
      %7441 = vdwg.mxu0
      %7442 = vrot.lane.b32.xlu0 %v1190, 104
      %v7443 = vpop.permute.xlu0 %7442
      %7444 = vrot.lane.b32.xlu0 %v1238, 104
      %v7445 = vpop.permute.xlu0 %7444
      %v7447 = vsel %vm1291, %v7443, 0
      %v7450 = vsel %vm1291, %v7445, 0
      %7452 = vmatprep.subr.bf16.mxu0 0
      %7453 = vmatpush1.bf16.xpose.msra.mxu0 %v7450
      %7454 = vmatprep.subr.bf16.mxu0 0
      %7455 = vmatpush1.bf16.xpose.msra.mxu0 0
      %7456 = vmatprep.subr.bf16.mxu0 0
      %7457 = vmatpush1.bf16.xpose.msra.mxu0 0
      %7458 = vmatprep.subr.bf16.mxu0 0
      %7459 = vmatpush1.bf16.xpose.msra.mxu0 0
      %7460 = vmatprep.subr.bf16.mxu0 0
      %7461 = vmatpush1.bf16.xpose.msra.mxu0 0
      %7462 = vmatprep.subr.bf16.mxu0 0
      %7463 = vmatpush1.bf16.xpose.msra.mxu0 0
      %7464 = vmatprep.subr.bf16.mxu0 0
      %7465 = vmatpush1.bf16.xpose.msra.mxu0 0
      %7466 = vmatprep.subr.bf16.mxu0 0
      %7467 = vmatpush1.bf16.xpose.msra.mxu0 0
      %7468 = vmatprep.subr.bf16.mxu0 0
      %7469 = vmatpush1.bf16.xpose.msra.mxu0 0
      %7470 = vmatprep.subr.bf16.mxu0 0
      %7471 = vmatpush1.bf16.xpose.msra.mxu0 0
      %7472 = vmatprep.subr.bf16.mxu0 0
      %7473 = vmatpush1.bf16.xpose.msra.mxu0 0
      %7474 = vmatprep.subr.bf16.mxu0 0
      %7475 = vmatpush1.bf16.xpose.msra.mxu0 0
      %7476 = vmatprep.subr.bf16.mxu0 0
      %7477 = vmatpush1.bf16.xpose.msra.mxu0 0
      %7478 = vmatprep.subr.bf16.mxu0 0
      %7479 = vmatpush1.bf16.xpose.msra.mxu0 0
      %7480 = vmatprep.subr.bf16.mxu0 0
      %7481 = vmatpush1.bf16.xpose.msra.mxu0 0
      %7482 = vmatprep.subr.bf16.mxu0 0
      %7483 = vmatpush1.bf16.xpose.msra.mxu0 0
      %7484 = vmatprep.mubr.bf16.mxu0 0
      %7485 = vmatmul.mubr.bf16.gmra.mrb[0].mxu0 %v7447
      %v7486 = vpop.f32.mrb[0].mxu0
      %v7487 = vadd.f32 %v1146, %v7486
      %v7488 = vpop.f32.mrb[0].mxu0
      %v7489 = vpop.f32.mrb[0].mxu0
      %v7490 = vpop.f32.mrb[0].mxu0
      %7491 = vdwg.mxu0
      %7492 = vrot.lane.b32.xlu0 %v1191, 104
      %v7493 = vpop.permute.xlu0 %7492
      %7494 = vrot.lane.b32.xlu0 %v1239, 104
      %v7495 = vpop.permute.xlu0 %7494
      %v7497 = vsel %vm1291, %v7493, 0
      %v7500 = vsel %vm1291, %v7495, 0
      %7502 = vmatprep.subr.bf16.mxu0 0
      %7503 = vmatpush1.bf16.xpose.msra.mxu0 %v7500
      %7504 = vmatprep.subr.bf16.mxu0 0
      %7505 = vmatpush1.bf16.xpose.msra.mxu0 0
      %7506 = vmatprep.subr.bf16.mxu0 0
      %7507 = vmatpush1.bf16.xpose.msra.mxu0 0
      %7508 = vmatprep.subr.bf16.mxu0 0
      %7509 = vmatpush1.bf16.xpose.msra.mxu0 0
      %7510 = vmatprep.subr.bf16.mxu0 0
      %7511 = vmatpush1.bf16.xpose.msra.mxu0 0
      %7512 = vmatprep.subr.bf16.mxu0 0
      %7513 = vmatpush1.bf16.xpose.msra.mxu0 0
      %7514 = vmatprep.subr.bf16.mxu0 0
      %7515 = vmatpush1.bf16.xpose.msra.mxu0 0
      %7516 = vmatprep.subr.bf16.mxu0 0
      %7517 = vmatpush1.bf16.xpose.msra.mxu0 0
      %7518 = vmatprep.subr.bf16.mxu0 0
      %7519 = vmatpush1.bf16.xpose.msra.mxu0 0
      %7520 = vmatprep.subr.bf16.mxu0 0
      %7521 = vmatpush1.bf16.xpose.msra.mxu0 0
      %7522 = vmatprep.subr.bf16.mxu0 0
      %7523 = vmatpush1.bf16.xpose.msra.mxu0 0
      %7524 = vmatprep.subr.bf16.mxu0 0
      %7525 = vmatpush1.bf16.xpose.msra.mxu0 0
      %7526 = vmatprep.subr.bf16.mxu0 0
      %7527 = vmatpush1.bf16.xpose.msra.mxu0 0
      %7528 = vmatprep.subr.bf16.mxu0 0
      %7529 = vmatpush1.bf16.xpose.msra.mxu0 0
      %7530 = vmatprep.subr.bf16.mxu0 0
      %7531 = vmatpush1.bf16.xpose.msra.mxu0 0
      %7532 = vmatprep.subr.bf16.mxu0 0
      %7533 = vmatpush1.bf16.xpose.msra.mxu0 0
      %7534 = vmatprep.mubr.bf16.mxu0 0
      %7535 = vmatmul.mubr.bf16.gmra.mrb[0].mxu0 %v7497
      %v7536 = vpop.f32.mrb[0].mxu0
      %v7537 = vadd.f32 %v1146, %v7536
      %v7538 = vpop.f32.mrb[0].mxu0
      %v7539 = vpop.f32.mrb[0].mxu0
      %v7540 = vpop.f32.mrb[0].mxu0
      %7541 = vdwg.mxu0
      %7542 = vrot.lane.b32.xlu0 %v1192, 104
      %v7543 = vpop.permute.xlu0 %7542
      %7544 = vrot.lane.b32.xlu0 %v1240, 104
      %v7545 = vpop.permute.xlu0 %7544
      %v7547 = vsel %vm1291, %v7543, 0
      %v7550 = vsel %vm1291, %v7545, 0
      %7552 = vmatprep.subr.bf16.mxu0 0
      %7553 = vmatpush1.bf16.xpose.msra.mxu0 %v7550
      %7554 = vmatprep.subr.bf16.mxu0 0
      %7555 = vmatpush1.bf16.xpose.msra.mxu0 0
      %7556 = vmatprep.subr.bf16.mxu0 0
      %7557 = vmatpush1.bf16.xpose.msra.mxu0 0
      %7558 = vmatprep.subr.bf16.mxu0 0
      %7559 = vmatpush1.bf16.xpose.msra.mxu0 0
      %7560 = vmatprep.subr.bf16.mxu0 0
      %7561 = vmatpush1.bf16.xpose.msra.mxu0 0
      %7562 = vmatprep.subr.bf16.mxu0 0
      %7563 = vmatpush1.bf16.xpose.msra.mxu0 0
      %7564 = vmatprep.subr.bf16.mxu0 0
      %7565 = vmatpush1.bf16.xpose.msra.mxu0 0
      %7566 = vmatprep.subr.bf16.mxu0 0
      %7567 = vmatpush1.bf16.xpose.msra.mxu0 0
      %7568 = vmatprep.subr.bf16.mxu0 0
      %7569 = vmatpush1.bf16.xpose.msra.mxu0 0
      %7570 = vmatprep.subr.bf16.mxu0 0
      %7571 = vmatpush1.bf16.xpose.msra.mxu0 0
      %7572 = vmatprep.subr.bf16.mxu0 0
      %7573 = vmatpush1.bf16.xpose.msra.mxu0 0
      %7574 = vmatprep.subr.bf16.mxu0 0
      %7575 = vmatpush1.bf16.xpose.msra.mxu0 0
      %7576 = vmatprep.subr.bf16.mxu0 0
      %7577 = vmatpush1.bf16.xpose.msra.mxu0 0
      %7578 = vmatprep.subr.bf16.mxu0 0
      %7579 = vmatpush1.bf16.xpose.msra.mxu0 0
      %7580 = vmatprep.subr.bf16.mxu0 0
      %7581 = vmatpush1.bf16.xpose.msra.mxu0 0
      %7582 = vmatprep.subr.bf16.mxu0 0
      %7583 = vmatpush1.bf16.xpose.msra.mxu0 0
      %7584 = vmatprep.mubr.bf16.mxu0 0
      %7585 = vmatmul.mubr.bf16.gmra.mrb[0].mxu0 %v7547
      %v7586 = vpop.f32.mrb[0].mxu0
      %v7587 = vadd.f32 %v1146, %v7586
      %v7588 = vpop.f32.mrb[0].mxu0
      %v7589 = vpop.f32.mrb[0].mxu0
      %v7590 = vpop.f32.mrb[0].mxu0
      %7591 = vdwg.mxu0
      %7592 = vrot.lane.b32.xlu0 %v1193, 104
      %v7593 = vpop.permute.xlu0 %7592
      %7594 = vrot.lane.b32.xlu0 %v1241, 104
      %v7595 = vpop.permute.xlu0 %7594
      %v7597 = vsel %vm1291, %v7593, 0
      %v7600 = vsel %vm1291, %v7595, 0
      %7602 = vmatprep.subr.bf16.mxu0 0
      %7603 = vmatpush1.bf16.xpose.msra.mxu0 %v7600
      %7604 = vmatprep.subr.bf16.mxu0 0
      %7605 = vmatpush1.bf16.xpose.msra.mxu0 0
      %7606 = vmatprep.subr.bf16.mxu0 0
      %7607 = vmatpush1.bf16.xpose.msra.mxu0 0
      %7608 = vmatprep.subr.bf16.mxu0 0
      %7609 = vmatpush1.bf16.xpose.msra.mxu0 0
      %7610 = vmatprep.subr.bf16.mxu0 0
      %7611 = vmatpush1.bf16.xpose.msra.mxu0 0
      %7612 = vmatprep.subr.bf16.mxu0 0
      %7613 = vmatpush1.bf16.xpose.msra.mxu0 0
      %7614 = vmatprep.subr.bf16.mxu0 0
      %7615 = vmatpush1.bf16.xpose.msra.mxu0 0
      %7616 = vmatprep.subr.bf16.mxu0 0
      %7617 = vmatpush1.bf16.xpose.msra.mxu0 0
      %7618 = vmatprep.subr.bf16.mxu0 0
      %7619 = vmatpush1.bf16.xpose.msra.mxu0 0
      %7620 = vmatprep.subr.bf16.mxu0 0
      %7621 = vmatpush1.bf16.xpose.msra.mxu0 0
      %7622 = vmatprep.subr.bf16.mxu0 0
      %7623 = vmatpush1.bf16.xpose.msra.mxu0 0
      %7624 = vmatprep.subr.bf16.mxu0 0
      %7625 = vmatpush1.bf16.xpose.msra.mxu0 0
      %7626 = vmatprep.subr.bf16.mxu0 0
      %7627 = vmatpush1.bf16.xpose.msra.mxu0 0
      %7628 = vmatprep.subr.bf16.mxu0 0
      %7629 = vmatpush1.bf16.xpose.msra.mxu0 0
      %7630 = vmatprep.subr.bf16.mxu0 0
      %7631 = vmatpush1.bf16.xpose.msra.mxu0 0
      %7632 = vmatprep.subr.bf16.mxu0 0
      %7633 = vmatpush1.bf16.xpose.msra.mxu0 0
      %7634 = vmatprep.mubr.bf16.mxu0 0
      %7635 = vmatmul.mubr.bf16.gmra.mrb[0].mxu0 %v7597
      %v7636 = vpop.f32.mrb[0].mxu0
      %v7637 = vadd.f32 %v1146, %v7636
      %v7638 = vpop.f32.mrb[0].mxu0
      %v7639 = vpop.f32.mrb[0].mxu0
      %v7640 = vpop.f32.mrb[0].mxu0
      %7641 = vdwg.mxu0
      %7642 = vrot.lane.b32.xlu0 %v1194, 104
      %v7643 = vpop.permute.xlu0 %7642
      %7644 = vrot.lane.b32.xlu0 %v1242, 104
      %v7645 = vpop.permute.xlu0 %7644
      %v7647 = vsel %vm1291, %v7643, 0
      %v7650 = vsel %vm1291, %v7645, 0
      %7652 = vmatprep.subr.bf16.mxu0 0
      %7653 = vmatpush1.bf16.xpose.msra.mxu0 %v7650
      %7654 = vmatprep.subr.bf16.mxu0 0
      %7655 = vmatpush1.bf16.xpose.msra.mxu0 0
      %7656 = vmatprep.subr.bf16.mxu0 0
      %7657 = vmatpush1.bf16.xpose.msra.mxu0 0
      %7658 = vmatprep.subr.bf16.mxu0 0
      %7659 = vmatpush1.bf16.xpose.msra.mxu0 0
      %7660 = vmatprep.subr.bf16.mxu0 0
      %7661 = vmatpush1.bf16.xpose.msra.mxu0 0
      %7662 = vmatprep.subr.bf16.mxu0 0
      %7663 = vmatpush1.bf16.xpose.msra.mxu0 0
      %7664 = vmatprep.subr.bf16.mxu0 0
      %7665 = vmatpush1.bf16.xpose.msra.mxu0 0
      %7666 = vmatprep.subr.bf16.mxu0 0
      %7667 = vmatpush1.bf16.xpose.msra.mxu0 0
      %7668 = vmatprep.subr.bf16.mxu0 0
      %7669 = vmatpush1.bf16.xpose.msra.mxu0 0
      %7670 = vmatprep.subr.bf16.mxu0 0
      %7671 = vmatpush1.bf16.xpose.msra.mxu0 0
      %7672 = vmatprep.subr.bf16.mxu0 0
      %7673 = vmatpush1.bf16.xpose.msra.mxu0 0
      %7674 = vmatprep.subr.bf16.mxu0 0
      %7675 = vmatpush1.bf16.xpose.msra.mxu0 0
      %7676 = vmatprep.subr.bf16.mxu0 0
      %7677 = vmatpush1.bf16.xpose.msra.mxu0 0
      %7678 = vmatprep.subr.bf16.mxu0 0
      %7679 = vmatpush1.bf16.xpose.msra.mxu0 0
      %7680 = vmatprep.subr.bf16.mxu0 0
      %7681 = vmatpush1.bf16.xpose.msra.mxu0 0
      %7682 = vmatprep.subr.bf16.mxu0 0
      %7683 = vmatpush1.bf16.xpose.msra.mxu0 0
      %7684 = vmatprep.mubr.bf16.mxu0 0
      %7685 = vmatmul.mubr.bf16.gmra.mrb[0].mxu0 %v7647
      %v7686 = vpop.f32.mrb[0].mxu0
      %v7687 = vadd.f32 %v1146, %v7686
      %v7688 = vpop.f32.mrb[0].mxu0
      %v7689 = vpop.f32.mrb[0].mxu0
      %v7690 = vpop.f32.mrb[0].mxu0
      %7691 = vdwg.mxu0
      %v7692 = vsel %vm1291, %v6937, -inf
      %7693 = vmax.xlane.f32.xlu0 %v7692
      %v7694 = vpop.xlane.xlu0 %7693
      %v7695 = vsel %vm1291, %v6987, -inf
      %7696 = vmax.xlane.f32.xlu0 %v7695
      %v7697 = vpop.xlane.xlu0 %7696
      %v7698 = vsel %vm1291, %v7037, -inf
      %7699 = vmax.xlane.f32.xlu0 %v7698
      %v7700 = vpop.xlane.xlu0 %7699
      %v7701 = vsel %vm1291, %v7087, -inf
      %7702 = vmax.xlane.f32.xlu0 %v7701
      %v7703 = vpop.xlane.xlu0 %7702
      %v7704 = vsel %vm1291, %v7137, -inf
      %7705 = vmax.xlane.f32.xlu0 %v7704
      %v7706 = vpop.xlane.xlu0 %7705
      %v7707 = vsel %vm1291, %v7187, -inf
      %7708 = vmax.xlane.f32.xlu0 %v7707
      %v7709 = vpop.xlane.xlu0 %7708
      %v7710 = vsel %vm1291, %v7237, -inf
      %7711 = vmax.xlane.f32.xlu0 %v7710
      %v7712 = vpop.xlane.xlu0 %7711
      %v7713 = vsel %vm1291, %v7287, -inf
      %7714 = vmax.xlane.f32.xlu0 %v7713
      %v7715 = vpop.xlane.xlu0 %7714
      %v7716 = vsel %vm1291, %v7337, -inf
      %7717 = vmax.xlane.f32.xlu0 %v7716
      %v7718 = vpop.xlane.xlu0 %7717
      %v7719 = vsel %vm1291, %v7387, -inf
      %7720 = vmax.xlane.f32.xlu0 %v7719
      %v7721 = vpop.xlane.xlu0 %7720
      %v7722 = vsel %vm1291, %v7437, -inf
      %7723 = vmax.xlane.f32.xlu0 %v7722
      %v7724 = vpop.xlane.xlu0 %7723
      %v7725 = vsel %vm1291, %v7487, -inf
      %7726 = vmax.xlane.f32.xlu0 %v7725
      %v7727 = vpop.xlane.xlu0 %7726
      %v7728 = vsel %vm1291, %v7537, -inf
      %7729 = vmax.xlane.f32.xlu0 %v7728
      %v7730 = vpop.xlane.xlu0 %7729
      %v7731 = vsel %vm1291, %v7587, -inf
      %7732 = vmax.xlane.f32.xlu0 %v7731
      %v7733 = vpop.xlane.xlu0 %7732
      %v7734 = vsel %vm1291, %v7637, -inf
      %7735 = vmax.xlane.f32.xlu0 %v7734
      %v7736 = vpop.xlane.xlu0 %7735
      %v7737 = vsel %vm1291, %v7687, -inf
      %7738 = vmax.xlane.f32.xlu0 %v7737
      %v7739 = vpop.xlane.xlu0 %7738
      %v7740 = vsub.f32 %v6937, %v7694
      %v7741 = vsub.f32 %v6987, %v7697
      %v7742 = vsub.f32 %v7037, %v7700
      %v7743 = vsub.f32 %v7087, %v7703
      %v7744 = vsub.f32 %v7137, %v7706
      %v7745 = vsub.f32 %v7187, %v7709
      %v7746 = vsub.f32 %v7237, %v7712
      %v7747 = vsub.f32 %v7287, %v7715
      %v7748 = vsub.f32 %v7337, %v7718
      %v7749 = vsub.f32 %v7387, %v7721
      %v7750 = vsub.f32 %v7437, %v7724
      %v7751 = vsub.f32 %v7487, %v7727
      %v7752 = vsub.f32 %v7537, %v7730
      %v7753 = vsub.f32 %v7587, %v7733
      %v7754 = vsub.f32 %v7637, %v7736
      %v7755 = vsub.f32 %v7687, %v7739
      %v7756 = vmul.f32 %v7740, 1.442695
      %v7757 = vpow.pop %v7756
      %v7758 = vmul.f32 %v7741, 1.442695
      %v7759 = vpow.pop %v7758
      %v7760 = vmul.f32 %v7742, 1.442695
      %v7761 = vpow.pop %v7760
      %v7762 = vmul.f32 %v7743, 1.442695
      %v7763 = vpow.pop %v7762
      %v7764 = vmul.f32 %v7744, 1.442695
      %v7765 = vpow.pop %v7764
      %v7766 = vmul.f32 %v7745, 1.442695
      %v7767 = vpow.pop %v7766
      %v7768 = vmul.f32 %v7746, 1.442695
      %v7769 = vpow.pop %v7768
      %v7770 = vmul.f32 %v7747, 1.442695
      %v7771 = vpow.pop %v7770
      %v7772 = vmul.f32 %v7748, 1.442695
      %v7773 = vpow.pop %v7772
      %v7774 = vmul.f32 %v7749, 1.442695
      %v7775 = vpow.pop %v7774
      %v7776 = vmul.f32 %v7750, 1.442695
      %v7777 = vpow.pop %v7776
      %v7778 = vmul.f32 %v7751, 1.442695
      %v7779 = vpow.pop %v7778
      %v7780 = vmul.f32 %v7752, 1.442695
      %v7781 = vpow.pop %v7780
      %v7782 = vmul.f32 %v7753, 1.442695
      %v7783 = vpow.pop %v7782
      %v7784 = vmul.f32 %v7754, 1.442695
      %v7785 = vpow.pop %v7784
      %v7786 = vmul.f32 %v7755, 1.442695
      %v7787 = vpow.pop %v7786
      %v7788 = vsel %vm1291, %v7757, 0.0
      %7789 = vadd.xlane.f32.xlu0 %v7788
      %v7790 = vpop.xlane.xlu0 %7789
      %v7791 = vsel %vm1291, %v7759, 0.0
      %7792 = vadd.xlane.f32.xlu0 %v7791
      %v7793 = vpop.xlane.xlu0 %7792
      %v7794 = vsel %vm1291, %v7761, 0.0
      %7795 = vadd.xlane.f32.xlu0 %v7794
      %v7796 = vpop.xlane.xlu0 %7795
      %v7797 = vsel %vm1291, %v7763, 0.0
      %7798 = vadd.xlane.f32.xlu0 %v7797
      %v7799 = vpop.xlane.xlu0 %7798
      %v7800 = vsel %vm1291, %v7765, 0.0
      %7801 = vadd.xlane.f32.xlu0 %v7800
      %v7802 = vpop.xlane.xlu0 %7801
      %v7803 = vsel %vm1291, %v7767, 0.0
      %7804 = vadd.xlane.f32.xlu0 %v7803
      %v7805 = vpop.xlane.xlu0 %7804
      %v7806 = vsel %vm1291, %v7769, 0.0
      %7807 = vadd.xlane.f32.xlu0 %v7806
      %v7808 = vpop.xlane.xlu0 %7807
      %v7809 = vsel %vm1291, %v7771, 0.0
      %7810 = vadd.xlane.f32.xlu0 %v7809
      %v7811 = vpop.xlane.xlu0 %7810
      %v7812 = vsel %vm1291, %v7773, 0.0
      %7813 = vadd.xlane.f32.xlu0 %v7812
      %v7814 = vpop.xlane.xlu0 %7813
      %v7815 = vsel %vm1291, %v7775, 0.0
      %7816 = vadd.xlane.f32.xlu0 %v7815
      %v7817 = vpop.xlane.xlu0 %7816
      %v7818 = vsel %vm1291, %v7777, 0.0
      %7819 = vadd.xlane.f32.xlu0 %v7818
      %v7820 = vpop.xlane.xlu0 %7819
      %v7821 = vsel %vm1291, %v7779, 0.0
      %7822 = vadd.xlane.f32.xlu0 %v7821
      %v7823 = vpop.xlane.xlu0 %7822
      %v7824 = vsel %vm1291, %v7781, 0.0
      %7825 = vadd.xlane.f32.xlu0 %v7824
      %v7826 = vpop.xlane.xlu0 %7825
      %v7827 = vsel %vm1291, %v7783, 0.0
      %7828 = vadd.xlane.f32.xlu0 %v7827
      %v7829 = vpop.xlane.xlu0 %7828
      %v7830 = vsel %vm1291, %v7785, 0.0
      %7831 = vadd.xlane.f32.xlu0 %v7830
      %v7832 = vpop.xlane.xlu0 %7831
      %v7833 = vsel %vm1291, %v7787, 0.0
      %7834 = vadd.xlane.f32.xlu0 %v7833
      %v7835 = vpop.xlane.xlu0 %7834
      %v7836 = vrcp.pop %v7790
      %v7837 = vrcp.pop %v7793
      %v7838 = vrcp.pop %v7796
      %v7839 = vrcp.pop %v7799
      %v7840 = vrcp.pop %v7802
      %v7841 = vrcp.pop %v7805
      %v7842 = vrcp.pop %v7808
      %v7843 = vrcp.pop %v7811
      %v7844 = vrcp.pop %v7814
      %v7845 = vrcp.pop %v7817
      %v7846 = vrcp.pop %v7820
      %v7847 = vrcp.pop %v7823
      %v7848 = vrcp.pop %v7826
      %v7849 = vrcp.pop %v7829
      %v7850 = vrcp.pop %v7832
      %v7851 = vrcp.pop %v7835
      %v7852 = vmul.f32 %v7757, %v7836
      %v7853 = vmul.f32 %v7759, %v7837
      %v7854 = vmul.f32 %v7761, %v7838
      %v7855 = vmul.f32 %v7763, %v7839
      %v7856 = vmul.f32 %v7765, %v7840
      %v7857 = vmul.f32 %v7767, %v7841
      %v7858 = vmul.f32 %v7769, %v7842
      %v7859 = vmul.f32 %v7771, %v7843
      %v7860 = vmul.f32 %v7773, %v7844
      %v7861 = vmul.f32 %v7775, %v7845
      %v7862 = vmul.f32 %v7777, %v7846
      %v7863 = vmul.f32 %v7779, %v7847
      %v7864 = vmul.f32 %v7781, %v7848
      %v7865 = vmul.f32 %v7783, %v7849
      %v7866 = vmul.f32 %v7785, %v7850
      %v7867 = vmul.f32 %v7787, %v7851
      %v7868 = vpack.c.bf16 %v7852, %v7852
      %v7869 = vpack.c.bf16 %v7853, %v7853
      %v7870 = vpack.c.bf16 %v7854, %v7854
      %v7871 = vpack.c.bf16 %v7855, %v7855
      %v7872 = vpack.c.bf16 %v7856, %v7856
      %v7873 = vpack.c.bf16 %v7857, %v7857
      %v7874 = vpack.c.bf16 %v7858, %v7858
      %v7875 = vpack.c.bf16 %v7859, %v7859
      %v7876 = vpack.c.bf16 %v7860, %v7860
      %v7877 = vpack.c.bf16 %v7861, %v7861
      %v7878 = vpack.c.bf16 %v7862, %v7862
      %v7879 = vpack.c.bf16 %v7863, %v7863
      %v7880 = vpack.c.bf16 %v7864, %v7864
      %v7881 = vpack.c.bf16 %v7865, %v7865
      %v7882 = vpack.c.bf16 %v7866, %v7866
      %v7883 = vpack.c.bf16 %v7867, %v7867
      %7884 = vrot.lane.b32.xlu0 %v1275, 104
      %v7885 = vpop.permute.xlu0 %7884
      %v7887 = vsel %vm1291, %v7868, 0
      %v7890 = vsel %vm2223, %v7885, 0
      %7892 = vmatprep.subr.bf16.mxu0 0
      %7893 = vmatpush1.bf16.msra.mxu0 %v7890
      %7894 = vmatprep.subr.bf16.mxu0 0
      %7895 = vmatpush1.bf16.msra.mxu0 0
      %7896 = vmatprep.subr.bf16.mxu0 0
      %7897 = vmatpush1.bf16.msra.mxu0 0
      %7898 = vmatprep.subr.bf16.mxu0 0
      %7899 = vmatpush1.bf16.msra.mxu0 0
      %7900 = vmatprep.subr.bf16.mxu0 0
      %7901 = vmatpush1.bf16.msra.mxu0 0
      %7902 = vmatprep.subr.bf16.mxu0 0
      %7903 = vmatpush1.bf16.msra.mxu0 0
      %7904 = vmatprep.subr.bf16.mxu0 0
      %7905 = vmatpush1.bf16.msra.mxu0 0
      %7906 = vmatprep.subr.bf16.mxu0 0
      %7907 = vmatpush1.bf16.msra.mxu0 0
      %7908 = vmatprep.subr.bf16.mxu0 0
      %7909 = vmatpush1.bf16.msra.mxu0 0
      %7910 = vmatprep.subr.bf16.mxu0 0
      %7911 = vmatpush1.bf16.msra.mxu0 0
      %7912 = vmatprep.subr.bf16.mxu0 0
      %7913 = vmatpush1.bf16.msra.mxu0 0
      %7914 = vmatprep.subr.bf16.mxu0 0
      %7915 = vmatpush1.bf16.msra.mxu0 0
      %7916 = vmatprep.subr.bf16.mxu0 0
      %7917 = vmatpush1.bf16.msra.mxu0 0
      %7918 = vmatprep.subr.bf16.mxu0 0
      %7919 = vmatpush1.bf16.msra.mxu0 0
      %7920 = vmatprep.subr.bf16.mxu0 0
      %7921 = vmatpush1.bf16.msra.mxu0 0
      %7922 = vmatprep.subr.bf16.mxu0 0
      %7923 = vmatpush1.bf16.msra.mxu0 0
      %7924 = vmatprep.mubr.bf16.mxu0 0
      %7925 = vmatmul.mubr.bf16.gmra.mrb[0].mxu0 %v7887
      %v7926 = vpop.f32.mrb[0].mxu0
      %v7927 = vadd.f32 0.0, %v7926
      %v7928 = vpop.f32.mrb[0].mxu0
      %v7929 = vpop.f32.mrb[0].mxu0
      %v7930 = vpop.f32.mrb[0].mxu0
      %7931 = vdwg.mxu0
      %7932 = vrot.lane.b32.xlu0 %v1276, 104
      %v7933 = vpop.permute.xlu0 %7932
      %v7935 = vsel %vm1291, %v7869, 0
      %v7938 = vsel %vm2223, %v7933, 0
      %7940 = vmatprep.subr.bf16.mxu0 0
      %7941 = vmatpush1.bf16.msra.mxu0 %v7938
      %7942 = vmatprep.subr.bf16.mxu0 0
      %7943 = vmatpush1.bf16.msra.mxu0 0
      %7944 = vmatprep.subr.bf16.mxu0 0
      %7945 = vmatpush1.bf16.msra.mxu0 0
      %7946 = vmatprep.subr.bf16.mxu0 0
      %7947 = vmatpush1.bf16.msra.mxu0 0
      %7948 = vmatprep.subr.bf16.mxu0 0
      %7949 = vmatpush1.bf16.msra.mxu0 0
      %7950 = vmatprep.subr.bf16.mxu0 0
      %7951 = vmatpush1.bf16.msra.mxu0 0
      %7952 = vmatprep.subr.bf16.mxu0 0
      %7953 = vmatpush1.bf16.msra.mxu0 0
      %7954 = vmatprep.subr.bf16.mxu0 0
      %7955 = vmatpush1.bf16.msra.mxu0 0
      %7956 = vmatprep.subr.bf16.mxu0 0
      %7957 = vmatpush1.bf16.msra.mxu0 0
      %7958 = vmatprep.subr.bf16.mxu0 0
      %7959 = vmatpush1.bf16.msra.mxu0 0
      %7960 = vmatprep.subr.bf16.mxu0 0
      %7961 = vmatpush1.bf16.msra.mxu0 0
      %7962 = vmatprep.subr.bf16.mxu0 0
      %7963 = vmatpush1.bf16.msra.mxu0 0
      %7964 = vmatprep.subr.bf16.mxu0 0
      %7965 = vmatpush1.bf16.msra.mxu0 0
      %7966 = vmatprep.subr.bf16.mxu0 0
      %7967 = vmatpush1.bf16.msra.mxu0 0
      %7968 = vmatprep.subr.bf16.mxu0 0
      %7969 = vmatpush1.bf16.msra.mxu0 0
      %7970 = vmatprep.subr.bf16.mxu0 0
      %7971 = vmatpush1.bf16.msra.mxu0 0
      %7972 = vmatprep.mubr.bf16.mxu0 0
      %7973 = vmatmul.mubr.bf16.gmra.mrb[0].mxu0 %v7935
      %v7974 = vpop.f32.mrb[0].mxu0
      %v7975 = vadd.f32 0.0, %v7974
      %v7976 = vpop.f32.mrb[0].mxu0
      %v7977 = vpop.f32.mrb[0].mxu0
      %v7978 = vpop.f32.mrb[0].mxu0
      %7979 = vdwg.mxu0
      %7980 = vrot.lane.b32.xlu0 %v1277, 104
      %v7981 = vpop.permute.xlu0 %7980
      %v7983 = vsel %vm1291, %v7870, 0
      %v7986 = vsel %vm2223, %v7981, 0
      %7988 = vmatprep.subr.bf16.mxu0 0
      %7989 = vmatpush1.bf16.msra.mxu0 %v7986
      %7990 = vmatprep.subr.bf16.mxu0 0
      %7991 = vmatpush1.bf16.msra.mxu0 0
      %7992 = vmatprep.subr.bf16.mxu0 0
      %7993 = vmatpush1.bf16.msra.mxu0 0
      %7994 = vmatprep.subr.bf16.mxu0 0
      %7995 = vmatpush1.bf16.msra.mxu0 0
      %7996 = vmatprep.subr.bf16.mxu0 0
      %7997 = vmatpush1.bf16.msra.mxu0 0
      %7998 = vmatprep.subr.bf16.mxu0 0
      %7999 = vmatpush1.bf16.msra.mxu0 0
      %8000 = vmatprep.subr.bf16.mxu0 0
      %8001 = vmatpush1.bf16.msra.mxu0 0
      %8002 = vmatprep.subr.bf16.mxu0 0
      %8003 = vmatpush1.bf16.msra.mxu0 0
      %8004 = vmatprep.subr.bf16.mxu0 0
      %8005 = vmatpush1.bf16.msra.mxu0 0
      %8006 = vmatprep.subr.bf16.mxu0 0
      %8007 = vmatpush1.bf16.msra.mxu0 0
      %8008 = vmatprep.subr.bf16.mxu0 0
      %8009 = vmatpush1.bf16.msra.mxu0 0
      %8010 = vmatprep.subr.bf16.mxu0 0
      %8011 = vmatpush1.bf16.msra.mxu0 0
      %8012 = vmatprep.subr.bf16.mxu0 0
      %8013 = vmatpush1.bf16.msra.mxu0 0
      %8014 = vmatprep.subr.bf16.mxu0 0
      %8015 = vmatpush1.bf16.msra.mxu0 0
      %8016 = vmatprep.subr.bf16.mxu0 0
      %8017 = vmatpush1.bf16.msra.mxu0 0
      %8018 = vmatprep.subr.bf16.mxu0 0
      %8019 = vmatpush1.bf16.msra.mxu0 0
      %8020 = vmatprep.mubr.bf16.mxu0 0
      %8021 = vmatmul.mubr.bf16.gmra.mrb[0].mxu0 %v7983
      %v8022 = vpop.f32.mrb[0].mxu0
      %v8023 = vadd.f32 0.0, %v8022
      %v8024 = vpop.f32.mrb[0].mxu0
      %v8025 = vpop.f32.mrb[0].mxu0
      %v8026 = vpop.f32.mrb[0].mxu0
      %8027 = vdwg.mxu0
      %8028 = vrot.lane.b32.xlu0 %v1278, 104
      %v8029 = vpop.permute.xlu0 %8028
      %v8031 = vsel %vm1291, %v7871, 0
      %v8034 = vsel %vm2223, %v8029, 0
      %8036 = vmatprep.subr.bf16.mxu0 0
      %8037 = vmatpush1.bf16.msra.mxu0 %v8034
      %8038 = vmatprep.subr.bf16.mxu0 0
      %8039 = vmatpush1.bf16.msra.mxu0 0
      %8040 = vmatprep.subr.bf16.mxu0 0
      %8041 = vmatpush1.bf16.msra.mxu0 0
      %8042 = vmatprep.subr.bf16.mxu0 0
      %8043 = vmatpush1.bf16.msra.mxu0 0
      %8044 = vmatprep.subr.bf16.mxu0 0
      %8045 = vmatpush1.bf16.msra.mxu0 0
      %8046 = vmatprep.subr.bf16.mxu0 0
      %8047 = vmatpush1.bf16.msra.mxu0 0
      %8048 = vmatprep.subr.bf16.mxu0 0
      %8049 = vmatpush1.bf16.msra.mxu0 0
      %8050 = vmatprep.subr.bf16.mxu0 0
      %8051 = vmatpush1.bf16.msra.mxu0 0
      %8052 = vmatprep.subr.bf16.mxu0 0
      %8053 = vmatpush1.bf16.msra.mxu0 0
      %8054 = vmatprep.subr.bf16.mxu0 0
      %8055 = vmatpush1.bf16.msra.mxu0 0
      %8056 = vmatprep.subr.bf16.mxu0 0
      %8057 = vmatpush1.bf16.msra.mxu0 0
      %8058 = vmatprep.subr.bf16.mxu0 0
      %8059 = vmatpush1.bf16.msra.mxu0 0
      %8060 = vmatprep.subr.bf16.mxu0 0
      %8061 = vmatpush1.bf16.msra.mxu0 0
      %8062 = vmatprep.subr.bf16.mxu0 0
      %8063 = vmatpush1.bf16.msra.mxu0 0
      %8064 = vmatprep.subr.bf16.mxu0 0
      %8065 = vmatpush1.bf16.msra.mxu0 0
      %8066 = vmatprep.subr.bf16.mxu0 0
      %8067 = vmatpush1.bf16.msra.mxu0 0
      %8068 = vmatprep.mubr.bf16.mxu0 0
      %8069 = vmatmul.mubr.bf16.gmra.mrb[0].mxu0 %v8031
      %v8070 = vpop.f32.mrb[0].mxu0
      %v8071 = vadd.f32 0.0, %v8070
      %v8072 = vpop.f32.mrb[0].mxu0
      %v8073 = vpop.f32.mrb[0].mxu0
      %v8074 = vpop.f32.mrb[0].mxu0
      %8075 = vdwg.mxu0
      %8076 = vrot.lane.b32.xlu0 %v1279, 104
      %v8077 = vpop.permute.xlu0 %8076
      %v8079 = vsel %vm1291, %v7872, 0
      %v8082 = vsel %vm2223, %v8077, 0
      %8084 = vmatprep.subr.bf16.mxu0 0
      %8085 = vmatpush1.bf16.msra.mxu0 %v8082
      %8086 = vmatprep.subr.bf16.mxu0 0
      %8087 = vmatpush1.bf16.msra.mxu0 0
      %8088 = vmatprep.subr.bf16.mxu0 0
      %8089 = vmatpush1.bf16.msra.mxu0 0
      %8090 = vmatprep.subr.bf16.mxu0 0
      %8091 = vmatpush1.bf16.msra.mxu0 0
      %8092 = vmatprep.subr.bf16.mxu0 0
      %8093 = vmatpush1.bf16.msra.mxu0 0
      %8094 = vmatprep.subr.bf16.mxu0 0
      %8095 = vmatpush1.bf16.msra.mxu0 0
      %8096 = vmatprep.subr.bf16.mxu0 0
      %8097 = vmatpush1.bf16.msra.mxu0 0
      %8098 = vmatprep.subr.bf16.mxu0 0
      %8099 = vmatpush1.bf16.msra.mxu0 0
      %8100 = vmatprep.subr.bf16.mxu0 0
      %8101 = vmatpush1.bf16.msra.mxu0 0
      %8102 = vmatprep.subr.bf16.mxu0 0
      %8103 = vmatpush1.bf16.msra.mxu0 0
      %8104 = vmatprep.subr.bf16.mxu0 0
      %8105 = vmatpush1.bf16.msra.mxu0 0
      %8106 = vmatprep.subr.bf16.mxu0 0
      %8107 = vmatpush1.bf16.msra.mxu0 0
      %8108 = vmatprep.subr.bf16.mxu0 0
      %8109 = vmatpush1.bf16.msra.mxu0 0
      %8110 = vmatprep.subr.bf16.mxu0 0
      %8111 = vmatpush1.bf16.msra.mxu0 0
      %8112 = vmatprep.subr.bf16.mxu0 0
      %8113 = vmatpush1.bf16.msra.mxu0 0
      %8114 = vmatprep.subr.bf16.mxu0 0
      %8115 = vmatpush1.bf16.msra.mxu0 0
      %8116 = vmatprep.mubr.bf16.mxu0 0
      %8117 = vmatmul.mubr.bf16.gmra.mrb[0].mxu0 %v8079
      %v8118 = vpop.f32.mrb[0].mxu0
      %v8119 = vadd.f32 0.0, %v8118
      %v8120 = vpop.f32.mrb[0].mxu0
      %v8121 = vpop.f32.mrb[0].mxu0
      %v8122 = vpop.f32.mrb[0].mxu0
      %8123 = vdwg.mxu0
      %8124 = vrot.lane.b32.xlu0 %v1280, 104
      %v8125 = vpop.permute.xlu0 %8124
      %v8127 = vsel %vm1291, %v7873, 0
      %v8130 = vsel %vm2223, %v8125, 0
      %8132 = vmatprep.subr.bf16.mxu0 0
      %8133 = vmatpush1.bf16.msra.mxu0 %v8130
      %8134 = vmatprep.subr.bf16.mxu0 0
      %8135 = vmatpush1.bf16.msra.mxu0 0
      %8136 = vmatprep.subr.bf16.mxu0 0
      %8137 = vmatpush1.bf16.msra.mxu0 0
      %8138 = vmatprep.subr.bf16.mxu0 0
      %8139 = vmatpush1.bf16.msra.mxu0 0
      %8140 = vmatprep.subr.bf16.mxu0 0
      %8141 = vmatpush1.bf16.msra.mxu0 0
      %8142 = vmatprep.subr.bf16.mxu0 0
      %8143 = vmatpush1.bf16.msra.mxu0 0
      %8144 = vmatprep.subr.bf16.mxu0 0
      %8145 = vmatpush1.bf16.msra.mxu0 0
      %8146 = vmatprep.subr.bf16.mxu0 0
      %8147 = vmatpush1.bf16.msra.mxu0 0
      %8148 = vmatprep.subr.bf16.mxu0 0
      %8149 = vmatpush1.bf16.msra.mxu0 0
      %8150 = vmatprep.subr.bf16.mxu0 0
      %8151 = vmatpush1.bf16.msra.mxu0 0
      %8152 = vmatprep.subr.bf16.mxu0 0
      %8153 = vmatpush1.bf16.msra.mxu0 0
      %8154 = vmatprep.subr.bf16.mxu0 0
      %8155 = vmatpush1.bf16.msra.mxu0 0
      %8156 = vmatprep.subr.bf16.mxu0 0
      %8157 = vmatpush1.bf16.msra.mxu0 0
      %8158 = vmatprep.subr.bf16.mxu0 0
      %8159 = vmatpush1.bf16.msra.mxu0 0
      %8160 = vmatprep.subr.bf16.mxu0 0
      %8161 = vmatpush1.bf16.msra.mxu0 0
      %8162 = vmatprep.subr.bf16.mxu0 0
      %8163 = vmatpush1.bf16.msra.mxu0 0
      %8164 = vmatprep.mubr.bf16.mxu0 0
      %8165 = vmatmul.mubr.bf16.gmra.mrb[0].mxu0 %v8127
      %v8166 = vpop.f32.mrb[0].mxu0
      %v8167 = vadd.f32 0.0, %v8166
      %v8168 = vpop.f32.mrb[0].mxu0
      %v8169 = vpop.f32.mrb[0].mxu0
      %v8170 = vpop.f32.mrb[0].mxu0
      %8171 = vdwg.mxu0
      %8172 = vrot.lane.b32.xlu0 %v1281, 104
      %v8173 = vpop.permute.xlu0 %8172
      %v8175 = vsel %vm1291, %v7874, 0
      %v8178 = vsel %vm2223, %v8173, 0
      %8180 = vmatprep.subr.bf16.mxu0 0
      %8181 = vmatpush1.bf16.msra.mxu0 %v8178
      %8182 = vmatprep.subr.bf16.mxu0 0
      %8183 = vmatpush1.bf16.msra.mxu0 0
      %8184 = vmatprep.subr.bf16.mxu0 0
      %8185 = vmatpush1.bf16.msra.mxu0 0
      %8186 = vmatprep.subr.bf16.mxu0 0
      %8187 = vmatpush1.bf16.msra.mxu0 0
      %8188 = vmatprep.subr.bf16.mxu0 0
      %8189 = vmatpush1.bf16.msra.mxu0 0
      %8190 = vmatprep.subr.bf16.mxu0 0
      %8191 = vmatpush1.bf16.msra.mxu0 0
      %8192 = vmatprep.subr.bf16.mxu0 0
      %8193 = vmatpush1.bf16.msra.mxu0 0
      %8194 = vmatprep.subr.bf16.mxu0 0
      %8195 = vmatpush1.bf16.msra.mxu0 0
      %8196 = vmatprep.subr.bf16.mxu0 0
      %8197 = vmatpush1.bf16.msra.mxu0 0
      %8198 = vmatprep.subr.bf16.mxu0 0
      %8199 = vmatpush1.bf16.msra.mxu0 0
      %8200 = vmatprep.subr.bf16.mxu0 0
      %8201 = vmatpush1.bf16.msra.mxu0 0
      %8202 = vmatprep.subr.bf16.mxu0 0
      %8203 = vmatpush1.bf16.msra.mxu0 0
      %8204 = vmatprep.subr.bf16.mxu0 0
      %8205 = vmatpush1.bf16.msra.mxu0 0
      %8206 = vmatprep.subr.bf16.mxu0 0
      %8207 = vmatpush1.bf16.msra.mxu0 0
      %8208 = vmatprep.subr.bf16.mxu0 0
      %8209 = vmatpush1.bf16.msra.mxu0 0
      %8210 = vmatprep.subr.bf16.mxu0 0
      %8211 = vmatpush1.bf16.msra.mxu0 0
      %8212 = vmatprep.mubr.bf16.mxu0 0
      %8213 = vmatmul.mubr.bf16.gmra.mrb[0].mxu0 %v8175
      %v8214 = vpop.f32.mrb[0].mxu0
      %v8215 = vadd.f32 0.0, %v8214
      %v8216 = vpop.f32.mrb[0].mxu0
      %v8217 = vpop.f32.mrb[0].mxu0
      %v8218 = vpop.f32.mrb[0].mxu0
      %8219 = vdwg.mxu0
      %8220 = vrot.lane.b32.xlu0 %v1282, 104
      %v8221 = vpop.permute.xlu0 %8220
      %v8223 = vsel %vm1291, %v7875, 0
      %v8226 = vsel %vm2223, %v8221, 0
      %8228 = vmatprep.subr.bf16.mxu0 0
      %8229 = vmatpush1.bf16.msra.mxu0 %v8226
      %8230 = vmatprep.subr.bf16.mxu0 0
      %8231 = vmatpush1.bf16.msra.mxu0 0
      %8232 = vmatprep.subr.bf16.mxu0 0
      %8233 = vmatpush1.bf16.msra.mxu0 0
      %8234 = vmatprep.subr.bf16.mxu0 0
      %8235 = vmatpush1.bf16.msra.mxu0 0
      %8236 = vmatprep.subr.bf16.mxu0 0
      %8237 = vmatpush1.bf16.msra.mxu0 0
      %8238 = vmatprep.subr.bf16.mxu0 0
      %8239 = vmatpush1.bf16.msra.mxu0 0
      %8240 = vmatprep.subr.bf16.mxu0 0
      %8241 = vmatpush1.bf16.msra.mxu0 0
      %8242 = vmatprep.subr.bf16.mxu0 0
      %8243 = vmatpush1.bf16.msra.mxu0 0
      %8244 = vmatprep.subr.bf16.mxu0 0
      %8245 = vmatpush1.bf16.msra.mxu0 0
      %8246 = vmatprep.subr.bf16.mxu0 0
      %8247 = vmatpush1.bf16.msra.mxu0 0
      %8248 = vmatprep.subr.bf16.mxu0 0
      %8249 = vmatpush1.bf16.msra.mxu0 0
      %8250 = vmatprep.subr.bf16.mxu0 0
      %8251 = vmatpush1.bf16.msra.mxu0 0
      %8252 = vmatprep.subr.bf16.mxu0 0
      %8253 = vmatpush1.bf16.msra.mxu0 0
      %8254 = vmatprep.subr.bf16.mxu0 0
      %8255 = vmatpush1.bf16.msra.mxu0 0
      %8256 = vmatprep.subr.bf16.mxu0 0
      %8257 = vmatpush1.bf16.msra.mxu0 0
      %8258 = vmatprep.subr.bf16.mxu0 0
      %8259 = vmatpush1.bf16.msra.mxu0 0
      %8260 = vmatprep.mubr.bf16.mxu0 0
      %8261 = vmatmul.mubr.bf16.gmra.mrb[0].mxu0 %v8223
      %v8262 = vpop.f32.mrb[0].mxu0
      %v8263 = vadd.f32 0.0, %v8262
      %v8264 = vpop.f32.mrb[0].mxu0
      %v8265 = vpop.f32.mrb[0].mxu0
      %v8266 = vpop.f32.mrb[0].mxu0
      %8267 = vdwg.mxu0
      %8268 = vrot.lane.b32.xlu0 %v1283, 104
      %v8269 = vpop.permute.xlu0 %8268
      %v8271 = vsel %vm1291, %v7876, 0
      %v8274 = vsel %vm2223, %v8269, 0
      %8276 = vmatprep.subr.bf16.mxu0 0
      %8277 = vmatpush1.bf16.msra.mxu0 %v8274
      %8278 = vmatprep.subr.bf16.mxu0 0
      %8279 = vmatpush1.bf16.msra.mxu0 0
      %8280 = vmatprep.subr.bf16.mxu0 0
      %8281 = vmatpush1.bf16.msra.mxu0 0
      %8282 = vmatprep.subr.bf16.mxu0 0
      %8283 = vmatpush1.bf16.msra.mxu0 0
      %8284 = vmatprep.subr.bf16.mxu0 0
      %8285 = vmatpush1.bf16.msra.mxu0 0
      %8286 = vmatprep.subr.bf16.mxu0 0
      %8287 = vmatpush1.bf16.msra.mxu0 0
      %8288 = vmatprep.subr.bf16.mxu0 0
      %8289 = vmatpush1.bf16.msra.mxu0 0
      %8290 = vmatprep.subr.bf16.mxu0 0
      %8291 = vmatpush1.bf16.msra.mxu0 0
      %8292 = vmatprep.subr.bf16.mxu0 0
      %8293 = vmatpush1.bf16.msra.mxu0 0
      %8294 = vmatprep.subr.bf16.mxu0 0
      %8295 = vmatpush1.bf16.msra.mxu0 0
      %8296 = vmatprep.subr.bf16.mxu0 0
      %8297 = vmatpush1.bf16.msra.mxu0 0
      %8298 = vmatprep.subr.bf16.mxu0 0
      %8299 = vmatpush1.bf16.msra.mxu0 0
      %8300 = vmatprep.subr.bf16.mxu0 0
      %8301 = vmatpush1.bf16.msra.mxu0 0
      %8302 = vmatprep.subr.bf16.mxu0 0
      %8303 = vmatpush1.bf16.msra.mxu0 0
      %8304 = vmatprep.subr.bf16.mxu0 0
      %8305 = vmatpush1.bf16.msra.mxu0 0
      %8306 = vmatprep.subr.bf16.mxu0 0
      %8307 = vmatpush1.bf16.msra.mxu0 0
      %8308 = vmatprep.mubr.bf16.mxu0 0
      %8309 = vmatmul.mubr.bf16.gmra.mrb[0].mxu0 %v8271
      %v8310 = vpop.f32.mrb[0].mxu0
      %v8311 = vadd.f32 0.0, %v8310
      %v8312 = vpop.f32.mrb[0].mxu0
      %v8313 = vpop.f32.mrb[0].mxu0
      %v8314 = vpop.f32.mrb[0].mxu0
      %8315 = vdwg.mxu0
      %8316 = vrot.lane.b32.xlu0 %v1284, 104
      %v8317 = vpop.permute.xlu0 %8316
      %v8319 = vsel %vm1291, %v7877, 0
      %v8322 = vsel %vm2223, %v8317, 0
      %8324 = vmatprep.subr.bf16.mxu0 0
      %8325 = vmatpush1.bf16.msra.mxu0 %v8322
      %8326 = vmatprep.subr.bf16.mxu0 0
      %8327 = vmatpush1.bf16.msra.mxu0 0
      %8328 = vmatprep.subr.bf16.mxu0 0
      %8329 = vmatpush1.bf16.msra.mxu0 0
      %8330 = vmatprep.subr.bf16.mxu0 0
      %8331 = vmatpush1.bf16.msra.mxu0 0
      %8332 = vmatprep.subr.bf16.mxu0 0
      %8333 = vmatpush1.bf16.msra.mxu0 0
      %8334 = vmatprep.subr.bf16.mxu0 0
      %8335 = vmatpush1.bf16.msra.mxu0 0
      %8336 = vmatprep.subr.bf16.mxu0 0
      %8337 = vmatpush1.bf16.msra.mxu0 0
      %8338 = vmatprep.subr.bf16.mxu0 0
      %8339 = vmatpush1.bf16.msra.mxu0 0
      %8340 = vmatprep.subr.bf16.mxu0 0
      %8341 = vmatpush1.bf16.msra.mxu0 0
      %8342 = vmatprep.subr.bf16.mxu0 0
      %8343 = vmatpush1.bf16.msra.mxu0 0
      %8344 = vmatprep.subr.bf16.mxu0 0
      %8345 = vmatpush1.bf16.msra.mxu0 0
      %8346 = vmatprep.subr.bf16.mxu0 0
      %8347 = vmatpush1.bf16.msra.mxu0 0
      %8348 = vmatprep.subr.bf16.mxu0 0
      %8349 = vmatpush1.bf16.msra.mxu0 0
      %8350 = vmatprep.subr.bf16.mxu0 0
      %8351 = vmatpush1.bf16.msra.mxu0 0
      %8352 = vmatprep.subr.bf16.mxu0 0
      %8353 = vmatpush1.bf16.msra.mxu0 0
      %8354 = vmatprep.subr.bf16.mxu0 0
      %8355 = vmatpush1.bf16.msra.mxu0 0
      %8356 = vmatprep.mubr.bf16.mxu0 0
      %8357 = vmatmul.mubr.bf16.gmra.mrb[0].mxu0 %v8319
      %v8358 = vpop.f32.mrb[0].mxu0
      %v8359 = vadd.f32 0.0, %v8358
      %v8360 = vpop.f32.mrb[0].mxu0
      %v8361 = vpop.f32.mrb[0].mxu0
      %v8362 = vpop.f32.mrb[0].mxu0
      %8363 = vdwg.mxu0
      %8364 = vrot.lane.b32.xlu0 %v1285, 104
      %v8365 = vpop.permute.xlu0 %8364
      %v8367 = vsel %vm1291, %v7878, 0
      %v8370 = vsel %vm2223, %v8365, 0
      %8372 = vmatprep.subr.bf16.mxu0 0
      %8373 = vmatpush1.bf16.msra.mxu0 %v8370
      %8374 = vmatprep.subr.bf16.mxu0 0
      %8375 = vmatpush1.bf16.msra.mxu0 0
      %8376 = vmatprep.subr.bf16.mxu0 0
      %8377 = vmatpush1.bf16.msra.mxu0 0
      %8378 = vmatprep.subr.bf16.mxu0 0
      %8379 = vmatpush1.bf16.msra.mxu0 0
      %8380 = vmatprep.subr.bf16.mxu0 0
      %8381 = vmatpush1.bf16.msra.mxu0 0
      %8382 = vmatprep.subr.bf16.mxu0 0
      %8383 = vmatpush1.bf16.msra.mxu0 0
      %8384 = vmatprep.subr.bf16.mxu0 0
      %8385 = vmatpush1.bf16.msra.mxu0 0
      %8386 = vmatprep.subr.bf16.mxu0 0
      %8387 = vmatpush1.bf16.msra.mxu0 0
      %8388 = vmatprep.subr.bf16.mxu0 0
      %8389 = vmatpush1.bf16.msra.mxu0 0
      %8390 = vmatprep.subr.bf16.mxu0 0
      %8391 = vmatpush1.bf16.msra.mxu0 0
      %8392 = vmatprep.subr.bf16.mxu0 0
      %8393 = vmatpush1.bf16.msra.mxu0 0
      %8394 = vmatprep.subr.bf16.mxu0 0
      %8395 = vmatpush1.bf16.msra.mxu0 0
      %8396 = vmatprep.subr.bf16.mxu0 0
      %8397 = vmatpush1.bf16.msra.mxu0 0
      %8398 = vmatprep.subr.bf16.mxu0 0
      %8399 = vmatpush1.bf16.msra.mxu0 0
      %8400 = vmatprep.subr.bf16.mxu0 0
      %8401 = vmatpush1.bf16.msra.mxu0 0
      %8402 = vmatprep.subr.bf16.mxu0 0
      %8403 = vmatpush1.bf16.msra.mxu0 0
      %8404 = vmatprep.mubr.bf16.mxu0 0
      %8405 = vmatmul.mubr.bf16.gmra.mrb[0].mxu0 %v8367
      %v8406 = vpop.f32.mrb[0].mxu0
      %v8407 = vadd.f32 0.0, %v8406
      %v8408 = vpop.f32.mrb[0].mxu0
      %v8409 = vpop.f32.mrb[0].mxu0
      %v8410 = vpop.f32.mrb[0].mxu0
      %8411 = vdwg.mxu0
      %8412 = vrot.lane.b32.xlu0 %v1286, 104
      %v8413 = vpop.permute.xlu0 %8412
      %v8415 = vsel %vm1291, %v7879, 0
      %v8418 = vsel %vm2223, %v8413, 0
      %8420 = vmatprep.subr.bf16.mxu0 0
      %8421 = vmatpush1.bf16.msra.mxu0 %v8418
      %8422 = vmatprep.subr.bf16.mxu0 0
      %8423 = vmatpush1.bf16.msra.mxu0 0
      %8424 = vmatprep.subr.bf16.mxu0 0
      %8425 = vmatpush1.bf16.msra.mxu0 0
      %8426 = vmatprep.subr.bf16.mxu0 0
      %8427 = vmatpush1.bf16.msra.mxu0 0
      %8428 = vmatprep.subr.bf16.mxu0 0
      %8429 = vmatpush1.bf16.msra.mxu0 0
      %8430 = vmatprep.subr.bf16.mxu0 0
      %8431 = vmatpush1.bf16.msra.mxu0 0
      %8432 = vmatprep.subr.bf16.mxu0 0
      %8433 = vmatpush1.bf16.msra.mxu0 0
      %8434 = vmatprep.subr.bf16.mxu0 0
      %8435 = vmatpush1.bf16.msra.mxu0 0
      %8436 = vmatprep.subr.bf16.mxu0 0
      %8437 = vmatpush1.bf16.msra.mxu0 0
      %8438 = vmatprep.subr.bf16.mxu0 0
      %8439 = vmatpush1.bf16.msra.mxu0 0
      %8440 = vmatprep.subr.bf16.mxu0 0
      %8441 = vmatpush1.bf16.msra.mxu0 0
      %8442 = vmatprep.subr.bf16.mxu0 0
      %8443 = vmatpush1.bf16.msra.mxu0 0
      %8444 = vmatprep.subr.bf16.mxu0 0
      %8445 = vmatpush1.bf16.msra.mxu0 0
      %8446 = vmatprep.subr.bf16.mxu0 0
      %8447 = vmatpush1.bf16.msra.mxu0 0
      %8448 = vmatprep.subr.bf16.mxu0 0
      %8449 = vmatpush1.bf16.msra.mxu0 0
      %8450 = vmatprep.subr.bf16.mxu0 0
      %8451 = vmatpush1.bf16.msra.mxu0 0
      %8452 = vmatprep.mubr.bf16.mxu0 0
      %8453 = vmatmul.mubr.bf16.gmra.mrb[0].mxu0 %v8415
      %v8454 = vpop.f32.mrb[0].mxu0
      %v8455 = vadd.f32 0.0, %v8454
      %v8456 = vpop.f32.mrb[0].mxu0
      %v8457 = vpop.f32.mrb[0].mxu0
      %v8458 = vpop.f32.mrb[0].mxu0
      %8459 = vdwg.mxu0
      %8460 = vrot.lane.b32.xlu0 %v1287, 104
      %v8461 = vpop.permute.xlu0 %8460
      %v8463 = vsel %vm1291, %v7880, 0
      %v8466 = vsel %vm2223, %v8461, 0
      %8468 = vmatprep.subr.bf16.mxu0 0
      %8469 = vmatpush1.bf16.msra.mxu0 %v8466
      %8470 = vmatprep.subr.bf16.mxu0 0
      %8471 = vmatpush1.bf16.msra.mxu0 0
      %8472 = vmatprep.subr.bf16.mxu0 0
      %8473 = vmatpush1.bf16.msra.mxu0 0
      %8474 = vmatprep.subr.bf16.mxu0 0
      %8475 = vmatpush1.bf16.msra.mxu0 0
      %8476 = vmatprep.subr.bf16.mxu0 0
      %8477 = vmatpush1.bf16.msra.mxu0 0
      %8478 = vmatprep.subr.bf16.mxu0 0
      %8479 = vmatpush1.bf16.msra.mxu0 0
      %8480 = vmatprep.subr.bf16.mxu0 0
      %8481 = vmatpush1.bf16.msra.mxu0 0
      %8482 = vmatprep.subr.bf16.mxu0 0
      %8483 = vmatpush1.bf16.msra.mxu0 0
      %8484 = vmatprep.subr.bf16.mxu0 0
      %8485 = vmatpush1.bf16.msra.mxu0 0
      %8486 = vmatprep.subr.bf16.mxu0 0
      %8487 = vmatpush1.bf16.msra.mxu0 0
      %8488 = vmatprep.subr.bf16.mxu0 0
      %8489 = vmatpush1.bf16.msra.mxu0 0
      %8490 = vmatprep.subr.bf16.mxu0 0
      %8491 = vmatpush1.bf16.msra.mxu0 0
      %8492 = vmatprep.subr.bf16.mxu0 0
      %8493 = vmatpush1.bf16.msra.mxu0 0
      %8494 = vmatprep.subr.bf16.mxu0 0
      %8495 = vmatpush1.bf16.msra.mxu0 0
      %8496 = vmatprep.subr.bf16.mxu0 0
      %8497 = vmatpush1.bf16.msra.mxu0 0
      %8498 = vmatprep.subr.bf16.mxu0 0
      %8499 = vmatpush1.bf16.msra.mxu0 0
      %8500 = vmatprep.mubr.bf16.mxu0 0
      %8501 = vmatmul.mubr.bf16.gmra.mrb[0].mxu0 %v8463
      %v8502 = vpop.f32.mrb[0].mxu0
      %v8503 = vadd.f32 0.0, %v8502
      %v8504 = vpop.f32.mrb[0].mxu0
      %v8505 = vpop.f32.mrb[0].mxu0
      %v8506 = vpop.f32.mrb[0].mxu0
      %8507 = vdwg.mxu0
      %8508 = vrot.lane.b32.xlu0 %v1288, 104
      %v8509 = vpop.permute.xlu0 %8508
      %v8511 = vsel %vm1291, %v7881, 0
      %v8514 = vsel %vm2223, %v8509, 0
      %8516 = vmatprep.subr.bf16.mxu0 0
      %8517 = vmatpush1.bf16.msra.mxu0 %v8514
      %8518 = vmatprep.subr.bf16.mxu0 0
      %8519 = vmatpush1.bf16.msra.mxu0 0
      %8520 = vmatprep.subr.bf16.mxu0 0
      %8521 = vmatpush1.bf16.msra.mxu0 0
      %8522 = vmatprep.subr.bf16.mxu0 0
      %8523 = vmatpush1.bf16.msra.mxu0 0
      %8524 = vmatprep.subr.bf16.mxu0 0
      %8525 = vmatpush1.bf16.msra.mxu0 0
      %8526 = vmatprep.subr.bf16.mxu0 0
      %8527 = vmatpush1.bf16.msra.mxu0 0
      %8528 = vmatprep.subr.bf16.mxu0 0
      %8529 = vmatpush1.bf16.msra.mxu0 0
      %8530 = vmatprep.subr.bf16.mxu0 0
      %8531 = vmatpush1.bf16.msra.mxu0 0
      %8532 = vmatprep.subr.bf16.mxu0 0
      %8533 = vmatpush1.bf16.msra.mxu0 0
      %8534 = vmatprep.subr.bf16.mxu0 0
      %8535 = vmatpush1.bf16.msra.mxu0 0
      %8536 = vmatprep.subr.bf16.mxu0 0
      %8537 = vmatpush1.bf16.msra.mxu0 0
      %8538 = vmatprep.subr.bf16.mxu0 0
      %8539 = vmatpush1.bf16.msra.mxu0 0
      %8540 = vmatprep.subr.bf16.mxu0 0
      %8541 = vmatpush1.bf16.msra.mxu0 0
      %8542 = vmatprep.subr.bf16.mxu0 0
      %8543 = vmatpush1.bf16.msra.mxu0 0
      %8544 = vmatprep.subr.bf16.mxu0 0
      %8545 = vmatpush1.bf16.msra.mxu0 0
      %8546 = vmatprep.subr.bf16.mxu0 0
      %8547 = vmatpush1.bf16.msra.mxu0 0
      %8548 = vmatprep.mubr.bf16.mxu0 0
      %8549 = vmatmul.mubr.bf16.gmra.mrb[0].mxu0 %v8511
      %v8550 = vpop.f32.mrb[0].mxu0
      %v8551 = vadd.f32 0.0, %v8550
      %v8552 = vpop.f32.mrb[0].mxu0
      %v8553 = vpop.f32.mrb[0].mxu0
      %v8554 = vpop.f32.mrb[0].mxu0
      %8555 = vdwg.mxu0
      %8556 = vrot.lane.b32.xlu0 %v1289, 104
      %v8557 = vpop.permute.xlu0 %8556
      %v8559 = vsel %vm1291, %v7882, 0
      %v8562 = vsel %vm2223, %v8557, 0
      %8564 = vmatprep.subr.bf16.mxu0 0
      %8565 = vmatpush1.bf16.msra.mxu0 %v8562
      %8566 = vmatprep.subr.bf16.mxu0 0
      %8567 = vmatpush1.bf16.msra.mxu0 0
      %8568 = vmatprep.subr.bf16.mxu0 0
      %8569 = vmatpush1.bf16.msra.mxu0 0
      %8570 = vmatprep.subr.bf16.mxu0 0
      %8571 = vmatpush1.bf16.msra.mxu0 0
      %8572 = vmatprep.subr.bf16.mxu0 0
      %8573 = vmatpush1.bf16.msra.mxu0 0
      %8574 = vmatprep.subr.bf16.mxu0 0
      %8575 = vmatpush1.bf16.msra.mxu0 0
      %8576 = vmatprep.subr.bf16.mxu0 0
      %8577 = vmatpush1.bf16.msra.mxu0 0
      %8578 = vmatprep.subr.bf16.mxu0 0
      %8579 = vmatpush1.bf16.msra.mxu0 0
      %8580 = vmatprep.subr.bf16.mxu0 0
      %8581 = vmatpush1.bf16.msra.mxu0 0
      %8582 = vmatprep.subr.bf16.mxu0 0
      %8583 = vmatpush1.bf16.msra.mxu0 0
      %8584 = vmatprep.subr.bf16.mxu0 0
      %8585 = vmatpush1.bf16.msra.mxu0 0
      %8586 = vmatprep.subr.bf16.mxu0 0
      %8587 = vmatpush1.bf16.msra.mxu0 0
      %8588 = vmatprep.subr.bf16.mxu0 0
      %8589 = vmatpush1.bf16.msra.mxu0 0
      %8590 = vmatprep.subr.bf16.mxu0 0
      %8591 = vmatpush1.bf16.msra.mxu0 0
      %8592 = vmatprep.subr.bf16.mxu0 0
      %8593 = vmatpush1.bf16.msra.mxu0 0
      %8594 = vmatprep.subr.bf16.mxu0 0
      %8595 = vmatpush1.bf16.msra.mxu0 0
      %8596 = vmatprep.mubr.bf16.mxu0 0
      %8597 = vmatmul.mubr.bf16.gmra.mrb[0].mxu0 %v8559
      %v8598 = vpop.f32.mrb[0].mxu0
      %v8599 = vadd.f32 0.0, %v8598
      %v8600 = vpop.f32.mrb[0].mxu0
      %v8601 = vpop.f32.mrb[0].mxu0
      %v8602 = vpop.f32.mrb[0].mxu0
      %8603 = vdwg.mxu0
      %8604 = vrot.lane.b32.xlu0 %v1290, 104
      %v8605 = vpop.permute.xlu0 %8604
      %v8607 = vsel %vm1291, %v7883, 0
      %v8610 = vsel %vm2223, %v8605, 0
      %8612 = vmatprep.subr.bf16.mxu0 0
      %8613 = vmatpush1.bf16.msra.mxu0 %v8610
      %8614 = vmatprep.subr.bf16.mxu0 0
      %8615 = vmatpush1.bf16.msra.mxu0 0
      %8616 = vmatprep.subr.bf16.mxu0 0
      %8617 = vmatpush1.bf16.msra.mxu0 0
      %8618 = vmatprep.subr.bf16.mxu0 0
      %8619 = vmatpush1.bf16.msra.mxu0 0
      %8620 = vmatprep.subr.bf16.mxu0 0
      %8621 = vmatpush1.bf16.msra.mxu0 0
      %8622 = vmatprep.subr.bf16.mxu0 0
      %8623 = vmatpush1.bf16.msra.mxu0 0
      %8624 = vmatprep.subr.bf16.mxu0 0
      %8625 = vmatpush1.bf16.msra.mxu0 0
      %8626 = vmatprep.subr.bf16.mxu0 0
      %8627 = vmatpush1.bf16.msra.mxu0 0
      %8628 = vmatprep.subr.bf16.mxu0 0
      %8629 = vmatpush1.bf16.msra.mxu0 0
      %8630 = vmatprep.subr.bf16.mxu0 0
      %8631 = vmatpush1.bf16.msra.mxu0 0
      %8632 = vmatprep.subr.bf16.mxu0 0
      %8633 = vmatpush1.bf16.msra.mxu0 0
      %8634 = vmatprep.subr.bf16.mxu0 0
      %8635 = vmatpush1.bf16.msra.mxu0 0
      %8636 = vmatprep.subr.bf16.mxu0 0
      %8637 = vmatpush1.bf16.msra.mxu0 0
      %8638 = vmatprep.subr.bf16.mxu0 0
      %8639 = vmatpush1.bf16.msra.mxu0 0
      %8640 = vmatprep.subr.bf16.mxu0 0
      %8641 = vmatpush1.bf16.msra.mxu0 0
      %8642 = vmatprep.subr.bf16.mxu0 0
      %8643 = vmatpush1.bf16.msra.mxu0 0
      %8644 = vmatprep.mubr.bf16.mxu0 0
      %8645 = vmatmul.mubr.bf16.gmra.mrb[0].mxu0 %v8607
      %v8646 = vpop.f32.mrb[0].mxu0
      %v8647 = vadd.f32 0.0, %v8646
      %v8648 = vpop.f32.mrb[0].mxu0
      %v8649 = vpop.f32.mrb[0].mxu0
      %v8650 = vpop.f32.mrb[0].mxu0
      %8651 = vdwg.mxu0
      %v8652 = vpack.c.bf16 %v7975, %v7927
      %v8653 = vpack.c.bf16 %v8071, %v8023
      %v8654 = vpack.c.bf16 %v8167, %v8119
      %v8655 = vpack.c.bf16 %v8263, %v8215
      %v8656 = vpack.c.bf16 %v8359, %v8311
      %v8657 = vpack.c.bf16 %v8455, %v8407
      %v8658 = vpack.c.bf16 %v8551, %v8503
      %v8659 = vpack.c.bf16 %v8647, %v8599
      %v8660 = vld [vmem:[%s10 + $0xc] sm:$0xf]
      %v8662 = vsel %vm1291, %v8652, 0
      %v8665 = vsel %vm1291, %v8653, 0
      %v8668 = vsel %vm1291, %v8654, 0
      %v8671 = vsel %vm1291, %v8655, 0
      %v8674 = vsel %vm1291, %v8656, 0
      %v8677 = vsel %vm1291, %v8657, 0
      %v8680 = vsel %vm1291, %v8658, 0
      %v8683 = vsel %vm1291, %v8659, 0
      %v8686 = vsel %vm2223, %v8660, 0
      %8688 = vmatprep.subr.bf16.mxu0 0
      %8689 = vmatpush1.bf16.msra.mxu0 %v8686
      %8690 = vmatprep.subr.bf16.mxu0 0
      %8691 = vmatpush1.bf16.msra.mxu0 0
      %8692 = vmatprep.subr.bf16.mxu0 0
      %8693 = vmatpush1.bf16.msra.mxu0 0
      %8694 = vmatprep.subr.bf16.mxu0 0
      %8695 = vmatpush1.bf16.msra.mxu0 0
      %8696 = vmatprep.subr.bf16.mxu0 0
      %8697 = vmatpush1.bf16.msra.mxu0 0
      %8698 = vmatprep.subr.bf16.mxu0 0
      %8699 = vmatpush1.bf16.msra.mxu0 0
      %8700 = vmatprep.subr.bf16.mxu0 0
      %8701 = vmatpush1.bf16.msra.mxu0 0
      %8702 = vmatprep.subr.bf16.mxu0 0
      %8703 = vmatpush1.bf16.msra.mxu0 0
      %8704 = vmatprep.subr.bf16.mxu0 0
      %8705 = vmatpush1.bf16.msra.mxu0 0
      %8706 = vmatprep.subr.bf16.mxu0 0
      %8707 = vmatpush1.bf16.msra.mxu0 0
      %8708 = vmatprep.subr.bf16.mxu0 0
      %8709 = vmatpush1.bf16.msra.mxu0 0
      %8710 = vmatprep.subr.bf16.mxu0 0
      %8711 = vmatpush1.bf16.msra.mxu0 0
      %8712 = vmatprep.subr.bf16.mxu0 0
      %8713 = vmatpush1.bf16.msra.mxu0 0
      %8714 = vmatprep.subr.bf16.mxu0 0
      %8715 = vmatpush1.bf16.msra.mxu0 0
      %8716 = vmatprep.subr.bf16.mxu0 0
      %8717 = vmatpush1.bf16.msra.mxu0 0
      %8718 = vmatprep.subr.bf16.mxu0 0
      %8719 = vmatpush1.bf16.msra.mxu0 0
      %8720 = vmatprep.mubr.bf16.mxu0 0
      %8721 = vmatmul.mubr.bf16.gmra.mrb[0].mxu0 %v8662
      %v8722 = vpop.f32.mrb[0].mxu0
      %v8723 = vadd.f32 0.0, %v8722
      %v8724 = vpop.f32.mrb[0].mxu0
      %v8725 = vpop.f32.mrb[0].mxu0
      %v8726 = vadd.f32 0.0, %v8725
      %v8727 = vpop.f32.mrb[0].mxu0
      %8728 = vmatprep.mubr.bf16.mxu0 0
      %8729 = vmatmul.mubr.bf16.gmra.mrb[0].mxu0 %v8665
      %v8730 = vpop.f32.mrb[0].mxu0
      %v8731 = vadd.f32 0.0, %v8730
      %v8732 = vpop.f32.mrb[0].mxu0
      %v8733 = vpop.f32.mrb[0].mxu0
      %v8734 = vadd.f32 0.0, %v8733
      %v8735 = vpop.f32.mrb[0].mxu0
      %8736 = vmatprep.mubr.bf16.mxu0 0
      %8737 = vmatmul.mubr.bf16.gmra.mrb[0].mxu0 %v8668
      %v8738 = vpop.f32.mrb[0].mxu0
      %v8739 = vadd.f32 0.0, %v8738
      %v8740 = vpop.f32.mrb[0].mxu0
      %v8741 = vpop.f32.mrb[0].mxu0
      %v8742 = vadd.f32 0.0, %v8741
      %v8743 = vpop.f32.mrb[0].mxu0
      %8744 = vmatprep.mubr.bf16.mxu0 0
      %8745 = vmatmul.mubr.bf16.gmra.mrb[0].mxu0 %v8671
      %v8746 = vpop.f32.mrb[0].mxu0
      %v8747 = vadd.f32 0.0, %v8746
      %v8748 = vpop.f32.mrb[0].mxu0
      %v8749 = vpop.f32.mrb[0].mxu0
      %v8750 = vadd.f32 0.0, %v8749
      %v8751 = vpop.f32.mrb[0].mxu0
      %8752 = vmatprep.mubr.bf16.mxu0 0
      %8753 = vmatmul.mubr.bf16.gmra.mrb[0].mxu0 %v8674
      %v8754 = vpop.f32.mrb[0].mxu0
      %v8755 = vadd.f32 0.0, %v8754
      %v8756 = vpop.f32.mrb[0].mxu0
      %v8757 = vpop.f32.mrb[0].mxu0
      %v8758 = vadd.f32 0.0, %v8757
      %v8759 = vpop.f32.mrb[0].mxu0
      %8760 = vmatprep.mubr.bf16.mxu0 0
      %8761 = vmatmul.mubr.bf16.gmra.mrb[0].mxu0 %v8677
      %v8762 = vpop.f32.mrb[0].mxu0
      %v8763 = vadd.f32 0.0, %v8762
      %v8764 = vpop.f32.mrb[0].mxu0
      %v8765 = vpop.f32.mrb[0].mxu0
      %v8766 = vadd.f32 0.0, %v8765
      %v8767 = vpop.f32.mrb[0].mxu0
      %8768 = vmatprep.mubr.bf16.mxu0 0
      %8769 = vmatmul.mubr.bf16.gmra.mrb[0].mxu0 %v8680
      %v8770 = vpop.f32.mrb[0].mxu0
      %v8771 = vadd.f32 0.0, %v8770
      %v8772 = vpop.f32.mrb[0].mxu0
      %v8773 = vpop.f32.mrb[0].mxu0
      %v8774 = vadd.f32 0.0, %v8773
      %v8775 = vpop.f32.mrb[0].mxu0
      %8776 = vmatprep.mubr.bf16.mxu0 0
      %8777 = vmatmul.mubr.bf16.gmra.mrb[0].mxu0 %v8683
      %v8778 = vpop.f32.mrb[0].mxu0
      %v8779 = vadd.f32 0.0, %v8778
      %v8780 = vpop.f32.mrb[0].mxu0
      %v8781 = vpop.f32.mrb[0].mxu0
      %v8782 = vadd.f32 0.0, %v8781
      %v8783 = vpop.f32.mrb[0].mxu0
      %8784 = vdwg.mxu0
      %v8785 = vadd.f32 %v6876, %v8723
      %v8786 = vadd.f32 %v6877, %v8726
      %v8787 = vadd.f32 %v6878, %v8731
      %v8788 = vadd.f32 %v6879, %v8734
      %v8789 = vadd.f32 %v6880, %v8739
      %v8790 = vadd.f32 %v6881, %v8742
      %v8791 = vadd.f32 %v6882, %v8747
      %v8792 = vadd.f32 %v6883, %v8750
      %v8793 = vadd.f32 %v6884, %v8755
      %v8794 = vadd.f32 %v6885, %v8758
      %v8795 = vadd.f32 %v6886, %v8763
      %v8796 = vadd.f32 %v6887, %v8766
      %v8797 = vadd.f32 %v6888, %v8771
      %v8798 = vadd.f32 %v6889, %v8774
      %v8799 = vadd.f32 %v6890, %v8779
      %v8800 = vadd.f32 %v6891, %v8782
      %v8801 = vld [vmem:[%s11] sm:$0x1]
      %v8803 = vlaneseq
      %v8804 = vshrl.u32 %v8803, 7
      %v8805 = vsub.s32 0, %v8804
      %v8806 = vrot.slane %v8801, %v8805
      %v8808 = vadd.f32 %v8785, %v8806
      %v8809 = vadd.f32 %v8786, %v8806
      %v8810 = vadd.f32 %v8787, %v8806
      %v8811 = vadd.f32 %v8788, %v8806
      %v8812 = vadd.f32 %v8789, %v8806
      %v8813 = vadd.f32 %v8790, %v8806
      %v8814 = vadd.f32 %v8791, %v8806
      %v8815 = vadd.f32 %v8792, %v8806
      %v8816 = vadd.f32 %v8793, %v8806
      %v8817 = vadd.f32 %v8794, %v8806
      %v8818 = vadd.f32 %v8795, %v8806
      %v8819 = vadd.f32 %v8796, %v8806
      %v8820 = vadd.f32 %v8797, %v8806
      %v8821 = vadd.f32 %v8798, %v8806
      %v8822 = vadd.f32 %v8799, %v8806
      %v8823 = vadd.f32 %v8800, %v8806
      %8824 = vst.msk [vmem:[%s540] sm:$0xff] %vm622, %v8808
      %8825 = vst.msk [vmem:[%s540 + $0x8] sm:$0xff] %vm622, %v8809
      %8826 = vst.msk [vmem:[%s540 + $0x10] sm:$0xff] %vm622, %v8810
      %8827 = vst.msk [vmem:[%s540 + $0x18] sm:$0xff] %vm622, %v8811
      %8828 = vst.msk [vmem:[%s540 + $0x20] sm:$0xff] %vm622, %v8812
      %8829 = vst.msk [vmem:[%s540 + $0x28] sm:$0xff] %vm622, %v8813
      %8830 = vst.msk [vmem:[%s540 + $0x30] sm:$0xff] %vm622, %v8814
      %8831 = vst.msk [vmem:[%s540 + $0x38] sm:$0xff] %vm622, %v8815
      %8832 = vst.msk [vmem:[%s540 + $0x40] sm:$0xff] %vm622, %v8816
      %8833 = vst.msk [vmem:[%s540 + $0x48] sm:$0xff] %vm622, %v8817
      %8834 = vst.msk [vmem:[%s540 + $0x50] sm:$0xff] %vm622, %v8818
      %8835 = vst.msk [vmem:[%s540 + $0x58] sm:$0xff] %vm622, %v8819
      %8836 = vst.msk [vmem:[%s540 + $0x60] sm:$0xff] %vm622, %v8820
      %8837 = vst.msk [vmem:[%s540 + $0x68] sm:$0xff] %vm622, %v8821
      %8838 = vst.msk [vmem:[%s540 + $0x70] sm:$0xff] %vm622, %v8822
      %8839 = vst.msk [vmem:[%s540 + $0x78] sm:$0xff] %vm622, %v8823
      %s8840 = smul.u32 16, %s28
      %p8841 = scmp.lt.s32.totalorder %s27, 1
      %s8842 = scalar_select %p8841, %s27, 1
      %p8843 = scmp.lt.s32.totalorder %s8840, 15
      %s8844 = scalar_select %p8843, %s8840, 15
      %s8845 = smul.addr %s8842, 16
      %s8846 = sadd.s32 %s8844, %s8845
      %s8847 = smul.addr %s8846, 8
      %s8848 = scalar_lea.vmem %s12, %s8847
      // Predicated region
      $region69: #{tpu_custom_call.1} parent=67 // pred_check
        %p8849 = pneg %p333
      $region70: #{tpu_custom_call.1} parent=67 // pred_check_branch
        %8851 = sbr.rel (%p8849) target = $region72
      $region71: #{tpu_custom_call.1} parent=67 // pred_region
        %s8852 = smul.u32 16, %s28
      $region72: #{tpu_custom_call.1} parent=67 // pred_fallthru
        _
    $region68: #{tpu_custom_call.1} parent=5 // pred_fallthru
      _
    %p8853 = scmp.le.s32.totalorder 2, %s18
    // Predicated region
    $region73: #{tpu_custom_call.1} parent=5 // pred_check
      %p8854 = pneg %p8853
    $region74: #{tpu_custom_call.1} parent=5 // pred_check_branch
      %8856 = sbr.rel (%p8854) target = $region76
    $region75: #{tpu_custom_call.1} parent=5 // pred_region
      %s8857 = ssub.s32 %s18, 2
      // Predicated region
      $region77: #{tpu_custom_call.1} parent=75 // pred_check
        %p8858 = pneg %p339
      $region78: #{tpu_custom_call.1} parent=75 // pred_check_branch
        %8860 = sbr.rel (%p8858) target = $region80
      $region79: #{tpu_custom_call.1} parent=75 // pred_region
        %s8861 = smul.u32 16, %s30
        %p8862 = scmp.lt.s32.totalorder %s29, 1
        %s8863 = scalar_select %p8862, %s29, 1
        %p8864 = scmp.lt.s32.totalorder %s8861, 15
        %s8865 = scalar_select %p8864, %s8861, 15
        %s8866 = smul.addr %s8863, 16
        %s8867 = sadd.s32 %s8865, %s8866
        %s8868 = smul.addr %s8867, 8
        %s8869 = scalar_lea.vmem %s12, %s8868
      $region80: #{tpu_custom_call.1} parent=75 // pred_fallthru
        _
    $region76: #{tpu_custom_call.1} parent=5 // pred_fallthru
      _
  $region6: #{tpu_custom_call.1} parent=0 // loop_footer
    %s22 = sadd.s32 1, %s18
  $region7: #{tpu_custom_call.1} parent=0 // loop_footer_branch
    %17 = sbr.rel target = $region3
  $region8: #{tpu_custom_call.1} parent=0 // loop_exit
    _

</llo_original>
